<compile_context>
chip_gen: v7x
topology: tpu7x:2x2x1
jax: 0.10.0
libtpu: 0.0.40
codegen_flags: <defaults>
</compile_context>

<pallas_src>
import functools

import jax
import jax.numpy as jnp
import numpy as np
from jax import lax
from jax.experimental import pallas as pl
from jax.experimental.pallas import tpu as pltpu

_LANES = 128
_BF16_SUBLANES = 16


def _round_up(n, m):
    return (n + m - 1) // m * m


def _block_kernel(x_ref, w1_ref, b1_ref, w2_ref, b2_ref, w3_ref, b3_ref,
                  out_ref, hp_ref, *, H, W, halo, b_tile):
    # x_ref:  [B, H*W, Cp]  bf16 (Cp == Cout_p: residual adds directly)
    # w1_ref: [Cp, Pp] bf16          b1_ref: [1, Pp] f32
    # w2_ref: [9, Pp, Pp] bf16 (tap = dy*3+dx)   b2_ref: [1, Pp] f32
    # w3_ref: [Pp, Cp] bf16          b3_ref: [1, Cp] f32
    # out_ref:[B, H*W, Cp]  bf16
    # hp_ref: VMEM scratch [B*(H*W + 2*halo), Pp] bf16, per-image halo segments
    HW = H * W
    seg = HW + 2 * halo
    Pp = hp_ref.shape[-1]

    x = x_ref[...]                                            # [B, HW, Cp] bf16

    # --- conv1 (1x1) + folded BN1 + ReLU: one flattened M = B*HW matmul -------
    xf = x.reshape(b_tile * HW, x.shape[-1])
    h1 = jnp.dot(xf, w1_ref[...], preferred_element_type=jnp.float32)
    h1 = jnp.maximum(h1 + b1_ref[...], 0.0)                   # f32 elementwise

    # x-border (row-wrap) masks from a narrow [HW, 1] iota; they broadcast
    # lazily into the selects below.  y-borders are handled by the zeroed halo.
    ridx = lax.broadcasted_iota(jnp.int32, (HW, 1), 0)
    xc = ridx % W
    mask_l = xc >= 1          # dx == 0 taps sample x-1
    mask_r = xc <= W - 2      # dx == 2 taps sample x+1

    zero_halo = jnp.zeros((halo, Pp), jnp.bfloat16)           # hoisted constant

    for b in range(b_tile):
        s0 = b * seg

        # Zero ONLY the halo rows (tens of KB) every step: replaces the y-border
        # masks and is megacore-safe under the "parallel" batch axis.
        hp_ref[s0:s0 + halo, :] = zero_halo
        hp_ref[s0 + halo + HW:s0 + seg, :] = zero_halo
        # Store this image's activation as bf16 (single cast).
        hp_ref[s0 + halo:s0 + halo + HW, :] = (
            h1[b * HW:(b + 1) * HW, :].astype(jnp.bfloat16))

        # --- conv2 (3x3, stride 1, pad 1) as 9 accumulated MXU dots -----------
        acc = None
        for dy in range(3):
            for dx in range(3):
                d = (dy - 1) * W + (dx - 1)
                win = hp_ref[s0 + halo + d:s0 + halo + d + HW, :]   # bf16
                if dx == 0:
                    win = jnp.where(mask_l, win, 0.0)
                elif dx == 2:
                    win = jnp.where(mask_r, win, 0.0)
                part = jnp.dot(win, w2_ref[dy * 3 + dx],
                               preferred_element_type=jnp.float32)
                acc = part if acc is None else acc + part
        h2 = jnp.maximum(acc + b2_ref[...], 0.0).astype(jnp.bfloat16)

        # --- conv3 (1x1) + folded BN3, residual add, final ReLU ----------------
        h3 = jnp.dot(h2, w3_ref[...], preferred_element_type=jnp.float32)
        h3 = h3 + b3_ref[...]
        out = jnp.maximum(h3 + x[b].astype(jnp.float32), 0.0)
        out_ref[b] = out.astype(out_ref.dtype)      # single bf16 cast, lane-dense


def bottleneck_forward_padded(x_pad, packed_params, *, H, W, b_tile=None):
    """Core API: x_pad [N, H*W, Cp] bf16 (lane-padded) -> [N, H*W, Cp] bf16.

    Chained residual blocks should stay in this layout; depad only at the
    network boundary (see bottleneck_forward_nhwc).
    """
    w1p, b1p, w2p, b2p, w3p, b3p = packed_params
    N, HW, Cp = x_pad.shape
    assert HW == H * W
    Pp = w1p.shape[1]
    assert w1p.shape[0] == Cp and w3p.shape == (Pp, Cp), \
        "residual path requires Cin == Cout (downsample=None)"

    if b_tile is None:
        # Fuse images per step (amortize ~0.35us/step on single-TC v5e/v6e) but
        # keep >= 2 grid steps so both v7x TensorCores stay busy.
        b_tile = 2 if (N % 2 == 0 and N >= 4) else 1
    assert N % b_tile == 0

    halo = _round_up(W + 1, _BF16_SUBLANES)     # bf16 sublane packing
    seg = HW + 2 * halo

    kernel = functools.partial(_block_kernel, H=H, W=W, halo=halo, b_tile=b_tile)

    def const_spec(shape):
        # Weights/biases never change across the grid: single-buffer them so
        # they don't take 2x VMEM (matters at real widths on v7x's 64 MiB).
        return pl.BlockSpec(shape, lambda n, _s=len(shape): (0,) * _s,
                            pipeline_mode=pl.Buffered(1))

    # Explicit VMEM budget: double-buffered activation blocks (bf16 in + out),
    # single-buffered weights, halo scratch, plus slack.
    weight_bytes = sum(int(np.prod(a.shape)) * a.dtype.itemsize
                       for a in (w1p, b1p, w2p, b2p, w3p, b3p))
    act_bytes = 2 * 2 * (b_tile * HW * Cp * 2)
    scratch_bytes = b_tile * seg * Pp * 2
    vmem_limit = min(2 * (weight_bytes + act_bytes + scratch_bytes) + (4 << 20),
                     64 << 20)

    out = pl.pallas_call(
        kernel,
        out_shape=jax.ShapeDtypeStruct((N, HW, Cp), jnp.bfloat16),
        grid_spec=pltpu.PrefetchScalarGridSpec(
            num_scalar_prefetch=0,
            grid=(N // b_tile,),
            in_specs=[
                pl.BlockSpec((b_tile, HW, Cp), lambda n: (n, 0, 0)),
                const_spec(w1p.shape),
                const_spec(b1p.shape),
                const_spec(w2p.shape),
                const_spec(b2p.shape),
                const_spec(w3p.shape),
                const_spec(b3p.shape),
            ],
            out_specs=pl.BlockSpec((b_tile, HW, Cp), lambda n: (n, 0, 0)),
            scratch_shapes=[pltpu.VMEM((b_tile * seg, Pp), jnp.bfloat16)],
        ),
        compiler_params=pltpu.CompilerParams(
            dimension_semantics=("parallel",),
            vmem_limit_bytes=int(vmem_limit)),
    )(x_pad, w1p, b1p, w2p, b2p, w3p, b3p)
    return out


def bottleneck_forward_nhwc(x_nhwc, packed_params):
    """Network-boundary API: [N, H, W, C] float -> [N, H, W, C] float32."""
    w1p = packed_params[0]
    N, H, W, C = x_nhwc.shape
    Cp = w1p.shape[0]
    x_flat = x_nhwc.reshape(N, H * W, C).astype(jnp.bfloat16)
    if Cp != C:
        x_flat = jnp.pad(x_flat, ((0, 0), (0, 0), (0, Cp - C)))
    out = bottleneck_forward_padded(x_flat, packed_params, H=H, W=W)
    # Depad only here; chained blocks use bottleneck_forward_padded directly.
    return out[:, :, :C].reshape(N, H, W, C).astype(jnp.float32)


def bottleneck_forward_nchw(x_nchw, packed_params):
    """NCHW convenience wrapper (adds two HBM transposes; prefer the NHWC API)."""
    x = jnp.transpose(x_nchw, (0, 2, 3, 1))
    return jnp.transpose(bottleneck_forward_nhwc(x, packed_params), (0, 3, 1, 2))


def make_params(key, inplanes, planes, eps=1e-5):
    """Synthetic conv weights + eval-mode BN stats, with BN folded into conv/bias."""
    expansion = 4
    cout = planes * expansion
    ks = jax.random.split(key, 15)

    def bn_fold(kg, kb, km, kv, c):
        gamma = 1.0 + 0.1 * jax.random.normal(kg, (c,), jnp.float32)
        beta = 0.1 * jax.random.normal(kb, (c,), jnp.float32)
        mean = 0.1 * jax.random.normal(km, (c,), jnp.float32)
        var = 0.5 + 0.1 * jnp.abs(jax.random.normal(kv, (c,), jnp.float32))
        scale = gamma / jnp.sqrt(var + eps)
        bias = beta - mean * scale
        return scale, bias

    w1_raw = 0.1 * jax.random.normal(ks[0], (inplanes, planes), jnp.float32)
    w2_raw = 0.1 * jax.random.normal(ks[1], (3, 3, planes, planes), jnp.float32)  # HWIO
    w3_raw = 0.1 * jax.random.normal(ks[2], (planes, cout), jnp.float32)

    s1, b1 = bn_fold(ks[3], ks[4], ks[5], ks[6], planes)
    s2, b2 = bn_fold(ks[7], ks[8], ks[9], ks[10], planes)
    s3, b3 = bn_fold(ks[11], ks[12], ks[13], ks[14], cout)

    w1 = w1_raw * s1[None, :]
    w2 = w2_raw * s2[None, None, None, :]
    w3 = w3_raw * s3[None, :]
    return (w1, b1, w2, b2, w3, b3)


def pack_params(params, lane=_LANES):
    """One-time weight prep: lane-pad to 128 multiples, bf16 weights, per-tap w2."""
    w1, b1, w2, b2, w3, b3 = params
    cin, p = w1.shape
    cout = w3.shape[1]
    assert cin == cout, "Bottleneck with downsample=None requires Cin == Cout"
    cp = _round_up(cin, lane)
    pp = _round_up(p, lane)

    w1p = jnp.zeros((cp, pp), jnp.float32).at[:cin, :p].set(w1).astype(jnp.bfloat16)
    b1p = jnp.zeros((1, pp), jnp.float32).at[0, :p].set(b1)

    w2t = w2.reshape(9, p, p)                    # tap = dy*3 + dx, [tap, in, out]
    w2p = jnp.zeros((9, pp, pp), jnp.float32).at[:, :p, :p].set(w2t).astype(jnp.bfloat16)
    b2p = jnp.zeros((1, pp), jnp.float32).at[0, :p].set(b2)

    w3p = jnp.zeros((pp, cp), jnp.float32).at[:p, :cout].set(w3).astype(jnp.bfloat16)
    b3p = jnp.zeros((1, cp), jnp.float32).at[0, :cout].set(b3)
    return (w1p, b1p, w2p, b2p, w3p, b3p)


def reference_forward_nhwc(x_nhwc, params):
    """Pure-JAX (XLA) reference, mirroring the kernel's bf16 quantization points."""
    w1, b1, w2, b2, w3, b3 = params
    q = lambda a: a.astype(jnp.bfloat16).astype(jnp.float32)
    xq = q(x_nhwc)
    h1 = jnp.maximum(jnp.einsum('nhwc,cp->nhwp', xq, q(w1)) + b1, 0.0)
    h2 = lax.conv_general_dilated(
        q(h1), q(w2), window_strides=(1, 1), padding='SAME',
        dimension_numbers=('NHWC', 'HWIO', 'NHWC')) + b2
    h2 = jnp.maximum(h2, 0.0)
    h3 = jnp.einsum('nhwp,pc->nhwc', q(h2), q(w3)) + b3
    return jnp.maximum(h3 + xq, 0.0)


if __name__ == "__main__":
    key = jax.random.PRNGKey(0)
    N, H, W = 4, 16, 16            # N=4 exercises multi-image blocking (b_tile=2)
    planes = 4
    inplanes = planes * 4          # downsample is None -> Cin must equal Cout

    kx, kp = jax.random.split(key)
    x_nhwc = jax.random.normal(kx, (N, H, W, inplanes), jnp.float32)
    raw_params = make_params(kp, inplanes, planes)
    packed = pack_params(raw_params)

    out = bottleneck_forward_nhwc(x_nhwc, packed)
    out = jax.block_until_ready(out)

    ref = reference_forward_nhwc(x_nhwc, raw_params)
    assert out.shape == (N, H, W, inplanes)
    out_np, ref_np = np.asarray(out), np.asarray(ref)
    # Kernel output is bf16; allow one-ulp-at-bf16 slack vs. the f32 reference.
    assert np.allclose(out_np, ref_np, rtol=2e-2, atol=2e-2), \
        f"max abs error {float(np.max(np.abs(out_np - ref_np)))}"
    print("KERNEL_OK")
</pallas_src>

<mosaic_0001>
module attributes {stable_mosaic.version = 11 : i64} {
  func.func @_block_kernel(%arg0: i32, %arg1: memref<2x256x128xbf16, #tpu.memory_space<vmem>>, %arg2: memref<128x128xbf16, #tpu.memory_space<vmem>>, %arg3: memref<1x128xf32, #tpu.memory_space<vmem>>, %arg4: memref<9x128x128xbf16, #tpu.memory_space<vmem>>, %arg5: memref<1x128xf32, #tpu.memory_space<vmem>>, %arg6: memref<128x128xbf16, #tpu.memory_space<vmem>>, %arg7: memref<1x128xf32, #tpu.memory_space<vmem>>, %arg8: memref<2x256x128xbf16, #tpu.memory_space<vmem>>, %arg9: memref<640x128xbf16, #tpu.memory_space<vmem>>) attributes {dimension_semantics = [#tpu.dimension_semantics<parallel>], iteration_bounds = array<i64: 2>, scalar_prefetch = 0 : i64, scratch_operands = 1 : i64, tpu.core_type = #tpu.core_type<tc>, window_params = [{transform_indices = @transform_0, window_bounds = array<i64: 2, 256, 128>}, {pipeline_mode = #tpu.pipeline_mode<synchronous>, transform_indices = @transform_1, window_bounds = array<i64: 128, 128>}, {pipeline_mode = #tpu.pipeline_mode<synchronous>, transform_indices = @transform_2, window_bounds = array<i64: 1, 128>}, {pipeline_mode = #tpu.pipeline_mode<synchronous>, transform_indices = @transform_3, window_bounds = array<i64: 9, 128, 128>}, {pipeline_mode = #tpu.pipeline_mode<synchronous>, transform_indices = @transform_4, window_bounds = array<i64: 1, 128>}, {pipeline_mode = #tpu.pipeline_mode<synchronous>, transform_indices = @transform_5, window_bounds = array<i64: 128, 128>}, {pipeline_mode = #tpu.pipeline_mode<synchronous>, transform_indices = @transform_6, window_bounds = array<i64: 1, 128>}, {transform_indices = @transform_7, window_bounds = array<i64: 2, 256, 128>}]} {
    %c0 = arith.constant 0 : index
    %c0_0 = arith.constant 0 : index
    %c0_1 = arith.constant 0 : index
    %0 = vector.load %arg1[%c0, %c0_0, %c0_1] : memref<2x256x128xbf16, #tpu.memory_space<vmem>>, vector<2x256x128xbf16>
    %1 = vector.shape_cast %0 : vector<2x256x128xbf16> to vector<512x128xbf16>
    %c0_2 = arith.constant 0 : index
    %c0_3 = arith.constant 0 : index
    %2 = vector.load %arg2[%c0_2, %c0_3] : memref<128x128xbf16, #tpu.memory_space<vmem>>, vector<128x128xbf16>
    %cst = arith.constant dense<0.000000e+00> : vector<512x128xf32>
    %3 = tpu.matmul %1, %2, %cst {dimension_numbers = #tpu.dot_dimension_numbers<[1], [0], [0], [1], [0, 0, 1, 1], [], []>} : vector<512x128xbf16>, vector<128x128xbf16>, vector<512x128xf32> -> vector<512x128xf32>
    %c0_4 = arith.constant 0 : index
    %c0_5 = arith.constant 0 : index
    %4 = vector.load %arg3[%c0_4, %c0_5] : memref<1x128xf32, #tpu.memory_space<vmem>>, vector<1x128xf32>
    %5 = vector.broadcast %4 : vector<1x128xf32> to vector<512x128xf32>
    %6 = arith.addf %3, %5 : vector<512x128xf32>
    %cst_6 = arith.constant 0.000000e+00 : f32
    %7 = vector.broadcast %cst_6 : f32 to vector<512x128xf32>
    %8 = arith.maximumf %6, %7 : vector<512x128xf32>
    %9 = tpu.iota {dimensions = array<i32: 0>} : vector<256x1xi32>
    %c16_i32 = arith.constant 16 : i32
    %c0_i32 = arith.constant 0 : i32
    %10 = arith.cmpi eq, %c16_i32, %c0_i32 : i32
    %c1_i32 = arith.constant 1 : i32
    %11 = arith.select %10, %c1_i32, %c16_i32 : i32
    %12 = vector.broadcast %11 : i32 to vector<256x1xi32>
    %13 = arith.remsi %9, %12 : vector<256x1xi32>
    %c0_i32_7 = arith.constant 0 : i32
    %14 = vector.broadcast %c0_i32_7 : i32 to vector<256x1xi32>
    %15 = arith.cmpi ne, %13, %14 : vector<256x1xi32>
    %c0_i32_8 = arith.constant 0 : i32
    %16 = vector.broadcast %c0_i32_8 : i32 to vector<256x1xi32>
    %17 = arith.cmpi slt, %13, %16 : vector<256x1xi32>
    %c0_i32_9 = arith.constant 0 : i32
    %18 = arith.cmpi slt, %11, %c0_i32_9 : i32
    %19 = vector.broadcast %18 : i1 to vector<256x1xi1>
    %20 = vector.broadcast %19 : vector<256x1xi1> to vector<256x1xi1>
    %21 = arith.xori %17, %20 : vector<256x1xi1>
    %22 = arith.andi %21, %15 : vector<256x1xi1>
    %23 = vector.broadcast %11 : i32 to vector<256x1xi32>
    %24 = arith.addi %13, %23 : vector<256x1xi32>
    %25 = arith.select %22, %24, %13 : vector<256x1xi1>, vector<256x1xi32>
    %c1_i32_10 = arith.constant 1 : i32
    %26 = vector.broadcast %c1_i32_10 : i32 to vector<256x1xi32>
    %27 = arith.cmpi sge, %25, %26 : vector<256x1xi32>
    %c14_i32 = arith.constant 14 : i32
    %28 = vector.broadcast %c14_i32 : i32 to vector<256x1xi32>
    %29 = arith.cmpi sle, %25, %28 : vector<256x1xi32>
    %cst_11 = arith.constant 0.000000e+00 : bf16
    %30 = vector.broadcast %cst_11 : bf16 to vector<32x128xbf16>
    %c0_12 = arith.constant 0 : index
    %c0_13 = arith.constant 0 : index
    %31 = vector.load %arg9[%c0_12, %c0_13] : memref<640x128xbf16, #tpu.memory_space<vmem>>, vector<32x128xbf16>
    tpu.vector_store %arg9[%c0_12, %c0_13], %30 {strides = array<i32>} : memref<640x128xbf16, #tpu.memory_space<vmem>>, vector<32x128xbf16>,
    %c288 = arith.constant 288 : index
    %c0_14 = arith.constant 0 : index
    %32 = vector.load %arg9[%c288, %c0_14] : memref<640x128xbf16, #tpu.memory_space<vmem>>, vector<32x128xbf16>
    tpu.vector_store %arg9[%c288, %c0_14], %30 {strides = array<i32>} : memref<640x128xbf16, #tpu.memory_space<vmem>>, vector<32x128xbf16>,
    %33 = vector.extract_strided_slice %8 {offsets = [0, 0], sizes = [256, 128], strides = [1, 1]} : vector<512x128xf32> to vector<256x128xf32>
    %34 = arith.truncf %33 : vector<256x128xf32> to vector<256x128xbf16>
    %c32 = arith.constant 32 : index
    %c0_15 = arith.constant 0 : index
    %35 = vector.load %arg9[%c32, %c0_15] : memref<640x128xbf16, #tpu.memory_space<vmem>>, vector<256x128xbf16>
    tpu.vector_store %arg9[%c32, %c0_15], %34 {strides = array<i32>} : memref<640x128xbf16, #tpu.memory_space<vmem>>, vector<256x128xbf16>,
    %c15 = arith.constant 15 : index
    %c0_16 = arith.constant 0 : index
    %36 = vector.load %arg9[%c15, %c0_16] : memref<640x128xbf16, #tpu.memory_space<vmem>>, vector<256x128xbf16>
    %cst_17 = arith.constant 0.000000e+00 : f32
    %37 = arith.truncf %cst_17 : f32 to bf16
    %38 = vector.shape_cast %27 : vector<256x1xi1> to vector<256x1xi1>
    %39 = vector.broadcast %38 : vector<256x1xi1> to vector<256x128xi1>
    %40 = vector.broadcast %37 : bf16 to vector<256x128xbf16>
    %41 = arith.select %39, %36, %40 : vector<256x128xi1>, vector<256x128xbf16>
    %c0_18 = arith.constant 0 : index
    %c0_19 = arith.constant 0 : index
    %c0_20 = arith.constant 0 : index
    %42 = vector.load %arg4[%c0_18, %c0_19, %c0_20] : memref<9x128x128xbf16, #tpu.memory_space<vmem>>, vector<1x128x128xbf16>
    %43 = vector.shape_cast %42 : vector<1x128x128xbf16> to vector<128x128xbf16>
    %cst_21 = arith.constant dense<0.000000e+00> : vector<256x128xf32>
    %44 = tpu.matmul %41, %43, %cst_21 {dimension_numbers = #tpu.dot_dimension_numbers<[1], [0], [0], [1], [0, 0, 1, 1], [], []>} : vector<256x128xbf16>, vector<128x128xbf16>, vector<256x128xf32> -> vector<256x128xf32>
    %c16 = arith.constant 16 : index
    %c0_22 = arith.constant 0 : index
    %45 = vector.load %arg9[%c16, %c0_22] : memref<640x128xbf16, #tpu.memory_space<vmem>>, vector<256x128xbf16>
    %c1 = arith.constant 1 : index
    %c0_23 = arith.constant 0 : index
    %c0_24 = arith.constant 0 : index
    %46 = vector.load %arg4[%c1, %c0_23, %c0_24] : memref<9x128x128xbf16, #tpu.memory_space<vmem>>, vector<1x128x128xbf16>
    %47 = vector.shape_cast %46 : vector<1x128x128xbf16> to vector<128x128xbf16>
    %cst_25 = arith.constant dense<0.000000e+00> : vector<256x128xf32>
    %48 = tpu.matmul %45, %47, %cst_25 {dimension_numbers = #tpu.dot_dimension_numbers<[1], [0], [0], [1], [0, 0, 1, 1], [], []>} : vector<256x128xbf16>, vector<128x128xbf16>, vector<256x128xf32> -> vector<256x128xf32>
    %49 = arith.addf %44, %48 : vector<256x128xf32>
    %c17 = arith.constant 17 : index
    %c0_26 = arith.constant 0 : index
    %50 = vector.load %arg9[%c17, %c0_26] : memref<640x128xbf16, #tpu.memory_space<vmem>>, vector<256x128xbf16>
    %cst_27 = arith.constant 0.000000e+00 : f32
    %51 = arith.truncf %cst_27 : f32 to bf16
    %52 = vector.shape_cast %29 : vector<256x1xi1> to vector<256x1xi1>
    %53 = vector.broadcast %52 : vector<256x1xi1> to vector<256x128xi1>
    %54 = vector.broadcast %51 : bf16 to vector<256x128xbf16>
    %55 = arith.select %53, %50, %54 : vector<256x128xi1>, vector<256x128xbf16>
    %c2 = arith.constant 2 : index
    %c0_28 = arith.constant 0 : index
    %c0_29 = arith.constant 0 : index
    %56 = vector.load %arg4[%c2, %c0_28, %c0_29] : memref<9x128x128xbf16, #tpu.memory_space<vmem>>, vector<1x128x128xbf16>
    %57 = vector.shape_cast %56 : vector<1x128x128xbf16> to vector<128x128xbf16>
    %cst_30 = arith.constant dense<0.000000e+00> : vector<256x128xf32>
    %58 = tpu.matmul %55, %57, %cst_30 {dimension_numbers = #tpu.dot_dimension_numbers<[1], [0], [0], [1], [0, 0, 1, 1], [], []>} : vector<256x128xbf16>, vector<128x128xbf16>, vector<256x128xf32> -> vector<256x128xf32>
    %59 = arith.addf %49, %58 : vector<256x128xf32>
    %c31 = arith.constant 31 : index
    %c0_31 = arith.constant 0 : index
    %60 = vector.load %arg9[%c31, %c0_31] : memref<640x128xbf16, #tpu.memory_space<vmem>>, vector<256x128xbf16>
    %cst_32 = arith.constant 0.000000e+00 : f32
    %61 = arith.truncf %cst_32 : f32 to bf16
    %62 = vector.shape_cast %27 : vector<256x1xi1> to vector<256x1xi1>
    %63 = vector.broadcast %62 : vector<256x1xi1> to vector<256x128xi1>
    %64 = vector.broadcast %61 : bf16 to vector<256x128xbf16>
    %65 = arith.select %63, %60, %64 : vector<256x128xi1>, vector<256x128xbf16>
    %c3 = arith.constant 3 : index
    %c0_33 = arith.constant 0 : index
    %c0_34 = arith.constant 0 : index
    %66 = vector.load %arg4[%c3, %c0_33, %c0_34] : memref<9x128x128xbf16, #tpu.memory_space<vmem>>, vector<1x128x128xbf16>
    %67 = vector.shape_cast %66 : vector<1x128x128xbf16> to vector<128x128xbf16>
    %cst_35 = arith.constant dense<0.000000e+00> : vector<256x128xf32>
    %68 = tpu.matmul %65, %67, %cst_35 {dimension_numbers = #tpu.dot_dimension_numbers<[1], [0], [0], [1], [0, 0, 1, 1], [], []>} : vector<256x128xbf16>, vector<128x128xbf16>, vector<256x128xf32> -> vector<256x128xf32>
    %69 = arith.addf %59, %68 : vector<256x128xf32>
    %c32_36 = arith.constant 32 : index
    %c0_37 = arith.constant 0 : index
    %70 = vector.load %arg9[%c32_36, %c0_37] : memref<640x128xbf16, #tpu.memory_space<vmem>>, vector<256x128xbf16>
    %c4 = arith.constant 4 : index
    %c0_38 = arith.constant 0 : index
    %c0_39 = arith.constant 0 : index
    %71 = vector.load %arg4[%c4, %c0_38, %c0_39] : memref<9x128x128xbf16, #tpu.memory_space<vmem>>, vector<1x128x128xbf16>
    %72 = vector.shape_cast %71 : vector<1x128x128xbf16> to vector<128x128xbf16>
    %cst_40 = arith.constant dense<0.000000e+00> : vector<256x128xf32>
    %73 = tpu.matmul %70, %72, %cst_40 {dimension_numbers = #tpu.dot_dimension_numbers<[1], [0], [0], [1], [0, 0, 1, 1], [], []>} : vector<256x128xbf16>, vector<128x128xbf16>, vector<256x128xf32> -> vector<256x128xf32>
    %74 = arith.addf %69, %73 : vector<256x128xf32>
    %c33 = arith.constant 33 : index
    %c0_41 = arith.constant 0 : index
    %75 = vector.load %arg9[%c33, %c0_41] : memref<640x128xbf16, #tpu.memory_space<vmem>>, vector<256x128xbf16>
    %cst_42 = arith.constant 0.000000e+00 : f32
    %76 = arith.truncf %cst_42 : f32 to bf16
    %77 = vector.shape_cast %29 : vector<256x1xi1> to vector<256x1xi1>
    %78 = vector.broadcast %77 : vector<256x1xi1> to vector<256x128xi1>
    %79 = vector.broadcast %76 : bf16 to vector<256x128xbf16>
    %80 = arith.select %78, %75, %79 : vector<256x128xi1>, vector<256x128xbf16>
    %c5 = arith.constant 5 : index
    %c0_43 = arith.constant 0 : index
    %c0_44 = arith.constant 0 : index
    %81 = vector.load %arg4[%c5, %c0_43, %c0_44] : memref<9x128x128xbf16, #tpu.memory_space<vmem>>, vector<1x128x128xbf16>
    %82 = vector.shape_cast %81 : vector<1x128x128xbf16> to vector<128x128xbf16>
    %cst_45 = arith.constant dense<0.000000e+00> : vector<256x128xf32>
    %83 = tpu.matmul %80, %82, %cst_45 {dimension_numbers = #tpu.dot_dimension_numbers<[1], [0], [0], [1], [0, 0, 1, 1], [], []>} : vector<256x128xbf16>, vector<128x128xbf16>, vector<256x128xf32> -> vector<256x128xf32>
    %84 = arith.addf %74, %83 : vector<256x128xf32>
    %c47 = arith.constant 47 : index
    %c0_46 = arith.constant 0 : index
    %85 = vector.load %arg9[%c47, %c0_46] : memref<640x128xbf16, #tpu.memory_space<vmem>>, vector<256x128xbf16>
    %cst_47 = arith.constant 0.000000e+00 : f32
    %86 = arith.truncf %cst_47 : f32 to bf16
    %87 = vector.shape_cast %27 : vector<256x1xi1> to vector<256x1xi1>
    %88 = vector.broadcast %87 : vector<256x1xi1> to vector<256x128xi1>
    %89 = vector.broadcast %86 : bf16 to vector<256x128xbf16>
    %90 = arith.select %88, %85, %89 : vector<256x128xi1>, vector<256x128xbf16>
    %c6 = arith.constant 6 : index
    %c0_48 = arith.constant 0 : index
    %c0_49 = arith.constant 0 : index
    %91 = vector.load %arg4[%c6, %c0_48, %c0_49] : memref<9x128x128xbf16, #tpu.memory_space<vmem>>, vector<1x128x128xbf16>
    %92 = vector.shape_cast %91 : vector<1x128x128xbf16> to vector<128x128xbf16>
    %cst_50 = arith.constant dense<0.000000e+00> : vector<256x128xf32>
    %93 = tpu.matmul %90, %92, %cst_50 {dimension_numbers = #tpu.dot_dimension_numbers<[1], [0], [0], [1], [0, 0, 1, 1], [], []>} : vector<256x128xbf16>, vector<128x128xbf16>, vector<256x128xf32> -> vector<256x128xf32>
    %94 = arith.addf %84, %93 : vector<256x128xf32>
    %c48 = arith.constant 48 : index
    %c0_51 = arith.constant 0 : index
    %95 = vector.load %arg9[%c48, %c0_51] : memref<640x128xbf16, #tpu.memory_space<vmem>>, vector<256x128xbf16>
    %c7 = arith.constant 7 : index
    %c0_52 = arith.constant 0 : index
    %c0_53 = arith.constant 0 : index
    %96 = vector.load %arg4[%c7, %c0_52, %c0_53] : memref<9x128x128xbf16, #tpu.memory_space<vmem>>, vector<1x128x128xbf16>
    %97 = vector.shape_cast %96 : vector<1x128x128xbf16> to vector<128x128xbf16>
    %cst_54 = arith.constant dense<0.000000e+00> : vector<256x128xf32>
    %98 = tpu.matmul %95, %97, %cst_54 {dimension_numbers = #tpu.dot_dimension_numbers<[1], [0], [0], [1], [0, 0, 1, 1], [], []>} : vector<256x128xbf16>, vector<128x128xbf16>, vector<256x128xf32> -> vector<256x128xf32>
    %99 = arith.addf %94, %98 : vector<256x128xf32>
    %c49 = arith.constant 49 : index
    %c0_55 = arith.constant 0 : index
    %100 = vector.load %arg9[%c49, %c0_55] : memref<640x128xbf16, #tpu.memory_space<vmem>>, vector<256x128xbf16>
    %cst_56 = arith.constant 0.000000e+00 : f32
    %101 = arith.truncf %cst_56 : f32 to bf16
    %102 = vector.shape_cast %29 : vector<256x1xi1> to vector<256x1xi1>
    %103 = vector.broadcast %102 : vector<256x1xi1> to vector<256x128xi1>
    %104 = vector.broadcast %101 : bf16 to vector<256x128xbf16>
    %105 = arith.select %103, %100, %104 : vector<256x128xi1>, vector<256x128xbf16>
    %c8 = arith.constant 8 : index
    %c0_57 = arith.constant 0 : index
    %c0_58 = arith.constant 0 : index
    %106 = vector.load %arg4[%c8, %c0_57, %c0_58] : memref<9x128x128xbf16, #tpu.memory_space<vmem>>, vector<1x128x128xbf16>
    %107 = vector.shape_cast %106 : vector<1x128x128xbf16> to vector<128x128xbf16>
    %cst_59 = arith.constant dense<0.000000e+00> : vector<256x128xf32>
    %108 = tpu.matmul %105, %107, %cst_59 {dimension_numbers = #tpu.dot_dimension_numbers<[1], [0], [0], [1], [0, 0, 1, 1], [], []>} : vector<256x128xbf16>, vector<128x128xbf16>, vector<256x128xf32> -> vector<256x128xf32>
    %109 = arith.addf %99, %108 : vector<256x128xf32>
    %c0_60 = arith.constant 0 : index
    %c0_61 = arith.constant 0 : index
    %110 = vector.load %arg5[%c0_60, %c0_61] : memref<1x128xf32, #tpu.memory_space<vmem>>, vector<1x128xf32>
    %111 = vector.broadcast %110 : vector<1x128xf32> to vector<256x128xf32>
    %112 = arith.addf %109, %111 : vector<256x128xf32>
    %cst_62 = arith.constant 0.000000e+00 : f32
    %113 = vector.broadcast %cst_62 : f32 to vector<256x128xf32>
    %114 = arith.maximumf %112, %113 : vector<256x128xf32>
    %115 = arith.truncf %114 : vector<256x128xf32> to vector<256x128xbf16>
    %c0_63 = arith.constant 0 : index
    %c0_64 = arith.constant 0 : index
    %116 = vector.load %arg6[%c0_63, %c0_64] : memref<128x128xbf16, #tpu.memory_space<vmem>>, vector<128x128xbf16>
    %cst_65 = arith.constant dense<0.000000e+00> : vector<256x128xf32>
    %117 = tpu.matmul %115, %116, %cst_65 {dimension_numbers = #tpu.dot_dimension_numbers<[1], [0], [0], [1], [0, 0, 1, 1], [], []>} : vector<256x128xbf16>, vector<128x128xbf16>, vector<256x128xf32> -> vector<256x128xf32>
    %c0_66 = arith.constant 0 : index
    %c0_67 = arith.constant 0 : index
    %118 = vector.load %arg7[%c0_66, %c0_67] : memref<1x128xf32, #tpu.memory_space<vmem>>, vector<1x128xf32>
    %119 = vector.broadcast %118 : vector<1x128xf32> to vector<256x128xf32>
    %120 = arith.addf %117, %119 : vector<256x128xf32>
    %121 = vector.extract_strided_slice %0 {offsets = [0, 0, 0], sizes = [1, 256, 128], strides = [1, 1, 1]} : vector<2x256x128xbf16> to vector<1x256x128xbf16>
    %122 = vector.shape_cast %121 : vector<1x256x128xbf16> to vector<256x128xbf16>
    %123 = arith.extf %122 : vector<256x128xbf16> to vector<256x128xf32>
    %124 = arith.addf %120, %123 : vector<256x128xf32>
    %cst_68 = arith.constant 0.000000e+00 : f32
    %125 = vector.broadcast %cst_68 : f32 to vector<256x128xf32>
    %126 = arith.maximumf %124, %125 : vector<256x128xf32>
    %127 = arith.truncf %126 : vector<256x128xf32> to vector<256x128xbf16>
    %c0_69 = arith.constant 0 : index
    %c0_70 = arith.constant 0 : index
    %c0_71 = arith.constant 0 : index
    %128 = vector.load %arg8[%c0_69, %c0_70, %c0_71] : memref<2x256x128xbf16, #tpu.memory_space<vmem>>, vector<1x256x128xbf16>
    %129 = vector.shape_cast %128 : vector<1x256x128xbf16> to vector<256x128xbf16>
    %130 = vector.shape_cast %127 : vector<256x128xbf16> to vector<1x256x128xbf16>
    tpu.vector_store %arg8[%c0_69, %c0_70, %c0_71], %130 {strides = array<i32>} : memref<2x256x128xbf16, #tpu.memory_space<vmem>>, vector<1x256x128xbf16>,
    %c320 = arith.constant 320 : index
    %c0_72 = arith.constant 0 : index
    %131 = vector.load %arg9[%c320, %c0_72] : memref<640x128xbf16, #tpu.memory_space<vmem>>, vector<32x128xbf16>
    tpu.vector_store %arg9[%c320, %c0_72], %30 {strides = array<i32>} : memref<640x128xbf16, #tpu.memory_space<vmem>>, vector<32x128xbf16>,
    %c608 = arith.constant 608 : index
    %c0_73 = arith.constant 0 : index
    %132 = vector.load %arg9[%c608, %c0_73] : memref<640x128xbf16, #tpu.memory_space<vmem>>, vector<32x128xbf16>
    tpu.vector_store %arg9[%c608, %c0_73], %30 {strides = array<i32>} : memref<640x128xbf16, #tpu.memory_space<vmem>>, vector<32x128xbf16>,
    %133 = vector.extract_strided_slice %8 {offsets = [256, 0], sizes = [256, 128], strides = [1, 1]} : vector<512x128xf32> to vector<256x128xf32>
    %134 = arith.truncf %133 : vector<256x128xf32> to vector<256x128xbf16>
    %c352 = arith.constant 352 : index
    %c0_74 = arith.constant 0 : index
    %135 = vector.load %arg9[%c352, %c0_74] : memref<640x128xbf16, #tpu.memory_space<vmem>>, vector<256x128xbf16>
    tpu.vector_store %arg9[%c352, %c0_74], %134 {strides = array<i32>} : memref<640x128xbf16, #tpu.memory_space<vmem>>, vector<256x128xbf16>,
    %c335 = arith.constant 335 : index
    %c0_75 = arith.constant 0 : index
    %136 = vector.load %arg9[%c335, %c0_75] : memref<640x128xbf16, #tpu.memory_space<vmem>>, vector<256x128xbf16>
    %cst_76 = arith.constant 0.000000e+00 : f32
    %137 = arith.truncf %cst_76 : f32 to bf16
    %138 = vector.shape_cast %27 : vector<256x1xi1> to vector<256x1xi1>
    %139 = vector.broadcast %138 : vector<256x1xi1> to vector<256x128xi1>
    %140 = vector.broadcast %137 : bf16 to vector<256x128xbf16>
    %141 = arith.select %139, %136, %140 : vector<256x128xi1>, vector<256x128xbf16>
    %c0_77 = arith.constant 0 : index
    %c0_78 = arith.constant 0 : index
    %c0_79 = arith.constant 0 : index
    %142 = vector.load %arg4[%c0_77, %c0_78, %c0_79] : memref<9x128x128xbf16, #tpu.memory_space<vmem>>, vector<1x128x128xbf16>
    %143 = vector.shape_cast %142 : vector<1x128x128xbf16> to vector<128x128xbf16>
    %cst_80 = arith.constant dense<0.000000e+00> : vector<256x128xf32>
    %144 = tpu.matmul %141, %143, %cst_80 {dimension_numbers = #tpu.dot_dimension_numbers<[1], [0], [0], [1], [0, 0, 1, 1], [], []>} : vector<256x128xbf16>, vector<128x128xbf16>, vector<256x128xf32> -> vector<256x128xf32>
    %c336 = arith.constant 336 : index
    %c0_81 = arith.constant 0 : index
    %145 = vector.load %arg9[%c336, %c0_81] : memref<640x128xbf16, #tpu.memory_space<vmem>>, vector<256x128xbf16>
    %c1_82 = arith.constant 1 : index
    %c0_83 = arith.constant 0 : index
    %c0_84 = arith.constant 0 : index
    %146 = vector.load %arg4[%c1_82, %c0_83, %c0_84] : memref<9x128x128xbf16, #tpu.memory_space<vmem>>, vector<1x128x128xbf16>
    %147 = vector.shape_cast %146 : vector<1x128x128xbf16> to vector<128x128xbf16>
    %cst_85 = arith.constant dense<0.000000e+00> : vector<256x128xf32>
    %148 = tpu.matmul %145, %147, %cst_85 {dimension_numbers = #tpu.dot_dimension_numbers<[1], [0], [0], [1], [0, 0, 1, 1], [], []>} : vector<256x128xbf16>, vector<128x128xbf16>, vector<256x128xf32> -> vector<256x128xf32>
    %149 = arith.addf %144, %148 : vector<256x128xf32>
    %c337 = arith.constant 337 : index
    %c0_86 = arith.constant 0 : index
    %150 = vector.load %arg9[%c337, %c0_86] : memref<640x128xbf16, #tpu.memory_space<vmem>>, vector<256x128xbf16>
    %cst_87 = arith.constant 0.000000e+00 : f32
    %151 = arith.truncf %cst_87 : f32 to bf16
    %152 = vector.shape_cast %29 : vector<256x1xi1> to vector<256x1xi1>
    %153 = vector.broadcast %152 : vector<256x1xi1> to vector<256x128xi1>
    %154 = vector.broadcast %151 : bf16 to vector<256x128xbf16>
    %155 = arith.select %153, %150, %154 : vector<256x128xi1>, vector<256x128xbf16>
    %c2_88 = arith.constant 2 : index
    %c0_89 = arith.constant 0 : index
    %c0_90 = arith.constant 0 : index
    %156 = vector.load %arg4[%c2_88, %c0_89, %c0_90] : memref<9x128x128xbf16, #tpu.memory_space<vmem>>, vector<1x128x128xbf16>
    %157 = vector.shape_cast %156 : vector<1x128x128xbf16> to vector<128x128xbf16>
    %cst_91 = arith.constant dense<0.000000e+00> : vector<256x128xf32>
    %158 = tpu.matmul %155, %157, %cst_91 {dimension_numbers = #tpu.dot_dimension_numbers<[1], [0], [0], [1], [0, 0, 1, 1], [], []>} : vector<256x128xbf16>, vector<128x128xbf16>, vector<256x128xf32> -> vector<256x128xf32>
    %159 = arith.addf %149, %158 : vector<256x128xf32>
    %c351 = arith.constant 351 : index
    %c0_92 = arith.constant 0 : index
    %160 = vector.load %arg9[%c351, %c0_92] : memref<640x128xbf16, #tpu.memory_space<vmem>>, vector<256x128xbf16>
    %cst_93 = arith.constant 0.000000e+00 : f32
    %161 = arith.truncf %cst_93 : f32 to bf16
    %162 = vector.shape_cast %27 : vector<256x1xi1> to vector<256x1xi1>
    %163 = vector.broadcast %162 : vector<256x1xi1> to vector<256x128xi1>
    %164 = vector.broadcast %161 : bf16 to vector<256x128xbf16>
    %165 = arith.select %163, %160, %164 : vector<256x128xi1>, vector<256x128xbf16>
    %c3_94 = arith.constant 3 : index
    %c0_95 = arith.constant 0 : index
    %c0_96 = arith.constant 0 : index
    %166 = vector.load %arg4[%c3_94, %c0_95, %c0_96] : memref<9x128x128xbf16, #tpu.memory_space<vmem>>, vector<1x128x128xbf16>
    %167 = vector.shape_cast %166 : vector<1x128x128xbf16> to vector<128x128xbf16>
    %cst_97 = arith.constant dense<0.000000e+00> : vector<256x128xf32>
    %168 = tpu.matmul %165, %167, %cst_97 {dimension_numbers = #tpu.dot_dimension_numbers<[1], [0], [0], [1], [0, 0, 1, 1], [], []>} : vector<256x128xbf16>, vector<128x128xbf16>, vector<256x128xf32> -> vector<256x128xf32>
    %169 = arith.addf %159, %168 : vector<256x128xf32>
    %c352_98 = arith.constant 352 : index
    %c0_99 = arith.constant 0 : index
    %170 = vector.load %arg9[%c352_98, %c0_99] : memref<640x128xbf16, #tpu.memory_space<vmem>>, vector<256x128xbf16>
    %c4_100 = arith.constant 4 : index
    %c0_101 = arith.constant 0 : index
    %c0_102 = arith.constant 0 : index
    %171 = vector.load %arg4[%c4_100, %c0_101, %c0_102] : memref<9x128x128xbf16, #tpu.memory_space<vmem>>, vector<1x128x128xbf16>
    %172 = vector.shape_cast %171 : vector<1x128x128xbf16> to vector<128x128xbf16>
    %cst_103 = arith.constant dense<0.000000e+00> : vector<256x128xf32>
    %173 = tpu.matmul %170, %172, %cst_103 {dimension_numbers = #tpu.dot_dimension_numbers<[1], [0], [0], [1], [0, 0, 1, 1], [], []>} : vector<256x128xbf16>, vector<128x128xbf16>, vector<256x128xf32> -> vector<256x128xf32>
    %174 = arith.addf %169, %173 : vector<256x128xf32>
    %c353 = arith.constant 353 : index
    %c0_104 = arith.constant 0 : index
    %175 = vector.load %arg9[%c353, %c0_104] : memref<640x128xbf16, #tpu.memory_space<vmem>>, vector<256x128xbf16>
    %cst_105 = arith.constant 0.000000e+00 : f32
    %176 = arith.truncf %cst_105 : f32 to bf16
    %177 = vector.shape_cast %29 : vector<256x1xi1> to vector<256x1xi1>
    %178 = vector.broadcast %177 : vector<256x1xi1> to vector<256x128xi1>
    %179 = vector.broadcast %176 : bf16 to vector<256x128xbf16>
    %180 = arith.select %178, %175, %179 : vector<256x128xi1>, vector<256x128xbf16>
    %c5_106 = arith.constant 5 : index
    %c0_107 = arith.constant 0 : index
    %c0_108 = arith.constant 0 : index
    %181 = vector.load %arg4[%c5_106, %c0_107, %c0_108] : memref<9x128x128xbf16, #tpu.memory_space<vmem>>, vector<1x128x128xbf16>
    %182 = vector.shape_cast %181 : vector<1x128x128xbf16> to vector<128x128xbf16>
    %cst_109 = arith.constant dense<0.000000e+00> : vector<256x128xf32>
    %183 = tpu.matmul %180, %182, %cst_109 {dimension_numbers = #tpu.dot_dimension_numbers<[1], [0], [0], [1], [0, 0, 1, 1], [], []>} : vector<256x128xbf16>, vector<128x128xbf16>, vector<256x128xf32> -> vector<256x128xf32>
    %184 = arith.addf %174, %183 : vector<256x128xf32>
    %c367 = arith.constant 367 : index
    %c0_110 = arith.constant 0 : index
    %185 = vector.load %arg9[%c367, %c0_110] : memref<640x128xbf16, #tpu.memory_space<vmem>>, vector<256x128xbf16>
    %cst_111 = arith.constant 0.000000e+00 : f32
    %186 = arith.truncf %cst_111 : f32 to bf16
    %187 = vector.shape_cast %27 : vector<256x1xi1> to vector<256x1xi1>
    %188 = vector.broadcast %187 : vector<256x1xi1> to vector<256x128xi1>
    %189 = vector.broadcast %186 : bf16 to vector<256x128xbf16>
    %190 = arith.select %188, %185, %189 : vector<256x128xi1>, vector<256x128xbf16>
    %c6_112 = arith.constant 6 : index
    %c0_113 = arith.constant 0 : index
    %c0_114 = arith.constant 0 : index
    %191 = vector.load %arg4[%c6_112, %c0_113, %c0_114] : memref<9x128x128xbf16, #tpu.memory_space<vmem>>, vector<1x128x128xbf16>
    %192 = vector.shape_cast %191 : vector<1x128x128xbf16> to vector<128x128xbf16>
    %cst_115 = arith.constant dense<0.000000e+00> : vector<256x128xf32>
    %193 = tpu.matmul %190, %192, %cst_115 {dimension_numbers = #tpu.dot_dimension_numbers<[1], [0], [0], [1], [0, 0, 1, 1], [], []>} : vector<256x128xbf16>, vector<128x128xbf16>, vector<256x128xf32> -> vector<256x128xf32>
    %194 = arith.addf %184, %193 : vector<256x128xf32>
    %c368 = arith.constant 368 : index
    %c0_116 = arith.constant 0 : index
    %195 = vector.load %arg9[%c368, %c0_116] : memref<640x128xbf16, #tpu.memory_space<vmem>>, vector<256x128xbf16>
    %c7_117 = arith.constant 7 : index
    %c0_118 = arith.constant 0 : index
    %c0_119 = arith.constant 0 : index
    %196 = vector.load %arg4[%c7_117, %c0_118, %c0_119] : memref<9x128x128xbf16, #tpu.memory_space<vmem>>, vector<1x128x128xbf16>
    %197 = vector.shape_cast %196 : vector<1x128x128xbf16> to vector<128x128xbf16>
    %cst_120 = arith.constant dense<0.000000e+00> : vector<256x128xf32>
    %198 = tpu.matmul %195, %197, %cst_120 {dimension_numbers = #tpu.dot_dimension_numbers<[1], [0], [0], [1], [0, 0, 1, 1], [], []>} : vector<256x128xbf16>, vector<128x128xbf16>, vector<256x128xf32> -> vector<256x128xf32>
    %199 = arith.addf %194, %198 : vector<256x128xf32>
    %c369 = arith.constant 369 : index
    %c0_121 = arith.constant 0 : index
    %200 = vector.load %arg9[%c369, %c0_121] : memref<640x128xbf16, #tpu.memory_space<vmem>>, vector<256x128xbf16>
    %cst_122 = arith.constant 0.000000e+00 : f32
    %201 = arith.truncf %cst_122 : f32 to bf16
    %202 = vector.shape_cast %29 : vector<256x1xi1> to vector<256x1xi1>
    %203 = vector.broadcast %202 : vector<256x1xi1> to vector<256x128xi1>
    %204 = vector.broadcast %201 : bf16 to vector<256x128xbf16>
    %205 = arith.select %203, %200, %204 : vector<256x128xi1>, vector<256x128xbf16>
    %c8_123 = arith.constant 8 : index
    %c0_124 = arith.constant 0 : index
    %c0_125 = arith.constant 0 : index
    %206 = vector.load %arg4[%c8_123, %c0_124, %c0_125] : memref<9x128x128xbf16, #tpu.memory_space<vmem>>, vector<1x128x128xbf16>
    %207 = vector.shape_cast %206 : vector<1x128x128xbf16> to vector<128x128xbf16>
    %cst_126 = arith.constant dense<0.000000e+00> : vector<256x128xf32>
    %208 = tpu.matmul %205, %207, %cst_126 {dimension_numbers = #tpu.dot_dimension_numbers<[1], [0], [0], [1], [0, 0, 1, 1], [], []>} : vector<256x128xbf16>, vector<128x128xbf16>, vector<256x128xf32> -> vector<256x128xf32>
    %209 = arith.addf %199, %208 : vector<256x128xf32>
    %c0_127 = arith.constant 0 : index
    %c0_128 = arith.constant 0 : index
    %210 = vector.load %arg5[%c0_127, %c0_128] : memref<1x128xf32, #tpu.memory_space<vmem>>, vector<1x128xf32>
    %211 = vector.broadcast %210 : vector<1x128xf32> to vector<256x128xf32>
    %212 = arith.addf %209, %211 : vector<256x128xf32>
    %cst_129 = arith.constant 0.000000e+00 : f32
    %213 = vector.broadcast %cst_129 : f32 to vector<256x128xf32>
    %214 = arith.maximumf %212, %213 : vector<256x128xf32>
    %215 = arith.truncf %214 : vector<256x128xf32> to vector<256x128xbf16>
    %c0_130 = arith.constant 0 : index
    %c0_131 = arith.constant 0 : index
    %216 = vector.load %arg6[%c0_130, %c0_131] : memref<128x128xbf16, #tpu.memory_space<vmem>>, vector<128x128xbf16>
    %cst_132 = arith.constant dense<0.000000e+00> : vector<256x128xf32>
    %217 = tpu.matmul %215, %216, %cst_132 {dimension_numbers = #tpu.dot_dimension_numbers<[1], [0], [0], [1], [0, 0, 1, 1], [], []>} : vector<256x128xbf16>, vector<128x128xbf16>, vector<256x128xf32> -> vector<256x128xf32>
    %c0_133 = arith.constant 0 : index
    %c0_134 = arith.constant 0 : index
    %218 = vector.load %arg7[%c0_133, %c0_134] : memref<1x128xf32, #tpu.memory_space<vmem>>, vector<1x128xf32>
    %219 = vector.broadcast %218 : vector<1x128xf32> to vector<256x128xf32>
    %220 = arith.addf %217, %219 : vector<256x128xf32>
    %221 = vector.extract_strided_slice %0 {offsets = [1, 0, 0], sizes = [1, 256, 128], strides = [1, 1, 1]} : vector<2x256x128xbf16> to vector<1x256x128xbf16>
    %222 = vector.shape_cast %221 : vector<1x256x128xbf16> to vector<256x128xbf16>
    %223 = arith.extf %222 : vector<256x128xbf16> to vector<256x128xf32>
    %224 = arith.addf %220, %223 : vector<256x128xf32>
    %cst_135 = arith.constant 0.000000e+00 : f32
    %225 = vector.broadcast %cst_135 : f32 to vector<256x128xf32>
    %226 = arith.maximumf %224, %225 : vector<256x128xf32>
    %227 = arith.truncf %226 : vector<256x128xf32> to vector<256x128xbf16>
    %c1_136 = arith.constant 1 : index
    %c0_137 = arith.constant 0 : index
    %c0_138 = arith.constant 0 : index
    %228 = vector.load %arg8[%c1_136, %c0_137, %c0_138] : memref<2x256x128xbf16, #tpu.memory_space<vmem>>, vector<1x256x128xbf16>
    %229 = vector.shape_cast %228 : vector<1x256x128xbf16> to vector<256x128xbf16>
    %230 = vector.shape_cast %227 : vector<256x128xbf16> to vector<1x256x128xbf16>
    tpu.vector_store %arg8[%c1_136, %c0_137, %c0_138], %230 {strides = array<i32>} : memref<2x256x128xbf16, #tpu.memory_space<vmem>>, vector<1x256x128xbf16>,
    return
  }
  func.func @transform_0(%arg0: i32) -> (i32, i32, i32) {
    %c0_i32 = arith.constant 0 : i32
    %c0_i32_0 = arith.constant 0 : i32
    %c0_i32_1 = arith.constant 0 : i32
    return %arg0, %c0_i32, %c0_i32_0 : i32, i32, i32
  }
  func.func @transform_1(%arg0: i32) -> (i32, i32) {
    %c0_i32 = arith.constant 0 : i32
    %c0_i32_0 = arith.constant 0 : i32
    %c0_i32_1 = arith.constant 0 : i32
    return %c0_i32, %c0_i32_0 : i32, i32
  }
  func.func @transform_2(%arg0: i32) -> (i32, i32) {
    %c0_i32 = arith.constant 0 : i32
    %c0_i32_0 = arith.constant 0 : i32
    %c0_i32_1 = arith.constant 0 : i32
    return %c0_i32, %c0_i32_0 : i32, i32
  }
  func.func @transform_3(%arg0: i32) -> (i32, i32, i32) {
    %c0_i32 = arith.constant 0 : i32
    %c0_i32_0 = arith.constant 0 : i32
    %c0_i32_1 = arith.constant 0 : i32
    %c0_i32_2 = arith.constant 0 : i32
    return %c0_i32, %c0_i32_0, %c0_i32_1 : i32, i32, i32
  }
  func.func @transform_4(%arg0: i32) -> (i32, i32) {
    %c0_i32 = arith.constant 0 : i32
    %c0_i32_0 = arith.constant 0 : i32
    %c0_i32_1 = arith.constant 0 : i32
    return %c0_i32, %c0_i32_0 : i32, i32
  }
  func.func @transform_5(%arg0: i32) -> (i32, i32) {
    %c0_i32 = arith.constant 0 : i32
    %c0_i32_0 = arith.constant 0 : i32
    %c0_i32_1 = arith.constant 0 : i32
    return %c0_i32, %c0_i32_0 : i32, i32
  }
  func.func @transform_6(%arg0: i32) -> (i32, i32) {
    %c0_i32 = arith.constant 0 : i32
    %c0_i32_0 = arith.constant 0 : i32
    %c0_i32_1 = arith.constant 0 : i32
    return %c0_i32, %c0_i32_0 : i32, i32
  }
  func.func @transform_7(%arg0: i32) -> (i32, i32, i32) {
    %c0_i32 = arith.constant 0 : i32
    %c0_i32_0 = arith.constant 0 : i32
    %c0_i32_1 = arith.constant 0 : i32
    return %arg0, %c0_i32, %c0_i32_0 : i32, i32, i32
  }
}

</mosaic_0001>

<llo_original>
// kernel: tpu_custom_call.1
$region0: #{tpu_custom_call.1}
  #allocation0 [shape = 'u32[]', space=smem, size = 0x4, offset = 0x4, fixed_abs, tag = 'smem constant byte address 0x4 - core index']
  #allocation1 [shape = 'u32[144,128]{1,0:T(1,128)}', space=vmem, size = 0x12000, scoped, tag = 'internal scratch']
  #allocation2 [shape = 'bf16[640,128]{1,0:T(16,128)(2,1)}', space=vmem, size = 0x28000, scoped, tag = 'scratch operand']
  %s0 = inlined_call_operand.hbm [shape: bf16[4,256,128], index: 0, kind: input, shape index: {}]
  %s1 = inlined_call_operand.hbm [shape: bf16[128,128], index: 1, kind: input, shape index: {}]
  %s2 = inlined_call_operand.vmem [shape: f32[1,128], index: 2, kind: input, shape index: {}]
  %s3 = inlined_call_operand.hbm [shape: bf16[9,128,128], index: 3, kind: input, shape index: {}]
  %s4 = inlined_call_operand.vmem [shape: f32[1,128], index: 4, kind: input, shape index: {}]
  %s5 = inlined_call_operand.hbm [shape: bf16[128,128], index: 5, kind: input, shape index: {}]
  %s6 = inlined_call_operand.vmem [shape: f32[1,128], index: 6, kind: input, shape index: {}]
  %s7 = inlined_call_operand.hbm [shape: bf16[4,256,128], index: 7, kind: output, shape index: {}]
  %s8 = sld [smem:[#allocation0]]
  $region77: #{tpu_custom_call.1} parent=0
    _
  %s10 = ssub.s32 1, %s8
  %s11 = scalar_select 0, %s10, %s8
  $region1: #{tpu_custom_call.1} parent=0
    #allocation3 [shape = 'u8[262144]{0}', space=vmem, size = 0x40000, scoped, tag = 'input window, operand 0']
    #allocation4 [shape = 's32[2]{0}', space=sflag, size = 0x8, scoped, tag = 'scoped memory for tpu_custom_call.1']
    #allocation5 [shape = 's32[2]{0}', space=sflag, size = 0x8, scoped, tag = 'scoped memory for tpu_custom_call.1']
    #allocation6 [shape = 'u8[32768]{0}', space=vmem, size = 0x8000, scoped, tag = 'input window, operand 1, single buffered']
    #allocation7 [shape = 's32[1]{0}', space=sflag, size = 0x4, scoped, tag = 'scoped memory for tpu_custom_call.1']
    #allocation8 [shape = 'u8[294912]{0}', space=vmem, size = 0x48000, scoped, tag = 'input window, operand 3, single buffered']
    #allocation9 [shape = 'u8[32768]{0}', space=vmem, size = 0x8000, scoped, tag = 'input window, operand 5, single buffered']
    #allocation10 [shape = 's32[1]{0}', space=sflag, size = 0x4, scoped, tag = 'scoped memory for tpu_custom_call.1']
    #allocation11 [shape = 'u8[262144]{0}', space=vmem, size = 0x40000, scoped, tag = 'output window, operand 0']
    %12 = vsyncpa [#allocation4], 0
    %s13 = scalar_lea.sflag [#allocation4], 1
    %14 = vsyncpa %s13, 0
    %15 = vsyncpa [#allocation7], 0
    %16 = vsyncpa [#allocation10], 0
    %17 = vsyncpa [#allocation5], 0
    %s18 = scalar_lea.sflag [#allocation5], 1
    %19 = vsyncpa %s18, 0
    loop: start=0, step=1, limit=4
    $region2: #{tpu_custom_call.1} parent=1 // loop_pre_header
      _
    $region3: #{tpu_custom_call.1} parent=1 // loop_header
      %s21 = sphi 0, %s25
      %p22 = scmp.ge.s32.totalorder %s21, 4
      %s31 = sphi 0, %s33
      %s34 = sphi 0, %s31
      %s35 = sphi 0, %s34
      %s51 = sphi 0, %s35
      %s55 = sphi 0, %s55
      %s57 = sphi 0, %s55
      %s58 = sphi 0, %s57
      %s72 = sphi 0, %s58
      %s76 = sphi 0, %s76
      %s78 = sphi 0, %s76
      %s79 = sphi 0, %s78
      %s93 = sphi 0, %s79
      %s97 = sphi 0, %s97
      %s99 = sphi 0, %s97
      %s100 = sphi 0, %s99
      %s114 = sphi 0, %s100
      %s118 = sphi 0, %s118
      %s120 = sphi 0, %s118
      %s121 = sphi 0, %s120
      %s135 = sphi 0, %s121
      %s139 = sphi 0, %s139
      %s141 = sphi 0, %s139
      %s142 = sphi 0, %s141
      %s156 = sphi 0, %s142
      %s160 = sphi 0, %s160
      %s162 = sphi 0, %s160
      %s163 = sphi 0, %s162
      %s177 = sphi 0, %s163
      %s183 = sphi 0, %s185
      %s186 = sphi 0, %s183
      %s187 = sphi 0, %s186
      %s203 = sphi 0, %s187
    $region4: #{tpu_custom_call.1} parent=1 // loop_header_branch
      %24 = sbr.rel (%p22) target = $region8
    $region5: #{tpu_custom_call.1} parent=1 // loop_body
      %s26 = ssub.s32 %s21, 1
      %s27 = ssub.s32 %s21, 2
      %s28 = sadd.s32 %s21, 1
      %s29 = ssub.s32 %s21, %s28
      %p30 = scmp.eq.s32.totalorder %s29, 0
      %s32 = sadd.s32 %s31, 1
      %s33 = scalar_select %p30, %s31, %s32
      %p36 = pneg %p30
      %p37 = scmp.eq.s32.totalorder %s21, 1
      %p38 = por %p36, %p37
      %p39 = scmp.ne.s32.totalorder %s31, %s34
      %p40 = scmp.eq.s32.totalorder %s21, 0
      %p41 = por %p39, %p40
      %p42 = scmp.ne.s32.totalorder %s31, %s34
      %p43 = scmp.eq.s32.totalorder %s26, 1
      %p44 = por %p42, %p43
      %p45 = scmp.ne.s32.totalorder %s34, %s35
      %p46 = scmp.eq.s32.totalorder %s26, 0
      %p47 = por %p45, %p46
      %p48 = scmp.ne.s32.totalorder %s34, %s35
      %p49 = scmp.eq.s32.totalorder %s27, 1
      %p50 = por %p48, %p49
      %p52 = scmp.ne.s32.totalorder %s35, %s51
      %p53 = scmp.eq.s32.totalorder %s27, 0
      %p54 = por %p52, %p53
      %s56 = sadd.s32 %s55, 1
      %p59 = scmp.eq.s32.totalorder %s21, 1
      %p60 = scmp.ne.s32.totalorder %s55, %s57
      %p61 = scmp.eq.s32.totalorder %s21, 0
      %p62 = por %p60, %p61
      %p63 = scmp.ne.s32.totalorder %s55, %s57
      %p64 = scmp.eq.s32.totalorder %s26, 1
      %p65 = por %p63, %p64
      %p66 = scmp.ne.s32.totalorder %s57, %s58
      %p67 = scmp.eq.s32.totalorder %s26, 0
      %p68 = por %p66, %p67
      %p69 = scmp.ne.s32.totalorder %s57, %s58
      %p70 = scmp.eq.s32.totalorder %s27, 1
      %p71 = por %p69, %p70
      %p73 = scmp.ne.s32.totalorder %s58, %s72
      %p74 = scmp.eq.s32.totalorder %s27, 0
      %p75 = por %p73, %p74
      %s77 = sadd.s32 %s76, 1
      %p80 = scmp.eq.s32.totalorder %s21, 1
      %p81 = scmp.ne.s32.totalorder %s76, %s78
      %p82 = scmp.eq.s32.totalorder %s21, 0
      %p83 = por %p81, %p82
      %p84 = scmp.ne.s32.totalorder %s76, %s78
      %p85 = scmp.eq.s32.totalorder %s26, 1
      %p86 = por %p84, %p85
      %p87 = scmp.ne.s32.totalorder %s78, %s79
      %p88 = scmp.eq.s32.totalorder %s26, 0
      %p89 = por %p87, %p88
      %p90 = scmp.ne.s32.totalorder %s78, %s79
      %p91 = scmp.eq.s32.totalorder %s27, 1
      %p92 = por %p90, %p91
      %p94 = scmp.ne.s32.totalorder %s79, %s93
      %p95 = scmp.eq.s32.totalorder %s27, 0
      %p96 = por %p94, %p95
      %s98 = sadd.s32 %s97, 1
      %p101 = scmp.eq.s32.totalorder %s21, 1
      %p102 = scmp.ne.s32.totalorder %s97, %s99
      %p103 = scmp.eq.s32.totalorder %s21, 0
      %p104 = por %p102, %p103
      %p105 = scmp.ne.s32.totalorder %s97, %s99
      %p106 = scmp.eq.s32.totalorder %s26, 1
      %p107 = por %p105, %p106
      %p108 = scmp.ne.s32.totalorder %s99, %s100
      %p109 = scmp.eq.s32.totalorder %s26, 0
      %p110 = por %p108, %p109
      %p111 = scmp.ne.s32.totalorder %s99, %s100
      %p112 = scmp.eq.s32.totalorder %s27, 1
      %p113 = por %p111, %p112
      %p115 = scmp.ne.s32.totalorder %s100, %s114
      %p116 = scmp.eq.s32.totalorder %s27, 0
      %p117 = por %p115, %p116
      %s119 = sadd.s32 %s118, 1
      %p122 = scmp.eq.s32.totalorder %s21, 1
      %p123 = scmp.ne.s32.totalorder %s118, %s120
      %p124 = scmp.eq.s32.totalorder %s21, 0
      %p125 = por %p123, %p124
      %p126 = scmp.ne.s32.totalorder %s118, %s120
      %p127 = scmp.eq.s32.totalorder %s26, 1
      %p128 = por %p126, %p127
      %p129 = scmp.ne.s32.totalorder %s120, %s121
      %p130 = scmp.eq.s32.totalorder %s26, 0
      %p131 = por %p129, %p130
      %p132 = scmp.ne.s32.totalorder %s120, %s121
      %p133 = scmp.eq.s32.totalorder %s27, 1
      %p134 = por %p132, %p133
      %p136 = scmp.ne.s32.totalorder %s121, %s135
      %p137 = scmp.eq.s32.totalorder %s27, 0
      %p138 = por %p136, %p137
      %s140 = sadd.s32 %s139, 1
      %p143 = scmp.eq.s32.totalorder %s21, 1
      %p144 = scmp.ne.s32.totalorder %s139, %s141
      %p145 = scmp.eq.s32.totalorder %s21, 0
      %p146 = por %p144, %p145
      %p147 = scmp.ne.s32.totalorder %s139, %s141
      %p148 = scmp.eq.s32.totalorder %s26, 1
      %p149 = por %p147, %p148
      %p150 = scmp.ne.s32.totalorder %s141, %s142
      %p151 = scmp.eq.s32.totalorder %s26, 0
      %p152 = por %p150, %p151
      %p153 = scmp.ne.s32.totalorder %s141, %s142
      %p154 = scmp.eq.s32.totalorder %s27, 1
      %p155 = por %p153, %p154
      %p157 = scmp.ne.s32.totalorder %s142, %s156
      %p158 = scmp.eq.s32.totalorder %s27, 0
      %p159 = por %p157, %p158
      %s161 = sadd.s32 %s160, 1
      %p164 = scmp.eq.s32.totalorder %s21, 1
      %p165 = scmp.ne.s32.totalorder %s160, %s162
      %p166 = scmp.eq.s32.totalorder %s21, 0
      %p167 = por %p165, %p166
      %p168 = scmp.ne.s32.totalorder %s160, %s162
      %p169 = scmp.eq.s32.totalorder %s26, 1
      %p170 = por %p168, %p169
      %p171 = scmp.ne.s32.totalorder %s162, %s163
      %p172 = scmp.eq.s32.totalorder %s26, 0
      %p173 = por %p171, %p172
      %p174 = scmp.ne.s32.totalorder %s162, %s163
      %p175 = scmp.eq.s32.totalorder %s27, 1
      %p176 = por %p174, %p175
      %p178 = scmp.ne.s32.totalorder %s163, %s177
      %p179 = scmp.eq.s32.totalorder %s27, 0
      %p180 = por %p178, %p179
      %s181 = ssub.s32 %s21, %s28
      %p182 = scmp.eq.s32.totalorder %s181, 0
      %s184 = sadd.s32 %s183, 1
      %s185 = scalar_select %p182, %s183, %s184
      %p188 = pneg %p182
      %p189 = scmp.eq.s32.totalorder %s21, 1
      %p190 = por %p188, %p189
      %p191 = scmp.ne.s32.totalorder %s183, %s186
      %p192 = scmp.eq.s32.totalorder %s21, 0
      %p193 = por %p191, %p192
      %p194 = scmp.ne.s32.totalorder %s183, %s186
      %p195 = scmp.eq.s32.totalorder %s26, 1
      %p196 = por %p194, %p195
      %p197 = scmp.ne.s32.totalorder %s186, %s187
      %p198 = scmp.eq.s32.totalorder %s26, 0
      %p199 = por %p197, %p198
      %p200 = scmp.ne.s32.totalorder %s186, %s187
      %p201 = scmp.eq.s32.totalorder %s27, 1
      %p202 = por %p200, %p201
      %p204 = scmp.ne.s32.totalorder %s187, %s203
      %p205 = scmp.eq.s32.totalorder %s27, 0
      %p206 = por %p204, %p205
      %p207 = scmp.le.s32.totalorder 1, %s21
      %p208 = scmp.lt.s32.totalorder %s21, 3
      %p209 = pnand %p207, %p208
      %p210 = pneg %p209
      // Predicated region
      $region9: #{tpu_custom_call.1} parent=5 // pred_check
        _
      $region10: #{tpu_custom_call.1} parent=5 // pred_check_branch
        %212 = sbr.rel (%p209) target = $region12
      $region11: #{tpu_custom_call.1} parent=5 // pred_region
        %s213 = ssub.s32 %s21, 1
        // Predicated region
        $region13: #{tpu_custom_call.1} parent=11 // pred_check
          %p214 = pneg %p68
        $region14: #{tpu_custom_call.1} parent=11 // pred_check_branch
          %216 = sbr.rel (%p214) target = $region16
        $region15: #{tpu_custom_call.1} parent=11 // pred_region
          %s218 = ssub.s32 1024, 1024
          %219 = vsyncadd [#allocation7], %s218
          %s220 = sshll.u32 [#allocation6], 4
          %s221 = int_to_ptr.vmem [resolvable:$true] %s220
          %226 = dma.hbm_to_vmem [thread:$0]  %s1, 1024, %s221, [#allocation7], 64, 64, 4
        $region16: #{tpu_custom_call.1} parent=11 // pred_fallthru
          _
        // Predicated region
        $region17: #{tpu_custom_call.1} parent=11 // pred_check
          %p227 = pneg %p89
        $region18: #{tpu_custom_call.1} parent=11 // pred_check_branch
          %229 = sbr.rel (%p227) target = $region20
        $region19: #{tpu_custom_call.1} parent=11 // pred_region
          _
        $region20: #{tpu_custom_call.1} parent=11 // pred_fallthru
          _
        // Predicated region
        $region21: #{tpu_custom_call.1} parent=11 // pred_check
          %p230 = pneg %p110
        $region22: #{tpu_custom_call.1} parent=11 // pred_check_branch
          %232 = sbr.rel (%p230) target = $region24
        $region23: #{tpu_custom_call.1} parent=11 // pred_region
          %s234 = ssub.s32 9216, 9216
          %235 = vsyncadd [#allocation7], %s234
          %s236 = sshll.u32 [#allocation8], 4
          %s237 = int_to_ptr.vmem [resolvable:$true] %s236
          %242 = dma.hbm_to_vmem [thread:$0]  %s3, 9216, %s237, [#allocation7], 64, 64, 4
        $region24: #{tpu_custom_call.1} parent=11 // pred_fallthru
          _
        // Predicated region
        $region25: #{tpu_custom_call.1} parent=11 // pred_check
          %p243 = pneg %p131
        $region26: #{tpu_custom_call.1} parent=11 // pred_check_branch
          %245 = sbr.rel (%p243) target = $region28
        $region27: #{tpu_custom_call.1} parent=11 // pred_region
          _
        $region28: #{tpu_custom_call.1} parent=11 // pred_fallthru
          _
        // Predicated region
        $region29: #{tpu_custom_call.1} parent=11 // pred_check
          %p246 = pneg %p152
        $region30: #{tpu_custom_call.1} parent=11 // pred_check_branch
          %248 = sbr.rel (%p246) target = $region32
        $region31: #{tpu_custom_call.1} parent=11 // pred_region
          %s250 = ssub.s32 1024, 1024
          %251 = vsyncadd [#allocation10], %s250
          %s252 = sshll.u32 [#allocation9], 4
          %s253 = int_to_ptr.vmem [resolvable:$true] %s252
          %258 = dma.hbm_to_vmem [thread:$0]  %s5, 1024, %s253, [#allocation10], 64, 64, 4
        $region32: #{tpu_custom_call.1} parent=11 // pred_fallthru
          _
        // Predicated region
        $region33: #{tpu_custom_call.1} parent=11 // pred_check
          %p259 = pneg %p173
        $region34: #{tpu_custom_call.1} parent=11 // pred_check_branch
          %261 = sbr.rel (%p259) target = $region36
        $region35: #{tpu_custom_call.1} parent=11 // pred_region
          _
        $region36: #{tpu_custom_call.1} parent=11 // pred_fallthru
          _
      $region12: #{tpu_custom_call.1} parent=5 // pred_fallthru
        _
      %p262 = scmp.lt.s32.totalorder %s21, 2
      // Predicated region
      $region37: #{tpu_custom_call.1} parent=5 // pred_check
        %p263 = pneg %p262
      $region38: #{tpu_custom_call.1} parent=5 // pred_check_branch
        %265 = sbr.rel (%p263) target = $region40
      $region39: #{tpu_custom_call.1} parent=5 // pred_region
        // Predicated region
        $region41: #{tpu_custom_call.1} parent=39 // pred_check
          %p266 = pneg %p41
        $region42: #{tpu_custom_call.1} parent=39 // pred_check_branch
          %268 = sbr.rel (%p266) target = $region44
        $region43: #{tpu_custom_call.1} parent=39 // pred_region
          %s269 = sand.u32 %s31, 1
          %s270 = scalar_lea.sflag [#allocation4], %s269
          %s271 = sand.u32 %s31, 1
          %s272 = smul.addr %s271, 256
          %s273 = scalar_lea.vmem [#allocation3], %s272
          %s274 = smul.u32 2, %s21
          %s276 = ssub.s32 4096, 4096
          %277 = vsyncadd %s270, %s276
          %s278 = smul.addr %s274, 32
          %s279 = smul.addr %s278, 64
          %s280 = scalar_lea.hbm %s0, %s279
          %s281 = sshll.u32 %s273, 4
          %s282 = int_to_ptr.vmem [resolvable:$true] %s281
          %287 = dma.hbm_to_vmem [thread:$0]  %s280, 4096, %s282, %s270, 64, 64, 4
        $region44: #{tpu_custom_call.1} parent=39 // pred_fallthru
          _
      $region40: #{tpu_custom_call.1} parent=5 // pred_fallthru
        _
      %p288 = scmp.le.s32.totalorder 1, %s21
      %p289 = scmp.lt.s32.totalorder %s21, 3
      %p290 = pnand %p288, %p289
      %p291 = pneg %p290
      // Predicated region
      $region45: #{tpu_custom_call.1} parent=5 // pred_check
        _
      $region46: #{tpu_custom_call.1} parent=5 // pred_check_branch
        %293 = sbr.rel (%p290) target = $region48
      $region47: #{tpu_custom_call.1} parent=5 // pred_region
        %s294 = ssub.s32 %s21, 1
        %s295 = sand.u32 %s34, 1
        %s296 = scalar_lea.sflag [#allocation4], %s295
        %s297 = sand.u32 %s34, 1
        %s298 = smul.addr %s297, 256
        %s299 = scalar_lea.vmem [#allocation3], %s298
        // Predicated region
        $region49: #{tpu_custom_call.1} parent=47 // pred_check
          %p300 = pneg %p47
        $region50: #{tpu_custom_call.1} parent=47 // pred_check_branch
          %302 = sbr.rel (%p300) target = $region52
        $region51: #{tpu_custom_call.1} parent=47 // pred_region
          %303 = dma.done %s296, 4096
        $region52: #{tpu_custom_call.1} parent=47 // pred_fallthru
          _
        // Predicated region
        $region53: #{tpu_custom_call.1} parent=47 // pred_check
          %p304 = pneg %p68
        $region54: #{tpu_custom_call.1} parent=47 // pred_check_branch
          %306 = sbr.rel (%p304) target = $region56
        $region55: #{tpu_custom_call.1} parent=47 // pred_region
          %307 = dma.done [#allocation7], 1024
        $region56: #{tpu_custom_call.1} parent=47 // pred_fallthru
          _
        // Predicated region
        $region57: #{tpu_custom_call.1} parent=47 // pred_check
          %p308 = pneg %p110
        $region58: #{tpu_custom_call.1} parent=47 // pred_check_branch
          %310 = sbr.rel (%p308) target = $region60
        $region59: #{tpu_custom_call.1} parent=47 // pred_region
          %311 = dma.done [#allocation7], 9216
        $region60: #{tpu_custom_call.1} parent=47 // pred_fallthru
          _
        // Predicated region
        $region61: #{tpu_custom_call.1} parent=47 // pred_check
          %p312 = pneg %p152
        $region62: #{tpu_custom_call.1} parent=47 // pred_check_branch
          %314 = sbr.rel (%p312) target = $region64
        $region63: #{tpu_custom_call.1} parent=47 // pred_region
          %315 = dma.done [#allocation10], 1024
        $region64: #{tpu_custom_call.1} parent=47 // pred_fallthru
          _
        %s316 = sand.u32 %s34, 1
        %s317 = scalar_lea.sflag [#allocation4], %s316
        %s318 = sand.u32 %s34, 1
        %s319 = smul.addr %s318, 256
        %s320 = scalar_lea.vmem [#allocation3], %s319
        %p321 = pneg %p47
        %p322 = pneg %p44
        %p323 = pneg %p68
        %p324 = pneg %p65
        %p325 = pneg %p89
        %p326 = pneg %p86
        %p327 = pneg %p110
        %p328 = pneg %p107
        %p329 = pneg %p131
        %p330 = pneg %p128
        %p331 = pneg %p152
        %p332 = pneg %p149
        %p333 = pneg %p173
        %p334 = pneg %p170
        %p335 = pneg %p199
        %p336 = pneg %p196
        %s337 = sand.u32 %s186, 1
        %s338 = scalar_lea.sflag [#allocation5], %s337
        %s339 = sand.u32 %s186, 1
        %s340 = smul.addr %s339, 256
        %s341 = scalar_lea.vmem [#allocation11], %s340
        %s342 = smul.u32 2, %s26
        %s343 = smul.u32 2, %s26
        %v347 = vld [vmem:[%s299] sm:$0xf]
        %v348 = vld [vmem:[%s299 + $0x4] sm:$0xf]
        %v349 = vld [vmem:[%s299 + $0x8] sm:$0xf]
        %v350 = vld [vmem:[%s299 + $0xc] sm:$0xf]
        %v351 = vld [vmem:[%s299 + $0x10] sm:$0xf]
        %v352 = vld [vmem:[%s299 + $0x14] sm:$0xf]
        %v353 = vld [vmem:[%s299 + $0x18] sm:$0xf]
        %v354 = vld [vmem:[%s299 + $0x1c] sm:$0xf]
        %v355 = vld [vmem:[%s299 + $0x20] sm:$0xf]
        %v356 = vld [vmem:[%s299 + $0x24] sm:$0xf]
        %v357 = vld [vmem:[%s299 + $0x28] sm:$0xf]
        %v358 = vld [vmem:[%s299 + $0x2c] sm:$0xf]
        %v359 = vld [vmem:[%s299 + $0x30] sm:$0xf]
        %v360 = vld [vmem:[%s299 + $0x34] sm:$0xf]
        %v361 = vld [vmem:[%s299 + $0x38] sm:$0xf]
        %v362 = vld [vmem:[%s299 + $0x3c] sm:$0xf]
        %v363 = vld [vmem:[%s299 + $0x40] sm:$0xf]
        %v364 = vld [vmem:[%s299 + $0x44] sm:$0xf]
        %v365 = vld [vmem:[%s299 + $0x48] sm:$0xf]
        %v366 = vld [vmem:[%s299 + $0x4c] sm:$0xf]
        %v367 = vld [vmem:[%s299 + $0x50] sm:$0xf]
        %v368 = vld [vmem:[%s299 + $0x54] sm:$0xf]
        %v369 = vld [vmem:[%s299 + $0x58] sm:$0xf]
        %v370 = vld [vmem:[%s299 + $0x5c] sm:$0xf]
        %v371 = vld [vmem:[%s299 + $0x60] sm:$0xf]
        %v372 = vld [vmem:[%s299 + $0x64] sm:$0xf]
        %v373 = vld [vmem:[%s299 + $0x68] sm:$0xf]
        %v374 = vld [vmem:[%s299 + $0x6c] sm:$0xf]
        %v375 = vld [vmem:[%s299 + $0x70] sm:$0xf]
        %v376 = vld [vmem:[%s299 + $0x74] sm:$0xf]
        %v377 = vld [vmem:[%s299 + $0x78] sm:$0xf]
        %v378 = vld [vmem:[%s299 + $0x7c] sm:$0xf]
        %v379 = vld [vmem:[%s299 + $0x80] sm:$0xf]
        %v380 = vld [vmem:[%s299 + $0x84] sm:$0xf]
        %v381 = vld [vmem:[%s299 + $0x88] sm:$0xf]
        %v382 = vld [vmem:[%s299 + $0x8c] sm:$0xf]
        %v383 = vld [vmem:[%s299 + $0x90] sm:$0xf]
        %v384 = vld [vmem:[%s299 + $0x94] sm:$0xf]
        %v385 = vld [vmem:[%s299 + $0x98] sm:$0xf]
        %v386 = vld [vmem:[%s299 + $0x9c] sm:$0xf]
        %v387 = vld [vmem:[%s299 + $0xa0] sm:$0xf]
        %v388 = vld [vmem:[%s299 + $0xa4] sm:$0xf]
        %v389 = vld [vmem:[%s299 + $0xa8] sm:$0xf]
        %v390 = vld [vmem:[%s299 + $0xac] sm:$0xf]
        %v391 = vld [vmem:[%s299 + $0xb0] sm:$0xf]
        %v392 = vld [vmem:[%s299 + $0xb4] sm:$0xf]
        %v393 = vld [vmem:[%s299 + $0xb8] sm:$0xf]
        %v394 = vld [vmem:[%s299 + $0xbc] sm:$0xf]
        %v395 = vld [vmem:[%s299 + $0xc0] sm:$0xf]
        %v396 = vld [vmem:[%s299 + $0xc4] sm:$0xf]
        %v397 = vld [vmem:[%s299 + $0xc8] sm:$0xf]
        %v398 = vld [vmem:[%s299 + $0xcc] sm:$0xf]
        %v399 = vld [vmem:[%s299 + $0xd0] sm:$0xf]
        %v400 = vld [vmem:[%s299 + $0xd4] sm:$0xf]
        %v401 = vld [vmem:[%s299 + $0xd8] sm:$0xf]
        %v402 = vld [vmem:[%s299 + $0xdc] sm:$0xf]
        %v403 = vld [vmem:[%s299 + $0xe0] sm:$0xf]
        %v404 = vld [vmem:[%s299 + $0xe4] sm:$0xf]
        %v405 = vld [vmem:[%s299 + $0xe8] sm:$0xf]
        %v406 = vld [vmem:[%s299 + $0xec] sm:$0xf]
        %v407 = vld [vmem:[%s299 + $0xf0] sm:$0xf]
        %v408 = vld [vmem:[%s299 + $0xf4] sm:$0xf]
        %v409 = vld [vmem:[%s299 + $0xf8] sm:$0xf]
        %v410 = vld [vmem:[%s299 + $0xfc] sm:$0xf]
        %v411 = vld [vmem:[#allocation6] sm:$0xf]
        %v412 = vld [vmem:[#allocation6 + $0x4] sm:$0xf]
        %v413 = vld [vmem:[#allocation6 + $0x8] sm:$0xf]
        %v414 = vld [vmem:[#allocation6 + $0xc] sm:$0xf]
        %v415 = vld [vmem:[#allocation6 + $0x10] sm:$0xf]
        %v416 = vld [vmem:[#allocation6 + $0x14] sm:$0xf]
        %v417 = vld [vmem:[#allocation6 + $0x18] sm:$0xf]
        %v418 = vld [vmem:[#allocation6 + $0x1c] sm:$0xf]
        %v419 = vld [vmem:[#allocation6 + $0x20] sm:$0xf]
        %v420 = vld [vmem:[#allocation6 + $0x24] sm:$0xf]
        %v421 = vld [vmem:[#allocation6 + $0x28] sm:$0xf]
        %v422 = vld [vmem:[#allocation6 + $0x2c] sm:$0xf]
        %v423 = vld [vmem:[#allocation6 + $0x30] sm:$0xf]
        %v424 = vld [vmem:[#allocation6 + $0x34] sm:$0xf]
        %v425 = vld [vmem:[#allocation6 + $0x38] sm:$0xf]
        %v426 = vld [vmem:[#allocation6 + $0x3c] sm:$0xf]
        %v427 = vld [vmem:[%s2] sm:$0x1]
        %v429 = vlaneseq
        %v430 = vshrl.u32 %v429, 7
        %v431 = vsub.s32 0, %v430
        %v432 = vrot.slane %v427, %v431
        %v498 = vunpack.c.l.b16 %v347
        %v499 = vunpack.c.l.b16 %v348
        %v500 = vunpack.c.l.b16 %v349
        %v501 = vunpack.c.l.b16 %v350
        %v502 = vunpack.c.l.b16 %v351
        %v503 = vunpack.c.l.b16 %v352
        %v504 = vunpack.c.l.b16 %v353
        %v505 = vunpack.c.l.b16 %v354
        %v506 = vunpack.c.l.b16 %v355
        %v507 = vunpack.c.l.b16 %v356
        %v508 = vunpack.c.l.b16 %v357
        %v509 = vunpack.c.l.b16 %v358
        %v510 = vunpack.c.l.b16 %v359
        %v511 = vunpack.c.l.b16 %v360
        %v512 = vunpack.c.l.b16 %v361
        %v513 = vunpack.c.l.b16 %v362
        %v514 = vunpack.c.l.b16 %v363
        %v515 = vunpack.c.l.b16 %v364
        %v516 = vunpack.c.l.b16 %v365
        %v517 = vunpack.c.l.b16 %v366
        %v518 = vunpack.c.l.b16 %v367
        %v519 = vunpack.c.l.b16 %v368
        %v520 = vunpack.c.l.b16 %v369
        %v521 = vunpack.c.l.b16 %v370
        %v522 = vunpack.c.l.b16 %v371
        %v523 = vunpack.c.l.b16 %v372
        %v524 = vunpack.c.l.b16 %v373
        %v525 = vunpack.c.l.b16 %v374
        %v526 = vunpack.c.l.b16 %v375
        %v527 = vunpack.c.l.b16 %v376
        %v528 = vunpack.c.l.b16 %v377
        %v529 = vunpack.c.l.b16 %v378
        %v530 = vunpack.c.l.b16 %v379
        %v531 = vunpack.c.l.b16 %v380
        %v532 = vunpack.c.l.b16 %v381
        %v533 = vunpack.c.l.b16 %v382
        %v534 = vunpack.c.l.b16 %v383
        %v535 = vunpack.c.l.b16 %v384
        %v536 = vunpack.c.l.b16 %v385
        %v537 = vunpack.c.l.b16 %v386
        %v538 = vunpack.c.l.b16 %v387
        %v539 = vunpack.c.l.b16 %v388
        %v540 = vunpack.c.l.b16 %v389
        %v541 = vunpack.c.l.b16 %v390
        %v542 = vunpack.c.l.b16 %v391
        %v543 = vunpack.c.l.b16 %v392
        %v544 = vunpack.c.l.b16 %v393
        %v545 = vunpack.c.l.b16 %v394
        %v546 = vunpack.c.l.b16 %v395
        %v547 = vunpack.c.l.b16 %v396
        %v548 = vunpack.c.l.b16 %v397
        %v549 = vunpack.c.l.b16 %v398
        %v550 = vunpack.c.l.b16 %v399
        %v551 = vunpack.c.l.b16 %v400
        %v552 = vunpack.c.l.b16 %v401
        %v553 = vunpack.c.l.b16 %v402
        %v554 = vunpack.c.l.b16 %v403
        %v555 = vunpack.c.l.b16 %v404
        %v556 = vunpack.c.l.b16 %v405
        %v557 = vunpack.c.l.b16 %v406
        %v558 = vunpack.c.l.b16 %v407
        %v559 = vunpack.c.l.b16 %v408
        %v560 = vunpack.c.l.b16 %v409
        %v561 = vunpack.c.l.b16 %v410
        %v562 = vpack.c.b16 %v499, %v498
        %v563 = vpack.c.b16 %v501, %v500
        %v564 = vpack.c.b16 %v503, %v502
        %v565 = vpack.c.b16 %v505, %v504
        %v566 = vpack.c.b16 %v507, %v506
        %v567 = vpack.c.b16 %v509, %v508
        %v568 = vpack.c.b16 %v511, %v510
        %v569 = vpack.c.b16 %v513, %v512
        %v570 = vpack.c.b16 %v515, %v514
        %v571 = vpack.c.b16 %v517, %v516
        %v572 = vpack.c.b16 %v519, %v518
        %v573 = vpack.c.b16 %v521, %v520
        %v574 = vpack.c.b16 %v523, %v522
        %v575 = vpack.c.b16 %v525, %v524
        %v576 = vpack.c.b16 %v527, %v526
        %v577 = vpack.c.b16 %v529, %v528
        %v578 = vpack.c.b16 %v531, %v530
        %v579 = vpack.c.b16 %v533, %v532
        %v580 = vpack.c.b16 %v535, %v534
        %v581 = vpack.c.b16 %v537, %v536
        %v582 = vpack.c.b16 %v539, %v538
        %v583 = vpack.c.b16 %v541, %v540
        %v584 = vpack.c.b16 %v543, %v542
        %v585 = vpack.c.b16 %v545, %v544
        %v586 = vpack.c.b16 %v547, %v546
        %v587 = vpack.c.b16 %v549, %v548
        %v588 = vpack.c.b16 %v551, %v550
        %v589 = vpack.c.b16 %v553, %v552
        %v590 = vpack.c.b16 %v555, %v554
        %v591 = vpack.c.b16 %v557, %v556
        %v592 = vpack.c.b16 %v559, %v558
        %v593 = vpack.c.b16 %v561, %v560
        %v642 = vunpack.c.l.b16 %v411
        %v643 = vunpack.c.l.b16 %v412
        %v644 = vunpack.c.l.b16 %v413
        %v645 = vunpack.c.l.b16 %v414
        %v646 = vunpack.c.l.b16 %v415
        %v647 = vunpack.c.l.b16 %v416
        %v648 = vunpack.c.l.b16 %v417
        %v649 = vunpack.c.l.b16 %v418
        %v650 = vunpack.c.l.b16 %v419
        %v651 = vunpack.c.l.b16 %v420
        %v652 = vunpack.c.l.b16 %v421
        %v653 = vunpack.c.l.b16 %v422
        %v654 = vunpack.c.l.b16 %v423
        %v655 = vunpack.c.l.b16 %v424
        %v656 = vunpack.c.l.b16 %v425
        %v657 = vunpack.c.l.b16 %v426
        %v658 = vpack.c.b16 %v643, %v642
        %v659 = vpack.c.b16 %v645, %v644
        %v660 = vpack.c.b16 %v647, %v646
        %v661 = vpack.c.b16 %v649, %v648
        %v662 = vpack.c.b16 %v651, %v650
        %v663 = vpack.c.b16 %v653, %v652
        %v664 = vpack.c.b16 %v655, %v654
        %v665 = vpack.c.b16 %v657, %v656
        %674 = vmatprep.subr.bf16.mxu0 0
        %675 = vmatpush1.bf16.msra.mxu0 %v658
        %676 = vmatprep.subr.bf16.mxu0 0
        %677 = vmatpush1.bf16.msra.mxu0 %v659
        %678 = vmatprep.subr.bf16.mxu0 0
        %679 = vmatpush1.bf16.msra.mxu0 %v660
        %680 = vmatprep.subr.bf16.mxu0 0
        %681 = vmatpush1.bf16.msra.mxu0 %v661
        %682 = vmatprep.subr.bf16.mxu0 0
        %683 = vmatpush1.bf16.msra.mxu0 %v662
        %684 = vmatprep.subr.bf16.mxu0 0
        %685 = vmatpush1.bf16.msra.mxu0 %v663
        %686 = vmatprep.subr.bf16.mxu0 0
        %687 = vmatpush1.bf16.msra.mxu0 %v664
        %688 = vmatprep.subr.bf16.mxu0 0
        %689 = vmatpush1.bf16.msra.mxu0 %v665
        %690 = vmatprep.subr.bf16.mxu0 0
        %691 = vmatpush1.bf16.msra.mxu0 0
        %692 = vmatprep.subr.bf16.mxu0 0
        %693 = vmatpush1.bf16.msra.mxu0 0
        %694 = vmatprep.subr.bf16.mxu0 0
        %695 = vmatpush1.bf16.msra.mxu0 0
        %696 = vmatprep.subr.bf16.mxu0 0
        %697 = vmatpush1.bf16.msra.mxu0 0
        %698 = vmatprep.subr.bf16.mxu0 0
        %699 = vmatpush1.bf16.msra.mxu0 0
        %700 = vmatprep.subr.bf16.mxu0 0
        %701 = vmatpush1.bf16.msra.mxu0 0
        %702 = vmatprep.subr.bf16.mxu0 0
        %703 = vmatpush1.bf16.msra.mxu0 0
        %704 = vmatprep.subr.bf16.mxu0 0
        %705 = vmatpush1.bf16.msra.mxu0 0
        %706 = vmatprep.mubr.bf16.mxu0 0
        %707 = vmatmul.mubr.bf16.gmra.mrb[0].mxu0 %v562
        %v708 = vpop.f32.mrb[0].mxu0
        %v709 = vadd.f32 %v432, %v708
        %v710 = vpop.f32.mrb[0].mxu0
        %v711 = vpop.f32.mrb[0].mxu0
        %v712 = vadd.f32 %v432, %v711
        %v713 = vpop.f32.mrb[0].mxu0
        %714 = vmatprep.mubr.bf16.mxu0 0
        %715 = vmatmul.mubr.bf16.gmra.mrb[0].mxu0 %v563
        %v716 = vpop.f32.mrb[0].mxu0
        %v717 = vadd.f32 %v432, %v716
        %v718 = vpop.f32.mrb[0].mxu0
        %v719 = vpop.f32.mrb[0].mxu0
        %v720 = vadd.f32 %v432, %v719
        %v721 = vpop.f32.mrb[0].mxu0
        %722 = vmatprep.mubr.bf16.mxu0 0
        %723 = vmatmul.mubr.bf16.gmra.mrb[0].mxu0 %v564
        %v724 = vpop.f32.mrb[0].mxu0
        %v725 = vadd.f32 %v432, %v724
        %v726 = vpop.f32.mrb[0].mxu0
        %v727 = vpop.f32.mrb[0].mxu0
        %v728 = vadd.f32 %v432, %v727
        %v729 = vpop.f32.mrb[0].mxu0
        %730 = vmatprep.mubr.bf16.mxu0 0
        %731 = vmatmul.mubr.bf16.gmra.mrb[0].mxu0 %v565
        %v732 = vpop.f32.mrb[0].mxu0
        %v733 = vadd.f32 %v432, %v732
        %v734 = vpop.f32.mrb[0].mxu0
        %v735 = vpop.f32.mrb[0].mxu0
        %v736 = vadd.f32 %v432, %v735
        %v737 = vpop.f32.mrb[0].mxu0
        %738 = vmatprep.mubr.bf16.mxu0 0
        %739 = vmatmul.mubr.bf16.gmra.mrb[0].mxu0 %v566
        %v740 = vpop.f32.mrb[0].mxu0
        %v741 = vadd.f32 %v432, %v740
        %v742 = vpop.f32.mrb[0].mxu0
        %v743 = vpop.f32.mrb[0].mxu0
        %v744 = vadd.f32 %v432, %v743
        %v745 = vpop.f32.mrb[0].mxu0
        %746 = vmatprep.mubr.bf16.mxu0 0
        %747 = vmatmul.mubr.bf16.gmra.mrb[0].mxu0 %v567
        %v748 = vpop.f32.mrb[0].mxu0
        %v749 = vadd.f32 %v432, %v748
        %v750 = vpop.f32.mrb[0].mxu0
        %v751 = vpop.f32.mrb[0].mxu0
        %v752 = vadd.f32 %v432, %v751
        %v753 = vpop.f32.mrb[0].mxu0
        %754 = vmatprep.mubr.bf16.mxu0 0
        %755 = vmatmul.mubr.bf16.gmra.mrb[0].mxu0 %v568
        %v756 = vpop.f32.mrb[0].mxu0
        %v757 = vadd.f32 %v432, %v756
        %v758 = vpop.f32.mrb[0].mxu0
        %v759 = vpop.f32.mrb[0].mxu0
        %v760 = vadd.f32 %v432, %v759
        %v761 = vpop.f32.mrb[0].mxu0
        %762 = vmatprep.mubr.bf16.mxu0 0
        %763 = vmatmul.mubr.bf16.gmra.mrb[0].mxu0 %v569
        %v764 = vpop.f32.mrb[0].mxu0
        %v765 = vadd.f32 %v432, %v764
        %v766 = vpop.f32.mrb[0].mxu0
        %v767 = vpop.f32.mrb[0].mxu0
        %v768 = vadd.f32 %v432, %v767
        %v769 = vpop.f32.mrb[0].mxu0
        %770 = vmatprep.mubr.bf16.mxu0 0
        %771 = vmatmul.mubr.bf16.gmra.mrb[0].mxu0 %v570
        %v772 = vpop.f32.mrb[0].mxu0
        %v773 = vadd.f32 %v432, %v772
        %v774 = vpop.f32.mrb[0].mxu0
        %v775 = vpop.f32.mrb[0].mxu0
        %v776 = vadd.f32 %v432, %v775
        %v777 = vpop.f32.mrb[0].mxu0
        %778 = vmatprep.mubr.bf16.mxu0 0
        %779 = vmatmul.mubr.bf16.gmra.mrb[0].mxu0 %v571
        %v780 = vpop.f32.mrb[0].mxu0
        %v781 = vadd.f32 %v432, %v780
        %v782 = vpop.f32.mrb[0].mxu0
        %v783 = vpop.f32.mrb[0].mxu0
        %v784 = vadd.f32 %v432, %v783
        %v785 = vpop.f32.mrb[0].mxu0
        %786 = vmatprep.mubr.bf16.mxu0 0
        %787 = vmatmul.mubr.bf16.gmra.mrb[0].mxu0 %v572
        %v788 = vpop.f32.mrb[0].mxu0
        %v789 = vadd.f32 %v432, %v788
        %v790 = vpop.f32.mrb[0].mxu0
        %v791 = vpop.f32.mrb[0].mxu0
        %v792 = vadd.f32 %v432, %v791
        %v793 = vpop.f32.mrb[0].mxu0
        %794 = vmatprep.mubr.bf16.mxu0 0
        %795 = vmatmul.mubr.bf16.gmra.mrb[0].mxu0 %v573
        %v796 = vpop.f32.mrb[0].mxu0
        %v797 = vadd.f32 %v432, %v796
        %v798 = vpop.f32.mrb[0].mxu0
        %v799 = vpop.f32.mrb[0].mxu0
        %v800 = vadd.f32 %v432, %v799
        %v801 = vpop.f32.mrb[0].mxu0
        %802 = vmatprep.mubr.bf16.mxu0 0
        %803 = vmatmul.mubr.bf16.gmra.mrb[0].mxu0 %v574
        %v804 = vpop.f32.mrb[0].mxu0
        %v805 = vadd.f32 %v432, %v804
        %v806 = vpop.f32.mrb[0].mxu0
        %v807 = vpop.f32.mrb[0].mxu0
        %v808 = vadd.f32 %v432, %v807
        %v809 = vpop.f32.mrb[0].mxu0
        %810 = vmatprep.mubr.bf16.mxu0 0
        %811 = vmatmul.mubr.bf16.gmra.mrb[0].mxu0 %v575
        %v812 = vpop.f32.mrb[0].mxu0
        %v813 = vadd.f32 %v432, %v812
        %v814 = vpop.f32.mrb[0].mxu0
        %v815 = vpop.f32.mrb[0].mxu0
        %v816 = vadd.f32 %v432, %v815
        %v817 = vpop.f32.mrb[0].mxu0
        %818 = vmatprep.mubr.bf16.mxu0 0
        %819 = vmatmul.mubr.bf16.gmra.mrb[0].mxu0 %v576
        %v820 = vpop.f32.mrb[0].mxu0
        %v821 = vadd.f32 %v432, %v820
        %v822 = vpop.f32.mrb[0].mxu0
        %v823 = vpop.f32.mrb[0].mxu0
        %v824 = vadd.f32 %v432, %v823
        %v825 = vpop.f32.mrb[0].mxu0
        %826 = vmatprep.mubr.bf16.mxu0 0
        %827 = vmatmul.mubr.bf16.gmra.mrb[0].mxu0 %v577
        %v828 = vpop.f32.mrb[0].mxu0
        %v829 = vadd.f32 %v432, %v828
        %v830 = vpop.f32.mrb[0].mxu0
        %v831 = vpop.f32.mrb[0].mxu0
        %v832 = vadd.f32 %v432, %v831
        %v833 = vpop.f32.mrb[0].mxu0
        %834 = vmatprep.mubr.bf16.mxu0 0
        %835 = vmatmul.mubr.bf16.gmra.mrb[0].mxu0 %v578
        %v836 = vpop.f32.mrb[0].mxu0
        %v837 = vadd.f32 %v432, %v836
        %v838 = vpop.f32.mrb[0].mxu0
        %v839 = vpop.f32.mrb[0].mxu0
        %v840 = vadd.f32 %v432, %v839
        %v841 = vpop.f32.mrb[0].mxu0
        %842 = vmatprep.mubr.bf16.mxu0 0
        %843 = vmatmul.mubr.bf16.gmra.mrb[0].mxu0 %v579
        %v844 = vpop.f32.mrb[0].mxu0
        %v845 = vadd.f32 %v432, %v844
        %v846 = vpop.f32.mrb[0].mxu0
        %v847 = vpop.f32.mrb[0].mxu0
        %v848 = vadd.f32 %v432, %v847
        %v849 = vpop.f32.mrb[0].mxu0
        %850 = vmatprep.mubr.bf16.mxu0 0
        %851 = vmatmul.mubr.bf16.gmra.mrb[0].mxu0 %v580
        %v852 = vpop.f32.mrb[0].mxu0
        %v853 = vadd.f32 %v432, %v852
        %v854 = vpop.f32.mrb[0].mxu0
        %v855 = vpop.f32.mrb[0].mxu0
        %v856 = vadd.f32 %v432, %v855
        %v857 = vpop.f32.mrb[0].mxu0
        %858 = vmatprep.mubr.bf16.mxu0 0
        %859 = vmatmul.mubr.bf16.gmra.mrb[0].mxu0 %v581
        %v860 = vpop.f32.mrb[0].mxu0
        %v861 = vadd.f32 %v432, %v860
        %v862 = vpop.f32.mrb[0].mxu0
        %v863 = vpop.f32.mrb[0].mxu0
        %v864 = vadd.f32 %v432, %v863
        %v865 = vpop.f32.mrb[0].mxu0
        %866 = vmatprep.mubr.bf16.mxu0 0
        %867 = vmatmul.mubr.bf16.gmra.mrb[0].mxu0 %v582
        %v868 = vpop.f32.mrb[0].mxu0
        %v869 = vadd.f32 %v432, %v868
        %v870 = vpop.f32.mrb[0].mxu0
        %v871 = vpop.f32.mrb[0].mxu0
        %v872 = vadd.f32 %v432, %v871
        %v873 = vpop.f32.mrb[0].mxu0
        %874 = vmatprep.mubr.bf16.mxu0 0
        %875 = vmatmul.mubr.bf16.gmra.mrb[0].mxu0 %v583
        %v876 = vpop.f32.mrb[0].mxu0
        %v877 = vadd.f32 %v432, %v876
        %v878 = vpop.f32.mrb[0].mxu0
        %v879 = vpop.f32.mrb[0].mxu0
        %v880 = vadd.f32 %v432, %v879
        %v881 = vpop.f32.mrb[0].mxu0
        %882 = vmatprep.mubr.bf16.mxu0 0
        %883 = vmatmul.mubr.bf16.gmra.mrb[0].mxu0 %v584
        %v884 = vpop.f32.mrb[0].mxu0
        %v885 = vadd.f32 %v432, %v884
        %v886 = vpop.f32.mrb[0].mxu0
        %v887 = vpop.f32.mrb[0].mxu0
        %v888 = vadd.f32 %v432, %v887
        %v889 = vpop.f32.mrb[0].mxu0
        %890 = vmatprep.mubr.bf16.mxu0 0
        %891 = vmatmul.mubr.bf16.gmra.mrb[0].mxu0 %v585
        %v892 = vpop.f32.mrb[0].mxu0
        %v893 = vadd.f32 %v432, %v892
        %v894 = vpop.f32.mrb[0].mxu0
        %v895 = vpop.f32.mrb[0].mxu0
        %v896 = vadd.f32 %v432, %v895
        %v897 = vpop.f32.mrb[0].mxu0
        %898 = vmatprep.mubr.bf16.mxu0 0
        %899 = vmatmul.mubr.bf16.gmra.mrb[0].mxu0 %v586
        %v900 = vpop.f32.mrb[0].mxu0
        %v901 = vadd.f32 %v432, %v900
        %v902 = vpop.f32.mrb[0].mxu0
        %v903 = vpop.f32.mrb[0].mxu0
        %v904 = vadd.f32 %v432, %v903
        %v905 = vpop.f32.mrb[0].mxu0
        %906 = vmatprep.mubr.bf16.mxu0 0
        %907 = vmatmul.mubr.bf16.gmra.mrb[0].mxu0 %v587
        %v908 = vpop.f32.mrb[0].mxu0
        %v909 = vadd.f32 %v432, %v908
        %v910 = vpop.f32.mrb[0].mxu0
        %v911 = vpop.f32.mrb[0].mxu0
        %v912 = vadd.f32 %v432, %v911
        %v913 = vpop.f32.mrb[0].mxu0
        %914 = vmatprep.mubr.bf16.mxu0 0
        %915 = vmatmul.mubr.bf16.gmra.mrb[0].mxu0 %v588
        %v916 = vpop.f32.mrb[0].mxu0
        %v917 = vadd.f32 %v432, %v916
        %v918 = vpop.f32.mrb[0].mxu0
        %v919 = vpop.f32.mrb[0].mxu0
        %v920 = vadd.f32 %v432, %v919
        %v921 = vpop.f32.mrb[0].mxu0
        %922 = vmatprep.mubr.bf16.mxu0 0
        %923 = vmatmul.mubr.bf16.gmra.mrb[0].mxu0 %v589
        %v924 = vpop.f32.mrb[0].mxu0
        %v925 = vadd.f32 %v432, %v924
        %v926 = vpop.f32.mrb[0].mxu0
        %v927 = vpop.f32.mrb[0].mxu0
        %v928 = vadd.f32 %v432, %v927
        %v929 = vpop.f32.mrb[0].mxu0
        %930 = vmatprep.mubr.bf16.mxu0 0
        %931 = vmatmul.mubr.bf16.gmra.mrb[0].mxu0 %v590
        %v932 = vpop.f32.mrb[0].mxu0
        %v933 = vadd.f32 %v432, %v932
        %v934 = vpop.f32.mrb[0].mxu0
        %v935 = vpop.f32.mrb[0].mxu0
        %v936 = vadd.f32 %v432, %v935
        %v937 = vpop.f32.mrb[0].mxu0
        %938 = vmatprep.mubr.bf16.mxu0 0
        %939 = vmatmul.mubr.bf16.gmra.mrb[0].mxu0 %v591
        %v940 = vpop.f32.mrb[0].mxu0
        %v941 = vadd.f32 %v432, %v940
        %v942 = vpop.f32.mrb[0].mxu0
        %v943 = vpop.f32.mrb[0].mxu0
        %v944 = vadd.f32 %v432, %v943
        %v945 = vpop.f32.mrb[0].mxu0
        %946 = vmatprep.mubr.bf16.mxu0 0
        %947 = vmatmul.mubr.bf16.gmra.mrb[0].mxu0 %v592
        %v948 = vpop.f32.mrb[0].mxu0
        %v949 = vadd.f32 %v432, %v948
        %v950 = vpop.f32.mrb[0].mxu0
        %v951 = vpop.f32.mrb[0].mxu0
        %v952 = vadd.f32 %v432, %v951
        %v953 = vpop.f32.mrb[0].mxu0
        %954 = vmatprep.mubr.bf16.mxu0 0
        %955 = vmatmul.mubr.bf16.gmra.mrb[0].mxu0 %v593
        %v956 = vpop.f32.mrb[0].mxu0
        %v957 = vadd.f32 %v432, %v956
        %v958 = vpop.f32.mrb[0].mxu0
        %v959 = vpop.f32.mrb[0].mxu0
        %v960 = vadd.f32 %v432, %v959
        %v961 = vpop.f32.mrb[0].mxu0
        %962 = vdwg.mxu0
        %v963 = vmax.f32 %v709, 0.0
        %v964 = vmax.f32 %v712, 0.0
        %v965 = vmax.f32 %v717, 0.0
        %v966 = vmax.f32 %v720, 0.0
        %v967 = vmax.f32 %v725, 0.0
        %v968 = vmax.f32 %v728, 0.0
        %v969 = vmax.f32 %v733, 0.0
        %v970 = vmax.f32 %v736, 0.0
        %v971 = vmax.f32 %v741, 0.0
        %v972 = vmax.f32 %v744, 0.0
        %v973 = vmax.f32 %v749, 0.0
        %v974 = vmax.f32 %v752, 0.0
        %v975 = vmax.f32 %v757, 0.0
        %v976 = vmax.f32 %v760, 0.0
        %v977 = vmax.f32 %v765, 0.0
        %v978 = vmax.f32 %v768, 0.0
        %v979 = vmax.f32 %v773, 0.0
        %v980 = vmax.f32 %v776, 0.0
        %v981 = vmax.f32 %v781, 0.0
        %v982 = vmax.f32 %v784, 0.0
        %v983 = vmax.f32 %v789, 0.0
        %v984 = vmax.f32 %v792, 0.0
        %v985 = vmax.f32 %v797, 0.0
        %v986 = vmax.f32 %v800, 0.0
        %v987 = vmax.f32 %v805, 0.0
        %v988 = vmax.f32 %v808, 0.0
        %v989 = vmax.f32 %v813, 0.0
        %v990 = vmax.f32 %v816, 0.0
        %v991 = vmax.f32 %v821, 0.0
        %v992 = vmax.f32 %v824, 0.0
        %v993 = vmax.f32 %v829, 0.0
        %v994 = vmax.f32 %v832, 0.0
        %v995 = vmax.f32 %v837, 0.0
        %v996 = vmax.f32 %v840, 0.0
        %v997 = vmax.f32 %v845, 0.0
        %v998 = vmax.f32 %v848, 0.0
        %v999 = vmax.f32 %v853, 0.0
        %v1000 = vmax.f32 %v856, 0.0
        %v1001 = vmax.f32 %v861, 0.0
        %v1002 = vmax.f32 %v864, 0.0
        %v1003 = vmax.f32 %v869, 0.0
        %v1004 = vmax.f32 %v872, 0.0
        %v1005 = vmax.f32 %v877, 0.0
        %v1006 = vmax.f32 %v880, 0.0
        %v1007 = vmax.f32 %v885, 0.0
        %v1008 = vmax.f32 %v888, 0.0
        %v1009 = vmax.f32 %v893, 0.0
        %v1010 = vmax.f32 %v896, 0.0
        %v1011 = vmax.f32 %v901, 0.0
        %v1012 = vmax.f32 %v904, 0.0
        %v1013 = vmax.f32 %v909, 0.0
        %v1014 = vmax.f32 %v912, 0.0
        %v1015 = vmax.f32 %v917, 0.0
        %v1016 = vmax.f32 %v920, 0.0
        %v1017 = vmax.f32 %v925, 0.0
        %v1018 = vmax.f32 %v928, 0.0
        %v1019 = vmax.f32 %v933, 0.0
        %v1020 = vmax.f32 %v936, 0.0
        %v1021 = vmax.f32 %v941, 0.0
        %v1022 = vmax.f32 %v944, 0.0
        %v1023 = vmax.f32 %v949, 0.0
        %v1024 = vmax.f32 %v952, 0.0
        %v1025 = vmax.f32 %v957, 0.0
        %v1026 = vmax.f32 %v960, 0.0
        %v1027 = vlaneseq
        %v1028 = vshrl.u32 %v1027, 7
        %v1029 = vadd.s32 %v1028, 8
        %v1030 = vadd.s32 %v1028, 16
        %v1031 = vadd.s32 %v1028, 24
        %v1032 = vadd.s32 %v1028, 32
        %v1033 = vadd.s32 %v1028, 40
        %v1034 = vadd.s32 %v1028, 48
        %v1035 = vadd.s32 %v1028, 56
        %v1036 = vadd.s32 %v1028, 64
        %v1037 = vadd.s32 %v1028, 72
        %v1038 = vadd.s32 %v1028, 80
        %v1039 = vadd.s32 %v1028, 88
        %v1040 = vadd.s32 %v1028, 96
        %v1041 = vadd.s32 %v1028, 104
        %v1042 = vadd.s32 %v1028, 112
        %v1043 = vadd.s32 %v1028, 120
        %v1044 = vadd.s32 %v1028, 128
        %v1045 = vadd.s32 %v1028, 136
        %v1046 = vadd.s32 %v1028, 144
        %v1047 = vadd.s32 %v1028, 152
        %v1048 = vadd.s32 %v1028, 160
        %v1049 = vadd.s32 %v1028, 168
        %v1050 = vadd.s32 %v1028, 176
        %v1051 = vadd.s32 %v1028, 184
        %v1052 = vadd.s32 %v1028, 192
        %v1053 = vadd.s32 %v1028, 200
        %v1054 = vadd.s32 %v1028, 208
        %v1055 = vadd.s32 %v1028, 216
        %v1056 = vadd.s32 %v1028, 224
        %v1057 = vadd.s32 %v1028, 232
        %v1058 = vadd.s32 %v1028, 240
        %v1059 = vadd.s32 %v1028, 248
        %vm1060 = vcmp.lt.s32.totalorder %v1028, 0
        %v1061 = vsub.s32 0, %v1028
        %v1062 = vsel %vm1060, %v1061, %v1028
        %v1063 = vshrl.u32 %v1062, 4
        %v1064 = vand.u32 %v1062, 15
        %v1065 = vsub.s32 0, %v1064
        %v1066 = vsel %vm1060, %v1065, %v1064
        %vm1067 = vcmp.lt.s32.totalorder %v1029, 0
        %v1068 = vsub.s32 0, %v1029
        %v1069 = vsel %vm1067, %v1068, %v1029
        %v1070 = vshrl.u32 %v1069, 4
        %v1071 = vand.u32 %v1069, 15
        %v1072 = vsub.s32 0, %v1071
        %v1073 = vsel %vm1067, %v1072, %v1071
        %vm1074 = vcmp.lt.s32.totalorder %v1030, 0
        %v1075 = vsub.s32 0, %v1030
        %v1076 = vsel %vm1074, %v1075, %v1030
        %v1077 = vshrl.u32 %v1076, 4
        %v1078 = vand.u32 %v1076, 15
        %v1079 = vsub.s32 0, %v1078
        %v1080 = vsel %vm1074, %v1079, %v1078
        %vm1081 = vcmp.lt.s32.totalorder %v1031, 0
        %v1082 = vsub.s32 0, %v1031
        %v1083 = vsel %vm1081, %v1082, %v1031
        %v1084 = vshrl.u32 %v1083, 4
        %v1085 = vand.u32 %v1083, 15
        %v1086 = vsub.s32 0, %v1085
        %v1087 = vsel %vm1081, %v1086, %v1085
        %vm1088 = vcmp.lt.s32.totalorder %v1032, 0
        %v1089 = vsub.s32 0, %v1032
        %v1090 = vsel %vm1088, %v1089, %v1032
        %v1091 = vshrl.u32 %v1090, 4
        %v1092 = vand.u32 %v1090, 15
        %v1093 = vsub.s32 0, %v1092
        %v1094 = vsel %vm1088, %v1093, %v1092
        %vm1095 = vcmp.lt.s32.totalorder %v1033, 0
        %v1096 = vsub.s32 0, %v1033
        %v1097 = vsel %vm1095, %v1096, %v1033
        %v1098 = vshrl.u32 %v1097, 4
        %v1099 = vand.u32 %v1097, 15
        %v1100 = vsub.s32 0, %v1099
        %v1101 = vsel %vm1095, %v1100, %v1099
        %vm1102 = vcmp.lt.s32.totalorder %v1034, 0
        %v1103 = vsub.s32 0, %v1034
        %v1104 = vsel %vm1102, %v1103, %v1034
        %v1105 = vshrl.u32 %v1104, 4
        %v1106 = vand.u32 %v1104, 15
        %v1107 = vsub.s32 0, %v1106
        %v1108 = vsel %vm1102, %v1107, %v1106
        %vm1109 = vcmp.lt.s32.totalorder %v1035, 0
        %v1110 = vsub.s32 0, %v1035
        %v1111 = vsel %vm1109, %v1110, %v1035
        %v1112 = vshrl.u32 %v1111, 4
        %v1113 = vand.u32 %v1111, 15
        %v1114 = vsub.s32 0, %v1113
        %v1115 = vsel %vm1109, %v1114, %v1113
        %vm1116 = vcmp.lt.s32.totalorder %v1036, 0
        %v1117 = vsub.s32 0, %v1036
        %v1118 = vsel %vm1116, %v1117, %v1036
        %v1119 = vshrl.u32 %v1118, 4
        %v1120 = vand.u32 %v1118, 15
        %v1121 = vsub.s32 0, %v1120
        %v1122 = vsel %vm1116, %v1121, %v1120
        %vm1123 = vcmp.lt.s32.totalorder %v1037, 0
        %v1124 = vsub.s32 0, %v1037
        %v1125 = vsel %vm1123, %v1124, %v1037
        %v1126 = vshrl.u32 %v1125, 4
        %v1127 = vand.u32 %v1125, 15
        %v1128 = vsub.s32 0, %v1127
        %v1129 = vsel %vm1123, %v1128, %v1127
        %vm1130 = vcmp.lt.s32.totalorder %v1038, 0
        %v1131 = vsub.s32 0, %v1038
        %v1132 = vsel %vm1130, %v1131, %v1038
        %v1133 = vshrl.u32 %v1132, 4
        %v1134 = vand.u32 %v1132, 15
        %v1135 = vsub.s32 0, %v1134
        %v1136 = vsel %vm1130, %v1135, %v1134
        %vm1137 = vcmp.lt.s32.totalorder %v1039, 0
        %v1138 = vsub.s32 0, %v1039
        %v1139 = vsel %vm1137, %v1138, %v1039
        %v1140 = vshrl.u32 %v1139, 4
        %v1141 = vand.u32 %v1139, 15
        %v1142 = vsub.s32 0, %v1141
        %v1143 = vsel %vm1137, %v1142, %v1141
        %vm1144 = vcmp.lt.s32.totalorder %v1040, 0
        %v1145 = vsub.s32 0, %v1040
        %v1146 = vsel %vm1144, %v1145, %v1040
        %v1147 = vshrl.u32 %v1146, 4
        %v1148 = vand.u32 %v1146, 15
        %v1149 = vsub.s32 0, %v1148
        %v1150 = vsel %vm1144, %v1149, %v1148
        %vm1151 = vcmp.lt.s32.totalorder %v1041, 0
        %v1152 = vsub.s32 0, %v1041
        %v1153 = vsel %vm1151, %v1152, %v1041
        %v1154 = vshrl.u32 %v1153, 4
        %v1155 = vand.u32 %v1153, 15
        %v1156 = vsub.s32 0, %v1155
        %v1157 = vsel %vm1151, %v1156, %v1155
        %vm1158 = vcmp.lt.s32.totalorder %v1042, 0
        %v1159 = vsub.s32 0, %v1042
        %v1160 = vsel %vm1158, %v1159, %v1042
        %v1161 = vshrl.u32 %v1160, 4
        %v1162 = vand.u32 %v1160, 15
        %v1163 = vsub.s32 0, %v1162
        %v1164 = vsel %vm1158, %v1163, %v1162
        %vm1165 = vcmp.lt.s32.totalorder %v1043, 0
        %v1166 = vsub.s32 0, %v1043
        %v1167 = vsel %vm1165, %v1166, %v1043
        %v1168 = vshrl.u32 %v1167, 4
        %v1169 = vand.u32 %v1167, 15
        %v1170 = vsub.s32 0, %v1169
        %v1171 = vsel %vm1165, %v1170, %v1169
        %vm1172 = vcmp.lt.s32.totalorder %v1044, 0
        %v1173 = vsub.s32 0, %v1044
        %v1174 = vsel %vm1172, %v1173, %v1044
        %v1175 = vshrl.u32 %v1174, 4
        %v1176 = vand.u32 %v1174, 15
        %v1177 = vsub.s32 0, %v1176
        %v1178 = vsel %vm1172, %v1177, %v1176
        %vm1179 = vcmp.lt.s32.totalorder %v1045, 0
        %v1180 = vsub.s32 0, %v1045
        %v1181 = vsel %vm1179, %v1180, %v1045
        %v1182 = vshrl.u32 %v1181, 4
        %v1183 = vand.u32 %v1181, 15
        %v1184 = vsub.s32 0, %v1183
        %v1185 = vsel %vm1179, %v1184, %v1183
        %vm1186 = vcmp.lt.s32.totalorder %v1046, 0
        %v1187 = vsub.s32 0, %v1046
        %v1188 = vsel %vm1186, %v1187, %v1046
        %v1189 = vshrl.u32 %v1188, 4
        %v1190 = vand.u32 %v1188, 15
        %v1191 = vsub.s32 0, %v1190
        %v1192 = vsel %vm1186, %v1191, %v1190
        %vm1193 = vcmp.lt.s32.totalorder %v1047, 0
        %v1194 = vsub.s32 0, %v1047
        %v1195 = vsel %vm1193, %v1194, %v1047
        %v1196 = vshrl.u32 %v1195, 4
        %v1197 = vand.u32 %v1195, 15
        %v1198 = vsub.s32 0, %v1197
        %v1199 = vsel %vm1193, %v1198, %v1197
        %vm1200 = vcmp.lt.s32.totalorder %v1048, 0
        %v1201 = vsub.s32 0, %v1048
        %v1202 = vsel %vm1200, %v1201, %v1048
        %v1203 = vshrl.u32 %v1202, 4
        %v1204 = vand.u32 %v1202, 15
        %v1205 = vsub.s32 0, %v1204
        %v1206 = vsel %vm1200, %v1205, %v1204
        %vm1207 = vcmp.lt.s32.totalorder %v1049, 0
        %v1208 = vsub.s32 0, %v1049
        %v1209 = vsel %vm1207, %v1208, %v1049
        %v1210 = vshrl.u32 %v1209, 4
        %v1211 = vand.u32 %v1209, 15
        %v1212 = vsub.s32 0, %v1211
        %v1213 = vsel %vm1207, %v1212, %v1211
        %vm1214 = vcmp.lt.s32.totalorder %v1050, 0
        %v1215 = vsub.s32 0, %v1050
        %v1216 = vsel %vm1214, %v1215, %v1050
        %v1217 = vshrl.u32 %v1216, 4
        %v1218 = vand.u32 %v1216, 15
        %v1219 = vsub.s32 0, %v1218
        %v1220 = vsel %vm1214, %v1219, %v1218
        %vm1221 = vcmp.lt.s32.totalorder %v1051, 0
        %v1222 = vsub.s32 0, %v1051
        %v1223 = vsel %vm1221, %v1222, %v1051
        %v1224 = vshrl.u32 %v1223, 4
        %v1225 = vand.u32 %v1223, 15
        %v1226 = vsub.s32 0, %v1225
        %v1227 = vsel %vm1221, %v1226, %v1225
        %vm1228 = vcmp.lt.s32.totalorder %v1052, 0
        %v1229 = vsub.s32 0, %v1052
        %v1230 = vsel %vm1228, %v1229, %v1052
        %v1231 = vshrl.u32 %v1230, 4
        %v1232 = vand.u32 %v1230, 15
        %v1233 = vsub.s32 0, %v1232
        %v1234 = vsel %vm1228, %v1233, %v1232
        %vm1235 = vcmp.lt.s32.totalorder %v1053, 0
        %v1236 = vsub.s32 0, %v1053
        %v1237 = vsel %vm1235, %v1236, %v1053
        %v1238 = vshrl.u32 %v1237, 4
        %v1239 = vand.u32 %v1237, 15
        %v1240 = vsub.s32 0, %v1239
        %v1241 = vsel %vm1235, %v1240, %v1239
        %vm1242 = vcmp.lt.s32.totalorder %v1054, 0
        %v1243 = vsub.s32 0, %v1054
        %v1244 = vsel %vm1242, %v1243, %v1054
        %v1245 = vshrl.u32 %v1244, 4
        %v1246 = vand.u32 %v1244, 15
        %v1247 = vsub.s32 0, %v1246
        %v1248 = vsel %vm1242, %v1247, %v1246
        %vm1249 = vcmp.lt.s32.totalorder %v1055, 0
        %v1250 = vsub.s32 0, %v1055
        %v1251 = vsel %vm1249, %v1250, %v1055
        %v1252 = vshrl.u32 %v1251, 4
        %v1253 = vand.u32 %v1251, 15
        %v1254 = vsub.s32 0, %v1253
        %v1255 = vsel %vm1249, %v1254, %v1253
        %vm1256 = vcmp.lt.s32.totalorder %v1056, 0
        %v1257 = vsub.s32 0, %v1056
        %v1258 = vsel %vm1256, %v1257, %v1056
        %v1259 = vshrl.u32 %v1258, 4
        %v1260 = vand.u32 %v1258, 15
        %v1261 = vsub.s32 0, %v1260
        %v1262 = vsel %vm1256, %v1261, %v1260
        %vm1263 = vcmp.lt.s32.totalorder %v1057, 0
        %v1264 = vsub.s32 0, %v1057
        %v1265 = vsel %vm1263, %v1264, %v1057
        %v1266 = vshrl.u32 %v1265, 4
        %v1267 = vand.u32 %v1265, 15
        %v1268 = vsub.s32 0, %v1267
        %v1269 = vsel %vm1263, %v1268, %v1267
        %vm1270 = vcmp.lt.s32.totalorder %v1058, 0
        %v1271 = vsub.s32 0, %v1058
        %v1272 = vsel %vm1270, %v1271, %v1058
        %v1273 = vshrl.u32 %v1272, 4
        %v1274 = vand.u32 %v1272, 15
        %v1275 = vsub.s32 0, %v1274
        %v1276 = vsel %vm1270, %v1275, %v1274
        %vm1277 = vcmp.lt.s32.totalorder %v1059, 0
        %v1278 = vsub.s32 0, %v1059
        %v1279 = vsel %vm1277, %v1278, %v1059
        %v1280 = vshrl.u32 %v1279, 4
        %v1281 = vand.u32 %v1279, 15
        %v1282 = vsub.s32 0, %v1281
        %v1283 = vsel %vm1277, %v1282, %v1281
        %vm1284 = vcmp.ne.s32.totalorder %v1066, 0
        %vm1285 = vcmp.ne.s32.totalorder %v1073, 0
        %vm1286 = vcmp.ne.s32.totalorder %v1080, 0
        %vm1287 = vcmp.ne.s32.totalorder %v1087, 0
        %vm1288 = vcmp.ne.s32.totalorder %v1094, 0
        %vm1289 = vcmp.ne.s32.totalorder %v1101, 0
        %vm1290 = vcmp.ne.s32.totalorder %v1108, 0
        %vm1291 = vcmp.ne.s32.totalorder %v1115, 0
        %vm1292 = vcmp.ne.s32.totalorder %v1122, 0
        %vm1293 = vcmp.ne.s32.totalorder %v1129, 0
        %vm1294 = vcmp.ne.s32.totalorder %v1136, 0
        %vm1295 = vcmp.ne.s32.totalorder %v1143, 0
        %vm1296 = vcmp.ne.s32.totalorder %v1150, 0
        %vm1297 = vcmp.ne.s32.totalorder %v1157, 0
        %vm1298 = vcmp.ne.s32.totalorder %v1164, 0
        %vm1299 = vcmp.ne.s32.totalorder %v1171, 0
        %vm1300 = vcmp.ne.s32.totalorder %v1178, 0
        %vm1301 = vcmp.ne.s32.totalorder %v1185, 0
        %vm1302 = vcmp.ne.s32.totalorder %v1192, 0
        %vm1303 = vcmp.ne.s32.totalorder %v1199, 0
        %vm1304 = vcmp.ne.s32.totalorder %v1206, 0
        %vm1305 = vcmp.ne.s32.totalorder %v1213, 0
        %vm1306 = vcmp.ne.s32.totalorder %v1220, 0
        %vm1307 = vcmp.ne.s32.totalorder %v1227, 0
        %vm1308 = vcmp.ne.s32.totalorder %v1234, 0
        %vm1309 = vcmp.ne.s32.totalorder %v1241, 0
        %vm1310 = vcmp.ne.s32.totalorder %v1248, 0
        %vm1311 = vcmp.ne.s32.totalorder %v1255, 0
        %vm1312 = vcmp.ne.s32.totalorder %v1262, 0
        %vm1313 = vcmp.ne.s32.totalorder %v1269, 0
        %vm1314 = vcmp.ne.s32.totalorder %v1276, 0
        %vm1315 = vcmp.ne.s32.totalorder %v1283, 0
        %vm1316 = vcmp.lt.s32.totalorder %v1066, 0
        %vm1317 = vcmp.lt.s32.totalorder %v1073, 0
        %vm1318 = vcmp.lt.s32.totalorder %v1080, 0
        %vm1319 = vcmp.lt.s32.totalorder %v1087, 0
        %vm1320 = vcmp.lt.s32.totalorder %v1094, 0
        %vm1321 = vcmp.lt.s32.totalorder %v1101, 0
        %vm1322 = vcmp.lt.s32.totalorder %v1108, 0
        %vm1323 = vcmp.lt.s32.totalorder %v1115, 0
        %vm1324 = vcmp.lt.s32.totalorder %v1122, 0
        %vm1325 = vcmp.lt.s32.totalorder %v1129, 0
        %vm1326 = vcmp.lt.s32.totalorder %v1136, 0
        %vm1327 = vcmp.lt.s32.totalorder %v1143, 0
        %vm1328 = vcmp.lt.s32.totalorder %v1150, 0
        %vm1329 = vcmp.lt.s32.totalorder %v1157, 0
        %vm1330 = vcmp.lt.s32.totalorder %v1164, 0
        %vm1331 = vcmp.lt.s32.totalorder %v1171, 0
        %vm1332 = vcmp.lt.s32.totalorder %v1178, 0
        %vm1333 = vcmp.lt.s32.totalorder %v1185, 0
        %vm1334 = vcmp.lt.s32.totalorder %v1192, 0
        %vm1335 = vcmp.lt.s32.totalorder %v1199, 0
        %vm1336 = vcmp.lt.s32.totalorder %v1206, 0
        %vm1337 = vcmp.lt.s32.totalorder %v1213, 0
        %vm1338 = vcmp.lt.s32.totalorder %v1220, 0
        %vm1339 = vcmp.lt.s32.totalorder %v1227, 0
        %vm1340 = vcmp.lt.s32.totalorder %v1234, 0
        %vm1341 = vcmp.lt.s32.totalorder %v1241, 0
        %vm1342 = vcmp.lt.s32.totalorder %v1248, 0
        %vm1343 = vcmp.lt.s32.totalorder %v1255, 0
        %vm1344 = vcmp.lt.s32.totalorder %v1262, 0
        %vm1345 = vcmp.lt.s32.totalorder %v1269, 0
        %vm1346 = vcmp.lt.s32.totalorder %v1276, 0
        %vm1347 = vcmp.lt.s32.totalorder %v1283, 0
        %vm1348 = vmand %vm1316, %vm1284
        %vm1349 = vmand %vm1317, %vm1285
        %vm1350 = vmand %vm1318, %vm1286
        %vm1351 = vmand %vm1319, %vm1287
        %vm1352 = vmand %vm1320, %vm1288
        %vm1353 = vmand %vm1321, %vm1289
        %vm1354 = vmand %vm1322, %vm1290
        %vm1355 = vmand %vm1323, %vm1291
        %vm1356 = vmand %vm1324, %vm1292
        %vm1357 = vmand %vm1325, %vm1293
        %vm1358 = vmand %vm1326, %vm1294
        %vm1359 = vmand %vm1327, %vm1295
        %vm1360 = vmand %vm1328, %vm1296
        %vm1361 = vmand %vm1329, %vm1297
        %vm1362 = vmand %vm1330, %vm1298
        %vm1363 = vmand %vm1331, %vm1299
        %vm1364 = vmand %vm1332, %vm1300
        %vm1365 = vmand %vm1333, %vm1301
        %vm1366 = vmand %vm1334, %vm1302
        %vm1367 = vmand %vm1335, %vm1303
        %vm1368 = vmand %vm1336, %vm1304
        %vm1369 = vmand %vm1337, %vm1305
        %vm1370 = vmand %vm1338, %vm1306
        %vm1371 = vmand %vm1339, %vm1307
        %vm1372 = vmand %vm1340, %vm1308
        %vm1373 = vmand %vm1341, %vm1309
        %vm1374 = vmand %vm1342, %vm1310
        %vm1375 = vmand %vm1343, %vm1311
        %vm1376 = vmand %vm1344, %vm1312
        %vm1377 = vmand %vm1345, %vm1313
        %vm1378 = vmand %vm1346, %vm1314
        %vm1379 = vmand %vm1347, %vm1315
        %v1380 = vadd.s32 %v1066, 16
        %v1381 = vadd.s32 %v1073, 16
        %v1382 = vadd.s32 %v1080, 16
        %v1383 = vadd.s32 %v1087, 16
        %v1384 = vadd.s32 %v1094, 16
        %v1385 = vadd.s32 %v1101, 16
        %v1386 = vadd.s32 %v1108, 16
        %v1387 = vadd.s32 %v1115, 16
        %v1388 = vadd.s32 %v1122, 16
        %v1389 = vadd.s32 %v1129, 16
        %v1390 = vadd.s32 %v1136, 16
        %v1391 = vadd.s32 %v1143, 16
        %v1392 = vadd.s32 %v1150, 16
        %v1393 = vadd.s32 %v1157, 16
        %v1394 = vadd.s32 %v1164, 16
        %v1395 = vadd.s32 %v1171, 16
        %v1396 = vadd.s32 %v1178, 16
        %v1397 = vadd.s32 %v1185, 16
        %v1398 = vadd.s32 %v1192, 16
        %v1399 = vadd.s32 %v1199, 16
        %v1400 = vadd.s32 %v1206, 16
        %v1401 = vadd.s32 %v1213, 16
        %v1402 = vadd.s32 %v1220, 16
        %v1403 = vadd.s32 %v1227, 16
        %v1404 = vadd.s32 %v1234, 16
        %v1405 = vadd.s32 %v1241, 16
        %v1406 = vadd.s32 %v1248, 16
        %v1407 = vadd.s32 %v1255, 16
        %v1408 = vadd.s32 %v1262, 16
        %v1409 = vadd.s32 %v1269, 16
        %v1410 = vadd.s32 %v1276, 16
        %v1411 = vadd.s32 %v1283, 16
        %v1412 = vsel %vm1348, %v1380, %v1066
        %v1413 = vsel %vm1349, %v1381, %v1073
        %v1414 = vsel %vm1350, %v1382, %v1080
        %v1415 = vsel %vm1351, %v1383, %v1087
        %v1416 = vsel %vm1352, %v1384, %v1094
        %v1417 = vsel %vm1353, %v1385, %v1101
        %v1418 = vsel %vm1354, %v1386, %v1108
        %v1419 = vsel %vm1355, %v1387, %v1115
        %v1420 = vsel %vm1356, %v1388, %v1122
        %v1421 = vsel %vm1357, %v1389, %v1129
        %v1422 = vsel %vm1358, %v1390, %v1136
        %v1423 = vsel %vm1359, %v1391, %v1143
        %v1424 = vsel %vm1360, %v1392, %v1150
        %v1425 = vsel %vm1361, %v1393, %v1157
        %v1426 = vsel %vm1362, %v1394, %v1164
        %v1427 = vsel %vm1363, %v1395, %v1171
        %v1428 = vsel %vm1364, %v1396, %v1178
        %v1429 = vsel %vm1365, %v1397, %v1185
        %v1430 = vsel %vm1366, %v1398, %v1192
        %v1431 = vsel %vm1367, %v1399, %v1199
        %v1432 = vsel %vm1368, %v1400, %v1206
        %v1433 = vsel %vm1369, %v1401, %v1213
        %v1434 = vsel %vm1370, %v1402, %v1220
        %v1435 = vsel %vm1371, %v1403, %v1227
        %v1436 = vsel %vm1372, %v1404, %v1234
        %v1437 = vsel %vm1373, %v1405, %v1241
        %v1438 = vsel %vm1374, %v1406, %v1248
        %v1439 = vsel %vm1375, %v1407, %v1255
        %v1440 = vsel %vm1376, %v1408, %v1262
        %v1441 = vsel %vm1377, %v1409, %v1269
        %v1442 = vsel %vm1378, %v1410, %v1276
        %v1443 = vsel %vm1379, %v1411, %v1283
        %vm1444 = vcmp.ge.s32.totalorder %v1412, 1
        %vm1445 = vcmp.ge.s32.totalorder %v1413, 1
        %vm1446 = vcmp.ge.s32.totalorder %v1414, 1
        %vm1447 = vcmp.ge.s32.totalorder %v1415, 1
        %vm1448 = vcmp.ge.s32.totalorder %v1416, 1
        %vm1449 = vcmp.ge.s32.totalorder %v1417, 1
        %vm1450 = vcmp.ge.s32.totalorder %v1418, 1
        %vm1451 = vcmp.ge.s32.totalorder %v1419, 1
        %vm1452 = vcmp.ge.s32.totalorder %v1420, 1
        %vm1453 = vcmp.ge.s32.totalorder %v1421, 1
        %vm1454 = vcmp.ge.s32.totalorder %v1422, 1
        %vm1455 = vcmp.ge.s32.totalorder %v1423, 1
        %vm1456 = vcmp.ge.s32.totalorder %v1424, 1
        %vm1457 = vcmp.ge.s32.totalorder %v1425, 1
        %vm1458 = vcmp.ge.s32.totalorder %v1426, 1
        %vm1459 = vcmp.ge.s32.totalorder %v1427, 1
        %vm1460 = vcmp.ge.s32.totalorder %v1428, 1
        %vm1461 = vcmp.ge.s32.totalorder %v1429, 1
        %vm1462 = vcmp.ge.s32.totalorder %v1430, 1
        %vm1463 = vcmp.ge.s32.totalorder %v1431, 1
        %vm1464 = vcmp.ge.s32.totalorder %v1432, 1
        %vm1465 = vcmp.ge.s32.totalorder %v1433, 1
        %vm1466 = vcmp.ge.s32.totalorder %v1434, 1
        %vm1467 = vcmp.ge.s32.totalorder %v1435, 1
        %vm1468 = vcmp.ge.s32.totalorder %v1436, 1
        %vm1469 = vcmp.ge.s32.totalorder %v1437, 1
        %vm1470 = vcmp.ge.s32.totalorder %v1438, 1
        %vm1471 = vcmp.ge.s32.totalorder %v1439, 1
        %vm1472 = vcmp.ge.s32.totalorder %v1440, 1
        %vm1473 = vcmp.ge.s32.totalorder %v1441, 1
        %vm1474 = vcmp.ge.s32.totalorder %v1442, 1
        %vm1475 = vcmp.ge.s32.totalorder %v1443, 1
        %vm1476 = vcmp.le.s32.totalorder %v1412, 14
        %vm1477 = vcmp.le.s32.totalorder %v1413, 14
        %vm1478 = vcmp.le.s32.totalorder %v1414, 14
        %vm1479 = vcmp.le.s32.totalorder %v1415, 14
        %vm1480 = vcmp.le.s32.totalorder %v1416, 14
        %vm1481 = vcmp.le.s32.totalorder %v1417, 14
        %vm1482 = vcmp.le.s32.totalorder %v1418, 14
        %vm1483 = vcmp.le.s32.totalorder %v1419, 14
        %vm1484 = vcmp.le.s32.totalorder %v1420, 14
        %vm1485 = vcmp.le.s32.totalorder %v1421, 14
        %vm1486 = vcmp.le.s32.totalorder %v1422, 14
        %vm1487 = vcmp.le.s32.totalorder %v1423, 14
        %vm1488 = vcmp.le.s32.totalorder %v1424, 14
        %vm1489 = vcmp.le.s32.totalorder %v1425, 14
        %vm1490 = vcmp.le.s32.totalorder %v1426, 14
        %vm1491 = vcmp.le.s32.totalorder %v1427, 14
        %vm1492 = vcmp.le.s32.totalorder %v1428, 14
        %vm1493 = vcmp.le.s32.totalorder %v1429, 14
        %vm1494 = vcmp.le.s32.totalorder %v1430, 14
        %vm1495 = vcmp.le.s32.totalorder %v1431, 14
        %vm1496 = vcmp.le.s32.totalorder %v1432, 14
        %vm1497 = vcmp.le.s32.totalorder %v1433, 14
        %vm1498 = vcmp.le.s32.totalorder %v1434, 14
        %vm1499 = vcmp.le.s32.totalorder %v1435, 14
        %vm1500 = vcmp.le.s32.totalorder %v1436, 14
        %vm1501 = vcmp.le.s32.totalorder %v1437, 14
        %vm1502 = vcmp.le.s32.totalorder %v1438, 14
        %vm1503 = vcmp.le.s32.totalorder %v1439, 14
        %vm1504 = vcmp.le.s32.totalorder %v1440, 14
        %vm1505 = vcmp.le.s32.totalorder %v1441, 14
        %vm1506 = vcmp.le.s32.totalorder %v1442, 14
        %vm1507 = vcmp.le.s32.totalorder %v1443, 14
        %1508 = vst [vmem:[#allocation2] sm:$0xff] 0
        %1509 = vst [vmem:[#allocation2 + $0x8] sm:$0xff] 0
        %1510 = vst [vmem:[#allocation2 + $0x90] sm:$0xff] 0
        %1511 = vst [vmem:[#allocation2 + $0x98] sm:$0xff] 0
        %v1512 = vpack.c.bf16 %v964, %v963
        %v1513 = vpack.c.bf16 %v966, %v965
        %v1514 = vpack.c.bf16 %v968, %v967
        %v1515 = vpack.c.bf16 %v970, %v969
        %v1516 = vpack.c.bf16 %v972, %v971
        %v1517 = vpack.c.bf16 %v974, %v973
        %v1518 = vpack.c.bf16 %v976, %v975
        %v1519 = vpack.c.bf16 %v978, %v977
        %v1520 = vpack.c.bf16 %v980, %v979
        %v1521 = vpack.c.bf16 %v982, %v981
        %v1522 = vpack.c.bf16 %v984, %v983
        %v1523 = vpack.c.bf16 %v986, %v985
        %v1524 = vpack.c.bf16 %v988, %v987
        %v1525 = vpack.c.bf16 %v990, %v989
        %v1526 = vpack.c.bf16 %v992, %v991
        %v1527 = vpack.c.bf16 %v994, %v993
        %1528 = vst [vmem:[#allocation2 + $0x10] sm:$0xff] %v1512
        %1529 = vst [vmem:[#allocation2 + $0x18] sm:$0xff] %v1513
        %1530 = vst [vmem:[#allocation2 + $0x20] sm:$0xff] %v1514
        %1531 = vst [vmem:[#allocation2 + $0x28] sm:$0xff] %v1515
        %1532 = vst [vmem:[#allocation2 + $0x30] sm:$0xff] %v1516
        %1533 = vst [vmem:[#allocation2 + $0x38] sm:$0xff] %v1517
        %1534 = vst [vmem:[#allocation2 + $0x40] sm:$0xff] %v1518
        %1535 = vst [vmem:[#allocation2 + $0x48] sm:$0xff] %v1519
        %1536 = vst [vmem:[#allocation2 + $0x50] sm:$0xff] %v1520
        %1537 = vst [vmem:[#allocation2 + $0x58] sm:$0xff] %v1521
        %1538 = vst [vmem:[#allocation2 + $0x60] sm:$0xff] %v1522
        %1539 = vst [vmem:[#allocation2 + $0x68] sm:$0xff] %v1523
        %1540 = vst [vmem:[#allocation2 + $0x70] sm:$0xff] %v1524
        %1541 = vst [vmem:[#allocation2 + $0x78] sm:$0xff] %v1525
        %1542 = vst [vmem:[#allocation2 + $0x80] sm:$0xff] %v1526
        %1543 = vst [vmem:[#allocation2 + $0x88] sm:$0xff] %v1527
        %v1544 = vld [vmem:[#allocation2] sm:$0x80]
        %v1545 = vld [vmem:[#allocation2 + $0x8] sm:$0xff]
        %v1546 = vld [vmem:[#allocation2 + $0x10] sm:$0xff]
        %v1547 = vld [vmem:[#allocation2 + $0x18] sm:$0xff]
        %v1548 = vld [vmem:[#allocation2 + $0x20] sm:$0xff]
        %v1549 = vld [vmem:[#allocation2 + $0x28] sm:$0xff]
        %v1550 = vld [vmem:[#allocation2 + $0x30] sm:$0xff]
        %v1551 = vld [vmem:[#allocation2 + $0x38] sm:$0xff]
        %v1552 = vld [vmem:[#allocation2 + $0x40] sm:$0xff]
        %v1553 = vld [vmem:[#allocation2 + $0x48] sm:$0xff]
        %v1554 = vld [vmem:[#allocation2 + $0x50] sm:$0xff]
        %v1555 = vld [vmem:[#allocation2 + $0x58] sm:$0xff]
        %v1556 = vld [vmem:[#allocation2 + $0x60] sm:$0xff]
        %v1557 = vld [vmem:[#allocation2 + $0x68] sm:$0xff]
        %v1558 = vld [vmem:[#allocation2 + $0x70] sm:$0xff]
        %v1559 = vld [vmem:[#allocation2 + $0x78] sm:$0xff]
        %v1560 = vld [vmem:[#allocation2 + $0x80] sm:$0xff]
        %v1561 = vsel %vm1444, 1, 0
        %v1562 = vsel %vm1445, 1, 0
        %v1563 = vsel %vm1446, 1, 0
        %v1564 = vsel %vm1447, 1, 0
        %v1565 = vsel %vm1448, 1, 0
        %v1566 = vsel %vm1449, 1, 0
        %v1567 = vsel %vm1450, 1, 0
        %v1568 = vsel %vm1451, 1, 0
        %v1569 = vsel %vm1452, 1, 0
        %v1570 = vsel %vm1453, 1, 0
        %v1571 = vsel %vm1454, 1, 0
        %v1572 = vsel %vm1455, 1, 0
        %v1573 = vsel %vm1456, 1, 0
        %v1574 = vsel %vm1457, 1, 0
        %v1575 = vsel %vm1458, 1, 0
        %v1576 = vsel %vm1459, 1, 0
        %v1577 = vsel %vm1460, 1, 0
        %v1578 = vsel %vm1461, 1, 0
        %v1579 = vsel %vm1462, 1, 0
        %v1580 = vsel %vm1463, 1, 0
        %v1581 = vsel %vm1464, 1, 0
        %v1582 = vsel %vm1465, 1, 0
        %v1583 = vsel %vm1466, 1, 0
        %v1584 = vsel %vm1467, 1, 0
        %v1585 = vsel %vm1468, 1, 0
        %v1586 = vsel %vm1469, 1, 0
        %v1587 = vsel %vm1470, 1, 0
        %v1588 = vsel %vm1471, 1, 0
        %v1589 = vsel %vm1472, 1, 0
        %v1590 = vsel %vm1473, 1, 0
        %v1591 = vsel %vm1474, 1, 0
        %v1592 = vsel %vm1475, 1, 0
        %vm1593 = vcmp.eq.s32.totalorder %v1561, 1
        %vm1594 = vcmp.eq.s32.totalorder %v1562, 1
        %vm1595 = vcmp.eq.s32.totalorder %v1563, 1
        %vm1596 = vcmp.eq.s32.totalorder %v1564, 1
        %vm1597 = vcmp.eq.s32.totalorder %v1565, 1
        %vm1598 = vcmp.eq.s32.totalorder %v1566, 1
        %vm1599 = vcmp.eq.s32.totalorder %v1567, 1
        %vm1600 = vcmp.eq.s32.totalorder %v1568, 1
        %vm1601 = vcmp.eq.s32.totalorder %v1569, 1
        %vm1602 = vcmp.eq.s32.totalorder %v1570, 1
        %vm1603 = vcmp.eq.s32.totalorder %v1571, 1
        %vm1604 = vcmp.eq.s32.totalorder %v1572, 1
        %vm1605 = vcmp.eq.s32.totalorder %v1573, 1
        %vm1606 = vcmp.eq.s32.totalorder %v1574, 1
        %vm1607 = vcmp.eq.s32.totalorder %v1575, 1
        %vm1608 = vcmp.eq.s32.totalorder %v1576, 1
        %vm1609 = vcmp.eq.s32.totalorder %v1577, 1
        %vm1610 = vcmp.eq.s32.totalorder %v1578, 1
        %vm1611 = vcmp.eq.s32.totalorder %v1579, 1
        %vm1612 = vcmp.eq.s32.totalorder %v1580, 1
        %vm1613 = vcmp.eq.s32.totalorder %v1581, 1
        %vm1614 = vcmp.eq.s32.totalorder %v1582, 1
        %vm1615 = vcmp.eq.s32.totalorder %v1583, 1
        %vm1616 = vcmp.eq.s32.totalorder %v1584, 1
        %vm1617 = vcmp.eq.s32.totalorder %v1585, 1
        %vm1618 = vcmp.eq.s32.totalorder %v1586, 1
        %vm1619 = vcmp.eq.s32.totalorder %v1587, 1
        %vm1620 = vcmp.eq.s32.totalorder %v1588, 1
        %vm1621 = vcmp.eq.s32.totalorder %v1589, 1
        %vm1622 = vcmp.eq.s32.totalorder %v1590, 1
        %vm1623 = vcmp.eq.s32.totalorder %v1591, 1
        %vm1624 = vcmp.eq.s32.totalorder %v1592, 1
        %vm1625 = vmpackc.low %vm1593, %vm1593
        %vm1626 = vmpackc.low %vm1594, %vm1594
        %vm1627 = vmpackc.low %vm1595, %vm1595
        %vm1628 = vmpackc.low %vm1596, %vm1596
        %vm1629 = vmpackc.low %vm1597, %vm1597
        %vm1630 = vmpackc.low %vm1598, %vm1598
        %vm1631 = vmpackc.low %vm1599, %vm1599
        %vm1632 = vmpackc.low %vm1600, %vm1600
        %vm1633 = vmpackc.low %vm1601, %vm1601
        %vm1634 = vmpackc.low %vm1602, %vm1602
        %vm1635 = vmpackc.low %vm1603, %vm1603
        %vm1636 = vmpackc.low %vm1604, %vm1604
        %vm1637 = vmpackc.low %vm1605, %vm1605
        %vm1638 = vmpackc.low %vm1606, %vm1606
        %vm1639 = vmpackc.low %vm1607, %vm1607
        %vm1640 = vmpackc.low %vm1608, %vm1608
        %vm1641 = vmpackc.low %vm1609, %vm1609
        %vm1642 = vmpackc.low %vm1610, %vm1610
        %vm1643 = vmpackc.low %vm1611, %vm1611
        %vm1644 = vmpackc.low %vm1612, %vm1612
        %vm1645 = vmpackc.low %vm1613, %vm1613
        %vm1646 = vmpackc.low %vm1614, %vm1614
        %vm1647 = vmpackc.low %vm1615, %vm1615
        %vm1648 = vmpackc.low %vm1616, %vm1616
        %vm1649 = vmpackc.low %vm1617, %vm1617
        %vm1650 = vmpackc.low %vm1618, %vm1618
        %vm1651 = vmpackc.low %vm1619, %vm1619
        %vm1652 = vmpackc.low %vm1620, %vm1620
        %vm1653 = vmpackc.low %vm1621, %vm1621
        %vm1654 = vmpackc.low %vm1622, %vm1622
        %vm1655 = vmpackc.low %vm1623, %vm1623
        %vm1656 = vmpackc.low %vm1624, %vm1624
        %v1657 = vsel %vm1625, 65537, 0
        %v1658 = vsel %vm1626, 65537, 0
        %v1659 = vsel %vm1627, 65537, 0
        %v1660 = vsel %vm1628, 65537, 0
        %v1661 = vsel %vm1629, 65537, 0
        %v1662 = vsel %vm1630, 65537, 0
        %v1663 = vsel %vm1631, 65537, 0
        %v1664 = vsel %vm1632, 65537, 0
        %v1665 = vsel %vm1633, 65537, 0
        %v1666 = vsel %vm1634, 65537, 0
        %v1667 = vsel %vm1635, 65537, 0
        %v1668 = vsel %vm1636, 65537, 0
        %v1669 = vsel %vm1637, 65537, 0
        %v1670 = vsel %vm1638, 65537, 0
        %v1671 = vsel %vm1639, 65537, 0
        %v1672 = vsel %vm1640, 65537, 0
        %v1673 = vsel %vm1641, 65537, 0
        %v1674 = vsel %vm1642, 65537, 0
        %v1675 = vsel %vm1643, 65537, 0
        %v1676 = vsel %vm1644, 65537, 0
        %v1677 = vsel %vm1645, 65537, 0
        %v1678 = vsel %vm1646, 65537, 0
        %v1679 = vsel %vm1647, 65537, 0
        %v1680 = vsel %vm1648, 65537, 0
        %v1681 = vsel %vm1649, 65537, 0
        %v1682 = vsel %vm1650, 65537, 0
        %v1683 = vsel %vm1651, 65537, 0
        %v1684 = vsel %vm1652, 65537, 0
        %v1685 = vsel %vm1653, 65537, 0
        %v1686 = vsel %vm1654, 65537, 0
        %v1687 = vsel %vm1655, 65537, 0
        %v1688 = vsel %vm1656, 65537, 0
        %v1689 = vunpack.c.l.b16 %v1657
        %v1690 = vunpack.c.l.b16 %v1658
        %v1691 = vunpack.c.l.b16 %v1659
        %v1692 = vunpack.c.l.b16 %v1660
        %v1693 = vunpack.c.l.b16 %v1661
        %v1694 = vunpack.c.l.b16 %v1662
        %v1695 = vunpack.c.l.b16 %v1663
        %v1696 = vunpack.c.l.b16 %v1664
        %v1697 = vunpack.c.l.b16 %v1665
        %v1698 = vunpack.c.l.b16 %v1666
        %v1699 = vunpack.c.l.b16 %v1667
        %v1700 = vunpack.c.l.b16 %v1668
        %v1701 = vunpack.c.l.b16 %v1669
        %v1702 = vunpack.c.l.b16 %v1670
        %v1703 = vunpack.c.l.b16 %v1671
        %v1704 = vunpack.c.l.b16 %v1672
        %v1705 = vunpack.c.l.b16 %v1673
        %v1706 = vunpack.c.l.b16 %v1674
        %v1707 = vunpack.c.l.b16 %v1675
        %v1708 = vunpack.c.l.b16 %v1676
        %v1709 = vunpack.c.l.b16 %v1677
        %v1710 = vunpack.c.l.b16 %v1678
        %v1711 = vunpack.c.l.b16 %v1679
        %v1712 = vunpack.c.l.b16 %v1680
        %v1713 = vunpack.c.l.b16 %v1681
        %v1714 = vunpack.c.l.b16 %v1682
        %v1715 = vunpack.c.l.b16 %v1683
        %v1716 = vunpack.c.l.b16 %v1684
        %v1717 = vunpack.c.l.b16 %v1685
        %v1718 = vunpack.c.l.b16 %v1686
        %v1719 = vunpack.c.l.b16 %v1687
        %v1720 = vunpack.c.l.b16 %v1688
        %v1721 = vpack.c.b16 %v1690, %v1689
        %v1722 = vpack.c.b16 %v1692, %v1691
        %v1723 = vpack.c.b16 %v1694, %v1693
        %v1724 = vpack.c.b16 %v1696, %v1695
        %v1725 = vpack.c.b16 %v1698, %v1697
        %v1726 = vpack.c.b16 %v1700, %v1699
        %v1727 = vpack.c.b16 %v1702, %v1701
        %v1728 = vpack.c.b16 %v1704, %v1703
        %v1729 = vpack.c.b16 %v1706, %v1705
        %v1730 = vpack.c.b16 %v1708, %v1707
        %v1731 = vpack.c.b16 %v1710, %v1709
        %v1732 = vpack.c.b16 %v1712, %v1711
        %v1733 = vpack.c.b16 %v1714, %v1713
        %v1734 = vpack.c.b16 %v1716, %v1715
        %v1735 = vpack.c.b16 %v1718, %v1717
        %v1736 = vpack.c.b16 %v1720, %v1719
        %vm1737 = vsmask.f32 7424
        %v1739 = vshll.u32 %v1721, 16
        %v1741 = vrot.slane %v1739, 1
        %v1742 = vshrl.u32 %v1721, 16
        %v1744 = vor.u32 %v1742, %v1741
        %v1746 = vshll.u32 %v1722, 16
        %v1748 = vrot.slane %v1746, 1
        %v1749 = vsel %vm1737, %v1744, %v1748
        %v1750 = vshrl.u32 %v1722, 16
        %v1752 = vor.u32 %v1750, %v1748
        %v1754 = vshll.u32 %v1723, 16
        %v1756 = vrot.slane %v1754, 1
        %v1757 = vsel %vm1737, %v1752, %v1756
        %v1758 = vshrl.u32 %v1723, 16
        %v1760 = vor.u32 %v1758, %v1756
        %v1762 = vshll.u32 %v1724, 16
        %v1764 = vrot.slane %v1762, 1
        %v1765 = vsel %vm1737, %v1760, %v1764
        %v1766 = vshrl.u32 %v1724, 16
        %v1768 = vor.u32 %v1766, %v1764
        %v1770 = vshll.u32 %v1725, 16
        %v1772 = vrot.slane %v1770, 1
        %v1773 = vsel %vm1737, %v1768, %v1772
        %v1774 = vshrl.u32 %v1725, 16
        %v1776 = vor.u32 %v1774, %v1772
        %v1778 = vshll.u32 %v1726, 16
        %v1780 = vrot.slane %v1778, 1
        %v1781 = vsel %vm1737, %v1776, %v1780
        %v1782 = vshrl.u32 %v1726, 16
        %v1784 = vor.u32 %v1782, %v1780
        %v1786 = vshll.u32 %v1727, 16
        %v1788 = vrot.slane %v1786, 1
        %v1789 = vsel %vm1737, %v1784, %v1788
        %v1790 = vshrl.u32 %v1727, 16
        %v1792 = vor.u32 %v1790, %v1788
        %v1794 = vshll.u32 %v1728, 16
        %v1796 = vrot.slane %v1794, 1
        %v1797 = vsel %vm1737, %v1792, %v1796
        %v1798 = vshrl.u32 %v1728, 16
        %v1800 = vor.u32 %v1798, %v1796
        %v1802 = vshll.u32 %v1729, 16
        %v1804 = vrot.slane %v1802, 1
        %v1805 = vsel %vm1737, %v1800, %v1804
        %v1806 = vshrl.u32 %v1729, 16
        %v1808 = vor.u32 %v1806, %v1804
        %v1810 = vshll.u32 %v1730, 16
        %v1812 = vrot.slane %v1810, 1
        %v1813 = vsel %vm1737, %v1808, %v1812
        %v1814 = vshrl.u32 %v1730, 16
        %v1816 = vor.u32 %v1814, %v1812
        %v1818 = vshll.u32 %v1731, 16
        %v1820 = vrot.slane %v1818, 1
        %v1821 = vsel %vm1737, %v1816, %v1820
        %v1822 = vshrl.u32 %v1731, 16
        %v1824 = vor.u32 %v1822, %v1820
        %v1826 = vshll.u32 %v1732, 16
        %v1828 = vrot.slane %v1826, 1
        %v1829 = vsel %vm1737, %v1824, %v1828
        %v1830 = vshrl.u32 %v1732, 16
        %v1832 = vor.u32 %v1830, %v1828
        %v1834 = vshll.u32 %v1733, 16
        %v1836 = vrot.slane %v1834, 1
        %v1837 = vsel %vm1737, %v1832, %v1836
        %v1838 = vshrl.u32 %v1733, 16
        %v1840 = vor.u32 %v1838, %v1836
        %v1842 = vshll.u32 %v1734, 16
        %v1844 = vrot.slane %v1842, 1
        %v1845 = vsel %vm1737, %v1840, %v1844
        %v1846 = vshrl.u32 %v1734, 16
        %v1848 = vor.u32 %v1846, %v1844
        %v1850 = vshll.u32 %v1735, 16
        %v1852 = vrot.slane %v1850, 1
        %v1853 = vsel %vm1737, %v1848, %v1852
        %v1854 = vshrl.u32 %v1735, 16
        %v1856 = vor.u32 %v1854, %v1852
        %v1858 = vshll.u32 %v1736, 16
        %v1860 = vrot.slane %v1858, 1
        %v1861 = vsel %vm1737, %v1856, %v1860
        %v1862 = vshrl.u32 %v1736, 16
        %v1864 = vor.u32 %v1862, %v1860
        %vm1865 = vcmp.ne.s16.totalorder %v1741, 0
        %vm1866 = vcmp.ne.s16.totalorder %v1749, 0
        %vm1867 = vcmp.ne.s16.totalorder %v1757, 0
        %vm1868 = vcmp.ne.s16.totalorder %v1765, 0
        %vm1869 = vcmp.ne.s16.totalorder %v1773, 0
        %vm1870 = vcmp.ne.s16.totalorder %v1781, 0
        %vm1871 = vcmp.ne.s16.totalorder %v1789, 0
        %vm1872 = vcmp.ne.s16.totalorder %v1797, 0
        %vm1873 = vcmp.ne.s16.totalorder %v1805, 0
        %vm1874 = vcmp.ne.s16.totalorder %v1813, 0
        %vm1875 = vcmp.ne.s16.totalorder %v1821, 0
        %vm1876 = vcmp.ne.s16.totalorder %v1829, 0
        %vm1877 = vcmp.ne.s16.totalorder %v1837, 0
        %vm1878 = vcmp.ne.s16.totalorder %v1845, 0
        %vm1879 = vcmp.ne.s16.totalorder %v1853, 0
        %vm1880 = vcmp.ne.s16.totalorder %v1861, 0
        %vm1881 = vcmp.ne.s16.totalorder %v1864, 0
        %v1882 = vsel %vm1865, %v1544, 0
        %v1883 = vsel %vm1866, %v1545, 0
        %v1884 = vsel %vm1867, %v1546, 0
        %v1885 = vsel %vm1868, %v1547, 0
        %v1886 = vsel %vm1869, %v1548, 0
        %v1887 = vsel %vm1870, %v1549, 0
        %v1888 = vsel %vm1871, %v1550, 0
        %v1889 = vsel %vm1872, %v1551, 0
        %v1890 = vsel %vm1873, %v1552, 0
        %v1891 = vsel %vm1874, %v1553, 0
        %v1892 = vsel %vm1875, %v1554, 0
        %v1893 = vsel %vm1876, %v1555, 0
        %v1894 = vsel %vm1877, %v1556, 0
        %v1895 = vsel %vm1878, %v1557, 0
        %v1896 = vsel %vm1879, %v1558, 0
        %v1897 = vsel %vm1880, %v1559, 0
        %v1898 = vsel %vm1881, %v1560, 0
        %v1899 = vld [vmem:[#allocation8] sm:$0xf]
        %v1900 = vld [vmem:[#allocation8 + $0x4] sm:$0xf]
        %v1901 = vld [vmem:[#allocation8 + $0x8] sm:$0xf]
        %v1902 = vld [vmem:[#allocation8 + $0xc] sm:$0xf]
        %v1903 = vld [vmem:[#allocation8 + $0x10] sm:$0xf]
        %v1904 = vld [vmem:[#allocation8 + $0x14] sm:$0xf]
        %v1905 = vld [vmem:[#allocation8 + $0x18] sm:$0xf]
        %v1906 = vld [vmem:[#allocation8 + $0x1c] sm:$0xf]
        %v1907 = vld [vmem:[#allocation8 + $0x20] sm:$0xf]
        %v1908 = vld [vmem:[#allocation8 + $0x24] sm:$0xf]
        %v1909 = vld [vmem:[#allocation8 + $0x28] sm:$0xf]
        %v1910 = vld [vmem:[#allocation8 + $0x2c] sm:$0xf]
        %v1911 = vld [vmem:[#allocation8 + $0x30] sm:$0xf]
        %v1912 = vld [vmem:[#allocation8 + $0x34] sm:$0xf]
        %v1913 = vld [vmem:[#allocation8 + $0x38] sm:$0xf]
        %v1914 = vld [vmem:[#allocation8 + $0x3c] sm:$0xf]
        %s1915 = scalar_lea.vmem [#allocation8], 64
        %v1916 = vld [vmem:[%s1915] sm:$0xf]
        %v1917 = vld [vmem:[%s1915 + $0x4] sm:$0xf]
        %v1918 = vld [vmem:[%s1915 + $0x8] sm:$0xf]
        %v1919 = vld [vmem:[%s1915 + $0xc] sm:$0xf]
        %v1920 = vld [vmem:[%s1915 + $0x10] sm:$0xf]
        %v1921 = vld [vmem:[%s1915 + $0x14] sm:$0xf]
        %v1922 = vld [vmem:[%s1915 + $0x18] sm:$0xf]
        %v1923 = vld [vmem:[%s1915 + $0x1c] sm:$0xf]
        %v1924 = vld [vmem:[%s1915 + $0x20] sm:$0xf]
        %v1925 = vld [vmem:[%s1915 + $0x24] sm:$0xf]
        %v1926 = vld [vmem:[%s1915 + $0x28] sm:$0xf]
        %v1927 = vld [vmem:[%s1915 + $0x2c] sm:$0xf]
        %v1928 = vld [vmem:[%s1915 + $0x30] sm:$0xf]
        %v1929 = vld [vmem:[%s1915 + $0x34] sm:$0xf]
        %v1930 = vld [vmem:[%s1915 + $0x38] sm:$0xf]
        %v1931 = vld [vmem:[%s1915 + $0x3c] sm:$0xf]
        %v1948 = vunpack.c.l.b16 %v1916
        %v1949 = vunpack.c.l.b16 %v1917
        %v1950 = vunpack.c.l.b16 %v1918
        %v1951 = vunpack.c.l.b16 %v1919
        %v1952 = vunpack.c.l.b16 %v1920
        %v1953 = vunpack.c.l.b16 %v1921
        %v1954 = vunpack.c.l.b16 %v1922
        %v1955 = vunpack.c.l.b16 %v1923
        %v1956 = vunpack.c.l.b16 %v1924
        %v1957 = vunpack.c.l.b16 %v1925
        %v1958 = vunpack.c.l.b16 %v1926
        %v1959 = vunpack.c.l.b16 %v1927
        %v1960 = vunpack.c.l.b16 %v1928
        %v1961 = vunpack.c.l.b16 %v1929
        %v1962 = vunpack.c.l.b16 %v1930
        %v1963 = vunpack.c.l.b16 %v1931
        %v1964 = vpack.c.b16 %v1949, %v1948
        %v1965 = vpack.c.b16 %v1951, %v1950
        %v1966 = vpack.c.b16 %v1953, %v1952
        %v1967 = vpack.c.b16 %v1955, %v1954
        %v1968 = vpack.c.b16 %v1957, %v1956
        %v1969 = vpack.c.b16 %v1959, %v1958
        %v1970 = vpack.c.b16 %v1961, %v1960
        %v1971 = vpack.c.b16 %v1963, %v1962
        %1980 = vmatprep.subr.bf16.mxu0 0
        %1981 = vmatpush1.bf16.msra.mxu0 %v1964
        %1982 = vmatprep.subr.bf16.mxu0 0
        %1983 = vmatpush1.bf16.msra.mxu0 %v1965
        %1984 = vmatprep.subr.bf16.mxu0 0
        %1985 = vmatpush1.bf16.msra.mxu0 %v1966
        %1986 = vmatprep.subr.bf16.mxu0 0
        %1987 = vmatpush1.bf16.msra.mxu0 %v1967
        %1988 = vmatprep.subr.bf16.mxu0 0
        %1989 = vmatpush1.bf16.msra.mxu0 %v1968
        %1990 = vmatprep.subr.bf16.mxu0 0
        %1991 = vmatpush1.bf16.msra.mxu0 %v1969
        %1992 = vmatprep.subr.bf16.mxu0 0
        %1993 = vmatpush1.bf16.msra.mxu0 %v1970
        %1994 = vmatprep.subr.bf16.mxu0 0
        %1995 = vmatpush1.bf16.msra.mxu0 %v1971
        %1996 = vmatprep.subr.bf16.mxu0 0
        %1997 = vmatpush1.bf16.msra.mxu0 0
        %1998 = vmatprep.subr.bf16.mxu0 0
        %1999 = vmatpush1.bf16.msra.mxu0 0
        %2000 = vmatprep.subr.bf16.mxu0 0
        %2001 = vmatpush1.bf16.msra.mxu0 0
        %2002 = vmatprep.subr.bf16.mxu0 0
        %2003 = vmatpush1.bf16.msra.mxu0 0
        %2004 = vmatprep.subr.bf16.mxu0 0
        %2005 = vmatpush1.bf16.msra.mxu0 0
        %2006 = vmatprep.subr.bf16.mxu0 0
        %2007 = vmatpush1.bf16.msra.mxu0 0
        %2008 = vmatprep.subr.bf16.mxu0 0
        %2009 = vmatpush1.bf16.msra.mxu0 0
        %2010 = vmatprep.subr.bf16.mxu0 0
        %2011 = vmatpush1.bf16.msra.mxu0 0
        %2012 = vmatprep.mubr.bf16.mxu0 0
        %2013 = vmatmul.mubr.bf16.gmra.mrb[0].mxu0 %v1545
        %v2014 = vpop.f32.mrb[0].mxu0
        %v2015 = vadd.f32 0.0, %v2014
        %v2016 = vpop.f32.mrb[0].mxu0
        %v2017 = vpop.f32.mrb[0].mxu0
        %v2018 = vadd.f32 0.0, %v2017
        %v2019 = vpop.f32.mrb[0].mxu0
        %2020 = vmatprep.mubr.bf16.mxu0 0
        %2021 = vmatmul.mubr.bf16.gmra.mrb[0].mxu0 %v1546
        %v2022 = vpop.f32.mrb[0].mxu0
        %v2023 = vadd.f32 0.0, %v2022
        %v2024 = vpop.f32.mrb[0].mxu0
        %v2025 = vpop.f32.mrb[0].mxu0
        %v2026 = vadd.f32 0.0, %v2025
        %v2027 = vpop.f32.mrb[0].mxu0
        %2028 = vmatprep.mubr.bf16.mxu0 0
        %2029 = vmatmul.mubr.bf16.gmra.mrb[0].mxu0 %v1547
        %v2030 = vpop.f32.mrb[0].mxu0
        %v2031 = vadd.f32 0.0, %v2030
        %v2032 = vpop.f32.mrb[0].mxu0
        %v2033 = vpop.f32.mrb[0].mxu0
        %v2034 = vadd.f32 0.0, %v2033
        %v2035 = vpop.f32.mrb[0].mxu0
        %2036 = vmatprep.mubr.bf16.mxu0 0
        %2037 = vmatmul.mubr.bf16.gmra.mrb[0].mxu0 %v1548
        %v2038 = vpop.f32.mrb[0].mxu0
        %v2039 = vadd.f32 0.0, %v2038
        %v2040 = vpop.f32.mrb[0].mxu0
        %v2041 = vpop.f32.mrb[0].mxu0
        %v2042 = vadd.f32 0.0, %v2041
        %v2043 = vpop.f32.mrb[0].mxu0
        %2044 = vmatprep.mubr.bf16.mxu0 0
        %2045 = vmatmul.mubr.bf16.gmra.mrb[0].mxu0 %v1549
        %v2046 = vpop.f32.mrb[0].mxu0
        %v2047 = vadd.f32 0.0, %v2046
        %v2048 = vpop.f32.mrb[0].mxu0
        %v2049 = vpop.f32.mrb[0].mxu0
        %v2050 = vadd.f32 0.0, %v2049
        %v2051 = vpop.f32.mrb[0].mxu0
        %2052 = vmatprep.mubr.bf16.mxu0 0
        %2053 = vmatmul.mubr.bf16.gmra.mrb[0].mxu0 %v1550
        %v2054 = vpop.f32.mrb[0].mxu0
        %v2055 = vadd.f32 0.0, %v2054
        %v2056 = vpop.f32.mrb[0].mxu0
        %v2057 = vpop.f32.mrb[0].mxu0
        %v2058 = vadd.f32 0.0, %v2057
        %v2059 = vpop.f32.mrb[0].mxu0
        %2060 = vmatprep.mubr.bf16.mxu0 0
        %2061 = vmatmul.mubr.bf16.gmra.mrb[0].mxu0 %v1551
        %v2062 = vpop.f32.mrb[0].mxu0
        %v2063 = vadd.f32 0.0, %v2062
        %v2064 = vpop.f32.mrb[0].mxu0
        %v2065 = vpop.f32.mrb[0].mxu0
        %v2066 = vadd.f32 0.0, %v2065
        %v2067 = vpop.f32.mrb[0].mxu0
        %2068 = vmatprep.mubr.bf16.mxu0 0
        %2069 = vmatmul.mubr.bf16.gmra.mrb[0].mxu0 %v1552
        %v2070 = vpop.f32.mrb[0].mxu0
        %v2071 = vadd.f32 0.0, %v2070
        %v2072 = vpop.f32.mrb[0].mxu0
        %v2073 = vpop.f32.mrb[0].mxu0
        %v2074 = vadd.f32 0.0, %v2073
        %v2075 = vpop.f32.mrb[0].mxu0
        %2076 = vmatprep.mubr.bf16.mxu0 0
        %2077 = vmatmul.mubr.bf16.gmra.mrb[0].mxu0 %v1553
        %v2078 = vpop.f32.mrb[0].mxu0
        %v2079 = vadd.f32 0.0, %v2078
        %v2080 = vpop.f32.mrb[0].mxu0
        %v2081 = vpop.f32.mrb[0].mxu0
        %v2082 = vadd.f32 0.0, %v2081
        %v2083 = vpop.f32.mrb[0].mxu0
        %2084 = vmatprep.mubr.bf16.mxu0 0
        %2085 = vmatmul.mubr.bf16.gmra.mrb[0].mxu0 %v1554
        %v2086 = vpop.f32.mrb[0].mxu0
        %v2087 = vadd.f32 0.0, %v2086
        %v2088 = vpop.f32.mrb[0].mxu0
        %v2089 = vpop.f32.mrb[0].mxu0
        %v2090 = vadd.f32 0.0, %v2089
        %v2091 = vpop.f32.mrb[0].mxu0
        %2092 = vmatprep.mubr.bf16.mxu0 0
        %2093 = vmatmul.mubr.bf16.gmra.mrb[0].mxu0 %v1555
        %v2094 = vpop.f32.mrb[0].mxu0
        %v2095 = vadd.f32 0.0, %v2094
        %v2096 = vpop.f32.mrb[0].mxu0
        %v2097 = vpop.f32.mrb[0].mxu0
        %v2098 = vadd.f32 0.0, %v2097
        %v2099 = vpop.f32.mrb[0].mxu0
        %2100 = vmatprep.mubr.bf16.mxu0 0
        %2101 = vmatmul.mubr.bf16.gmra.mrb[0].mxu0 %v1556
        %v2102 = vpop.f32.mrb[0].mxu0
        %v2103 = vadd.f32 0.0, %v2102
        %v2104 = vpop.f32.mrb[0].mxu0
        %v2105 = vpop.f32.mrb[0].mxu0
        %v2106 = vadd.f32 0.0, %v2105
        %v2107 = vpop.f32.mrb[0].mxu0
        %2108 = vmatprep.mubr.bf16.mxu0 0
        %2109 = vmatmul.mubr.bf16.gmra.mrb[0].mxu0 %v1557
        %v2110 = vpop.f32.mrb[0].mxu0
        %v2111 = vadd.f32 0.0, %v2110
        %v2112 = vpop.f32.mrb[0].mxu0
        %v2113 = vpop.f32.mrb[0].mxu0
        %v2114 = vadd.f32 0.0, %v2113
        %v2115 = vpop.f32.mrb[0].mxu0
        %2116 = vmatprep.mubr.bf16.mxu0 0
        %2117 = vmatmul.mubr.bf16.gmra.mrb[0].mxu0 %v1558
        %v2118 = vpop.f32.mrb[0].mxu0
        %v2119 = vadd.f32 0.0, %v2118
        %v2120 = vpop.f32.mrb[0].mxu0
        %v2121 = vpop.f32.mrb[0].mxu0
        %v2122 = vadd.f32 0.0, %v2121
        %v2123 = vpop.f32.mrb[0].mxu0
        %2124 = vmatprep.mubr.bf16.mxu0 0
        %2125 = vmatmul.mubr.bf16.gmra.mrb[0].mxu0 %v1559
        %v2126 = vpop.f32.mrb[0].mxu0
        %v2127 = vadd.f32 0.0, %v2126
        %v2128 = vpop.f32.mrb[0].mxu0
        %v2129 = vpop.f32.mrb[0].mxu0
        %v2130 = vadd.f32 0.0, %v2129
        %v2131 = vpop.f32.mrb[0].mxu0
        %2132 = vmatprep.mubr.bf16.mxu0 0
        %2133 = vmatmul.mubr.bf16.gmra.mrb[0].mxu0 %v1560
        %v2134 = vpop.f32.mrb[0].mxu0
        %v2135 = vadd.f32 0.0, %v2134
        %v2136 = vpop.f32.mrb[0].mxu0
        %v2137 = vpop.f32.mrb[0].mxu0
        %v2138 = vadd.f32 0.0, %v2137
        %v2139 = vpop.f32.mrb[0].mxu0
        %2140 = vdwg.mxu0
        %vm2141 = vsmask.f32 256
        %v2143 = vshrl.u32 %v1882, 16
        %v2145 = vrot.slane %v2143, 7
        %v2147 = vshrl.u32 %v1883, 16
        %v2149 = vrot.slane %v2147, 7
        %v2150 = vshll.u32 %v1883, 16
        %v2152 = vor.u32 %v2149, %v2150
        %v2153 = vsel %vm2141, %v2145, %v2152
        %v2155 = vshrl.u32 %v1884, 16
        %v2157 = vrot.slane %v2155, 7
        %v2158 = vshll.u32 %v1884, 16
        %v2160 = vor.u32 %v2157, %v2158
        %v2161 = vsel %vm2141, %v2149, %v2160
        %v2163 = vshrl.u32 %v1885, 16
        %v2165 = vrot.slane %v2163, 7
        %v2166 = vshll.u32 %v1885, 16
        %v2168 = vor.u32 %v2165, %v2166
        %v2169 = vsel %vm2141, %v2157, %v2168
        %v2171 = vshrl.u32 %v1886, 16
        %v2173 = vrot.slane %v2171, 7
        %v2174 = vshll.u32 %v1886, 16
        %v2176 = vor.u32 %v2173, %v2174
        %v2177 = vsel %vm2141, %v2165, %v2176
        %v2179 = vshrl.u32 %v1887, 16
        %v2181 = vrot.slane %v2179, 7
        %v2182 = vshll.u32 %v1887, 16
        %v2184 = vor.u32 %v2181, %v2182
        %v2185 = vsel %vm2141, %v2173, %v2184
        %v2187 = vshrl.u32 %v1888, 16
        %v2189 = vrot.slane %v2187, 7
        %v2190 = vshll.u32 %v1888, 16
        %v2192 = vor.u32 %v2189, %v2190
        %v2193 = vsel %vm2141, %v2181, %v2192
        %v2195 = vshrl.u32 %v1889, 16
        %v2197 = vrot.slane %v2195, 7
        %v2198 = vshll.u32 %v1889, 16
        %v2200 = vor.u32 %v2197, %v2198
        %v2201 = vsel %vm2141, %v2189, %v2200
        %v2203 = vshrl.u32 %v1890, 16
        %v2205 = vrot.slane %v2203, 7
        %v2206 = vshll.u32 %v1890, 16
        %v2208 = vor.u32 %v2205, %v2206
        %v2209 = vsel %vm2141, %v2197, %v2208
        %v2211 = vshrl.u32 %v1891, 16
        %v2213 = vrot.slane %v2211, 7
        %v2214 = vshll.u32 %v1891, 16
        %v2216 = vor.u32 %v2213, %v2214
        %v2217 = vsel %vm2141, %v2205, %v2216
        %v2219 = vshrl.u32 %v1892, 16
        %v2221 = vrot.slane %v2219, 7
        %v2222 = vshll.u32 %v1892, 16
        %v2224 = vor.u32 %v2221, %v2222
        %v2225 = vsel %vm2141, %v2213, %v2224
        %v2227 = vshrl.u32 %v1893, 16
        %v2229 = vrot.slane %v2227, 7
        %v2230 = vshll.u32 %v1893, 16
        %v2232 = vor.u32 %v2229, %v2230
        %v2233 = vsel %vm2141, %v2221, %v2232
        %v2235 = vshrl.u32 %v1894, 16
        %v2237 = vrot.slane %v2235, 7
        %v2238 = vshll.u32 %v1894, 16
        %v2240 = vor.u32 %v2237, %v2238
        %v2241 = vsel %vm2141, %v2229, %v2240
        %v2243 = vshrl.u32 %v1895, 16
        %v2245 = vrot.slane %v2243, 7
        %v2246 = vshll.u32 %v1895, 16
        %v2248 = vor.u32 %v2245, %v2246
        %v2249 = vsel %vm2141, %v2237, %v2248
        %v2251 = vshrl.u32 %v1896, 16
        %v2253 = vrot.slane %v2251, 7
        %v2254 = vshll.u32 %v1896, 16
        %v2256 = vor.u32 %v2253, %v2254
        %v2257 = vsel %vm2141, %v2245, %v2256
        %v2259 = vshrl.u32 %v1897, 16
        %v2261 = vrot.slane %v2259, 7
        %v2262 = vshll.u32 %v1897, 16
        %v2264 = vor.u32 %v2261, %v2262
        %v2265 = vsel %vm2141, %v2253, %v2264
        %v2267 = vshrl.u32 %v1898, 16
        %v2269 = vrot.slane %v2267, 7
        %v2270 = vshll.u32 %v1898, 16
        %v2272 = vor.u32 %v2269, %v2270
        %v2273 = vsel %vm2141, %v2261, %v2272
        %v2306 = vunpack.c.l.b16 %v1899
        %v2307 = vunpack.c.l.b16 %v1900
        %v2308 = vunpack.c.l.b16 %v1901
        %v2309 = vunpack.c.l.b16 %v1902
        %v2310 = vunpack.c.l.b16 %v1903
        %v2311 = vunpack.c.l.b16 %v1904
        %v2312 = vunpack.c.l.b16 %v1905
        %v2313 = vunpack.c.l.b16 %v1906
        %v2314 = vunpack.c.l.b16 %v1907
        %v2315 = vunpack.c.l.b16 %v1908
        %v2316 = vunpack.c.l.b16 %v1909
        %v2317 = vunpack.c.l.b16 %v1910
        %v2318 = vunpack.c.l.b16 %v1911
        %v2319 = vunpack.c.l.b16 %v1912
        %v2320 = vunpack.c.l.b16 %v1913
        %v2321 = vunpack.c.l.b16 %v1914
        %v2322 = vpack.c.b16 %v2307, %v2306
        %v2323 = vpack.c.b16 %v2309, %v2308
        %v2324 = vpack.c.b16 %v2311, %v2310
        %v2325 = vpack.c.b16 %v2313, %v2312
        %v2326 = vpack.c.b16 %v2315, %v2314
        %v2327 = vpack.c.b16 %v2317, %v2316
        %v2328 = vpack.c.b16 %v2319, %v2318
        %v2329 = vpack.c.b16 %v2321, %v2320
        %2338 = vmatprep.subr.bf16.mxu0 0
        %2339 = vmatpush1.bf16.msra.mxu0 %v2322
        %2340 = vmatprep.subr.bf16.mxu0 0
        %2341 = vmatpush1.bf16.msra.mxu0 %v2323
        %2342 = vmatprep.subr.bf16.mxu0 0
        %2343 = vmatpush1.bf16.msra.mxu0 %v2324
        %2344 = vmatprep.subr.bf16.mxu0 0
        %2345 = vmatpush1.bf16.msra.mxu0 %v2325
        %2346 = vmatprep.subr.bf16.mxu0 0
        %2347 = vmatpush1.bf16.msra.mxu0 %v2326
        %2348 = vmatprep.subr.bf16.mxu0 0
        %2349 = vmatpush1.bf16.msra.mxu0 %v2327
        %2350 = vmatprep.subr.bf16.mxu0 0
        %2351 = vmatpush1.bf16.msra.mxu0 %v2328
        %2352 = vmatprep.subr.bf16.mxu0 0
        %2353 = vmatpush1.bf16.msra.mxu0 %v2329
        %2354 = vmatprep.subr.bf16.mxu0 0
        %2355 = vmatpush1.bf16.msra.mxu0 0
        %2356 = vmatprep.subr.bf16.mxu0 0
        %2357 = vmatpush1.bf16.msra.mxu0 0
        %2358 = vmatprep.subr.bf16.mxu0 0
        %2359 = vmatpush1.bf16.msra.mxu0 0
        %2360 = vmatprep.subr.bf16.mxu0 0
        %2361 = vmatpush1.bf16.msra.mxu0 0
        %2362 = vmatprep.subr.bf16.mxu0 0
        %2363 = vmatpush1.bf16.msra.mxu0 0
        %2364 = vmatprep.subr.bf16.mxu0 0
        %2365 = vmatpush1.bf16.msra.mxu0 0
        %2366 = vmatprep.subr.bf16.mxu0 0
        %2367 = vmatpush1.bf16.msra.mxu0 0
        %2368 = vmatprep.subr.bf16.mxu0 0
        %2369 = vmatpush1.bf16.msra.mxu0 0
        %2370 = vmatprep.mubr.bf16.mxu0 0
        %2371 = vmatmul.mubr.bf16.gmra.mrb[0].mxu0 %v2153
        %v2372 = vpop.f32.mrb[0].mxu0
        %v2373 = vadd.f32 %v2015, %v2372
        %v2374 = vpop.f32.mrb[0].mxu0
        %v2375 = vpop.f32.mrb[0].mxu0
        %v2376 = vadd.f32 %v2018, %v2375
        %v2377 = vpop.f32.mrb[0].mxu0
        %2378 = vmatprep.mubr.bf16.mxu0 0
        %2379 = vmatmul.mubr.bf16.gmra.mrb[0].mxu0 %v2161
        %v2380 = vpop.f32.mrb[0].mxu0
        %v2381 = vadd.f32 %v2023, %v2380
        %v2382 = vpop.f32.mrb[0].mxu0
        %v2383 = vpop.f32.mrb[0].mxu0
        %v2384 = vadd.f32 %v2026, %v2383
        %v2385 = vpop.f32.mrb[0].mxu0
        %2386 = vmatprep.mubr.bf16.mxu0 0
        %2387 = vmatmul.mubr.bf16.gmra.mrb[0].mxu0 %v2169
        %v2388 = vpop.f32.mrb[0].mxu0
        %v2389 = vadd.f32 %v2031, %v2388
        %v2390 = vpop.f32.mrb[0].mxu0
        %v2391 = vpop.f32.mrb[0].mxu0
        %v2392 = vadd.f32 %v2034, %v2391
        %v2393 = vpop.f32.mrb[0].mxu0
        %2394 = vmatprep.mubr.bf16.mxu0 0
        %2395 = vmatmul.mubr.bf16.gmra.mrb[0].mxu0 %v2177
        %v2396 = vpop.f32.mrb[0].mxu0
        %v2397 = vadd.f32 %v2039, %v2396
        %v2398 = vpop.f32.mrb[0].mxu0
        %v2399 = vpop.f32.mrb[0].mxu0
        %v2400 = vadd.f32 %v2042, %v2399
        %v2401 = vpop.f32.mrb[0].mxu0
        %2402 = vmatprep.mubr.bf16.mxu0 0
        %2403 = vmatmul.mubr.bf16.gmra.mrb[0].mxu0 %v2185
        %v2404 = vpop.f32.mrb[0].mxu0
        %v2405 = vadd.f32 %v2047, %v2404
        %v2406 = vpop.f32.mrb[0].mxu0
        %v2407 = vpop.f32.mrb[0].mxu0
        %v2408 = vadd.f32 %v2050, %v2407
        %v2409 = vpop.f32.mrb[0].mxu0
        %2410 = vmatprep.mubr.bf16.mxu0 0
        %2411 = vmatmul.mubr.bf16.gmra.mrb[0].mxu0 %v2193
        %v2412 = vpop.f32.mrb[0].mxu0
        %v2413 = vadd.f32 %v2055, %v2412
        %v2414 = vpop.f32.mrb[0].mxu0
        %v2415 = vpop.f32.mrb[0].mxu0
        %v2416 = vadd.f32 %v2058, %v2415
        %v2417 = vpop.f32.mrb[0].mxu0
        %2418 = vmatprep.mubr.bf16.mxu0 0
        %2419 = vmatmul.mubr.bf16.gmra.mrb[0].mxu0 %v2201
        %v2420 = vpop.f32.mrb[0].mxu0
        %v2421 = vadd.f32 %v2063, %v2420
        %v2422 = vpop.f32.mrb[0].mxu0
        %v2423 = vpop.f32.mrb[0].mxu0
        %v2424 = vadd.f32 %v2066, %v2423
        %v2425 = vpop.f32.mrb[0].mxu0
        %2426 = vmatprep.mubr.bf16.mxu0 0
        %2427 = vmatmul.mubr.bf16.gmra.mrb[0].mxu0 %v2209
        %v2428 = vpop.f32.mrb[0].mxu0
        %v2429 = vadd.f32 %v2071, %v2428
        %v2430 = vpop.f32.mrb[0].mxu0
        %v2431 = vpop.f32.mrb[0].mxu0
        %v2432 = vadd.f32 %v2074, %v2431
        %v2433 = vpop.f32.mrb[0].mxu0
        %2434 = vmatprep.mubr.bf16.mxu0 0
        %2435 = vmatmul.mubr.bf16.gmra.mrb[0].mxu0 %v2217
        %v2436 = vpop.f32.mrb[0].mxu0
        %v2437 = vadd.f32 %v2079, %v2436
        %v2438 = vpop.f32.mrb[0].mxu0
        %v2439 = vpop.f32.mrb[0].mxu0
        %v2440 = vadd.f32 %v2082, %v2439
        %v2441 = vpop.f32.mrb[0].mxu0
        %2442 = vmatprep.mubr.bf16.mxu0 0
        %2443 = vmatmul.mubr.bf16.gmra.mrb[0].mxu0 %v2225
        %v2444 = vpop.f32.mrb[0].mxu0
        %v2445 = vadd.f32 %v2087, %v2444
        %v2446 = vpop.f32.mrb[0].mxu0
        %v2447 = vpop.f32.mrb[0].mxu0
        %v2448 = vadd.f32 %v2090, %v2447
        %v2449 = vpop.f32.mrb[0].mxu0
        %2450 = vmatprep.mubr.bf16.mxu0 0
        %2451 = vmatmul.mubr.bf16.gmra.mrb[0].mxu0 %v2233
        %v2452 = vpop.f32.mrb[0].mxu0
        %v2453 = vadd.f32 %v2095, %v2452
        %v2454 = vpop.f32.mrb[0].mxu0
        %v2455 = vpop.f32.mrb[0].mxu0
        %v2456 = vadd.f32 %v2098, %v2455
        %v2457 = vpop.f32.mrb[0].mxu0
        %2458 = vmatprep.mubr.bf16.mxu0 0
        %2459 = vmatmul.mubr.bf16.gmra.mrb[0].mxu0 %v2241
        %v2460 = vpop.f32.mrb[0].mxu0
        %v2461 = vadd.f32 %v2103, %v2460
        %v2462 = vpop.f32.mrb[0].mxu0
        %v2463 = vpop.f32.mrb[0].mxu0
        %v2464 = vadd.f32 %v2106, %v2463
        %v2465 = vpop.f32.mrb[0].mxu0
        %2466 = vmatprep.mubr.bf16.mxu0 0
        %2467 = vmatmul.mubr.bf16.gmra.mrb[0].mxu0 %v2249
        %v2468 = vpop.f32.mrb[0].mxu0
        %v2469 = vadd.f32 %v2111, %v2468
        %v2470 = vpop.f32.mrb[0].mxu0
        %v2471 = vpop.f32.mrb[0].mxu0
        %v2472 = vadd.f32 %v2114, %v2471
        %v2473 = vpop.f32.mrb[0].mxu0
        %2474 = vmatprep.mubr.bf16.mxu0 0
        %2475 = vmatmul.mubr.bf16.gmra.mrb[0].mxu0 %v2257
        %v2476 = vpop.f32.mrb[0].mxu0
        %v2477 = vadd.f32 %v2119, %v2476
        %v2478 = vpop.f32.mrb[0].mxu0
        %v2479 = vpop.f32.mrb[0].mxu0
        %v2480 = vadd.f32 %v2122, %v2479
        %v2481 = vpop.f32.mrb[0].mxu0
        %2482 = vmatprep.mubr.bf16.mxu0 0
        %2483 = vmatmul.mubr.bf16.gmra.mrb[0].mxu0 %v2265
        %v2484 = vpop.f32.mrb[0].mxu0
        %v2485 = vadd.f32 %v2127, %v2484
        %v2486 = vpop.f32.mrb[0].mxu0
        %v2487 = vpop.f32.mrb[0].mxu0
        %v2488 = vadd.f32 %v2130, %v2487
        %v2489 = vpop.f32.mrb[0].mxu0
        %2490 = vmatprep.mubr.bf16.mxu0 0
        %2491 = vmatmul.mubr.bf16.gmra.mrb[0].mxu0 %v2273
        %v2492 = vpop.f32.mrb[0].mxu0
        %v2493 = vadd.f32 %v2135, %v2492
        %v2494 = vpop.f32.mrb[0].mxu0
        %v2495 = vpop.f32.mrb[0].mxu0
        %v2496 = vadd.f32 %v2138, %v2495
        %v2497 = vpop.f32.mrb[0].mxu0
        %2498 = vdwg.mxu0
        %v2499 = vld [vmem:[#allocation2 + $0x8] sm:$0xff]
        %v2500 = vld [vmem:[#allocation2 + $0x10] sm:$0xff]
        %v2501 = vld [vmem:[#allocation2 + $0x18] sm:$0xff]
        %v2502 = vld [vmem:[#allocation2 + $0x20] sm:$0xff]
        %v2503 = vld [vmem:[#allocation2 + $0x28] sm:$0xff]
        %v2504 = vld [vmem:[#allocation2 + $0x30] sm:$0xff]
        %v2505 = vld [vmem:[#allocation2 + $0x38] sm:$0xff]
        %v2506 = vld [vmem:[#allocation2 + $0x40] sm:$0xff]
        %v2507 = vld [vmem:[#allocation2 + $0x48] sm:$0xff]
        %v2508 = vld [vmem:[#allocation2 + $0x50] sm:$0xff]
        %v2509 = vld [vmem:[#allocation2 + $0x58] sm:$0xff]
        %v2510 = vld [vmem:[#allocation2 + $0x60] sm:$0xff]
        %v2511 = vld [vmem:[#allocation2 + $0x68] sm:$0xff]
        %v2512 = vld [vmem:[#allocation2 + $0x70] sm:$0xff]
        %v2513 = vld [vmem:[#allocation2 + $0x78] sm:$0xff]
        %v2514 = vld [vmem:[#allocation2 + $0x80] sm:$0xff]
        %v2515 = vld [vmem:[#allocation2 + $0x88] sm:$0x1]
        %v2516 = vsel %vm1476, 1, 0
        %v2517 = vsel %vm1477, 1, 0
        %v2518 = vsel %vm1478, 1, 0
        %v2519 = vsel %vm1479, 1, 0
        %v2520 = vsel %vm1480, 1, 0
        %v2521 = vsel %vm1481, 1, 0
        %v2522 = vsel %vm1482, 1, 0
        %v2523 = vsel %vm1483, 1, 0
        %v2524 = vsel %vm1484, 1, 0
        %v2525 = vsel %vm1485, 1, 0
        %v2526 = vsel %vm1486, 1, 0
        %v2527 = vsel %vm1487, 1, 0
        %v2528 = vsel %vm1488, 1, 0
        %v2529 = vsel %vm1489, 1, 0
        %v2530 = vsel %vm1490, 1, 0
        %v2531 = vsel %vm1491, 1, 0
        %v2532 = vsel %vm1492, 1, 0
        %v2533 = vsel %vm1493, 1, 0
        %v2534 = vsel %vm1494, 1, 0
        %v2535 = vsel %vm1495, 1, 0
        %v2536 = vsel %vm1496, 1, 0
        %v2537 = vsel %vm1497, 1, 0
        %v2538 = vsel %vm1498, 1, 0
        %v2539 = vsel %vm1499, 1, 0
        %v2540 = vsel %vm1500, 1, 0
        %v2541 = vsel %vm1501, 1, 0
        %v2542 = vsel %vm1502, 1, 0
        %v2543 = vsel %vm1503, 1, 0
        %v2544 = vsel %vm1504, 1, 0
        %v2545 = vsel %vm1505, 1, 0
        %v2546 = vsel %vm1506, 1, 0
        %v2547 = vsel %vm1507, 1, 0
        %vm2548 = vcmp.eq.s32.totalorder %v2516, 1
        %vm2549 = vcmp.eq.s32.totalorder %v2517, 1
        %vm2550 = vcmp.eq.s32.totalorder %v2518, 1
        %vm2551 = vcmp.eq.s32.totalorder %v2519, 1
        %vm2552 = vcmp.eq.s32.totalorder %v2520, 1
        %vm2553 = vcmp.eq.s32.totalorder %v2521, 1
        %vm2554 = vcmp.eq.s32.totalorder %v2522, 1
        %vm2555 = vcmp.eq.s32.totalorder %v2523, 1
        %vm2556 = vcmp.eq.s32.totalorder %v2524, 1
        %vm2557 = vcmp.eq.s32.totalorder %v2525, 1
        %vm2558 = vcmp.eq.s32.totalorder %v2526, 1
        %vm2559 = vcmp.eq.s32.totalorder %v2527, 1
        %vm2560 = vcmp.eq.s32.totalorder %v2528, 1
        %vm2561 = vcmp.eq.s32.totalorder %v2529, 1
        %vm2562 = vcmp.eq.s32.totalorder %v2530, 1
        %vm2563 = vcmp.eq.s32.totalorder %v2531, 1
        %vm2564 = vcmp.eq.s32.totalorder %v2532, 1
        %vm2565 = vcmp.eq.s32.totalorder %v2533, 1
        %vm2566 = vcmp.eq.s32.totalorder %v2534, 1
        %vm2567 = vcmp.eq.s32.totalorder %v2535, 1
        %vm2568 = vcmp.eq.s32.totalorder %v2536, 1
        %vm2569 = vcmp.eq.s32.totalorder %v2537, 1
        %vm2570 = vcmp.eq.s32.totalorder %v2538, 1
        %vm2571 = vcmp.eq.s32.totalorder %v2539, 1
        %vm2572 = vcmp.eq.s32.totalorder %v2540, 1
        %vm2573 = vcmp.eq.s32.totalorder %v2541, 1
        %vm2574 = vcmp.eq.s32.totalorder %v2542, 1
        %vm2575 = vcmp.eq.s32.totalorder %v2543, 1
        %vm2576 = vcmp.eq.s32.totalorder %v2544, 1
        %vm2577 = vcmp.eq.s32.totalorder %v2545, 1
        %vm2578 = vcmp.eq.s32.totalorder %v2546, 1
        %vm2579 = vcmp.eq.s32.totalorder %v2547, 1
        %vm2580 = vmpackc.low %vm2548, %vm2548
        %vm2581 = vmpackc.low %vm2549, %vm2549
        %vm2582 = vmpackc.low %vm2550, %vm2550
        %vm2583 = vmpackc.low %vm2551, %vm2551
        %vm2584 = vmpackc.low %vm2552, %vm2552
        %vm2585 = vmpackc.low %vm2553, %vm2553
        %vm2586 = vmpackc.low %vm2554, %vm2554
        %vm2587 = vmpackc.low %vm2555, %vm2555
        %vm2588 = vmpackc.low %vm2556, %vm2556
        %vm2589 = vmpackc.low %vm2557, %vm2557
        %vm2590 = vmpackc.low %vm2558, %vm2558
        %vm2591 = vmpackc.low %vm2559, %vm2559
        %vm2592 = vmpackc.low %vm2560, %vm2560
        %vm2593 = vmpackc.low %vm2561, %vm2561
        %vm2594 = vmpackc.low %vm2562, %vm2562
        %vm2595 = vmpackc.low %vm2563, %vm2563
        %vm2596 = vmpackc.low %vm2564, %vm2564
        %vm2597 = vmpackc.low %vm2565, %vm2565
        %vm2598 = vmpackc.low %vm2566, %vm2566
        %vm2599 = vmpackc.low %vm2567, %vm2567
        %vm2600 = vmpackc.low %vm2568, %vm2568
        %vm2601 = vmpackc.low %vm2569, %vm2569
        %vm2602 = vmpackc.low %vm2570, %vm2570
        %vm2603 = vmpackc.low %vm2571, %vm2571
        %vm2604 = vmpackc.low %vm2572, %vm2572
        %vm2605 = vmpackc.low %vm2573, %vm2573
        %vm2606 = vmpackc.low %vm2574, %vm2574
        %vm2607 = vmpackc.low %vm2575, %vm2575
        %vm2608 = vmpackc.low %vm2576, %vm2576
        %vm2609 = vmpackc.low %vm2577, %vm2577
        %vm2610 = vmpackc.low %vm2578, %vm2578
        %vm2611 = vmpackc.low %vm2579, %vm2579
        %v2612 = vsel %vm2580, 65537, 0
        %v2613 = vsel %vm2581, 65537, 0
        %v2614 = vsel %vm2582, 65537, 0
        %v2615 = vsel %vm2583, 65537, 0
        %v2616 = vsel %vm2584, 65537, 0
        %v2617 = vsel %vm2585, 65537, 0
        %v2618 = vsel %vm2586, 65537, 0
        %v2619 = vsel %vm2587, 65537, 0
        %v2620 = vsel %vm2588, 65537, 0
        %v2621 = vsel %vm2589, 65537, 0
        %v2622 = vsel %vm2590, 65537, 0
        %v2623 = vsel %vm2591, 65537, 0
        %v2624 = vsel %vm2592, 65537, 0
        %v2625 = vsel %vm2593, 65537, 0
        %v2626 = vsel %vm2594, 65537, 0
        %v2627 = vsel %vm2595, 65537, 0
        %v2628 = vsel %vm2596, 65537, 0
        %v2629 = vsel %vm2597, 65537, 0
        %v2630 = vsel %vm2598, 65537, 0
        %v2631 = vsel %vm2599, 65537, 0
        %v2632 = vsel %vm2600, 65537, 0
        %v2633 = vsel %vm2601, 65537, 0
        %v2634 = vsel %vm2602, 65537, 0
        %v2635 = vsel %vm2603, 65537, 0
        %v2636 = vsel %vm2604, 65537, 0
        %v2637 = vsel %vm2605, 65537, 0
        %v2638 = vsel %vm2606, 65537, 0
        %v2639 = vsel %vm2607, 65537, 0
        %v2640 = vsel %vm2608, 65537, 0
        %v2641 = vsel %vm2609, 65537, 0
        %v2642 = vsel %vm2610, 65537, 0
        %v2643 = vsel %vm2611, 65537, 0
        %v2644 = vunpack.c.l.b16 %v2612
        %v2645 = vunpack.c.l.b16 %v2613
        %v2646 = vunpack.c.l.b16 %v2614
        %v2647 = vunpack.c.l.b16 %v2615
        %v2648 = vunpack.c.l.b16 %v2616
        %v2649 = vunpack.c.l.b16 %v2617
        %v2650 = vunpack.c.l.b16 %v2618
        %v2651 = vunpack.c.l.b16 %v2619
        %v2652 = vunpack.c.l.b16 %v2620
        %v2653 = vunpack.c.l.b16 %v2621
        %v2654 = vunpack.c.l.b16 %v2622
        %v2655 = vunpack.c.l.b16 %v2623
        %v2656 = vunpack.c.l.b16 %v2624
        %v2657 = vunpack.c.l.b16 %v2625
        %v2658 = vunpack.c.l.b16 %v2626
        %v2659 = vunpack.c.l.b16 %v2627
        %v2660 = vunpack.c.l.b16 %v2628
        %v2661 = vunpack.c.l.b16 %v2629
        %v2662 = vunpack.c.l.b16 %v2630
        %v2663 = vunpack.c.l.b16 %v2631
        %v2664 = vunpack.c.l.b16 %v2632
        %v2665 = vunpack.c.l.b16 %v2633
        %v2666 = vunpack.c.l.b16 %v2634
        %v2667 = vunpack.c.l.b16 %v2635
        %v2668 = vunpack.c.l.b16 %v2636
        %v2669 = vunpack.c.l.b16 %v2637
        %v2670 = vunpack.c.l.b16 %v2638
        %v2671 = vunpack.c.l.b16 %v2639
        %v2672 = vunpack.c.l.b16 %v2640
        %v2673 = vunpack.c.l.b16 %v2641
        %v2674 = vunpack.c.l.b16 %v2642
        %v2675 = vunpack.c.l.b16 %v2643
        %v2676 = vpack.c.b16 %v2645, %v2644
        %v2677 = vpack.c.b16 %v2647, %v2646
        %v2678 = vpack.c.b16 %v2649, %v2648
        %v2679 = vpack.c.b16 %v2651, %v2650
        %v2680 = vpack.c.b16 %v2653, %v2652
        %v2681 = vpack.c.b16 %v2655, %v2654
        %v2682 = vpack.c.b16 %v2657, %v2656
        %v2683 = vpack.c.b16 %v2659, %v2658
        %v2684 = vpack.c.b16 %v2661, %v2660
        %v2685 = vpack.c.b16 %v2663, %v2662
        %v2686 = vpack.c.b16 %v2665, %v2664
        %v2687 = vpack.c.b16 %v2667, %v2666
        %v2688 = vpack.c.b16 %v2669, %v2668
        %v2689 = vpack.c.b16 %v2671, %v2670
        %v2690 = vpack.c.b16 %v2673, %v2672
        %v2691 = vpack.c.b16 %v2675, %v2674
        %v2693 = vshrl.u32 %v2676, 16
        %v2695 = vrot.slane %v2693, 7
        %v2696 = vshll.u32 %v2676, 16
        %v2698 = vor.u32 %v2695, %v2696
        %v2700 = vshrl.u32 %v2677, 16
        %v2702 = vrot.slane %v2700, 7
        %v2703 = vshll.u32 %v2677, 16
        %v2705 = vor.u32 %v2702, %v2703
        %v2706 = vsel %vm2141, %v2695, %v2705
        %v2708 = vshrl.u32 %v2678, 16
        %v2710 = vrot.slane %v2708, 7
        %v2711 = vshll.u32 %v2678, 16
        %v2713 = vor.u32 %v2710, %v2711
        %v2714 = vsel %vm2141, %v2702, %v2713
        %v2716 = vshrl.u32 %v2679, 16
        %v2718 = vrot.slane %v2716, 7
        %v2719 = vshll.u32 %v2679, 16
        %v2721 = vor.u32 %v2718, %v2719
        %v2722 = vsel %vm2141, %v2710, %v2721
        %v2724 = vshrl.u32 %v2680, 16
        %v2726 = vrot.slane %v2724, 7
        %v2727 = vshll.u32 %v2680, 16
        %v2729 = vor.u32 %v2726, %v2727
        %v2730 = vsel %vm2141, %v2718, %v2729
        %v2732 = vshrl.u32 %v2681, 16
        %v2734 = vrot.slane %v2732, 7
        %v2735 = vshll.u32 %v2681, 16
        %v2737 = vor.u32 %v2734, %v2735
        %v2738 = vsel %vm2141, %v2726, %v2737
        %v2740 = vshrl.u32 %v2682, 16
        %v2742 = vrot.slane %v2740, 7
        %v2743 = vshll.u32 %v2682, 16
        %v2745 = vor.u32 %v2742, %v2743
        %v2746 = vsel %vm2141, %v2734, %v2745
        %v2748 = vshrl.u32 %v2683, 16
        %v2750 = vrot.slane %v2748, 7
        %v2751 = vshll.u32 %v2683, 16
        %v2753 = vor.u32 %v2750, %v2751
        %v2754 = vsel %vm2141, %v2742, %v2753
        %v2756 = vshrl.u32 %v2684, 16
        %v2758 = vrot.slane %v2756, 7
        %v2759 = vshll.u32 %v2684, 16
        %v2761 = vor.u32 %v2758, %v2759
        %v2762 = vsel %vm2141, %v2750, %v2761
        %v2764 = vshrl.u32 %v2685, 16
        %v2766 = vrot.slane %v2764, 7
        %v2767 = vshll.u32 %v2685, 16
        %v2769 = vor.u32 %v2766, %v2767
        %v2770 = vsel %vm2141, %v2758, %v2769
        %v2772 = vshrl.u32 %v2686, 16
        %v2774 = vrot.slane %v2772, 7
        %v2775 = vshll.u32 %v2686, 16
        %v2777 = vor.u32 %v2774, %v2775
        %v2778 = vsel %vm2141, %v2766, %v2777
        %v2780 = vshrl.u32 %v2687, 16
        %v2782 = vrot.slane %v2780, 7
        %v2783 = vshll.u32 %v2687, 16
        %v2785 = vor.u32 %v2782, %v2783
        %v2786 = vsel %vm2141, %v2774, %v2785
        %v2788 = vshrl.u32 %v2688, 16
        %v2790 = vrot.slane %v2788, 7
        %v2791 = vshll.u32 %v2688, 16
        %v2793 = vor.u32 %v2790, %v2791
        %v2794 = vsel %vm2141, %v2782, %v2793
        %v2796 = vshrl.u32 %v2689, 16
        %v2798 = vrot.slane %v2796, 7
        %v2799 = vshll.u32 %v2689, 16
        %v2801 = vor.u32 %v2798, %v2799
        %v2802 = vsel %vm2141, %v2790, %v2801
        %v2804 = vshrl.u32 %v2690, 16
        %v2806 = vrot.slane %v2804, 7
        %v2807 = vshll.u32 %v2690, 16
        %v2809 = vor.u32 %v2806, %v2807
        %v2810 = vsel %vm2141, %v2798, %v2809
        %v2812 = vshrl.u32 %v2691, 16
        %v2814 = vrot.slane %v2812, 7
        %v2815 = vshll.u32 %v2691, 16
        %v2817 = vor.u32 %v2814, %v2815
        %v2818 = vsel %vm2141, %v2806, %v2817
        %vm2819 = vcmp.ne.s16.totalorder %v2698, 0
        %vm2820 = vcmp.ne.s16.totalorder %v2706, 0
        %vm2821 = vcmp.ne.s16.totalorder %v2714, 0
        %vm2822 = vcmp.ne.s16.totalorder %v2722, 0
        %vm2823 = vcmp.ne.s16.totalorder %v2730, 0
        %vm2824 = vcmp.ne.s16.totalorder %v2738, 0
        %vm2825 = vcmp.ne.s16.totalorder %v2746, 0
        %vm2826 = vcmp.ne.s16.totalorder %v2754, 0
        %vm2827 = vcmp.ne.s16.totalorder %v2762, 0
        %vm2828 = vcmp.ne.s16.totalorder %v2770, 0
        %vm2829 = vcmp.ne.s16.totalorder %v2778, 0
        %vm2830 = vcmp.ne.s16.totalorder %v2786, 0
        %vm2831 = vcmp.ne.s16.totalorder %v2794, 0
        %vm2832 = vcmp.ne.s16.totalorder %v2802, 0
        %vm2833 = vcmp.ne.s16.totalorder %v2810, 0
        %vm2834 = vcmp.ne.s16.totalorder %v2818, 0
        %vm2835 = vcmp.ne.s16.totalorder %v2814, 0
        %v2836 = vsel %vm2819, %v2499, 0
        %v2837 = vsel %vm2820, %v2500, 0
        %v2838 = vsel %vm2821, %v2501, 0
        %v2839 = vsel %vm2822, %v2502, 0
        %v2840 = vsel %vm2823, %v2503, 0
        %v2841 = vsel %vm2824, %v2504, 0
        %v2842 = vsel %vm2825, %v2505, 0
        %v2843 = vsel %vm2826, %v2506, 0
        %v2844 = vsel %vm2827, %v2507, 0
        %v2845 = vsel %vm2828, %v2508, 0
        %v2846 = vsel %vm2829, %v2509, 0
        %v2847 = vsel %vm2830, %v2510, 0
        %v2848 = vsel %vm2831, %v2511, 0
        %v2849 = vsel %vm2832, %v2512, 0
        %v2850 = vsel %vm2833, %v2513, 0
        %v2851 = vsel %vm2834, %v2514, 0
        %v2852 = vsel %vm2835, %v2515, 0
        %s2853 = scalar_lea.vmem [#allocation8], 128
        %v2854 = vld [vmem:[%s2853] sm:$0xf]
        %v2855 = vld [vmem:[%s2853 + $0x4] sm:$0xf]
        %v2856 = vld [vmem:[%s2853 + $0x8] sm:$0xf]
        %v2857 = vld [vmem:[%s2853 + $0xc] sm:$0xf]
        %v2858 = vld [vmem:[%s2853 + $0x10] sm:$0xf]
        %v2859 = vld [vmem:[%s2853 + $0x14] sm:$0xf]
        %v2860 = vld [vmem:[%s2853 + $0x18] sm:$0xf]
        %v2861 = vld [vmem:[%s2853 + $0x1c] sm:$0xf]
        %v2862 = vld [vmem:[%s2853 + $0x20] sm:$0xf]
        %v2863 = vld [vmem:[%s2853 + $0x24] sm:$0xf]
        %v2864 = vld [vmem:[%s2853 + $0x28] sm:$0xf]
        %v2865 = vld [vmem:[%s2853 + $0x2c] sm:$0xf]
        %v2866 = vld [vmem:[%s2853 + $0x30] sm:$0xf]
        %v2867 = vld [vmem:[%s2853 + $0x34] sm:$0xf]
        %v2868 = vld [vmem:[%s2853 + $0x38] sm:$0xf]
        %v2869 = vld [vmem:[%s2853 + $0x3c] sm:$0xf]
        %v2871 = vshrl.u32 %v2836, 16
        %v2873 = vshll.u32 %v2836, 16
        %v2875 = vrot.slane %v2873, 1
        %v2876 = vor.u32 %v2871, %v2875
        %v2878 = vshll.u32 %v2837, 16
        %v2880 = vrot.slane %v2878, 1
        %v2881 = vsel %vm1737, %v2876, %v2880
        %v2882 = vshrl.u32 %v2837, 16
        %v2884 = vor.u32 %v2882, %v2880
        %v2886 = vshll.u32 %v2838, 16
        %v2888 = vrot.slane %v2886, 1
        %v2889 = vsel %vm1737, %v2884, %v2888
        %v2890 = vshrl.u32 %v2838, 16
        %v2892 = vor.u32 %v2890, %v2888
        %v2894 = vshll.u32 %v2839, 16
        %v2896 = vrot.slane %v2894, 1
        %v2897 = vsel %vm1737, %v2892, %v2896
        %v2898 = vshrl.u32 %v2839, 16
        %v2900 = vor.u32 %v2898, %v2896
        %v2902 = vshll.u32 %v2840, 16
        %v2904 = vrot.slane %v2902, 1
        %v2905 = vsel %vm1737, %v2900, %v2904
        %v2906 = vshrl.u32 %v2840, 16
        %v2908 = vor.u32 %v2906, %v2904
        %v2910 = vshll.u32 %v2841, 16
        %v2912 = vrot.slane %v2910, 1
        %v2913 = vsel %vm1737, %v2908, %v2912
        %v2914 = vshrl.u32 %v2841, 16
        %v2916 = vor.u32 %v2914, %v2912
        %v2918 = vshll.u32 %v2842, 16
        %v2920 = vrot.slane %v2918, 1
        %v2921 = vsel %vm1737, %v2916, %v2920
        %v2922 = vshrl.u32 %v2842, 16
        %v2924 = vor.u32 %v2922, %v2920
        %v2926 = vshll.u32 %v2843, 16
        %v2928 = vrot.slane %v2926, 1
        %v2929 = vsel %vm1737, %v2924, %v2928
        %v2930 = vshrl.u32 %v2843, 16
        %v2932 = vor.u32 %v2930, %v2928
        %v2934 = vshll.u32 %v2844, 16
        %v2936 = vrot.slane %v2934, 1
        %v2937 = vsel %vm1737, %v2932, %v2936
        %v2938 = vshrl.u32 %v2844, 16
        %v2940 = vor.u32 %v2938, %v2936
        %v2942 = vshll.u32 %v2845, 16
        %v2944 = vrot.slane %v2942, 1
        %v2945 = vsel %vm1737, %v2940, %v2944
        %v2946 = vshrl.u32 %v2845, 16
        %v2948 = vor.u32 %v2946, %v2944
        %v2950 = vshll.u32 %v2846, 16
        %v2952 = vrot.slane %v2950, 1
        %v2953 = vsel %vm1737, %v2948, %v2952
        %v2954 = vshrl.u32 %v2846, 16
        %v2956 = vor.u32 %v2954, %v2952
        %v2958 = vshll.u32 %v2847, 16
        %v2960 = vrot.slane %v2958, 1
        %v2961 = vsel %vm1737, %v2956, %v2960
        %v2962 = vshrl.u32 %v2847, 16
        %v2964 = vor.u32 %v2962, %v2960
        %v2966 = vshll.u32 %v2848, 16
        %v2968 = vrot.slane %v2966, 1
        %v2969 = vsel %vm1737, %v2964, %v2968
        %v2970 = vshrl.u32 %v2848, 16
        %v2972 = vor.u32 %v2970, %v2968
        %v2974 = vshll.u32 %v2849, 16
        %v2976 = vrot.slane %v2974, 1
        %v2977 = vsel %vm1737, %v2972, %v2976
        %v2978 = vshrl.u32 %v2849, 16
        %v2980 = vor.u32 %v2978, %v2976
        %v2982 = vshll.u32 %v2850, 16
        %v2984 = vrot.slane %v2982, 1
        %v2985 = vsel %vm1737, %v2980, %v2984
        %v2986 = vshrl.u32 %v2850, 16
        %v2988 = vor.u32 %v2986, %v2984
        %v2990 = vshll.u32 %v2851, 16
        %v2992 = vrot.slane %v2990, 1
        %v2993 = vsel %vm1737, %v2988, %v2992
        %v2994 = vshrl.u32 %v2851, 16
        %v2996 = vor.u32 %v2994, %v2992
        %v2998 = vshll.u32 %v2852, 16
        %v3000 = vrot.slane %v2998, 1
        %v3001 = vsel %vm1737, %v2996, %v3000
        %v3034 = vunpack.c.l.b16 %v2854
        %v3035 = vunpack.c.l.b16 %v2855
        %v3036 = vunpack.c.l.b16 %v2856
        %v3037 = vunpack.c.l.b16 %v2857
        %v3038 = vunpack.c.l.b16 %v2858
        %v3039 = vunpack.c.l.b16 %v2859
        %v3040 = vunpack.c.l.b16 %v2860
        %v3041 = vunpack.c.l.b16 %v2861
        %v3042 = vunpack.c.l.b16 %v2862
        %v3043 = vunpack.c.l.b16 %v2863
        %v3044 = vunpack.c.l.b16 %v2864
        %v3045 = vunpack.c.l.b16 %v2865
        %v3046 = vunpack.c.l.b16 %v2866
        %v3047 = vunpack.c.l.b16 %v2867
        %v3048 = vunpack.c.l.b16 %v2868
        %v3049 = vunpack.c.l.b16 %v2869
        %v3050 = vpack.c.b16 %v3035, %v3034
        %v3051 = vpack.c.b16 %v3037, %v3036
        %v3052 = vpack.c.b16 %v3039, %v3038
        %v3053 = vpack.c.b16 %v3041, %v3040
        %v3054 = vpack.c.b16 %v3043, %v3042
        %v3055 = vpack.c.b16 %v3045, %v3044
        %v3056 = vpack.c.b16 %v3047, %v3046
        %v3057 = vpack.c.b16 %v3049, %v3048
        %3066 = vmatprep.subr.bf16.mxu0 0
        %3067 = vmatpush1.bf16.msra.mxu0 %v3050
        %3068 = vmatprep.subr.bf16.mxu0 0
        %3069 = vmatpush1.bf16.msra.mxu0 %v3051
        %3070 = vmatprep.subr.bf16.mxu0 0
        %3071 = vmatpush1.bf16.msra.mxu0 %v3052
        %3072 = vmatprep.subr.bf16.mxu0 0
        %3073 = vmatpush1.bf16.msra.mxu0 %v3053
        %3074 = vmatprep.subr.bf16.mxu0 0
        %3075 = vmatpush1.bf16.msra.mxu0 %v3054
        %3076 = vmatprep.subr.bf16.mxu0 0
        %3077 = vmatpush1.bf16.msra.mxu0 %v3055
        %3078 = vmatprep.subr.bf16.mxu0 0
        %3079 = vmatpush1.bf16.msra.mxu0 %v3056
        %3080 = vmatprep.subr.bf16.mxu0 0
        %3081 = vmatpush1.bf16.msra.mxu0 %v3057
        %3082 = vmatprep.subr.bf16.mxu0 0
        %3083 = vmatpush1.bf16.msra.mxu0 0
        %3084 = vmatprep.subr.bf16.mxu0 0
        %3085 = vmatpush1.bf16.msra.mxu0 0
        %3086 = vmatprep.subr.bf16.mxu0 0
        %3087 = vmatpush1.bf16.msra.mxu0 0
        %3088 = vmatprep.subr.bf16.mxu0 0
        %3089 = vmatpush1.bf16.msra.mxu0 0
        %3090 = vmatprep.subr.bf16.mxu0 0
        %3091 = vmatpush1.bf16.msra.mxu0 0
        %3092 = vmatprep.subr.bf16.mxu0 0
        %3093 = vmatpush1.bf16.msra.mxu0 0
        %3094 = vmatprep.subr.bf16.mxu0 0
        %3095 = vmatpush1.bf16.msra.mxu0 0
        %3096 = vmatprep.subr.bf16.mxu0 0
        %3097 = vmatpush1.bf16.msra.mxu0 0
        %3098 = vmatprep.mubr.bf16.mxu0 0
        %3099 = vmatmul.mubr.bf16.gmra.mrb[0].mxu0 %v2881
        %v3100 = vpop.f32.mrb[0].mxu0
        %v3101 = vadd.f32 0.0, %v3100
        %v3102 = vpop.f32.mrb[0].mxu0
        %v3103 = vpop.f32.mrb[0].mxu0
        %v3104 = vadd.f32 0.0, %v3103
        %v3105 = vpop.f32.mrb[0].mxu0
        %3106 = vmatprep.mubr.bf16.mxu0 0
        %3107 = vmatmul.mubr.bf16.gmra.mrb[0].mxu0 %v2889
        %v3108 = vpop.f32.mrb[0].mxu0
        %v3109 = vadd.f32 0.0, %v3108
        %v3110 = vpop.f32.mrb[0].mxu0
        %v3111 = vpop.f32.mrb[0].mxu0
        %v3112 = vadd.f32 0.0, %v3111
        %v3113 = vpop.f32.mrb[0].mxu0
        %3114 = vmatprep.mubr.bf16.mxu0 0
        %3115 = vmatmul.mubr.bf16.gmra.mrb[0].mxu0 %v2897
        %v3116 = vpop.f32.mrb[0].mxu0
        %v3117 = vadd.f32 0.0, %v3116
        %v3118 = vpop.f32.mrb[0].mxu0
        %v3119 = vpop.f32.mrb[0].mxu0
        %v3120 = vadd.f32 0.0, %v3119
        %v3121 = vpop.f32.mrb[0].mxu0
        %3122 = vmatprep.mubr.bf16.mxu0 0
        %3123 = vmatmul.mubr.bf16.gmra.mrb[0].mxu0 %v2905
        %v3124 = vpop.f32.mrb[0].mxu0
        %v3125 = vadd.f32 0.0, %v3124
        %v3126 = vpop.f32.mrb[0].mxu0
        %v3127 = vpop.f32.mrb[0].mxu0
        %v3128 = vadd.f32 0.0, %v3127
        %v3129 = vpop.f32.mrb[0].mxu0
        %3130 = vmatprep.mubr.bf16.mxu0 0
        %3131 = vmatmul.mubr.bf16.gmra.mrb[0].mxu0 %v2913
        %v3132 = vpop.f32.mrb[0].mxu0
        %v3133 = vadd.f32 0.0, %v3132
        %v3134 = vpop.f32.mrb[0].mxu0
        %v3135 = vpop.f32.mrb[0].mxu0
        %v3136 = vadd.f32 0.0, %v3135
        %v3137 = vpop.f32.mrb[0].mxu0
        %3138 = vmatprep.mubr.bf16.mxu0 0
        %3139 = vmatmul.mubr.bf16.gmra.mrb[0].mxu0 %v2921
        %v3140 = vpop.f32.mrb[0].mxu0
        %v3141 = vadd.f32 0.0, %v3140
        %v3142 = vpop.f32.mrb[0].mxu0
        %v3143 = vpop.f32.mrb[0].mxu0
        %v3144 = vadd.f32 0.0, %v3143
        %v3145 = vpop.f32.mrb[0].mxu0
        %3146 = vmatprep.mubr.bf16.mxu0 0
        %3147 = vmatmul.mubr.bf16.gmra.mrb[0].mxu0 %v2929
        %v3148 = vpop.f32.mrb[0].mxu0
        %v3149 = vadd.f32 0.0, %v3148
        %v3150 = vpop.f32.mrb[0].mxu0
        %v3151 = vpop.f32.mrb[0].mxu0
        %v3152 = vadd.f32 0.0, %v3151
        %v3153 = vpop.f32.mrb[0].mxu0
        %3154 = vmatprep.mubr.bf16.mxu0 0
        %3155 = vmatmul.mubr.bf16.gmra.mrb[0].mxu0 %v2937
        %v3156 = vpop.f32.mrb[0].mxu0
        %v3157 = vadd.f32 0.0, %v3156
        %v3158 = vpop.f32.mrb[0].mxu0
        %v3159 = vpop.f32.mrb[0].mxu0
        %v3160 = vadd.f32 0.0, %v3159
        %v3161 = vpop.f32.mrb[0].mxu0
        %3162 = vmatprep.mubr.bf16.mxu0 0
        %3163 = vmatmul.mubr.bf16.gmra.mrb[0].mxu0 %v2945
        %v3164 = vpop.f32.mrb[0].mxu0
        %v3165 = vadd.f32 0.0, %v3164
        %v3166 = vpop.f32.mrb[0].mxu0
        %v3167 = vpop.f32.mrb[0].mxu0
        %v3168 = vadd.f32 0.0, %v3167
        %v3169 = vpop.f32.mrb[0].mxu0
        %3170 = vmatprep.mubr.bf16.mxu0 0
        %3171 = vmatmul.mubr.bf16.gmra.mrb[0].mxu0 %v2953
        %v3172 = vpop.f32.mrb[0].mxu0
        %v3173 = vadd.f32 0.0, %v3172
        %v3174 = vpop.f32.mrb[0].mxu0
        %v3175 = vpop.f32.mrb[0].mxu0
        %v3176 = vadd.f32 0.0, %v3175
        %v3177 = vpop.f32.mrb[0].mxu0
        %3178 = vmatprep.mubr.bf16.mxu0 0
        %3179 = vmatmul.mubr.bf16.gmra.mrb[0].mxu0 %v2961
        %v3180 = vpop.f32.mrb[0].mxu0
        %v3181 = vadd.f32 0.0, %v3180
        %v3182 = vpop.f32.mrb[0].mxu0
        %v3183 = vpop.f32.mrb[0].mxu0
        %v3184 = vadd.f32 0.0, %v3183
        %v3185 = vpop.f32.mrb[0].mxu0
        %3186 = vmatprep.mubr.bf16.mxu0 0
        %3187 = vmatmul.mubr.bf16.gmra.mrb[0].mxu0 %v2969
        %v3188 = vpop.f32.mrb[0].mxu0
        %v3189 = vadd.f32 0.0, %v3188
        %v3190 = vpop.f32.mrb[0].mxu0
        %v3191 = vpop.f32.mrb[0].mxu0
        %v3192 = vadd.f32 0.0, %v3191
        %v3193 = vpop.f32.mrb[0].mxu0
        %3194 = vmatprep.mubr.bf16.mxu0 0
        %3195 = vmatmul.mubr.bf16.gmra.mrb[0].mxu0 %v2977
        %v3196 = vpop.f32.mrb[0].mxu0
        %v3197 = vadd.f32 0.0, %v3196
        %v3198 = vpop.f32.mrb[0].mxu0
        %v3199 = vpop.f32.mrb[0].mxu0
        %v3200 = vadd.f32 0.0, %v3199
        %v3201 = vpop.f32.mrb[0].mxu0
        %3202 = vmatprep.mubr.bf16.mxu0 0
        %3203 = vmatmul.mubr.bf16.gmra.mrb[0].mxu0 %v2985
        %v3204 = vpop.f32.mrb[0].mxu0
        %v3205 = vadd.f32 0.0, %v3204
        %v3206 = vpop.f32.mrb[0].mxu0
        %v3207 = vpop.f32.mrb[0].mxu0
        %v3208 = vadd.f32 0.0, %v3207
        %v3209 = vpop.f32.mrb[0].mxu0
        %3210 = vmatprep.mubr.bf16.mxu0 0
        %3211 = vmatmul.mubr.bf16.gmra.mrb[0].mxu0 %v2993
        %v3212 = vpop.f32.mrb[0].mxu0
        %v3213 = vadd.f32 0.0, %v3212
        %v3214 = vpop.f32.mrb[0].mxu0
        %v3215 = vpop.f32.mrb[0].mxu0
        %v3216 = vadd.f32 0.0, %v3215
        %v3217 = vpop.f32.mrb[0].mxu0
        %3218 = vmatprep.mubr.bf16.mxu0 0
        %3219 = vmatmul.mubr.bf16.gmra.mrb[0].mxu0 %v3001
        %v3220 = vpop.f32.mrb[0].mxu0
        %v3221 = vadd.f32 0.0, %v3220
        %v3222 = vpop.f32.mrb[0].mxu0
        %v3223 = vpop.f32.mrb[0].mxu0
        %v3224 = vadd.f32 0.0, %v3223
        %v3225 = vpop.f32.mrb[0].mxu0
        %3226 = vdwg.mxu0
        %v3227 = vadd.f32 %v2373, %v3101
        %v3228 = vadd.f32 %v2376, %v3104
        %v3229 = vadd.f32 %v2381, %v3109
        %v3230 = vadd.f32 %v2384, %v3112
        %v3231 = vadd.f32 %v2389, %v3117
        %v3232 = vadd.f32 %v2392, %v3120
        %v3233 = vadd.f32 %v2397, %v3125
        %v3234 = vadd.f32 %v2400, %v3128
        %v3235 = vadd.f32 %v2405, %v3133
        %v3236 = vadd.f32 %v2408, %v3136
        %v3237 = vadd.f32 %v2413, %v3141
        %v3238 = vadd.f32 %v2416, %v3144
        %v3239 = vadd.f32 %v2421, %v3149
        %v3240 = vadd.f32 %v2424, %v3152
        %v3241 = vadd.f32 %v2429, %v3157
        %v3242 = vadd.f32 %v2432, %v3160
        %v3243 = vadd.f32 %v2437, %v3165
        %v3244 = vadd.f32 %v2440, %v3168
        %v3245 = vadd.f32 %v2445, %v3173
        %v3246 = vadd.f32 %v2448, %v3176
        %v3247 = vadd.f32 %v2453, %v3181
        %v3248 = vadd.f32 %v2456, %v3184
        %v3249 = vadd.f32 %v2461, %v3189
        %v3250 = vadd.f32 %v2464, %v3192
        %v3251 = vadd.f32 %v2469, %v3197
        %v3252 = vadd.f32 %v2472, %v3200
        %v3253 = vadd.f32 %v2477, %v3205
        %v3254 = vadd.f32 %v2480, %v3208
        %v3255 = vadd.f32 %v2485, %v3213
        %v3256 = vadd.f32 %v2488, %v3216
        %v3257 = vadd.f32 %v2493, %v3221
        %v3258 = vadd.f32 %v2496, %v3224
        %v3259 = vld [vmem:[#allocation2 + $0x8] sm:$0x80]
        %v3260 = vld [vmem:[#allocation2 + $0x88] sm:$0xff]
        %v3261 = vsel %vm1865, %v3259, 0
        %v3262 = vsel %vm1866, %v2500, 0
        %v3263 = vsel %vm1867, %v2501, 0
        %v3264 = vsel %vm1868, %v2502, 0
        %v3265 = vsel %vm1869, %v2503, 0
        %v3266 = vsel %vm1870, %v2504, 0
        %v3267 = vsel %vm1871, %v2505, 0
        %v3268 = vsel %vm1872, %v2506, 0
        %v3269 = vsel %vm1873, %v2507, 0
        %v3270 = vsel %vm1874, %v2508, 0
        %v3271 = vsel %vm1875, %v2509, 0
        %v3272 = vsel %vm1876, %v2510, 0
        %v3273 = vsel %vm1877, %v2511, 0
        %v3274 = vsel %vm1878, %v2512, 0
        %v3275 = vsel %vm1879, %v2513, 0
        %v3276 = vsel %vm1880, %v2514, 0
        %v3277 = vsel %vm1881, %v3260, 0
        %s3278 = scalar_lea.vmem [#allocation8], 192
        %v3279 = vld [vmem:[%s3278] sm:$0xf]
        %v3280 = vld [vmem:[%s3278 + $0x4] sm:$0xf]
        %v3281 = vld [vmem:[%s3278 + $0x8] sm:$0xf]
        %v3282 = vld [vmem:[%s3278 + $0xc] sm:$0xf]
        %v3283 = vld [vmem:[%s3278 + $0x10] sm:$0xf]
        %v3284 = vld [vmem:[%s3278 + $0x14] sm:$0xf]
        %v3285 = vld [vmem:[%s3278 + $0x18] sm:$0xf]
        %v3286 = vld [vmem:[%s3278 + $0x1c] sm:$0xf]
        %v3287 = vld [vmem:[%s3278 + $0x20] sm:$0xf]
        %v3288 = vld [vmem:[%s3278 + $0x24] sm:$0xf]
        %v3289 = vld [vmem:[%s3278 + $0x28] sm:$0xf]
        %v3290 = vld [vmem:[%s3278 + $0x2c] sm:$0xf]
        %v3291 = vld [vmem:[%s3278 + $0x30] sm:$0xf]
        %v3292 = vld [vmem:[%s3278 + $0x34] sm:$0xf]
        %v3293 = vld [vmem:[%s3278 + $0x38] sm:$0xf]
        %v3294 = vld [vmem:[%s3278 + $0x3c] sm:$0xf]
        %v3296 = vshrl.u32 %v3261, 16
        %v3298 = vrot.slane %v3296, 7
        %v3300 = vshrl.u32 %v3262, 16
        %v3302 = vrot.slane %v3300, 7
        %v3303 = vshll.u32 %v3262, 16
        %v3305 = vor.u32 %v3302, %v3303
        %v3306 = vsel %vm2141, %v3298, %v3305
        %v3308 = vshrl.u32 %v3263, 16
        %v3310 = vrot.slane %v3308, 7
        %v3311 = vshll.u32 %v3263, 16
        %v3313 = vor.u32 %v3310, %v3311
        %v3314 = vsel %vm2141, %v3302, %v3313
        %v3316 = vshrl.u32 %v3264, 16
        %v3318 = vrot.slane %v3316, 7
        %v3319 = vshll.u32 %v3264, 16
        %v3321 = vor.u32 %v3318, %v3319
        %v3322 = vsel %vm2141, %v3310, %v3321
        %v3324 = vshrl.u32 %v3265, 16
        %v3326 = vrot.slane %v3324, 7
        %v3327 = vshll.u32 %v3265, 16
        %v3329 = vor.u32 %v3326, %v3327
        %v3330 = vsel %vm2141, %v3318, %v3329
        %v3332 = vshrl.u32 %v3266, 16
        %v3334 = vrot.slane %v3332, 7
        %v3335 = vshll.u32 %v3266, 16
        %v3337 = vor.u32 %v3334, %v3335
        %v3338 = vsel %vm2141, %v3326, %v3337
        %v3340 = vshrl.u32 %v3267, 16
        %v3342 = vrot.slane %v3340, 7
        %v3343 = vshll.u32 %v3267, 16
        %v3345 = vor.u32 %v3342, %v3343
        %v3346 = vsel %vm2141, %v3334, %v3345
        %v3348 = vshrl.u32 %v3268, 16
        %v3350 = vrot.slane %v3348, 7
        %v3351 = vshll.u32 %v3268, 16
        %v3353 = vor.u32 %v3350, %v3351
        %v3354 = vsel %vm2141, %v3342, %v3353
        %v3356 = vshrl.u32 %v3269, 16
        %v3358 = vrot.slane %v3356, 7
        %v3359 = vshll.u32 %v3269, 16
        %v3361 = vor.u32 %v3358, %v3359
        %v3362 = vsel %vm2141, %v3350, %v3361
        %v3364 = vshrl.u32 %v3270, 16
        %v3366 = vrot.slane %v3364, 7
        %v3367 = vshll.u32 %v3270, 16
        %v3369 = vor.u32 %v3366, %v3367
        %v3370 = vsel %vm2141, %v3358, %v3369
        %v3372 = vshrl.u32 %v3271, 16
        %v3374 = vrot.slane %v3372, 7
        %v3375 = vshll.u32 %v3271, 16
        %v3377 = vor.u32 %v3374, %v3375
        %v3378 = vsel %vm2141, %v3366, %v3377
        %v3380 = vshrl.u32 %v3272, 16
        %v3382 = vrot.slane %v3380, 7
        %v3383 = vshll.u32 %v3272, 16
        %v3385 = vor.u32 %v3382, %v3383
        %v3386 = vsel %vm2141, %v3374, %v3385
        %v3388 = vshrl.u32 %v3273, 16
        %v3390 = vrot.slane %v3388, 7
        %v3391 = vshll.u32 %v3273, 16
        %v3393 = vor.u32 %v3390, %v3391
        %v3394 = vsel %vm2141, %v3382, %v3393
        %v3396 = vshrl.u32 %v3274, 16
        %v3398 = vrot.slane %v3396, 7
        %v3399 = vshll.u32 %v3274, 16
        %v3401 = vor.u32 %v3398, %v3399
        %v3402 = vsel %vm2141, %v3390, %v3401
        %v3404 = vshrl.u32 %v3275, 16
        %v3406 = vrot.slane %v3404, 7
        %v3407 = vshll.u32 %v3275, 16
        %v3409 = vor.u32 %v3406, %v3407
        %v3410 = vsel %vm2141, %v3398, %v3409
        %v3412 = vshrl.u32 %v3276, 16
        %v3414 = vrot.slane %v3412, 7
        %v3415 = vshll.u32 %v3276, 16
        %v3417 = vor.u32 %v3414, %v3415
        %v3418 = vsel %vm2141, %v3406, %v3417
        %v3420 = vshrl.u32 %v3277, 16
        %v3422 = vrot.slane %v3420, 7
        %v3423 = vshll.u32 %v3277, 16
        %v3425 = vor.u32 %v3422, %v3423
        %v3426 = vsel %vm2141, %v3414, %v3425
        %v3459 = vunpack.c.l.b16 %v3279
        %v3460 = vunpack.c.l.b16 %v3280
        %v3461 = vunpack.c.l.b16 %v3281
        %v3462 = vunpack.c.l.b16 %v3282
        %v3463 = vunpack.c.l.b16 %v3283
        %v3464 = vunpack.c.l.b16 %v3284
        %v3465 = vunpack.c.l.b16 %v3285
        %v3466 = vunpack.c.l.b16 %v3286
        %v3467 = vunpack.c.l.b16 %v3287
        %v3468 = vunpack.c.l.b16 %v3288
        %v3469 = vunpack.c.l.b16 %v3289
        %v3470 = vunpack.c.l.b16 %v3290
        %v3471 = vunpack.c.l.b16 %v3291
        %v3472 = vunpack.c.l.b16 %v3292
        %v3473 = vunpack.c.l.b16 %v3293
        %v3474 = vunpack.c.l.b16 %v3294
        %v3475 = vpack.c.b16 %v3460, %v3459
        %v3476 = vpack.c.b16 %v3462, %v3461
        %v3477 = vpack.c.b16 %v3464, %v3463
        %v3478 = vpack.c.b16 %v3466, %v3465
        %v3479 = vpack.c.b16 %v3468, %v3467
        %v3480 = vpack.c.b16 %v3470, %v3469
        %v3481 = vpack.c.b16 %v3472, %v3471
        %v3482 = vpack.c.b16 %v3474, %v3473
        %3491 = vmatprep.subr.bf16.mxu0 0
        %3492 = vmatpush1.bf16.msra.mxu0 %v3475
        %3493 = vmatprep.subr.bf16.mxu0 0
        %3494 = vmatpush1.bf16.msra.mxu0 %v3476
        %3495 = vmatprep.subr.bf16.mxu0 0
        %3496 = vmatpush1.bf16.msra.mxu0 %v3477
        %3497 = vmatprep.subr.bf16.mxu0 0
        %3498 = vmatpush1.bf16.msra.mxu0 %v3478
        %3499 = vmatprep.subr.bf16.mxu0 0
        %3500 = vmatpush1.bf16.msra.mxu0 %v3479
        %3501 = vmatprep.subr.bf16.mxu0 0
        %3502 = vmatpush1.bf16.msra.mxu0 %v3480
        %3503 = vmatprep.subr.bf16.mxu0 0
        %3504 = vmatpush1.bf16.msra.mxu0 %v3481
        %3505 = vmatprep.subr.bf16.mxu0 0
        %3506 = vmatpush1.bf16.msra.mxu0 %v3482
        %3507 = vmatprep.subr.bf16.mxu0 0
        %3508 = vmatpush1.bf16.msra.mxu0 0
        %3509 = vmatprep.subr.bf16.mxu0 0
        %3510 = vmatpush1.bf16.msra.mxu0 0
        %3511 = vmatprep.subr.bf16.mxu0 0
        %3512 = vmatpush1.bf16.msra.mxu0 0
        %3513 = vmatprep.subr.bf16.mxu0 0
        %3514 = vmatpush1.bf16.msra.mxu0 0
        %3515 = vmatprep.subr.bf16.mxu0 0
        %3516 = vmatpush1.bf16.msra.mxu0 0
        %3517 = vmatprep.subr.bf16.mxu0 0
        %3518 = vmatpush1.bf16.msra.mxu0 0
        %3519 = vmatprep.subr.bf16.mxu0 0
        %3520 = vmatpush1.bf16.msra.mxu0 0
        %3521 = vmatprep.subr.bf16.mxu0 0
        %3522 = vmatpush1.bf16.msra.mxu0 0
        %3523 = vmatprep.mubr.bf16.mxu0 0
        %3524 = vmatmul.mubr.bf16.gmra.mrb[0].mxu0 %v3306
        %v3525 = vpop.f32.mrb[0].mxu0
        %v3526 = vadd.f32 0.0, %v3525
        %v3527 = vpop.f32.mrb[0].mxu0
        %v3528 = vpop.f32.mrb[0].mxu0
        %v3529 = vadd.f32 0.0, %v3528
        %v3530 = vpop.f32.mrb[0].mxu0
        %3531 = vmatprep.mubr.bf16.mxu0 0
        %3532 = vmatmul.mubr.bf16.gmra.mrb[0].mxu0 %v3314
        %v3533 = vpop.f32.mrb[0].mxu0
        %v3534 = vadd.f32 0.0, %v3533
        %v3535 = vpop.f32.mrb[0].mxu0
        %v3536 = vpop.f32.mrb[0].mxu0
        %v3537 = vadd.f32 0.0, %v3536
        %v3538 = vpop.f32.mrb[0].mxu0
        %3539 = vmatprep.mubr.bf16.mxu0 0
        %3540 = vmatmul.mubr.bf16.gmra.mrb[0].mxu0 %v3322
        %v3541 = vpop.f32.mrb[0].mxu0
        %v3542 = vadd.f32 0.0, %v3541
        %v3543 = vpop.f32.mrb[0].mxu0
        %v3544 = vpop.f32.mrb[0].mxu0
        %v3545 = vadd.f32 0.0, %v3544
        %v3546 = vpop.f32.mrb[0].mxu0
        %3547 = vmatprep.mubr.bf16.mxu0 0
        %3548 = vmatmul.mubr.bf16.gmra.mrb[0].mxu0 %v3330
        %v3549 = vpop.f32.mrb[0].mxu0
        %v3550 = vadd.f32 0.0, %v3549
        %v3551 = vpop.f32.mrb[0].mxu0
        %v3552 = vpop.f32.mrb[0].mxu0
        %v3553 = vadd.f32 0.0, %v3552
        %v3554 = vpop.f32.mrb[0].mxu0
        %3555 = vmatprep.mubr.bf16.mxu0 0
        %3556 = vmatmul.mubr.bf16.gmra.mrb[0].mxu0 %v3338
        %v3557 = vpop.f32.mrb[0].mxu0
        %v3558 = vadd.f32 0.0, %v3557
        %v3559 = vpop.f32.mrb[0].mxu0
        %v3560 = vpop.f32.mrb[0].mxu0
        %v3561 = vadd.f32 0.0, %v3560
        %v3562 = vpop.f32.mrb[0].mxu0
        %3563 = vmatprep.mubr.bf16.mxu0 0
        %3564 = vmatmul.mubr.bf16.gmra.mrb[0].mxu0 %v3346
        %v3565 = vpop.f32.mrb[0].mxu0
        %v3566 = vadd.f32 0.0, %v3565
        %v3567 = vpop.f32.mrb[0].mxu0
        %v3568 = vpop.f32.mrb[0].mxu0
        %v3569 = vadd.f32 0.0, %v3568
        %v3570 = vpop.f32.mrb[0].mxu0
        %3571 = vmatprep.mubr.bf16.mxu0 0
        %3572 = vmatmul.mubr.bf16.gmra.mrb[0].mxu0 %v3354
        %v3573 = vpop.f32.mrb[0].mxu0
        %v3574 = vadd.f32 0.0, %v3573
        %v3575 = vpop.f32.mrb[0].mxu0
        %v3576 = vpop.f32.mrb[0].mxu0
        %v3577 = vadd.f32 0.0, %v3576
        %v3578 = vpop.f32.mrb[0].mxu0
        %3579 = vmatprep.mubr.bf16.mxu0 0
        %3580 = vmatmul.mubr.bf16.gmra.mrb[0].mxu0 %v3362
        %v3581 = vpop.f32.mrb[0].mxu0
        %v3582 = vadd.f32 0.0, %v3581
        %v3583 = vpop.f32.mrb[0].mxu0
        %v3584 = vpop.f32.mrb[0].mxu0
        %v3585 = vadd.f32 0.0, %v3584
        %v3586 = vpop.f32.mrb[0].mxu0
        %3587 = vmatprep.mubr.bf16.mxu0 0
        %3588 = vmatmul.mubr.bf16.gmra.mrb[0].mxu0 %v3370
        %v3589 = vpop.f32.mrb[0].mxu0
        %v3590 = vadd.f32 0.0, %v3589
        %v3591 = vpop.f32.mrb[0].mxu0
        %v3592 = vpop.f32.mrb[0].mxu0
        %v3593 = vadd.f32 0.0, %v3592
        %v3594 = vpop.f32.mrb[0].mxu0
        %3595 = vmatprep.mubr.bf16.mxu0 0
        %3596 = vmatmul.mubr.bf16.gmra.mrb[0].mxu0 %v3378
        %v3597 = vpop.f32.mrb[0].mxu0
        %v3598 = vadd.f32 0.0, %v3597
        %v3599 = vpop.f32.mrb[0].mxu0
        %v3600 = vpop.f32.mrb[0].mxu0
        %v3601 = vadd.f32 0.0, %v3600
        %v3602 = vpop.f32.mrb[0].mxu0
        %3603 = vmatprep.mubr.bf16.mxu0 0
        %3604 = vmatmul.mubr.bf16.gmra.mrb[0].mxu0 %v3386
        %v3605 = vpop.f32.mrb[0].mxu0
        %v3606 = vadd.f32 0.0, %v3605
        %v3607 = vpop.f32.mrb[0].mxu0
        %v3608 = vpop.f32.mrb[0].mxu0
        %v3609 = vadd.f32 0.0, %v3608
        %v3610 = vpop.f32.mrb[0].mxu0
        %3611 = vmatprep.mubr.bf16.mxu0 0
        %3612 = vmatmul.mubr.bf16.gmra.mrb[0].mxu0 %v3394
        %v3613 = vpop.f32.mrb[0].mxu0
        %v3614 = vadd.f32 0.0, %v3613
        %v3615 = vpop.f32.mrb[0].mxu0
        %v3616 = vpop.f32.mrb[0].mxu0
        %v3617 = vadd.f32 0.0, %v3616
        %v3618 = vpop.f32.mrb[0].mxu0
        %3619 = vmatprep.mubr.bf16.mxu0 0
        %3620 = vmatmul.mubr.bf16.gmra.mrb[0].mxu0 %v3402
        %v3621 = vpop.f32.mrb[0].mxu0
        %v3622 = vadd.f32 0.0, %v3621
        %v3623 = vpop.f32.mrb[0].mxu0
        %v3624 = vpop.f32.mrb[0].mxu0
        %v3625 = vadd.f32 0.0, %v3624
        %v3626 = vpop.f32.mrb[0].mxu0
        %3627 = vmatprep.mubr.bf16.mxu0 0
        %3628 = vmatmul.mubr.bf16.gmra.mrb[0].mxu0 %v3410
        %v3629 = vpop.f32.mrb[0].mxu0
        %v3630 = vadd.f32 0.0, %v3629
        %v3631 = vpop.f32.mrb[0].mxu0
        %v3632 = vpop.f32.mrb[0].mxu0
        %v3633 = vadd.f32 0.0, %v3632
        %v3634 = vpop.f32.mrb[0].mxu0
        %3635 = vmatprep.mubr.bf16.mxu0 0
        %3636 = vmatmul.mubr.bf16.gmra.mrb[0].mxu0 %v3418
        %v3637 = vpop.f32.mrb[0].mxu0
        %v3638 = vadd.f32 0.0, %v3637
        %v3639 = vpop.f32.mrb[0].mxu0
        %v3640 = vpop.f32.mrb[0].mxu0
        %v3641 = vadd.f32 0.0, %v3640
        %v3642 = vpop.f32.mrb[0].mxu0
        %3643 = vmatprep.mubr.bf16.mxu0 0
        %3644 = vmatmul.mubr.bf16.gmra.mrb[0].mxu0 %v3426
        %v3645 = vpop.f32.mrb[0].mxu0
        %v3646 = vadd.f32 0.0, %v3645
        %v3647 = vpop.f32.mrb[0].mxu0
        %v3648 = vpop.f32.mrb[0].mxu0
        %v3649 = vadd.f32 0.0, %v3648
        %v3650 = vpop.f32.mrb[0].mxu0
        %3651 = vdwg.mxu0
        %v3652 = vadd.f32 %v3227, %v3526
        %v3653 = vadd.f32 %v3228, %v3529
        %v3654 = vadd.f32 %v3229, %v3534
        %v3655 = vadd.f32 %v3230, %v3537
        %v3656 = vadd.f32 %v3231, %v3542
        %v3657 = vadd.f32 %v3232, %v3545
        %v3658 = vadd.f32 %v3233, %v3550
        %v3659 = vadd.f32 %v3234, %v3553
        %v3660 = vadd.f32 %v3235, %v3558
        %v3661 = vadd.f32 %v3236, %v3561
        %v3662 = vadd.f32 %v3237, %v3566
        %v3663 = vadd.f32 %v3238, %v3569
        %v3664 = vadd.f32 %v3239, %v3574
        %v3665 = vadd.f32 %v3240, %v3577
        %v3666 = vadd.f32 %v3241, %v3582
        %v3667 = vadd.f32 %v3242, %v3585
        %v3668 = vadd.f32 %v3243, %v3590
        %v3669 = vadd.f32 %v3244, %v3593
        %v3670 = vadd.f32 %v3245, %v3598
        %v3671 = vadd.f32 %v3246, %v3601
        %v3672 = vadd.f32 %v3247, %v3606
        %v3673 = vadd.f32 %v3248, %v3609
        %v3674 = vadd.f32 %v3249, %v3614
        %v3675 = vadd.f32 %v3250, %v3617
        %v3676 = vadd.f32 %v3251, %v3622
        %v3677 = vadd.f32 %v3252, %v3625
        %v3678 = vadd.f32 %v3253, %v3630
        %v3679 = vadd.f32 %v3254, %v3633
        %v3680 = vadd.f32 %v3255, %v3638
        %v3681 = vadd.f32 %v3256, %v3641
        %v3682 = vadd.f32 %v3257, %v3646
        %v3683 = vadd.f32 %v3258, %v3649
        %s3684 = scalar_lea.vmem [#allocation8], 256
        %v3685 = vld [vmem:[%s3684] sm:$0xf]
        %v3686 = vld [vmem:[%s3684 + $0x4] sm:$0xf]
        %v3687 = vld [vmem:[%s3684 + $0x8] sm:$0xf]
        %v3688 = vld [vmem:[%s3684 + $0xc] sm:$0xf]
        %v3689 = vld [vmem:[%s3684 + $0x10] sm:$0xf]
        %v3690 = vld [vmem:[%s3684 + $0x14] sm:$0xf]
        %v3691 = vld [vmem:[%s3684 + $0x18] sm:$0xf]
        %v3692 = vld [vmem:[%s3684 + $0x1c] sm:$0xf]
        %v3693 = vld [vmem:[%s3684 + $0x20] sm:$0xf]
        %v3694 = vld [vmem:[%s3684 + $0x24] sm:$0xf]
        %v3695 = vld [vmem:[%s3684 + $0x28] sm:$0xf]
        %v3696 = vld [vmem:[%s3684 + $0x2c] sm:$0xf]
        %v3697 = vld [vmem:[%s3684 + $0x30] sm:$0xf]
        %v3698 = vld [vmem:[%s3684 + $0x34] sm:$0xf]
        %v3699 = vld [vmem:[%s3684 + $0x38] sm:$0xf]
        %v3700 = vld [vmem:[%s3684 + $0x3c] sm:$0xf]
        %v3717 = vunpack.c.l.b16 %v3685
        %v3718 = vunpack.c.l.b16 %v3686
        %v3719 = vunpack.c.l.b16 %v3687
        %v3720 = vunpack.c.l.b16 %v3688
        %v3721 = vunpack.c.l.b16 %v3689
        %v3722 = vunpack.c.l.b16 %v3690
        %v3723 = vunpack.c.l.b16 %v3691
        %v3724 = vunpack.c.l.b16 %v3692
        %v3725 = vunpack.c.l.b16 %v3693
        %v3726 = vunpack.c.l.b16 %v3694
        %v3727 = vunpack.c.l.b16 %v3695
        %v3728 = vunpack.c.l.b16 %v3696
        %v3729 = vunpack.c.l.b16 %v3697
        %v3730 = vunpack.c.l.b16 %v3698
        %v3731 = vunpack.c.l.b16 %v3699
        %v3732 = vunpack.c.l.b16 %v3700
        %v3733 = vpack.c.b16 %v3718, %v3717
        %v3734 = vpack.c.b16 %v3720, %v3719
        %v3735 = vpack.c.b16 %v3722, %v3721
        %v3736 = vpack.c.b16 %v3724, %v3723
        %v3737 = vpack.c.b16 %v3726, %v3725
        %v3738 = vpack.c.b16 %v3728, %v3727
        %v3739 = vpack.c.b16 %v3730, %v3729
        %v3740 = vpack.c.b16 %v3732, %v3731
        %3749 = vmatprep.subr.bf16.mxu0 0
        %3750 = vmatpush1.bf16.msra.mxu0 %v3733
        %3751 = vmatprep.subr.bf16.mxu0 0
        %3752 = vmatpush1.bf16.msra.mxu0 %v3734
        %3753 = vmatprep.subr.bf16.mxu0 0
        %3754 = vmatpush1.bf16.msra.mxu0 %v3735
        %3755 = vmatprep.subr.bf16.mxu0 0
        %3756 = vmatpush1.bf16.msra.mxu0 %v3736
        %3757 = vmatprep.subr.bf16.mxu0 0
        %3758 = vmatpush1.bf16.msra.mxu0 %v3737
        %3759 = vmatprep.subr.bf16.mxu0 0
        %3760 = vmatpush1.bf16.msra.mxu0 %v3738
        %3761 = vmatprep.subr.bf16.mxu0 0
        %3762 = vmatpush1.bf16.msra.mxu0 %v3739
        %3763 = vmatprep.subr.bf16.mxu0 0
        %3764 = vmatpush1.bf16.msra.mxu0 %v3740
        %3765 = vmatprep.subr.bf16.mxu0 0
        %3766 = vmatpush1.bf16.msra.mxu0 0
        %3767 = vmatprep.subr.bf16.mxu0 0
        %3768 = vmatpush1.bf16.msra.mxu0 0
        %3769 = vmatprep.subr.bf16.mxu0 0
        %3770 = vmatpush1.bf16.msra.mxu0 0
        %3771 = vmatprep.subr.bf16.mxu0 0
        %3772 = vmatpush1.bf16.msra.mxu0 0
        %3773 = vmatprep.subr.bf16.mxu0 0
        %3774 = vmatpush1.bf16.msra.mxu0 0
        %3775 = vmatprep.subr.bf16.mxu0 0
        %3776 = vmatpush1.bf16.msra.mxu0 0
        %3777 = vmatprep.subr.bf16.mxu0 0
        %3778 = vmatpush1.bf16.msra.mxu0 0
        %3779 = vmatprep.subr.bf16.mxu0 0
        %3780 = vmatpush1.bf16.msra.mxu0 0
        %3781 = vmatprep.mubr.bf16.mxu0 0
        %3782 = vmatmul.mubr.bf16.gmra.mrb[0].mxu0 %v2500
        %v3783 = vpop.f32.mrb[0].mxu0
        %v3784 = vadd.f32 0.0, %v3783
        %v3785 = vpop.f32.mrb[0].mxu0
        %v3786 = vpop.f32.mrb[0].mxu0
        %v3787 = vadd.f32 0.0, %v3786
        %v3788 = vpop.f32.mrb[0].mxu0
        %3789 = vmatprep.mubr.bf16.mxu0 0
        %3790 = vmatmul.mubr.bf16.gmra.mrb[0].mxu0 %v2501
        %v3791 = vpop.f32.mrb[0].mxu0
        %v3792 = vadd.f32 0.0, %v3791
        %v3793 = vpop.f32.mrb[0].mxu0
        %v3794 = vpop.f32.mrb[0].mxu0
        %v3795 = vadd.f32 0.0, %v3794
        %v3796 = vpop.f32.mrb[0].mxu0
        %3797 = vmatprep.mubr.bf16.mxu0 0
        %3798 = vmatmul.mubr.bf16.gmra.mrb[0].mxu0 %v2502
        %v3799 = vpop.f32.mrb[0].mxu0
        %v3800 = vadd.f32 0.0, %v3799
        %v3801 = vpop.f32.mrb[0].mxu0
        %v3802 = vpop.f32.mrb[0].mxu0
        %v3803 = vadd.f32 0.0, %v3802
        %v3804 = vpop.f32.mrb[0].mxu0
        %3805 = vmatprep.mubr.bf16.mxu0 0
        %3806 = vmatmul.mubr.bf16.gmra.mrb[0].mxu0 %v2503
        %v3807 = vpop.f32.mrb[0].mxu0
        %v3808 = vadd.f32 0.0, %v3807
        %v3809 = vpop.f32.mrb[0].mxu0
        %v3810 = vpop.f32.mrb[0].mxu0
        %v3811 = vadd.f32 0.0, %v3810
        %v3812 = vpop.f32.mrb[0].mxu0
        %3813 = vmatprep.mubr.bf16.mxu0 0
        %3814 = vmatmul.mubr.bf16.gmra.mrb[0].mxu0 %v2504
        %v3815 = vpop.f32.mrb[0].mxu0
        %v3816 = vadd.f32 0.0, %v3815
        %v3817 = vpop.f32.mrb[0].mxu0
        %v3818 = vpop.f32.mrb[0].mxu0
        %v3819 = vadd.f32 0.0, %v3818
        %v3820 = vpop.f32.mrb[0].mxu0
        %3821 = vmatprep.mubr.bf16.mxu0 0
        %3822 = vmatmul.mubr.bf16.gmra.mrb[0].mxu0 %v2505
        %v3823 = vpop.f32.mrb[0].mxu0
        %v3824 = vadd.f32 0.0, %v3823
        %v3825 = vpop.f32.mrb[0].mxu0
        %v3826 = vpop.f32.mrb[0].mxu0
        %v3827 = vadd.f32 0.0, %v3826
        %v3828 = vpop.f32.mrb[0].mxu0
        %3829 = vmatprep.mubr.bf16.mxu0 0
        %3830 = vmatmul.mubr.bf16.gmra.mrb[0].mxu0 %v2506
        %v3831 = vpop.f32.mrb[0].mxu0
        %v3832 = vadd.f32 0.0, %v3831
        %v3833 = vpop.f32.mrb[0].mxu0
        %v3834 = vpop.f32.mrb[0].mxu0
        %v3835 = vadd.f32 0.0, %v3834
        %v3836 = vpop.f32.mrb[0].mxu0
        %3837 = vmatprep.mubr.bf16.mxu0 0
        %3838 = vmatmul.mubr.bf16.gmra.mrb[0].mxu0 %v2507
        %v3839 = vpop.f32.mrb[0].mxu0
        %v3840 = vadd.f32 0.0, %v3839
        %v3841 = vpop.f32.mrb[0].mxu0
        %v3842 = vpop.f32.mrb[0].mxu0
        %v3843 = vadd.f32 0.0, %v3842
        %v3844 = vpop.f32.mrb[0].mxu0
        %3845 = vmatprep.mubr.bf16.mxu0 0
        %3846 = vmatmul.mubr.bf16.gmra.mrb[0].mxu0 %v2508
        %v3847 = vpop.f32.mrb[0].mxu0
        %v3848 = vadd.f32 0.0, %v3847
        %v3849 = vpop.f32.mrb[0].mxu0
        %v3850 = vpop.f32.mrb[0].mxu0
        %v3851 = vadd.f32 0.0, %v3850
        %v3852 = vpop.f32.mrb[0].mxu0
        %3853 = vmatprep.mubr.bf16.mxu0 0
        %3854 = vmatmul.mubr.bf16.gmra.mrb[0].mxu0 %v2509
        %v3855 = vpop.f32.mrb[0].mxu0
        %v3856 = vadd.f32 0.0, %v3855
        %v3857 = vpop.f32.mrb[0].mxu0
        %v3858 = vpop.f32.mrb[0].mxu0
        %v3859 = vadd.f32 0.0, %v3858
        %v3860 = vpop.f32.mrb[0].mxu0
        %3861 = vmatprep.mubr.bf16.mxu0 0
        %3862 = vmatmul.mubr.bf16.gmra.mrb[0].mxu0 %v2510
        %v3863 = vpop.f32.mrb[0].mxu0
        %v3864 = vadd.f32 0.0, %v3863
        %v3865 = vpop.f32.mrb[0].mxu0
        %v3866 = vpop.f32.mrb[0].mxu0
        %v3867 = vadd.f32 0.0, %v3866
        %v3868 = vpop.f32.mrb[0].mxu0
        %3869 = vmatprep.mubr.bf16.mxu0 0
        %3870 = vmatmul.mubr.bf16.gmra.mrb[0].mxu0 %v2511
        %v3871 = vpop.f32.mrb[0].mxu0
        %v3872 = vadd.f32 0.0, %v3871
        %v3873 = vpop.f32.mrb[0].mxu0
        %v3874 = vpop.f32.mrb[0].mxu0
        %v3875 = vadd.f32 0.0, %v3874
        %v3876 = vpop.f32.mrb[0].mxu0
        %3877 = vmatprep.mubr.bf16.mxu0 0
        %3878 = vmatmul.mubr.bf16.gmra.mrb[0].mxu0 %v2512
        %v3879 = vpop.f32.mrb[0].mxu0
        %v3880 = vadd.f32 0.0, %v3879
        %v3881 = vpop.f32.mrb[0].mxu0
        %v3882 = vpop.f32.mrb[0].mxu0
        %v3883 = vadd.f32 0.0, %v3882
        %v3884 = vpop.f32.mrb[0].mxu0
        %3885 = vmatprep.mubr.bf16.mxu0 0
        %3886 = vmatmul.mubr.bf16.gmra.mrb[0].mxu0 %v2513
        %v3887 = vpop.f32.mrb[0].mxu0
        %v3888 = vadd.f32 0.0, %v3887
        %v3889 = vpop.f32.mrb[0].mxu0
        %v3890 = vpop.f32.mrb[0].mxu0
        %v3891 = vadd.f32 0.0, %v3890
        %v3892 = vpop.f32.mrb[0].mxu0
        %3893 = vmatprep.mubr.bf16.mxu0 0
        %3894 = vmatmul.mubr.bf16.gmra.mrb[0].mxu0 %v2514
        %v3895 = vpop.f32.mrb[0].mxu0
        %v3896 = vadd.f32 0.0, %v3895
        %v3897 = vpop.f32.mrb[0].mxu0
        %v3898 = vpop.f32.mrb[0].mxu0
        %v3899 = vadd.f32 0.0, %v3898
        %v3900 = vpop.f32.mrb[0].mxu0
        %3901 = vmatprep.mubr.bf16.mxu0 0
        %3902 = vmatmul.mubr.bf16.gmra.mrb[0].mxu0 %v3260
        %v3903 = vpop.f32.mrb[0].mxu0
        %v3904 = vadd.f32 0.0, %v3903
        %v3905 = vpop.f32.mrb[0].mxu0
        %v3906 = vpop.f32.mrb[0].mxu0
        %v3907 = vadd.f32 0.0, %v3906
        %v3908 = vpop.f32.mrb[0].mxu0
        %3909 = vdwg.mxu0
        %v3910 = vadd.f32 %v3652, %v3784
        %v3911 = vadd.f32 %v3653, %v3787
        %v3912 = vadd.f32 %v3654, %v3792
        %v3913 = vadd.f32 %v3655, %v3795
        %v3914 = vadd.f32 %v3656, %v3800
        %v3915 = vadd.f32 %v3657, %v3803
        %v3916 = vadd.f32 %v3658, %v3808
        %v3917 = vadd.f32 %v3659, %v3811
        %v3918 = vadd.f32 %v3660, %v3816
        %v3919 = vadd.f32 %v3661, %v3819
        %v3920 = vadd.f32 %v3662, %v3824
        %v3921 = vadd.f32 %v3663, %v3827
        %v3922 = vadd.f32 %v3664, %v3832
        %v3923 = vadd.f32 %v3665, %v3835
        %v3924 = vadd.f32 %v3666, %v3840
        %v3925 = vadd.f32 %v3667, %v3843
        %v3926 = vadd.f32 %v3668, %v3848
        %v3927 = vadd.f32 %v3669, %v3851
        %v3928 = vadd.f32 %v3670, %v3856
        %v3929 = vadd.f32 %v3671, %v3859
        %v3930 = vadd.f32 %v3672, %v3864
        %v3931 = vadd.f32 %v3673, %v3867
        %v3932 = vadd.f32 %v3674, %v3872
        %v3933 = vadd.f32 %v3675, %v3875
        %v3934 = vadd.f32 %v3676, %v3880
        %v3935 = vadd.f32 %v3677, %v3883
        %v3936 = vadd.f32 %v3678, %v3888
        %v3937 = vadd.f32 %v3679, %v3891
        %v3938 = vadd.f32 %v3680, %v3896
        %v3939 = vadd.f32 %v3681, %v3899
        %v3940 = vadd.f32 %v3682, %v3904
        %v3941 = vadd.f32 %v3683, %v3907
        %v3942 = vld [vmem:[#allocation2 + $0x10] sm:$0xff]
        %v3943 = vld [vmem:[#allocation2 + $0x18] sm:$0xff]
        %v3944 = vld [vmem:[#allocation2 + $0x20] sm:$0xff]
        %v3945 = vld [vmem:[#allocation2 + $0x28] sm:$0xff]
        %v3946 = vld [vmem:[#allocation2 + $0x30] sm:$0xff]
        %v3947 = vld [vmem:[#allocation2 + $0x38] sm:$0xff]
        %v3948 = vld [vmem:[#allocation2 + $0x40] sm:$0xff]
        %v3949 = vld [vmem:[#allocation2 + $0x48] sm:$0xff]
        %v3950 = vld [vmem:[#allocation2 + $0x50] sm:$0xff]
        %v3951 = vld [vmem:[#allocation2 + $0x58] sm:$0xff]
        %v3952 = vld [vmem:[#allocation2 + $0x60] sm:$0xff]
        %v3953 = vld [vmem:[#allocation2 + $0x68] sm:$0xff]
        %v3954 = vld [vmem:[#allocation2 + $0x70] sm:$0xff]
        %v3955 = vld [vmem:[#allocation2 + $0x78] sm:$0xff]
        %v3956 = vld [vmem:[#allocation2 + $0x80] sm:$0xff]
        %v3957 = vld [vmem:[#allocation2 + $0x88] sm:$0xff]
        %v3958 = vld [vmem:[#allocation2 + $0x90] sm:$0x1]
        %v3959 = vsel %vm2819, %v3942, 0
        %v3960 = vsel %vm2820, %v3943, 0
        %v3961 = vsel %vm2821, %v3944, 0
        %v3962 = vsel %vm2822, %v3945, 0
        %v3963 = vsel %vm2823, %v3946, 0
        %v3964 = vsel %vm2824, %v3947, 0
        %v3965 = vsel %vm2825, %v3948, 0
        %v3966 = vsel %vm2826, %v3949, 0
        %v3967 = vsel %vm2827, %v3950, 0
        %v3968 = vsel %vm2828, %v3951, 0
        %v3969 = vsel %vm2829, %v3952, 0
        %v3970 = vsel %vm2830, %v3953, 0
        %v3971 = vsel %vm2831, %v3954, 0
        %v3972 = vsel %vm2832, %v3955, 0
        %v3973 = vsel %vm2833, %v3956, 0
        %v3974 = vsel %vm2834, %v3957, 0
        %v3975 = vsel %vm2835, %v3958, 0
        %s3976 = scalar_lea.vmem [#allocation8], 320
        %v3977 = vld [vmem:[%s3976] sm:$0xf]
        %v3978 = vld [vmem:[%s3976 + $0x4] sm:$0xf]
        %v3979 = vld [vmem:[%s3976 + $0x8] sm:$0xf]
        %v3980 = vld [vmem:[%s3976 + $0xc] sm:$0xf]
        %v3981 = vld [vmem:[%s3976 + $0x10] sm:$0xf]
        %v3982 = vld [vmem:[%s3976 + $0x14] sm:$0xf]
        %v3983 = vld [vmem:[%s3976 + $0x18] sm:$0xf]
        %v3984 = vld [vmem:[%s3976 + $0x1c] sm:$0xf]
        %v3985 = vld [vmem:[%s3976 + $0x20] sm:$0xf]
        %v3986 = vld [vmem:[%s3976 + $0x24] sm:$0xf]
        %v3987 = vld [vmem:[%s3976 + $0x28] sm:$0xf]
        %v3988 = vld [vmem:[%s3976 + $0x2c] sm:$0xf]
        %v3989 = vld [vmem:[%s3976 + $0x30] sm:$0xf]
        %v3990 = vld [vmem:[%s3976 + $0x34] sm:$0xf]
        %v3991 = vld [vmem:[%s3976 + $0x38] sm:$0xf]
        %v3992 = vld [vmem:[%s3976 + $0x3c] sm:$0xf]
        %v3994 = vshrl.u32 %v3959, 16
        %v3996 = vshll.u32 %v3959, 16
        %v3998 = vrot.slane %v3996, 1
        %v3999 = vor.u32 %v3994, %v3998
        %v4001 = vshll.u32 %v3960, 16
        %v4003 = vrot.slane %v4001, 1
        %v4004 = vsel %vm1737, %v3999, %v4003
        %v4005 = vshrl.u32 %v3960, 16
        %v4007 = vor.u32 %v4005, %v4003
        %v4009 = vshll.u32 %v3961, 16
        %v4011 = vrot.slane %v4009, 1
        %v4012 = vsel %vm1737, %v4007, %v4011
        %v4013 = vshrl.u32 %v3961, 16
        %v4015 = vor.u32 %v4013, %v4011
        %v4017 = vshll.u32 %v3962, 16
        %v4019 = vrot.slane %v4017, 1
        %v4020 = vsel %vm1737, %v4015, %v4019
        %v4021 = vshrl.u32 %v3962, 16
        %v4023 = vor.u32 %v4021, %v4019
        %v4025 = vshll.u32 %v3963, 16
        %v4027 = vrot.slane %v4025, 1
        %v4028 = vsel %vm1737, %v4023, %v4027
        %v4029 = vshrl.u32 %v3963, 16
        %v4031 = vor.u32 %v4029, %v4027
        %v4033 = vshll.u32 %v3964, 16
        %v4035 = vrot.slane %v4033, 1
        %v4036 = vsel %vm1737, %v4031, %v4035
        %v4037 = vshrl.u32 %v3964, 16
        %v4039 = vor.u32 %v4037, %v4035
        %v4041 = vshll.u32 %v3965, 16
        %v4043 = vrot.slane %v4041, 1
        %v4044 = vsel %vm1737, %v4039, %v4043
        %v4045 = vshrl.u32 %v3965, 16
        %v4047 = vor.u32 %v4045, %v4043
        %v4049 = vshll.u32 %v3966, 16
        %v4051 = vrot.slane %v4049, 1
        %v4052 = vsel %vm1737, %v4047, %v4051
        %v4053 = vshrl.u32 %v3966, 16
        %v4055 = vor.u32 %v4053, %v4051
        %v4057 = vshll.u32 %v3967, 16
        %v4059 = vrot.slane %v4057, 1
        %v4060 = vsel %vm1737, %v4055, %v4059
        %v4061 = vshrl.u32 %v3967, 16
        %v4063 = vor.u32 %v4061, %v4059
        %v4065 = vshll.u32 %v3968, 16
        %v4067 = vrot.slane %v4065, 1
        %v4068 = vsel %vm1737, %v4063, %v4067
        %v4069 = vshrl.u32 %v3968, 16
        %v4071 = vor.u32 %v4069, %v4067
        %v4073 = vshll.u32 %v3969, 16
        %v4075 = vrot.slane %v4073, 1
        %v4076 = vsel %vm1737, %v4071, %v4075
        %v4077 = vshrl.u32 %v3969, 16
        %v4079 = vor.u32 %v4077, %v4075
        %v4081 = vshll.u32 %v3970, 16
        %v4083 = vrot.slane %v4081, 1
        %v4084 = vsel %vm1737, %v4079, %v4083
        %v4085 = vshrl.u32 %v3970, 16
        %v4087 = vor.u32 %v4085, %v4083
        %v4089 = vshll.u32 %v3971, 16
        %v4091 = vrot.slane %v4089, 1
        %v4092 = vsel %vm1737, %v4087, %v4091
        %v4093 = vshrl.u32 %v3971, 16
        %v4095 = vor.u32 %v4093, %v4091
        %v4097 = vshll.u32 %v3972, 16
        %v4099 = vrot.slane %v4097, 1
        %v4100 = vsel %vm1737, %v4095, %v4099
        %v4101 = vshrl.u32 %v3972, 16
        %v4103 = vor.u32 %v4101, %v4099
        %v4105 = vshll.u32 %v3973, 16
        %v4107 = vrot.slane %v4105, 1
        %v4108 = vsel %vm1737, %v4103, %v4107
        %v4109 = vshrl.u32 %v3973, 16
        %v4111 = vor.u32 %v4109, %v4107
        %v4113 = vshll.u32 %v3974, 16
        %v4115 = vrot.slane %v4113, 1
        %v4116 = vsel %vm1737, %v4111, %v4115
        %v4117 = vshrl.u32 %v3974, 16
        %v4119 = vor.u32 %v4117, %v4115
        %v4121 = vshll.u32 %v3975, 16
        %v4123 = vrot.slane %v4121, 1
        %v4124 = vsel %vm1737, %v4119, %v4123
        %v4157 = vunpack.c.l.b16 %v3977
        %v4158 = vunpack.c.l.b16 %v3978
        %v4159 = vunpack.c.l.b16 %v3979
        %v4160 = vunpack.c.l.b16 %v3980
        %v4161 = vunpack.c.l.b16 %v3981
        %v4162 = vunpack.c.l.b16 %v3982
        %v4163 = vunpack.c.l.b16 %v3983
        %v4164 = vunpack.c.l.b16 %v3984
        %v4165 = vunpack.c.l.b16 %v3985
        %v4166 = vunpack.c.l.b16 %v3986
        %v4167 = vunpack.c.l.b16 %v3987
        %v4168 = vunpack.c.l.b16 %v3988
        %v4169 = vunpack.c.l.b16 %v3989
        %v4170 = vunpack.c.l.b16 %v3990
        %v4171 = vunpack.c.l.b16 %v3991
        %v4172 = vunpack.c.l.b16 %v3992
        %v4173 = vpack.c.b16 %v4158, %v4157
        %v4174 = vpack.c.b16 %v4160, %v4159
        %v4175 = vpack.c.b16 %v4162, %v4161
        %v4176 = vpack.c.b16 %v4164, %v4163
        %v4177 = vpack.c.b16 %v4166, %v4165
        %v4178 = vpack.c.b16 %v4168, %v4167
        %v4179 = vpack.c.b16 %v4170, %v4169
        %v4180 = vpack.c.b16 %v4172, %v4171
        %4189 = vmatprep.subr.bf16.mxu0 0
        %4190 = vmatpush1.bf16.msra.mxu0 %v4173
        %4191 = vmatprep.subr.bf16.mxu0 0
        %4192 = vmatpush1.bf16.msra.mxu0 %v4174
        %4193 = vmatprep.subr.bf16.mxu0 0
        %4194 = vmatpush1.bf16.msra.mxu0 %v4175
        %4195 = vmatprep.subr.bf16.mxu0 0
        %4196 = vmatpush1.bf16.msra.mxu0 %v4176
        %4197 = vmatprep.subr.bf16.mxu0 0
        %4198 = vmatpush1.bf16.msra.mxu0 %v4177
        %4199 = vmatprep.subr.bf16.mxu0 0
        %4200 = vmatpush1.bf16.msra.mxu0 %v4178
        %4201 = vmatprep.subr.bf16.mxu0 0
        %4202 = vmatpush1.bf16.msra.mxu0 %v4179
        %4203 = vmatprep.subr.bf16.mxu0 0
        %4204 = vmatpush1.bf16.msra.mxu0 %v4180
        %4205 = vmatprep.subr.bf16.mxu0 0
        %4206 = vmatpush1.bf16.msra.mxu0 0
        %4207 = vmatprep.subr.bf16.mxu0 0
        %4208 = vmatpush1.bf16.msra.mxu0 0
        %4209 = vmatprep.subr.bf16.mxu0 0
        %4210 = vmatpush1.bf16.msra.mxu0 0
        %4211 = vmatprep.subr.bf16.mxu0 0
        %4212 = vmatpush1.bf16.msra.mxu0 0
        %4213 = vmatprep.subr.bf16.mxu0 0
        %4214 = vmatpush1.bf16.msra.mxu0 0
        %4215 = vmatprep.subr.bf16.mxu0 0
        %4216 = vmatpush1.bf16.msra.mxu0 0
        %4217 = vmatprep.subr.bf16.mxu0 0
        %4218 = vmatpush1.bf16.msra.mxu0 0
        %4219 = vmatprep.subr.bf16.mxu0 0
        %4220 = vmatpush1.bf16.msra.mxu0 0
        %4221 = vmatprep.mubr.bf16.mxu0 0
        %4222 = vmatmul.mubr.bf16.gmra.mrb[0].mxu0 %v4004
        %v4223 = vpop.f32.mrb[0].mxu0
        %v4224 = vadd.f32 0.0, %v4223
        %v4225 = vpop.f32.mrb[0].mxu0
        %v4226 = vpop.f32.mrb[0].mxu0
        %v4227 = vadd.f32 0.0, %v4226
        %v4228 = vpop.f32.mrb[0].mxu0
        %4229 = vmatprep.mubr.bf16.mxu0 0
        %4230 = vmatmul.mubr.bf16.gmra.mrb[0].mxu0 %v4012
        %v4231 = vpop.f32.mrb[0].mxu0
        %v4232 = vadd.f32 0.0, %v4231
        %v4233 = vpop.f32.mrb[0].mxu0
        %v4234 = vpop.f32.mrb[0].mxu0
        %v4235 = vadd.f32 0.0, %v4234
        %v4236 = vpop.f32.mrb[0].mxu0
        %4237 = vmatprep.mubr.bf16.mxu0 0
        %4238 = vmatmul.mubr.bf16.gmra.mrb[0].mxu0 %v4020
        %v4239 = vpop.f32.mrb[0].mxu0
        %v4240 = vadd.f32 0.0, %v4239
        %v4241 = vpop.f32.mrb[0].mxu0
        %v4242 = vpop.f32.mrb[0].mxu0
        %v4243 = vadd.f32 0.0, %v4242
        %v4244 = vpop.f32.mrb[0].mxu0
        %4245 = vmatprep.mubr.bf16.mxu0 0
        %4246 = vmatmul.mubr.bf16.gmra.mrb[0].mxu0 %v4028
        %v4247 = vpop.f32.mrb[0].mxu0
        %v4248 = vadd.f32 0.0, %v4247
        %v4249 = vpop.f32.mrb[0].mxu0
        %v4250 = vpop.f32.mrb[0].mxu0
        %v4251 = vadd.f32 0.0, %v4250
        %v4252 = vpop.f32.mrb[0].mxu0
        %4253 = vmatprep.mubr.bf16.mxu0 0
        %4254 = vmatmul.mubr.bf16.gmra.mrb[0].mxu0 %v4036
        %v4255 = vpop.f32.mrb[0].mxu0
        %v4256 = vadd.f32 0.0, %v4255
        %v4257 = vpop.f32.mrb[0].mxu0
        %v4258 = vpop.f32.mrb[0].mxu0
        %v4259 = vadd.f32 0.0, %v4258
        %v4260 = vpop.f32.mrb[0].mxu0
        %4261 = vmatprep.mubr.bf16.mxu0 0
        %4262 = vmatmul.mubr.bf16.gmra.mrb[0].mxu0 %v4044
        %v4263 = vpop.f32.mrb[0].mxu0
        %v4264 = vadd.f32 0.0, %v4263
        %v4265 = vpop.f32.mrb[0].mxu0
        %v4266 = vpop.f32.mrb[0].mxu0
        %v4267 = vadd.f32 0.0, %v4266
        %v4268 = vpop.f32.mrb[0].mxu0
        %4269 = vmatprep.mubr.bf16.mxu0 0
        %4270 = vmatmul.mubr.bf16.gmra.mrb[0].mxu0 %v4052
        %v4271 = vpop.f32.mrb[0].mxu0
        %v4272 = vadd.f32 0.0, %v4271
        %v4273 = vpop.f32.mrb[0].mxu0
        %v4274 = vpop.f32.mrb[0].mxu0
        %v4275 = vadd.f32 0.0, %v4274
        %v4276 = vpop.f32.mrb[0].mxu0
        %4277 = vmatprep.mubr.bf16.mxu0 0
        %4278 = vmatmul.mubr.bf16.gmra.mrb[0].mxu0 %v4060
        %v4279 = vpop.f32.mrb[0].mxu0
        %v4280 = vadd.f32 0.0, %v4279
        %v4281 = vpop.f32.mrb[0].mxu0
        %v4282 = vpop.f32.mrb[0].mxu0
        %v4283 = vadd.f32 0.0, %v4282
        %v4284 = vpop.f32.mrb[0].mxu0
        %4285 = vmatprep.mubr.bf16.mxu0 0
        %4286 = vmatmul.mubr.bf16.gmra.mrb[0].mxu0 %v4068
        %v4287 = vpop.f32.mrb[0].mxu0
        %v4288 = vadd.f32 0.0, %v4287
        %v4289 = vpop.f32.mrb[0].mxu0
        %v4290 = vpop.f32.mrb[0].mxu0
        %v4291 = vadd.f32 0.0, %v4290
        %v4292 = vpop.f32.mrb[0].mxu0
        %4293 = vmatprep.mubr.bf16.mxu0 0
        %4294 = vmatmul.mubr.bf16.gmra.mrb[0].mxu0 %v4076
        %v4295 = vpop.f32.mrb[0].mxu0
        %v4296 = vadd.f32 0.0, %v4295
        %v4297 = vpop.f32.mrb[0].mxu0
        %v4298 = vpop.f32.mrb[0].mxu0
        %v4299 = vadd.f32 0.0, %v4298
        %v4300 = vpop.f32.mrb[0].mxu0
        %4301 = vmatprep.mubr.bf16.mxu0 0
        %4302 = vmatmul.mubr.bf16.gmra.mrb[0].mxu0 %v4084
        %v4303 = vpop.f32.mrb[0].mxu0
        %v4304 = vadd.f32 0.0, %v4303
        %v4305 = vpop.f32.mrb[0].mxu0
        %v4306 = vpop.f32.mrb[0].mxu0
        %v4307 = vadd.f32 0.0, %v4306
        %v4308 = vpop.f32.mrb[0].mxu0
        %4309 = vmatprep.mubr.bf16.mxu0 0
        %4310 = vmatmul.mubr.bf16.gmra.mrb[0].mxu0 %v4092
        %v4311 = vpop.f32.mrb[0].mxu0
        %v4312 = vadd.f32 0.0, %v4311
        %v4313 = vpop.f32.mrb[0].mxu0
        %v4314 = vpop.f32.mrb[0].mxu0
        %v4315 = vadd.f32 0.0, %v4314
        %v4316 = vpop.f32.mrb[0].mxu0
        %4317 = vmatprep.mubr.bf16.mxu0 0
        %4318 = vmatmul.mubr.bf16.gmra.mrb[0].mxu0 %v4100
        %v4319 = vpop.f32.mrb[0].mxu0
        %v4320 = vadd.f32 0.0, %v4319
        %v4321 = vpop.f32.mrb[0].mxu0
        %v4322 = vpop.f32.mrb[0].mxu0
        %v4323 = vadd.f32 0.0, %v4322
        %v4324 = vpop.f32.mrb[0].mxu0
        %4325 = vmatprep.mubr.bf16.mxu0 0
        %4326 = vmatmul.mubr.bf16.gmra.mrb[0].mxu0 %v4108
        %v4327 = vpop.f32.mrb[0].mxu0
        %v4328 = vadd.f32 0.0, %v4327
        %v4329 = vpop.f32.mrb[0].mxu0
        %v4330 = vpop.f32.mrb[0].mxu0
        %v4331 = vadd.f32 0.0, %v4330
        %v4332 = vpop.f32.mrb[0].mxu0
        %4333 = vmatprep.mubr.bf16.mxu0 0
        %4334 = vmatmul.mubr.bf16.gmra.mrb[0].mxu0 %v4116
        %v4335 = vpop.f32.mrb[0].mxu0
        %v4336 = vadd.f32 0.0, %v4335
        %v4337 = vpop.f32.mrb[0].mxu0
        %v4338 = vpop.f32.mrb[0].mxu0
        %v4339 = vadd.f32 0.0, %v4338
        %v4340 = vpop.f32.mrb[0].mxu0
        %4341 = vmatprep.mubr.bf16.mxu0 0
        %4342 = vmatmul.mubr.bf16.gmra.mrb[0].mxu0 %v4124
        %v4343 = vpop.f32.mrb[0].mxu0
        %v4344 = vadd.f32 0.0, %v4343
        %v4345 = vpop.f32.mrb[0].mxu0
        %v4346 = vpop.f32.mrb[0].mxu0
        %v4347 = vadd.f32 0.0, %v4346
        %v4348 = vpop.f32.mrb[0].mxu0
        %4349 = vdwg.mxu0
        %v4350 = vadd.f32 %v3910, %v4224
        %v4351 = vadd.f32 %v3911, %v4227
        %v4352 = vadd.f32 %v3912, %v4232
        %v4353 = vadd.f32 %v3913, %v4235
        %v4354 = vadd.f32 %v3914, %v4240
        %v4355 = vadd.f32 %v3915, %v4243
        %v4356 = vadd.f32 %v3916, %v4248
        %v4357 = vadd.f32 %v3917, %v4251
        %v4358 = vadd.f32 %v3918, %v4256
        %v4359 = vadd.f32 %v3919, %v4259
        %v4360 = vadd.f32 %v3920, %v4264
        %v4361 = vadd.f32 %v3921, %v4267
        %v4362 = vadd.f32 %v3922, %v4272
        %v4363 = vadd.f32 %v3923, %v4275
        %v4364 = vadd.f32 %v3924, %v4280
        %v4365 = vadd.f32 %v3925, %v4283
        %v4366 = vadd.f32 %v3926, %v4288
        %v4367 = vadd.f32 %v3927, %v4291
        %v4368 = vadd.f32 %v3928, %v4296
        %v4369 = vadd.f32 %v3929, %v4299
        %v4370 = vadd.f32 %v3930, %v4304
        %v4371 = vadd.f32 %v3931, %v4307
        %v4372 = vadd.f32 %v3932, %v4312
        %v4373 = vadd.f32 %v3933, %v4315
        %v4374 = vadd.f32 %v3934, %v4320
        %v4375 = vadd.f32 %v3935, %v4323
        %v4376 = vadd.f32 %v3936, %v4328
        %v4377 = vadd.f32 %v3937, %v4331
        %v4378 = vadd.f32 %v3938, %v4336
        %v4379 = vadd.f32 %v3939, %v4339
        %v4380 = vadd.f32 %v3940, %v4344
        %v4381 = vadd.f32 %v3941, %v4347
        %v4382 = vld [vmem:[#allocation2 + $0x10] sm:$0x80]
        %v4383 = vld [vmem:[#allocation2 + $0x90] sm:$0xff]
        %v4384 = vsel %vm1865, %v4382, 0
        %v4385 = vsel %vm1866, %v3943, 0
        %v4386 = vsel %vm1867, %v3944, 0
        %v4387 = vsel %vm1868, %v3945, 0
        %v4388 = vsel %vm1869, %v3946, 0
        %v4389 = vsel %vm1870, %v3947, 0
        %v4390 = vsel %vm1871, %v3948, 0
        %v4391 = vsel %vm1872, %v3949, 0
        %v4392 = vsel %vm1873, %v3950, 0
        %v4393 = vsel %vm1874, %v3951, 0
        %v4394 = vsel %vm1875, %v3952, 0
        %v4395 = vsel %vm1876, %v3953, 0
        %v4396 = vsel %vm1877, %v3954, 0
        %v4397 = vsel %vm1878, %v3955, 0
        %v4398 = vsel %vm1879, %v3956, 0
        %v4399 = vsel %vm1880, %v3957, 0
        %v4400 = vsel %vm1881, %v4383, 0
        %s4401 = scalar_lea.vmem [#allocation8], 384
        %v4402 = vld [vmem:[%s4401] sm:$0xf]
        %v4403 = vld [vmem:[%s4401 + $0x4] sm:$0xf]
        %v4404 = vld [vmem:[%s4401 + $0x8] sm:$0xf]
        %v4405 = vld [vmem:[%s4401 + $0xc] sm:$0xf]
        %v4406 = vld [vmem:[%s4401 + $0x10] sm:$0xf]
        %v4407 = vld [vmem:[%s4401 + $0x14] sm:$0xf]
        %v4408 = vld [vmem:[%s4401 + $0x18] sm:$0xf]
        %v4409 = vld [vmem:[%s4401 + $0x1c] sm:$0xf]
        %v4410 = vld [vmem:[%s4401 + $0x20] sm:$0xf]
        %v4411 = vld [vmem:[%s4401 + $0x24] sm:$0xf]
        %v4412 = vld [vmem:[%s4401 + $0x28] sm:$0xf]
        %v4413 = vld [vmem:[%s4401 + $0x2c] sm:$0xf]
        %v4414 = vld [vmem:[%s4401 + $0x30] sm:$0xf]
        %v4415 = vld [vmem:[%s4401 + $0x34] sm:$0xf]
        %v4416 = vld [vmem:[%s4401 + $0x38] sm:$0xf]
        %v4417 = vld [vmem:[%s4401 + $0x3c] sm:$0xf]
        %v4419 = vshrl.u32 %v4384, 16
        %v4421 = vrot.slane %v4419, 7
        %v4423 = vshrl.u32 %v4385, 16
        %v4425 = vrot.slane %v4423, 7
        %v4426 = vshll.u32 %v4385, 16
        %v4428 = vor.u32 %v4425, %v4426
        %v4429 = vsel %vm2141, %v4421, %v4428
        %v4431 = vshrl.u32 %v4386, 16
        %v4433 = vrot.slane %v4431, 7
        %v4434 = vshll.u32 %v4386, 16
        %v4436 = vor.u32 %v4433, %v4434
        %v4437 = vsel %vm2141, %v4425, %v4436
        %v4439 = vshrl.u32 %v4387, 16
        %v4441 = vrot.slane %v4439, 7
        %v4442 = vshll.u32 %v4387, 16
        %v4444 = vor.u32 %v4441, %v4442
        %v4445 = vsel %vm2141, %v4433, %v4444
        %v4447 = vshrl.u32 %v4388, 16
        %v4449 = vrot.slane %v4447, 7
        %v4450 = vshll.u32 %v4388, 16
        %v4452 = vor.u32 %v4449, %v4450
        %v4453 = vsel %vm2141, %v4441, %v4452
        %v4455 = vshrl.u32 %v4389, 16
        %v4457 = vrot.slane %v4455, 7
        %v4458 = vshll.u32 %v4389, 16
        %v4460 = vor.u32 %v4457, %v4458
        %v4461 = vsel %vm2141, %v4449, %v4460
        %v4463 = vshrl.u32 %v4390, 16
        %v4465 = vrot.slane %v4463, 7
        %v4466 = vshll.u32 %v4390, 16
        %v4468 = vor.u32 %v4465, %v4466
        %v4469 = vsel %vm2141, %v4457, %v4468
        %v4471 = vshrl.u32 %v4391, 16
        %v4473 = vrot.slane %v4471, 7
        %v4474 = vshll.u32 %v4391, 16
        %v4476 = vor.u32 %v4473, %v4474
        %v4477 = vsel %vm2141, %v4465, %v4476
        %v4479 = vshrl.u32 %v4392, 16
        %v4481 = vrot.slane %v4479, 7
        %v4482 = vshll.u32 %v4392, 16
        %v4484 = vor.u32 %v4481, %v4482
        %v4485 = vsel %vm2141, %v4473, %v4484
        %v4487 = vshrl.u32 %v4393, 16
        %v4489 = vrot.slane %v4487, 7
        %v4490 = vshll.u32 %v4393, 16
        %v4492 = vor.u32 %v4489, %v4490
        %v4493 = vsel %vm2141, %v4481, %v4492
        %v4495 = vshrl.u32 %v4394, 16
        %v4497 = vrot.slane %v4495, 7
        %v4498 = vshll.u32 %v4394, 16
        %v4500 = vor.u32 %v4497, %v4498
        %v4501 = vsel %vm2141, %v4489, %v4500
        %v4503 = vshrl.u32 %v4395, 16
        %v4505 = vrot.slane %v4503, 7
        %v4506 = vshll.u32 %v4395, 16
        %v4508 = vor.u32 %v4505, %v4506
        %v4509 = vsel %vm2141, %v4497, %v4508
        %v4511 = vshrl.u32 %v4396, 16
        %v4513 = vrot.slane %v4511, 7
        %v4514 = vshll.u32 %v4396, 16
        %v4516 = vor.u32 %v4513, %v4514
        %v4517 = vsel %vm2141, %v4505, %v4516
        %v4519 = vshrl.u32 %v4397, 16
        %v4521 = vrot.slane %v4519, 7
        %v4522 = vshll.u32 %v4397, 16
        %v4524 = vor.u32 %v4521, %v4522
        %v4525 = vsel %vm2141, %v4513, %v4524
        %v4527 = vshrl.u32 %v4398, 16
        %v4529 = vrot.slane %v4527, 7
        %v4530 = vshll.u32 %v4398, 16
        %v4532 = vor.u32 %v4529, %v4530
        %v4533 = vsel %vm2141, %v4521, %v4532
        %v4535 = vshrl.u32 %v4399, 16
        %v4537 = vrot.slane %v4535, 7
        %v4538 = vshll.u32 %v4399, 16
        %v4540 = vor.u32 %v4537, %v4538
        %v4541 = vsel %vm2141, %v4529, %v4540
        %v4543 = vshrl.u32 %v4400, 16
        %v4545 = vrot.slane %v4543, 7
        %v4546 = vshll.u32 %v4400, 16
        %v4548 = vor.u32 %v4545, %v4546
        %v4549 = vsel %vm2141, %v4537, %v4548
        %v4582 = vunpack.c.l.b16 %v4402
        %v4583 = vunpack.c.l.b16 %v4403
        %v4584 = vunpack.c.l.b16 %v4404
        %v4585 = vunpack.c.l.b16 %v4405
        %v4586 = vunpack.c.l.b16 %v4406
        %v4587 = vunpack.c.l.b16 %v4407
        %v4588 = vunpack.c.l.b16 %v4408
        %v4589 = vunpack.c.l.b16 %v4409
        %v4590 = vunpack.c.l.b16 %v4410
        %v4591 = vunpack.c.l.b16 %v4411
        %v4592 = vunpack.c.l.b16 %v4412
        %v4593 = vunpack.c.l.b16 %v4413
        %v4594 = vunpack.c.l.b16 %v4414
        %v4595 = vunpack.c.l.b16 %v4415
        %v4596 = vunpack.c.l.b16 %v4416
        %v4597 = vunpack.c.l.b16 %v4417
        %v4598 = vpack.c.b16 %v4583, %v4582
        %v4599 = vpack.c.b16 %v4585, %v4584
        %v4600 = vpack.c.b16 %v4587, %v4586
        %v4601 = vpack.c.b16 %v4589, %v4588
        %v4602 = vpack.c.b16 %v4591, %v4590
        %v4603 = vpack.c.b16 %v4593, %v4592
        %v4604 = vpack.c.b16 %v4595, %v4594
        %v4605 = vpack.c.b16 %v4597, %v4596
        %4614 = vmatprep.subr.bf16.mxu0 0
        %4615 = vmatpush1.bf16.msra.mxu0 %v4598
        %4616 = vmatprep.subr.bf16.mxu0 0
        %4617 = vmatpush1.bf16.msra.mxu0 %v4599
        %4618 = vmatprep.subr.bf16.mxu0 0
        %4619 = vmatpush1.bf16.msra.mxu0 %v4600
        %4620 = vmatprep.subr.bf16.mxu0 0
        %4621 = vmatpush1.bf16.msra.mxu0 %v4601
        %4622 = vmatprep.subr.bf16.mxu0 0
        %4623 = vmatpush1.bf16.msra.mxu0 %v4602
        %4624 = vmatprep.subr.bf16.mxu0 0
        %4625 = vmatpush1.bf16.msra.mxu0 %v4603
        %4626 = vmatprep.subr.bf16.mxu0 0
        %4627 = vmatpush1.bf16.msra.mxu0 %v4604
        %4628 = vmatprep.subr.bf16.mxu0 0
        %4629 = vmatpush1.bf16.msra.mxu0 %v4605
        %4630 = vmatprep.subr.bf16.mxu0 0
        %4631 = vmatpush1.bf16.msra.mxu0 0
        %4632 = vmatprep.subr.bf16.mxu0 0
        %4633 = vmatpush1.bf16.msra.mxu0 0
        %4634 = vmatprep.subr.bf16.mxu0 0
        %4635 = vmatpush1.bf16.msra.mxu0 0
        %4636 = vmatprep.subr.bf16.mxu0 0
        %4637 = vmatpush1.bf16.msra.mxu0 0
        %4638 = vmatprep.subr.bf16.mxu0 0
        %4639 = vmatpush1.bf16.msra.mxu0 0
        %4640 = vmatprep.subr.bf16.mxu0 0
        %4641 = vmatpush1.bf16.msra.mxu0 0
        %4642 = vmatprep.subr.bf16.mxu0 0
        %4643 = vmatpush1.bf16.msra.mxu0 0
        %4644 = vmatprep.subr.bf16.mxu0 0
        %4645 = vmatpush1.bf16.msra.mxu0 0
        %4646 = vmatprep.mubr.bf16.mxu0 0
        %4647 = vmatmul.mubr.bf16.gmra.mrb[0].mxu0 %v4429
        %v4648 = vpop.f32.mrb[0].mxu0
        %v4649 = vadd.f32 0.0, %v4648
        %v4650 = vpop.f32.mrb[0].mxu0
        %v4651 = vpop.f32.mrb[0].mxu0
        %v4652 = vadd.f32 0.0, %v4651
        %v4653 = vpop.f32.mrb[0].mxu0
        %4654 = vmatprep.mubr.bf16.mxu0 0
        %4655 = vmatmul.mubr.bf16.gmra.mrb[0].mxu0 %v4437
        %v4656 = vpop.f32.mrb[0].mxu0
        %v4657 = vadd.f32 0.0, %v4656
        %v4658 = vpop.f32.mrb[0].mxu0
        %v4659 = vpop.f32.mrb[0].mxu0
        %v4660 = vadd.f32 0.0, %v4659
        %v4661 = vpop.f32.mrb[0].mxu0
        %4662 = vmatprep.mubr.bf16.mxu0 0
        %4663 = vmatmul.mubr.bf16.gmra.mrb[0].mxu0 %v4445
        %v4664 = vpop.f32.mrb[0].mxu0
        %v4665 = vadd.f32 0.0, %v4664
        %v4666 = vpop.f32.mrb[0].mxu0
        %v4667 = vpop.f32.mrb[0].mxu0
        %v4668 = vadd.f32 0.0, %v4667
        %v4669 = vpop.f32.mrb[0].mxu0
        %4670 = vmatprep.mubr.bf16.mxu0 0
        %4671 = vmatmul.mubr.bf16.gmra.mrb[0].mxu0 %v4453
        %v4672 = vpop.f32.mrb[0].mxu0
        %v4673 = vadd.f32 0.0, %v4672
        %v4674 = vpop.f32.mrb[0].mxu0
        %v4675 = vpop.f32.mrb[0].mxu0
        %v4676 = vadd.f32 0.0, %v4675
        %v4677 = vpop.f32.mrb[0].mxu0
        %4678 = vmatprep.mubr.bf16.mxu0 0
        %4679 = vmatmul.mubr.bf16.gmra.mrb[0].mxu0 %v4461
        %v4680 = vpop.f32.mrb[0].mxu0
        %v4681 = vadd.f32 0.0, %v4680
        %v4682 = vpop.f32.mrb[0].mxu0
        %v4683 = vpop.f32.mrb[0].mxu0
        %v4684 = vadd.f32 0.0, %v4683
        %v4685 = vpop.f32.mrb[0].mxu0
        %4686 = vmatprep.mubr.bf16.mxu0 0
        %4687 = vmatmul.mubr.bf16.gmra.mrb[0].mxu0 %v4469
        %v4688 = vpop.f32.mrb[0].mxu0
        %v4689 = vadd.f32 0.0, %v4688
        %v4690 = vpop.f32.mrb[0].mxu0
        %v4691 = vpop.f32.mrb[0].mxu0
        %v4692 = vadd.f32 0.0, %v4691
        %v4693 = vpop.f32.mrb[0].mxu0
        %4694 = vmatprep.mubr.bf16.mxu0 0
        %4695 = vmatmul.mubr.bf16.gmra.mrb[0].mxu0 %v4477
        %v4696 = vpop.f32.mrb[0].mxu0
        %v4697 = vadd.f32 0.0, %v4696
        %v4698 = vpop.f32.mrb[0].mxu0
        %v4699 = vpop.f32.mrb[0].mxu0
        %v4700 = vadd.f32 0.0, %v4699
        %v4701 = vpop.f32.mrb[0].mxu0
        %4702 = vmatprep.mubr.bf16.mxu0 0
        %4703 = vmatmul.mubr.bf16.gmra.mrb[0].mxu0 %v4485
        %v4704 = vpop.f32.mrb[0].mxu0
        %v4705 = vadd.f32 0.0, %v4704
        %v4706 = vpop.f32.mrb[0].mxu0
        %v4707 = vpop.f32.mrb[0].mxu0
        %v4708 = vadd.f32 0.0, %v4707
        %v4709 = vpop.f32.mrb[0].mxu0
        %4710 = vmatprep.mubr.bf16.mxu0 0
        %4711 = vmatmul.mubr.bf16.gmra.mrb[0].mxu0 %v4493
        %v4712 = vpop.f32.mrb[0].mxu0
        %v4713 = vadd.f32 0.0, %v4712
        %v4714 = vpop.f32.mrb[0].mxu0
        %v4715 = vpop.f32.mrb[0].mxu0
        %v4716 = vadd.f32 0.0, %v4715
        %v4717 = vpop.f32.mrb[0].mxu0
        %4718 = vmatprep.mubr.bf16.mxu0 0
        %4719 = vmatmul.mubr.bf16.gmra.mrb[0].mxu0 %v4501
        %v4720 = vpop.f32.mrb[0].mxu0
        %v4721 = vadd.f32 0.0, %v4720
        %v4722 = vpop.f32.mrb[0].mxu0
        %v4723 = vpop.f32.mrb[0].mxu0
        %v4724 = vadd.f32 0.0, %v4723
        %v4725 = vpop.f32.mrb[0].mxu0
        %4726 = vmatprep.mubr.bf16.mxu0 0
        %4727 = vmatmul.mubr.bf16.gmra.mrb[0].mxu0 %v4509
        %v4728 = vpop.f32.mrb[0].mxu0
        %v4729 = vadd.f32 0.0, %v4728
        %v4730 = vpop.f32.mrb[0].mxu0
        %v4731 = vpop.f32.mrb[0].mxu0
        %v4732 = vadd.f32 0.0, %v4731
        %v4733 = vpop.f32.mrb[0].mxu0
        %4734 = vmatprep.mubr.bf16.mxu0 0
        %4735 = vmatmul.mubr.bf16.gmra.mrb[0].mxu0 %v4517
        %v4736 = vpop.f32.mrb[0].mxu0
        %v4737 = vadd.f32 0.0, %v4736
        %v4738 = vpop.f32.mrb[0].mxu0
        %v4739 = vpop.f32.mrb[0].mxu0
        %v4740 = vadd.f32 0.0, %v4739
        %v4741 = vpop.f32.mrb[0].mxu0
        %4742 = vmatprep.mubr.bf16.mxu0 0
        %4743 = vmatmul.mubr.bf16.gmra.mrb[0].mxu0 %v4525
        %v4744 = vpop.f32.mrb[0].mxu0
        %v4745 = vadd.f32 0.0, %v4744
        %v4746 = vpop.f32.mrb[0].mxu0
        %v4747 = vpop.f32.mrb[0].mxu0
        %v4748 = vadd.f32 0.0, %v4747
        %v4749 = vpop.f32.mrb[0].mxu0
        %4750 = vmatprep.mubr.bf16.mxu0 0
        %4751 = vmatmul.mubr.bf16.gmra.mrb[0].mxu0 %v4533
        %v4752 = vpop.f32.mrb[0].mxu0
        %v4753 = vadd.f32 0.0, %v4752
        %v4754 = vpop.f32.mrb[0].mxu0
        %v4755 = vpop.f32.mrb[0].mxu0
        %v4756 = vadd.f32 0.0, %v4755
        %v4757 = vpop.f32.mrb[0].mxu0
        %4758 = vmatprep.mubr.bf16.mxu0 0
        %4759 = vmatmul.mubr.bf16.gmra.mrb[0].mxu0 %v4541
        %v4760 = vpop.f32.mrb[0].mxu0
        %v4761 = vadd.f32 0.0, %v4760
        %v4762 = vpop.f32.mrb[0].mxu0
        %v4763 = vpop.f32.mrb[0].mxu0
        %v4764 = vadd.f32 0.0, %v4763
        %v4765 = vpop.f32.mrb[0].mxu0
        %4766 = vmatprep.mubr.bf16.mxu0 0
        %4767 = vmatmul.mubr.bf16.gmra.mrb[0].mxu0 %v4549
        %v4768 = vpop.f32.mrb[0].mxu0
        %v4769 = vadd.f32 0.0, %v4768
        %v4770 = vpop.f32.mrb[0].mxu0
        %v4771 = vpop.f32.mrb[0].mxu0
        %v4772 = vadd.f32 0.0, %v4771
        %v4773 = vpop.f32.mrb[0].mxu0
        %4774 = vdwg.mxu0
        %v4775 = vadd.f32 %v4350, %v4649
        %v4776 = vadd.f32 %v4351, %v4652
        %v4777 = vadd.f32 %v4352, %v4657
        %v4778 = vadd.f32 %v4353, %v4660
        %v4779 = vadd.f32 %v4354, %v4665
        %v4780 = vadd.f32 %v4355, %v4668
        %v4781 = vadd.f32 %v4356, %v4673
        %v4782 = vadd.f32 %v4357, %v4676
        %v4783 = vadd.f32 %v4358, %v4681
        %v4784 = vadd.f32 %v4359, %v4684
        %v4785 = vadd.f32 %v4360, %v4689
        %v4786 = vadd.f32 %v4361, %v4692
        %v4787 = vadd.f32 %v4362, %v4697
        %v4788 = vadd.f32 %v4363, %v4700
        %v4789 = vadd.f32 %v4364, %v4705
        %v4790 = vadd.f32 %v4365, %v4708
        %v4791 = vadd.f32 %v4366, %v4713
        %v4792 = vadd.f32 %v4367, %v4716
        %v4793 = vadd.f32 %v4368, %v4721
        %v4794 = vadd.f32 %v4369, %v4724
        %v4795 = vadd.f32 %v4370, %v4729
        %v4796 = vadd.f32 %v4371, %v4732
        %v4797 = vadd.f32 %v4372, %v4737
        %v4798 = vadd.f32 %v4373, %v4740
        %v4799 = vadd.f32 %v4374, %v4745
        %v4800 = vadd.f32 %v4375, %v4748
        %v4801 = vadd.f32 %v4376, %v4753
        %v4802 = vadd.f32 %v4377, %v4756
        %v4803 = vadd.f32 %v4378, %v4761
        %v4804 = vadd.f32 %v4379, %v4764
        %v4805 = vadd.f32 %v4380, %v4769
        %v4806 = vadd.f32 %v4381, %v4772
        %s4807 = scalar_lea.vmem [#allocation8], 448
        %v4808 = vld [vmem:[%s4807] sm:$0xf]
        %v4809 = vld [vmem:[%s4807 + $0x4] sm:$0xf]
        %v4810 = vld [vmem:[%s4807 + $0x8] sm:$0xf]
        %v4811 = vld [vmem:[%s4807 + $0xc] sm:$0xf]
        %v4812 = vld [vmem:[%s4807 + $0x10] sm:$0xf]
        %v4813 = vld [vmem:[%s4807 + $0x14] sm:$0xf]
        %v4814 = vld [vmem:[%s4807 + $0x18] sm:$0xf]
        %v4815 = vld [vmem:[%s4807 + $0x1c] sm:$0xf]
        %v4816 = vld [vmem:[%s4807 + $0x20] sm:$0xf]
        %v4817 = vld [vmem:[%s4807 + $0x24] sm:$0xf]
        %v4818 = vld [vmem:[%s4807 + $0x28] sm:$0xf]
        %v4819 = vld [vmem:[%s4807 + $0x2c] sm:$0xf]
        %v4820 = vld [vmem:[%s4807 + $0x30] sm:$0xf]
        %v4821 = vld [vmem:[%s4807 + $0x34] sm:$0xf]
        %v4822 = vld [vmem:[%s4807 + $0x38] sm:$0xf]
        %v4823 = vld [vmem:[%s4807 + $0x3c] sm:$0xf]
        %v4840 = vunpack.c.l.b16 %v4808
        %v4841 = vunpack.c.l.b16 %v4809
        %v4842 = vunpack.c.l.b16 %v4810
        %v4843 = vunpack.c.l.b16 %v4811
        %v4844 = vunpack.c.l.b16 %v4812
        %v4845 = vunpack.c.l.b16 %v4813
        %v4846 = vunpack.c.l.b16 %v4814
        %v4847 = vunpack.c.l.b16 %v4815
        %v4848 = vunpack.c.l.b16 %v4816
        %v4849 = vunpack.c.l.b16 %v4817
        %v4850 = vunpack.c.l.b16 %v4818
        %v4851 = vunpack.c.l.b16 %v4819
        %v4852 = vunpack.c.l.b16 %v4820
        %v4853 = vunpack.c.l.b16 %v4821
        %v4854 = vunpack.c.l.b16 %v4822
        %v4855 = vunpack.c.l.b16 %v4823
        %v4856 = vpack.c.b16 %v4841, %v4840
        %v4857 = vpack.c.b16 %v4843, %v4842
        %v4858 = vpack.c.b16 %v4845, %v4844
        %v4859 = vpack.c.b16 %v4847, %v4846
        %v4860 = vpack.c.b16 %v4849, %v4848
        %v4861 = vpack.c.b16 %v4851, %v4850
        %v4862 = vpack.c.b16 %v4853, %v4852
        %v4863 = vpack.c.b16 %v4855, %v4854
        %4872 = vmatprep.subr.bf16.mxu0 0
        %4873 = vmatpush1.bf16.msra.mxu0 %v4856
        %4874 = vmatprep.subr.bf16.mxu0 0
        %4875 = vmatpush1.bf16.msra.mxu0 %v4857
        %4876 = vmatprep.subr.bf16.mxu0 0
        %4877 = vmatpush1.bf16.msra.mxu0 %v4858
        %4878 = vmatprep.subr.bf16.mxu0 0
        %4879 = vmatpush1.bf16.msra.mxu0 %v4859
        %4880 = vmatprep.subr.bf16.mxu0 0
        %4881 = vmatpush1.bf16.msra.mxu0 %v4860
        %4882 = vmatprep.subr.bf16.mxu0 0
        %4883 = vmatpush1.bf16.msra.mxu0 %v4861
        %4884 = vmatprep.subr.bf16.mxu0 0
        %4885 = vmatpush1.bf16.msra.mxu0 %v4862
        %4886 = vmatprep.subr.bf16.mxu0 0
        %4887 = vmatpush1.bf16.msra.mxu0 %v4863
        %4888 = vmatprep.subr.bf16.mxu0 0
        %4889 = vmatpush1.bf16.msra.mxu0 0
        %4890 = vmatprep.subr.bf16.mxu0 0
        %4891 = vmatpush1.bf16.msra.mxu0 0
        %4892 = vmatprep.subr.bf16.mxu0 0
        %4893 = vmatpush1.bf16.msra.mxu0 0
        %4894 = vmatprep.subr.bf16.mxu0 0
        %4895 = vmatpush1.bf16.msra.mxu0 0
        %4896 = vmatprep.subr.bf16.mxu0 0
        %4897 = vmatpush1.bf16.msra.mxu0 0
        %4898 = vmatprep.subr.bf16.mxu0 0
        %4899 = vmatpush1.bf16.msra.mxu0 0
        %4900 = vmatprep.subr.bf16.mxu0 0
        %4901 = vmatpush1.bf16.msra.mxu0 0
        %4902 = vmatprep.subr.bf16.mxu0 0
        %4903 = vmatpush1.bf16.msra.mxu0 0
        %4904 = vmatprep.mubr.bf16.mxu0 0
        %4905 = vmatmul.mubr.bf16.gmra.mrb[0].mxu0 %v3943
        %v4906 = vpop.f32.mrb[0].mxu0
        %v4907 = vadd.f32 0.0, %v4906
        %v4908 = vpop.f32.mrb[0].mxu0
        %v4909 = vpop.f32.mrb[0].mxu0
        %v4910 = vadd.f32 0.0, %v4909
        %v4911 = vpop.f32.mrb[0].mxu0
        %4912 = vmatprep.mubr.bf16.mxu0 0
        %4913 = vmatmul.mubr.bf16.gmra.mrb[0].mxu0 %v3944
        %v4914 = vpop.f32.mrb[0].mxu0
        %v4915 = vadd.f32 0.0, %v4914
        %v4916 = vpop.f32.mrb[0].mxu0
        %v4917 = vpop.f32.mrb[0].mxu0
        %v4918 = vadd.f32 0.0, %v4917
        %v4919 = vpop.f32.mrb[0].mxu0
        %4920 = vmatprep.mubr.bf16.mxu0 0
        %4921 = vmatmul.mubr.bf16.gmra.mrb[0].mxu0 %v3945
        %v4922 = vpop.f32.mrb[0].mxu0
        %v4923 = vadd.f32 0.0, %v4922
        %v4924 = vpop.f32.mrb[0].mxu0
        %v4925 = vpop.f32.mrb[0].mxu0
        %v4926 = vadd.f32 0.0, %v4925
        %v4927 = vpop.f32.mrb[0].mxu0
        %4928 = vmatprep.mubr.bf16.mxu0 0
        %4929 = vmatmul.mubr.bf16.gmra.mrb[0].mxu0 %v3946
        %v4930 = vpop.f32.mrb[0].mxu0
        %v4931 = vadd.f32 0.0, %v4930
        %v4932 = vpop.f32.mrb[0].mxu0
        %v4933 = vpop.f32.mrb[0].mxu0
        %v4934 = vadd.f32 0.0, %v4933
        %v4935 = vpop.f32.mrb[0].mxu0
        %4936 = vmatprep.mubr.bf16.mxu0 0
        %4937 = vmatmul.mubr.bf16.gmra.mrb[0].mxu0 %v3947
        %v4938 = vpop.f32.mrb[0].mxu0
        %v4939 = vadd.f32 0.0, %v4938
        %v4940 = vpop.f32.mrb[0].mxu0
        %v4941 = vpop.f32.mrb[0].mxu0
        %v4942 = vadd.f32 0.0, %v4941
        %v4943 = vpop.f32.mrb[0].mxu0
        %4944 = vmatprep.mubr.bf16.mxu0 0
        %4945 = vmatmul.mubr.bf16.gmra.mrb[0].mxu0 %v3948
        %v4946 = vpop.f32.mrb[0].mxu0
        %v4947 = vadd.f32 0.0, %v4946
        %v4948 = vpop.f32.mrb[0].mxu0
        %v4949 = vpop.f32.mrb[0].mxu0
        %v4950 = vadd.f32 0.0, %v4949
        %v4951 = vpop.f32.mrb[0].mxu0
        %4952 = vmatprep.mubr.bf16.mxu0 0
        %4953 = vmatmul.mubr.bf16.gmra.mrb[0].mxu0 %v3949
        %v4954 = vpop.f32.mrb[0].mxu0
        %v4955 = vadd.f32 0.0, %v4954
        %v4956 = vpop.f32.mrb[0].mxu0
        %v4957 = vpop.f32.mrb[0].mxu0
        %v4958 = vadd.f32 0.0, %v4957
        %v4959 = vpop.f32.mrb[0].mxu0
        %4960 = vmatprep.mubr.bf16.mxu0 0
        %4961 = vmatmul.mubr.bf16.gmra.mrb[0].mxu0 %v3950
        %v4962 = vpop.f32.mrb[0].mxu0
        %v4963 = vadd.f32 0.0, %v4962
        %v4964 = vpop.f32.mrb[0].mxu0
        %v4965 = vpop.f32.mrb[0].mxu0
        %v4966 = vadd.f32 0.0, %v4965
        %v4967 = vpop.f32.mrb[0].mxu0
        %4968 = vmatprep.mubr.bf16.mxu0 0
        %4969 = vmatmul.mubr.bf16.gmra.mrb[0].mxu0 %v3951
        %v4970 = vpop.f32.mrb[0].mxu0
        %v4971 = vadd.f32 0.0, %v4970
        %v4972 = vpop.f32.mrb[0].mxu0
        %v4973 = vpop.f32.mrb[0].mxu0
        %v4974 = vadd.f32 0.0, %v4973
        %v4975 = vpop.f32.mrb[0].mxu0
        %4976 = vmatprep.mubr.bf16.mxu0 0
        %4977 = vmatmul.mubr.bf16.gmra.mrb[0].mxu0 %v3952
        %v4978 = vpop.f32.mrb[0].mxu0
        %v4979 = vadd.f32 0.0, %v4978
        %v4980 = vpop.f32.mrb[0].mxu0
        %v4981 = vpop.f32.mrb[0].mxu0
        %v4982 = vadd.f32 0.0, %v4981
        %v4983 = vpop.f32.mrb[0].mxu0
        %4984 = vmatprep.mubr.bf16.mxu0 0
        %4985 = vmatmul.mubr.bf16.gmra.mrb[0].mxu0 %v3953
        %v4986 = vpop.f32.mrb[0].mxu0
        %v4987 = vadd.f32 0.0, %v4986
        %v4988 = vpop.f32.mrb[0].mxu0
        %v4989 = vpop.f32.mrb[0].mxu0
        %v4990 = vadd.f32 0.0, %v4989
        %v4991 = vpop.f32.mrb[0].mxu0
        %4992 = vmatprep.mubr.bf16.mxu0 0
        %4993 = vmatmul.mubr.bf16.gmra.mrb[0].mxu0 %v3954
        %v4994 = vpop.f32.mrb[0].mxu0
        %v4995 = vadd.f32 0.0, %v4994
        %v4996 = vpop.f32.mrb[0].mxu0
        %v4997 = vpop.f32.mrb[0].mxu0
        %v4998 = vadd.f32 0.0, %v4997
        %v4999 = vpop.f32.mrb[0].mxu0
        %5000 = vmatprep.mubr.bf16.mxu0 0
        %5001 = vmatmul.mubr.bf16.gmra.mrb[0].mxu0 %v3955
        %v5002 = vpop.f32.mrb[0].mxu0
        %v5003 = vadd.f32 0.0, %v5002
        %v5004 = vpop.f32.mrb[0].mxu0
        %v5005 = vpop.f32.mrb[0].mxu0
        %v5006 = vadd.f32 0.0, %v5005
        %v5007 = vpop.f32.mrb[0].mxu0
        %5008 = vmatprep.mubr.bf16.mxu0 0
        %5009 = vmatmul.mubr.bf16.gmra.mrb[0].mxu0 %v3956
        %v5010 = vpop.f32.mrb[0].mxu0
        %v5011 = vadd.f32 0.0, %v5010
        %v5012 = vpop.f32.mrb[0].mxu0
        %v5013 = vpop.f32.mrb[0].mxu0
        %v5014 = vadd.f32 0.0, %v5013
        %v5015 = vpop.f32.mrb[0].mxu0
        %5016 = vmatprep.mubr.bf16.mxu0 0
        %5017 = vmatmul.mubr.bf16.gmra.mrb[0].mxu0 %v3957
        %v5018 = vpop.f32.mrb[0].mxu0
        %v5019 = vadd.f32 0.0, %v5018
        %v5020 = vpop.f32.mrb[0].mxu0
        %v5021 = vpop.f32.mrb[0].mxu0
        %v5022 = vadd.f32 0.0, %v5021
        %v5023 = vpop.f32.mrb[0].mxu0
        %5024 = vmatprep.mubr.bf16.mxu0 0
        %5025 = vmatmul.mubr.bf16.gmra.mrb[0].mxu0 %v4383
        %v5026 = vpop.f32.mrb[0].mxu0
        %v5027 = vadd.f32 0.0, %v5026
        %v5028 = vpop.f32.mrb[0].mxu0
        %v5029 = vpop.f32.mrb[0].mxu0
        %v5030 = vadd.f32 0.0, %v5029
        %v5031 = vpop.f32.mrb[0].mxu0
        %5032 = vdwg.mxu0
        %v5033 = vadd.f32 %v4775, %v4907
        %v5034 = vadd.f32 %v4776, %v4910
        %v5035 = vadd.f32 %v4777, %v4915
        %v5036 = vadd.f32 %v4778, %v4918
        %v5037 = vadd.f32 %v4779, %v4923
        %v5038 = vadd.f32 %v4780, %v4926
        %v5039 = vadd.f32 %v4781, %v4931
        %v5040 = vadd.f32 %v4782, %v4934
        %v5041 = vadd.f32 %v4783, %v4939
        %v5042 = vadd.f32 %v4784, %v4942
        %v5043 = vadd.f32 %v4785, %v4947
        %v5044 = vadd.f32 %v4786, %v4950
        %v5045 = vadd.f32 %v4787, %v4955
        %v5046 = vadd.f32 %v4788, %v4958
        %v5047 = vadd.f32 %v4789, %v4963
        %v5048 = vadd.f32 %v4790, %v4966
        %v5049 = vadd.f32 %v4791, %v4971
        %v5050 = vadd.f32 %v4792, %v4974
        %v5051 = vadd.f32 %v4793, %v4979
        %v5052 = vadd.f32 %v4794, %v4982
        %v5053 = vadd.f32 %v4795, %v4987
        %v5054 = vadd.f32 %v4796, %v4990
        %v5055 = vadd.f32 %v4797, %v4995
        %v5056 = vadd.f32 %v4798, %v4998
        %v5057 = vadd.f32 %v4799, %v5003
        %v5058 = vadd.f32 %v4800, %v5006
        %v5059 = vadd.f32 %v4801, %v5011
        %v5060 = vadd.f32 %v4802, %v5014
        %v5061 = vadd.f32 %v4803, %v5019
        %v5062 = vadd.f32 %v4804, %v5022
        %v5063 = vadd.f32 %v4805, %v5027
        %v5064 = vadd.f32 %v4806, %v5030
        %v5065 = vld [vmem:[#allocation2 + $0x18] sm:$0xff]
        %v5066 = vld [vmem:[#allocation2 + $0x20] sm:$0xff]
        %v5067 = vld [vmem:[#allocation2 + $0x28] sm:$0xff]
        %v5068 = vld [vmem:[#allocation2 + $0x30] sm:$0xff]
        %v5069 = vld [vmem:[#allocation2 + $0x38] sm:$0xff]
        %v5070 = vld [vmem:[#allocation2 + $0x40] sm:$0xff]
        %v5071 = vld [vmem:[#allocation2 + $0x48] sm:$0xff]
        %v5072 = vld [vmem:[#allocation2 + $0x50] sm:$0xff]
        %v5073 = vld [vmem:[#allocation2 + $0x58] sm:$0xff]
        %v5074 = vld [vmem:[#allocation2 + $0x60] sm:$0xff]
        %v5075 = vld [vmem:[#allocation2 + $0x68] sm:$0xff]
        %v5076 = vld [vmem:[#allocation2 + $0x70] sm:$0xff]
        %v5077 = vld [vmem:[#allocation2 + $0x78] sm:$0xff]
        %v5078 = vld [vmem:[#allocation2 + $0x80] sm:$0xff]
        %v5079 = vld [vmem:[#allocation2 + $0x88] sm:$0xff]
        %v5080 = vld [vmem:[#allocation2 + $0x90] sm:$0xff]
        %v5081 = vld [vmem:[#allocation2 + $0x98] sm:$0x1]
        %v5082 = vsel %vm2819, %v5065, 0
        %v5083 = vsel %vm2820, %v5066, 0
        %v5084 = vsel %vm2821, %v5067, 0
        %v5085 = vsel %vm2822, %v5068, 0
        %v5086 = vsel %vm2823, %v5069, 0
        %v5087 = vsel %vm2824, %v5070, 0
        %v5088 = vsel %vm2825, %v5071, 0
        %v5089 = vsel %vm2826, %v5072, 0
        %v5090 = vsel %vm2827, %v5073, 0
        %v5091 = vsel %vm2828, %v5074, 0
        %v5092 = vsel %vm2829, %v5075, 0
        %v5093 = vsel %vm2830, %v5076, 0
        %v5094 = vsel %vm2831, %v5077, 0
        %v5095 = vsel %vm2832, %v5078, 0
        %v5096 = vsel %vm2833, %v5079, 0
        %v5097 = vsel %vm2834, %v5080, 0
        %v5098 = vsel %vm2835, %v5081, 0
        %s5099 = scalar_lea.vmem [#allocation8], 512
        %v5100 = vld [vmem:[%s5099] sm:$0xf]
        %v5101 = vld [vmem:[%s5099 + $0x4] sm:$0xf]
        %v5102 = vld [vmem:[%s5099 + $0x8] sm:$0xf]
        %v5103 = vld [vmem:[%s5099 + $0xc] sm:$0xf]
        %v5104 = vld [vmem:[%s5099 + $0x10] sm:$0xf]
        %v5105 = vld [vmem:[%s5099 + $0x14] sm:$0xf]
        %v5106 = vld [vmem:[%s5099 + $0x18] sm:$0xf]
        %v5107 = vld [vmem:[%s5099 + $0x1c] sm:$0xf]
        %v5108 = vld [vmem:[%s5099 + $0x20] sm:$0xf]
        %v5109 = vld [vmem:[%s5099 + $0x24] sm:$0xf]
        %v5110 = vld [vmem:[%s5099 + $0x28] sm:$0xf]
        %v5111 = vld [vmem:[%s5099 + $0x2c] sm:$0xf]
        %v5112 = vld [vmem:[%s5099 + $0x30] sm:$0xf]
        %v5113 = vld [vmem:[%s5099 + $0x34] sm:$0xf]
        %v5114 = vld [vmem:[%s5099 + $0x38] sm:$0xf]
        %v5115 = vld [vmem:[%s5099 + $0x3c] sm:$0xf]
        %v5117 = vshrl.u32 %v5082, 16
        %v5119 = vshll.u32 %v5082, 16
        %v5121 = vrot.slane %v5119, 1
        %v5122 = vor.u32 %v5117, %v5121
        %v5124 = vshll.u32 %v5083, 16
        %v5126 = vrot.slane %v5124, 1
        %v5127 = vsel %vm1737, %v5122, %v5126
        %v5128 = vshrl.u32 %v5083, 16
        %v5130 = vor.u32 %v5128, %v5126
        %v5132 = vshll.u32 %v5084, 16
        %v5134 = vrot.slane %v5132, 1
        %v5135 = vsel %vm1737, %v5130, %v5134
        %v5136 = vshrl.u32 %v5084, 16
        %v5138 = vor.u32 %v5136, %v5134
        %v5140 = vshll.u32 %v5085, 16
        %v5142 = vrot.slane %v5140, 1
        %v5143 = vsel %vm1737, %v5138, %v5142
        %v5144 = vshrl.u32 %v5085, 16
        %v5146 = vor.u32 %v5144, %v5142
        %v5148 = vshll.u32 %v5086, 16
        %v5150 = vrot.slane %v5148, 1
        %v5151 = vsel %vm1737, %v5146, %v5150
        %v5152 = vshrl.u32 %v5086, 16
        %v5154 = vor.u32 %v5152, %v5150
        %v5156 = vshll.u32 %v5087, 16
        %v5158 = vrot.slane %v5156, 1
        %v5159 = vsel %vm1737, %v5154, %v5158
        %v5160 = vshrl.u32 %v5087, 16
        %v5162 = vor.u32 %v5160, %v5158
        %v5164 = vshll.u32 %v5088, 16
        %v5166 = vrot.slane %v5164, 1
        %v5167 = vsel %vm1737, %v5162, %v5166
        %v5168 = vshrl.u32 %v5088, 16
        %v5170 = vor.u32 %v5168, %v5166
        %v5172 = vshll.u32 %v5089, 16
        %v5174 = vrot.slane %v5172, 1
        %v5175 = vsel %vm1737, %v5170, %v5174
        %v5176 = vshrl.u32 %v5089, 16
        %v5178 = vor.u32 %v5176, %v5174
        %v5180 = vshll.u32 %v5090, 16
        %v5182 = vrot.slane %v5180, 1
        %v5183 = vsel %vm1737, %v5178, %v5182
        %v5184 = vshrl.u32 %v5090, 16
        %v5186 = vor.u32 %v5184, %v5182
        %v5188 = vshll.u32 %v5091, 16
        %v5190 = vrot.slane %v5188, 1
        %v5191 = vsel %vm1737, %v5186, %v5190
        %v5192 = vshrl.u32 %v5091, 16
        %v5194 = vor.u32 %v5192, %v5190
        %v5196 = vshll.u32 %v5092, 16
        %v5198 = vrot.slane %v5196, 1
        %v5199 = vsel %vm1737, %v5194, %v5198
        %v5200 = vshrl.u32 %v5092, 16
        %v5202 = vor.u32 %v5200, %v5198
        %v5204 = vshll.u32 %v5093, 16
        %v5206 = vrot.slane %v5204, 1
        %v5207 = vsel %vm1737, %v5202, %v5206
        %v5208 = vshrl.u32 %v5093, 16
        %v5210 = vor.u32 %v5208, %v5206
        %v5212 = vshll.u32 %v5094, 16
        %v5214 = vrot.slane %v5212, 1
        %v5215 = vsel %vm1737, %v5210, %v5214
        %v5216 = vshrl.u32 %v5094, 16
        %v5218 = vor.u32 %v5216, %v5214
        %v5220 = vshll.u32 %v5095, 16
        %v5222 = vrot.slane %v5220, 1
        %v5223 = vsel %vm1737, %v5218, %v5222
        %v5224 = vshrl.u32 %v5095, 16
        %v5226 = vor.u32 %v5224, %v5222
        %v5228 = vshll.u32 %v5096, 16
        %v5230 = vrot.slane %v5228, 1
        %v5231 = vsel %vm1737, %v5226, %v5230
        %v5232 = vshrl.u32 %v5096, 16
        %v5234 = vor.u32 %v5232, %v5230
        %v5236 = vshll.u32 %v5097, 16
        %v5238 = vrot.slane %v5236, 1
        %v5239 = vsel %vm1737, %v5234, %v5238
        %v5240 = vshrl.u32 %v5097, 16
        %v5242 = vor.u32 %v5240, %v5238
        %v5244 = vshll.u32 %v5098, 16
        %v5246 = vrot.slane %v5244, 1
        %v5247 = vsel %vm1737, %v5242, %v5246
        %v5280 = vunpack.c.l.b16 %v5100
        %v5281 = vunpack.c.l.b16 %v5101
        %v5282 = vunpack.c.l.b16 %v5102
        %v5283 = vunpack.c.l.b16 %v5103
        %v5284 = vunpack.c.l.b16 %v5104
        %v5285 = vunpack.c.l.b16 %v5105
        %v5286 = vunpack.c.l.b16 %v5106
        %v5287 = vunpack.c.l.b16 %v5107
        %v5288 = vunpack.c.l.b16 %v5108
        %v5289 = vunpack.c.l.b16 %v5109
        %v5290 = vunpack.c.l.b16 %v5110
        %v5291 = vunpack.c.l.b16 %v5111
        %v5292 = vunpack.c.l.b16 %v5112
        %v5293 = vunpack.c.l.b16 %v5113
        %v5294 = vunpack.c.l.b16 %v5114
        %v5295 = vunpack.c.l.b16 %v5115
        %v5296 = vpack.c.b16 %v5281, %v5280
        %v5297 = vpack.c.b16 %v5283, %v5282
        %v5298 = vpack.c.b16 %v5285, %v5284
        %v5299 = vpack.c.b16 %v5287, %v5286
        %v5300 = vpack.c.b16 %v5289, %v5288
        %v5301 = vpack.c.b16 %v5291, %v5290
        %v5302 = vpack.c.b16 %v5293, %v5292
        %v5303 = vpack.c.b16 %v5295, %v5294
        %5312 = vmatprep.subr.bf16.mxu0 0
        %5313 = vmatpush1.bf16.msra.mxu0 %v5296
        %5314 = vmatprep.subr.bf16.mxu0 0
        %5315 = vmatpush1.bf16.msra.mxu0 %v5297
        %5316 = vmatprep.subr.bf16.mxu0 0
        %5317 = vmatpush1.bf16.msra.mxu0 %v5298
        %5318 = vmatprep.subr.bf16.mxu0 0
        %5319 = vmatpush1.bf16.msra.mxu0 %v5299
        %5320 = vmatprep.subr.bf16.mxu0 0
        %5321 = vmatpush1.bf16.msra.mxu0 %v5300
        %5322 = vmatprep.subr.bf16.mxu0 0
        %5323 = vmatpush1.bf16.msra.mxu0 %v5301
        %5324 = vmatprep.subr.bf16.mxu0 0
        %5325 = vmatpush1.bf16.msra.mxu0 %v5302
        %5326 = vmatprep.subr.bf16.mxu0 0
        %5327 = vmatpush1.bf16.msra.mxu0 %v5303
        %5328 = vmatprep.subr.bf16.mxu0 0
        %5329 = vmatpush1.bf16.msra.mxu0 0
        %5330 = vmatprep.subr.bf16.mxu0 0
        %5331 = vmatpush1.bf16.msra.mxu0 0
        %5332 = vmatprep.subr.bf16.mxu0 0
        %5333 = vmatpush1.bf16.msra.mxu0 0
        %5334 = vmatprep.subr.bf16.mxu0 0
        %5335 = vmatpush1.bf16.msra.mxu0 0
        %5336 = vmatprep.subr.bf16.mxu0 0
        %5337 = vmatpush1.bf16.msra.mxu0 0
        %5338 = vmatprep.subr.bf16.mxu0 0
        %5339 = vmatpush1.bf16.msra.mxu0 0
        %5340 = vmatprep.subr.bf16.mxu0 0
        %5341 = vmatpush1.bf16.msra.mxu0 0
        %5342 = vmatprep.subr.bf16.mxu0 0
        %5343 = vmatpush1.bf16.msra.mxu0 0
        %5344 = vmatprep.mubr.bf16.mxu0 0
        %5345 = vmatmul.mubr.bf16.gmra.mrb[0].mxu0 %v5127
        %v5346 = vpop.f32.mrb[0].mxu0
        %v5347 = vadd.f32 0.0, %v5346
        %v5348 = vpop.f32.mrb[0].mxu0
        %v5349 = vpop.f32.mrb[0].mxu0
        %v5350 = vadd.f32 0.0, %v5349
        %v5351 = vpop.f32.mrb[0].mxu0
        %5352 = vmatprep.mubr.bf16.mxu0 0
        %5353 = vmatmul.mubr.bf16.gmra.mrb[0].mxu0 %v5135
        %v5354 = vpop.f32.mrb[0].mxu0
        %v5355 = vadd.f32 0.0, %v5354
        %v5356 = vpop.f32.mrb[0].mxu0
        %v5357 = vpop.f32.mrb[0].mxu0
        %v5358 = vadd.f32 0.0, %v5357
        %v5359 = vpop.f32.mrb[0].mxu0
        %5360 = vmatprep.mubr.bf16.mxu0 0
        %5361 = vmatmul.mubr.bf16.gmra.mrb[0].mxu0 %v5143
        %v5362 = vpop.f32.mrb[0].mxu0
        %v5363 = vadd.f32 0.0, %v5362
        %v5364 = vpop.f32.mrb[0].mxu0
        %v5365 = vpop.f32.mrb[0].mxu0
        %v5366 = vadd.f32 0.0, %v5365
        %v5367 = vpop.f32.mrb[0].mxu0
        %5368 = vmatprep.mubr.bf16.mxu0 0
        %5369 = vmatmul.mubr.bf16.gmra.mrb[0].mxu0 %v5151
        %v5370 = vpop.f32.mrb[0].mxu0
        %v5371 = vadd.f32 0.0, %v5370
        %v5372 = vpop.f32.mrb[0].mxu0
        %v5373 = vpop.f32.mrb[0].mxu0
        %v5374 = vadd.f32 0.0, %v5373
        %v5375 = vpop.f32.mrb[0].mxu0
        %5376 = vmatprep.mubr.bf16.mxu0 0
        %5377 = vmatmul.mubr.bf16.gmra.mrb[0].mxu0 %v5159
        %v5378 = vpop.f32.mrb[0].mxu0
        %v5379 = vadd.f32 0.0, %v5378
        %v5380 = vpop.f32.mrb[0].mxu0
        %v5381 = vpop.f32.mrb[0].mxu0
        %v5382 = vadd.f32 0.0, %v5381
        %v5383 = vpop.f32.mrb[0].mxu0
        %5384 = vmatprep.mubr.bf16.mxu0 0
        %5385 = vmatmul.mubr.bf16.gmra.mrb[0].mxu0 %v5167
        %v5386 = vpop.f32.mrb[0].mxu0
        %v5387 = vadd.f32 0.0, %v5386
        %v5388 = vpop.f32.mrb[0].mxu0
        %v5389 = vpop.f32.mrb[0].mxu0
        %v5390 = vadd.f32 0.0, %v5389
        %v5391 = vpop.f32.mrb[0].mxu0
        %5392 = vmatprep.mubr.bf16.mxu0 0
        %5393 = vmatmul.mubr.bf16.gmra.mrb[0].mxu0 %v5175
        %v5394 = vpop.f32.mrb[0].mxu0
        %v5395 = vadd.f32 0.0, %v5394
        %v5396 = vpop.f32.mrb[0].mxu0
        %v5397 = vpop.f32.mrb[0].mxu0
        %v5398 = vadd.f32 0.0, %v5397
        %v5399 = vpop.f32.mrb[0].mxu0
        %5400 = vmatprep.mubr.bf16.mxu0 0
        %5401 = vmatmul.mubr.bf16.gmra.mrb[0].mxu0 %v5183
        %v5402 = vpop.f32.mrb[0].mxu0
        %v5403 = vadd.f32 0.0, %v5402
        %v5404 = vpop.f32.mrb[0].mxu0
        %v5405 = vpop.f32.mrb[0].mxu0
        %v5406 = vadd.f32 0.0, %v5405
        %v5407 = vpop.f32.mrb[0].mxu0
        %5408 = vmatprep.mubr.bf16.mxu0 0
        %5409 = vmatmul.mubr.bf16.gmra.mrb[0].mxu0 %v5191
        %v5410 = vpop.f32.mrb[0].mxu0
        %v5411 = vadd.f32 0.0, %v5410
        %v5412 = vpop.f32.mrb[0].mxu0
        %v5413 = vpop.f32.mrb[0].mxu0
        %v5414 = vadd.f32 0.0, %v5413
        %v5415 = vpop.f32.mrb[0].mxu0
        %5416 = vmatprep.mubr.bf16.mxu0 0
        %5417 = vmatmul.mubr.bf16.gmra.mrb[0].mxu0 %v5199
        %v5418 = vpop.f32.mrb[0].mxu0
        %v5419 = vadd.f32 0.0, %v5418
        %v5420 = vpop.f32.mrb[0].mxu0
        %v5421 = vpop.f32.mrb[0].mxu0
        %v5422 = vadd.f32 0.0, %v5421
        %v5423 = vpop.f32.mrb[0].mxu0
        %5424 = vmatprep.mubr.bf16.mxu0 0
        %5425 = vmatmul.mubr.bf16.gmra.mrb[0].mxu0 %v5207
        %v5426 = vpop.f32.mrb[0].mxu0
        %v5427 = vadd.f32 0.0, %v5426
        %v5428 = vpop.f32.mrb[0].mxu0
        %v5429 = vpop.f32.mrb[0].mxu0
        %v5430 = vadd.f32 0.0, %v5429
        %v5431 = vpop.f32.mrb[0].mxu0
        %5432 = vmatprep.mubr.bf16.mxu0 0
        %5433 = vmatmul.mubr.bf16.gmra.mrb[0].mxu0 %v5215
        %v5434 = vpop.f32.mrb[0].mxu0
        %v5435 = vadd.f32 0.0, %v5434
        %v5436 = vpop.f32.mrb[0].mxu0
        %v5437 = vpop.f32.mrb[0].mxu0
        %v5438 = vadd.f32 0.0, %v5437
        %v5439 = vpop.f32.mrb[0].mxu0
        %5440 = vmatprep.mubr.bf16.mxu0 0
        %5441 = vmatmul.mubr.bf16.gmra.mrb[0].mxu0 %v5223
        %v5442 = vpop.f32.mrb[0].mxu0
        %v5443 = vadd.f32 0.0, %v5442
        %v5444 = vpop.f32.mrb[0].mxu0
        %v5445 = vpop.f32.mrb[0].mxu0
        %v5446 = vadd.f32 0.0, %v5445
        %v5447 = vpop.f32.mrb[0].mxu0
        %5448 = vmatprep.mubr.bf16.mxu0 0
        %5449 = vmatmul.mubr.bf16.gmra.mrb[0].mxu0 %v5231
        %v5450 = vpop.f32.mrb[0].mxu0
        %v5451 = vadd.f32 0.0, %v5450
        %v5452 = vpop.f32.mrb[0].mxu0
        %v5453 = vpop.f32.mrb[0].mxu0
        %v5454 = vadd.f32 0.0, %v5453
        %v5455 = vpop.f32.mrb[0].mxu0
        %5456 = vmatprep.mubr.bf16.mxu0 0
        %5457 = vmatmul.mubr.bf16.gmra.mrb[0].mxu0 %v5239
        %v5458 = vpop.f32.mrb[0].mxu0
        %v5459 = vadd.f32 0.0, %v5458
        %v5460 = vpop.f32.mrb[0].mxu0
        %v5461 = vpop.f32.mrb[0].mxu0
        %v5462 = vadd.f32 0.0, %v5461
        %v5463 = vpop.f32.mrb[0].mxu0
        %5464 = vmatprep.mubr.bf16.mxu0 0
        %5465 = vmatmul.mubr.bf16.gmra.mrb[0].mxu0 %v5247
        %v5466 = vpop.f32.mrb[0].mxu0
        %v5467 = vadd.f32 0.0, %v5466
        %v5468 = vpop.f32.mrb[0].mxu0
        %v5469 = vpop.f32.mrb[0].mxu0
        %v5470 = vadd.f32 0.0, %v5469
        %v5471 = vpop.f32.mrb[0].mxu0
        %5472 = vdwg.mxu0
        %v5473 = vadd.f32 %v5033, %v5347
        %v5474 = vadd.f32 %v5034, %v5350
        %v5475 = vadd.f32 %v5035, %v5355
        %v5476 = vadd.f32 %v5036, %v5358
        %v5477 = vadd.f32 %v5037, %v5363
        %v5478 = vadd.f32 %v5038, %v5366
        %v5479 = vadd.f32 %v5039, %v5371
        %v5480 = vadd.f32 %v5040, %v5374
        %v5481 = vadd.f32 %v5041, %v5379
        %v5482 = vadd.f32 %v5042, %v5382
        %v5483 = vadd.f32 %v5043, %v5387
        %v5484 = vadd.f32 %v5044, %v5390
        %v5485 = vadd.f32 %v5045, %v5395
        %v5486 = vadd.f32 %v5046, %v5398
        %v5487 = vadd.f32 %v5047, %v5403
        %v5488 = vadd.f32 %v5048, %v5406
        %v5489 = vadd.f32 %v5049, %v5411
        %v5490 = vadd.f32 %v5050, %v5414
        %v5491 = vadd.f32 %v5051, %v5419
        %v5492 = vadd.f32 %v5052, %v5422
        %v5493 = vadd.f32 %v5053, %v5427
        %v5494 = vadd.f32 %v5054, %v5430
        %v5495 = vadd.f32 %v5055, %v5435
        %v5496 = vadd.f32 %v5056, %v5438
        %v5497 = vadd.f32 %v5057, %v5443
        %v5498 = vadd.f32 %v5058, %v5446
        %v5499 = vadd.f32 %v5059, %v5451
        %v5500 = vadd.f32 %v5060, %v5454
        %v5501 = vadd.f32 %v5061, %v5459
        %v5502 = vadd.f32 %v5062, %v5462
        %v5503 = vadd.f32 %v5063, %v5467
        %v5504 = vadd.f32 %v5064, %v5470
        %v5505 = vld [vmem:[%s4] sm:$0x1]
        %v5507 = vlaneseq
        %v5508 = vshrl.u32 %v5507, 7
        %v5509 = vsub.s32 0, %v5508
        %v5510 = vrot.slane %v5505, %v5509
        %v5512 = vadd.f32 %v5473, %v5510
        %v5513 = vadd.f32 %v5474, %v5510
        %v5514 = vadd.f32 %v5475, %v5510
        %v5515 = vadd.f32 %v5476, %v5510
        %v5516 = vadd.f32 %v5477, %v5510
        %v5517 = vadd.f32 %v5478, %v5510
        %v5518 = vadd.f32 %v5479, %v5510
        %v5519 = vadd.f32 %v5480, %v5510
        %v5520 = vadd.f32 %v5481, %v5510
        %v5521 = vadd.f32 %v5482, %v5510
        %v5522 = vadd.f32 %v5483, %v5510
        %v5523 = vadd.f32 %v5484, %v5510
        %v5524 = vadd.f32 %v5485, %v5510
        %v5525 = vadd.f32 %v5486, %v5510
        %v5526 = vadd.f32 %v5487, %v5510
        %v5527 = vadd.f32 %v5488, %v5510
        %v5528 = vadd.f32 %v5489, %v5510
        %v5529 = vadd.f32 %v5490, %v5510
        %v5530 = vadd.f32 %v5491, %v5510
        %v5531 = vadd.f32 %v5492, %v5510
        %v5532 = vadd.f32 %v5493, %v5510
        %v5533 = vadd.f32 %v5494, %v5510
        %v5534 = vadd.f32 %v5495, %v5510
        %v5535 = vadd.f32 %v5496, %v5510
        %v5536 = vadd.f32 %v5497, %v5510
        %v5537 = vadd.f32 %v5498, %v5510
        %v5538 = vadd.f32 %v5499, %v5510
        %v5539 = vadd.f32 %v5500, %v5510
        %v5540 = vadd.f32 %v5501, %v5510
        %v5541 = vadd.f32 %v5502, %v5510
        %v5542 = vadd.f32 %v5503, %v5510
        %v5543 = vadd.f32 %v5504, %v5510
        %v5544 = vmax.f32 %v5512, 0.0
        %v5545 = vmax.f32 %v5513, 0.0
        %v5546 = vmax.f32 %v5514, 0.0
        %v5547 = vmax.f32 %v5515, 0.0
        %v5548 = vmax.f32 %v5516, 0.0
        %v5549 = vmax.f32 %v5517, 0.0
        %v5550 = vmax.f32 %v5518, 0.0
        %v5551 = vmax.f32 %v5519, 0.0
        %v5552 = vmax.f32 %v5520, 0.0
        %v5553 = vmax.f32 %v5521, 0.0
        %v5554 = vmax.f32 %v5522, 0.0
        %v5555 = vmax.f32 %v5523, 0.0
        %v5556 = vmax.f32 %v5524, 0.0
        %v5557 = vmax.f32 %v5525, 0.0
        %v5558 = vmax.f32 %v5526, 0.0
        %v5559 = vmax.f32 %v5527, 0.0
        %v5560 = vmax.f32 %v5528, 0.0
        %v5561 = vmax.f32 %v5529, 0.0
        %v5562 = vmax.f32 %v5530, 0.0
        %v5563 = vmax.f32 %v5531, 0.0
        %v5564 = vmax.f32 %v5532, 0.0
        %v5565 = vmax.f32 %v5533, 0.0
        %v5566 = vmax.f32 %v5534, 0.0
        %v5567 = vmax.f32 %v5535, 0.0
        %v5568 = vmax.f32 %v5536, 0.0
        %v5569 = vmax.f32 %v5537, 0.0
        %v5570 = vmax.f32 %v5538, 0.0
        %v5571 = vmax.f32 %v5539, 0.0
        %v5572 = vmax.f32 %v5540, 0.0
        %v5573 = vmax.f32 %v5541, 0.0
        %v5574 = vmax.f32 %v5542, 0.0
        %v5575 = vmax.f32 %v5543, 0.0
        %v5576 = vpack.c.bf16 %v5545, %v5544
        %v5577 = vpack.c.bf16 %v5547, %v5546
        %v5578 = vpack.c.bf16 %v5549, %v5548
        %v5579 = vpack.c.bf16 %v5551, %v5550
        %v5580 = vpack.c.bf16 %v5553, %v5552
        %v5581 = vpack.c.bf16 %v5555, %v5554
        %v5582 = vpack.c.bf16 %v5557, %v5556
        %v5583 = vpack.c.bf16 %v5559, %v5558
        %v5584 = vpack.c.bf16 %v5561, %v5560
        %v5585 = vpack.c.bf16 %v5563, %v5562
        %v5586 = vpack.c.bf16 %v5565, %v5564
        %v5587 = vpack.c.bf16 %v5567, %v5566
        %v5588 = vpack.c.bf16 %v5569, %v5568
        %v5589 = vpack.c.bf16 %v5571, %v5570
        %v5590 = vpack.c.bf16 %v5573, %v5572
        %v5591 = vpack.c.bf16 %v5575, %v5574
        %v5592 = vld [vmem:[#allocation9] sm:$0xf]
        %v5593 = vld [vmem:[#allocation9 + $0x4] sm:$0xf]
        %v5594 = vld [vmem:[#allocation9 + $0x8] sm:$0xf]
        %v5595 = vld [vmem:[#allocation9 + $0xc] sm:$0xf]
        %v5596 = vld [vmem:[#allocation9 + $0x10] sm:$0xf]
        %v5597 = vld [vmem:[#allocation9 + $0x14] sm:$0xf]
        %v5598 = vld [vmem:[#allocation9 + $0x18] sm:$0xf]
        %v5599 = vld [vmem:[#allocation9 + $0x1c] sm:$0xf]
        %v5600 = vld [vmem:[#allocation9 + $0x20] sm:$0xf]
        %v5601 = vld [vmem:[#allocation9 + $0x24] sm:$0xf]
        %v5602 = vld [vmem:[#allocation9 + $0x28] sm:$0xf]
        %v5603 = vld [vmem:[#allocation9 + $0x2c] sm:$0xf]
        %v5604 = vld [vmem:[#allocation9 + $0x30] sm:$0xf]
        %v5605 = vld [vmem:[#allocation9 + $0x34] sm:$0xf]
        %v5606 = vld [vmem:[#allocation9 + $0x38] sm:$0xf]
        %v5607 = vld [vmem:[#allocation9 + $0x3c] sm:$0xf]
        %v5608 = vld [vmem:[%s6] sm:$0x1]
        %v5610 = vlaneseq
        %v5611 = vshrl.u32 %v5610, 7
        %v5612 = vsub.s32 0, %v5611
        %v5613 = vrot.slane %v5608, %v5612
        %v5631 = vunpack.c.l.b16 %v5592
        %v5632 = vunpack.c.l.b16 %v5593
        %v5633 = vunpack.c.l.b16 %v5594
        %v5634 = vunpack.c.l.b16 %v5595
        %v5635 = vunpack.c.l.b16 %v5596
        %v5636 = vunpack.c.l.b16 %v5597
        %v5637 = vunpack.c.l.b16 %v5598
        %v5638 = vunpack.c.l.b16 %v5599
        %v5639 = vunpack.c.l.b16 %v5600
        %v5640 = vunpack.c.l.b16 %v5601
        %v5641 = vunpack.c.l.b16 %v5602
        %v5642 = vunpack.c.l.b16 %v5603
        %v5643 = vunpack.c.l.b16 %v5604
        %v5644 = vunpack.c.l.b16 %v5605
        %v5645 = vunpack.c.l.b16 %v5606
        %v5646 = vunpack.c.l.b16 %v5607
        %v5647 = vpack.c.b16 %v5632, %v5631
        %v5648 = vpack.c.b16 %v5634, %v5633
        %v5649 = vpack.c.b16 %v5636, %v5635
        %v5650 = vpack.c.b16 %v5638, %v5637
        %v5651 = vpack.c.b16 %v5640, %v5639
        %v5652 = vpack.c.b16 %v5642, %v5641
        %v5653 = vpack.c.b16 %v5644, %v5643
        %v5654 = vpack.c.b16 %v5646, %v5645
        %5663 = vmatprep.subr.bf16.mxu0 0
        %5664 = vmatpush1.bf16.msra.mxu0 %v5647
        %5665 = vmatprep.subr.bf16.mxu0 0
        %5666 = vmatpush1.bf16.msra.mxu0 %v5648
        %5667 = vmatprep.subr.bf16.mxu0 0
        %5668 = vmatpush1.bf16.msra.mxu0 %v5649
        %5669 = vmatprep.subr.bf16.mxu0 0
        %5670 = vmatpush1.bf16.msra.mxu0 %v5650
        %5671 = vmatprep.subr.bf16.mxu0 0
        %5672 = vmatpush1.bf16.msra.mxu0 %v5651
        %5673 = vmatprep.subr.bf16.mxu0 0
        %5674 = vmatpush1.bf16.msra.mxu0 %v5652
        %5675 = vmatprep.subr.bf16.mxu0 0
        %5676 = vmatpush1.bf16.msra.mxu0 %v5653
        %5677 = vmatprep.subr.bf16.mxu0 0
        %5678 = vmatpush1.bf16.msra.mxu0 %v5654
        %5679 = vmatprep.subr.bf16.mxu0 0
        %5680 = vmatpush1.bf16.msra.mxu0 0
        %5681 = vmatprep.subr.bf16.mxu0 0
        %5682 = vmatpush1.bf16.msra.mxu0 0
        %5683 = vmatprep.subr.bf16.mxu0 0
        %5684 = vmatpush1.bf16.msra.mxu0 0
        %5685 = vmatprep.subr.bf16.mxu0 0
        %5686 = vmatpush1.bf16.msra.mxu0 0
        %5687 = vmatprep.subr.bf16.mxu0 0
        %5688 = vmatpush1.bf16.msra.mxu0 0
        %5689 = vmatprep.subr.bf16.mxu0 0
        %5690 = vmatpush1.bf16.msra.mxu0 0
        %5691 = vmatprep.subr.bf16.mxu0 0
        %5692 = vmatpush1.bf16.msra.mxu0 0
        %5693 = vmatprep.subr.bf16.mxu0 0
        %5694 = vmatpush1.bf16.msra.mxu0 0
        %5695 = vmatprep.mubr.bf16.mxu0 0
        %5696 = vmatmul.mubr.bf16.gmra.mrb[0].mxu0 %v5576
        %v5697 = vpop.f32.mrb[0].mxu0
        %v5698 = vadd.f32 %v5613, %v5697
        %v5699 = vpop.f32.mrb[0].mxu0
        %v5700 = vpop.f32.mrb[0].mxu0
        %v5701 = vadd.f32 %v5613, %v5700
        %v5702 = vpop.f32.mrb[0].mxu0
        %5703 = vmatprep.mubr.bf16.mxu0 0
        %5704 = vmatmul.mubr.bf16.gmra.mrb[0].mxu0 %v5577
        %v5705 = vpop.f32.mrb[0].mxu0
        %v5706 = vadd.f32 %v5613, %v5705
        %v5707 = vpop.f32.mrb[0].mxu0
        %v5708 = vpop.f32.mrb[0].mxu0
        %v5709 = vadd.f32 %v5613, %v5708
        %v5710 = vpop.f32.mrb[0].mxu0
        %5711 = vmatprep.mubr.bf16.mxu0 0
        %5712 = vmatmul.mubr.bf16.gmra.mrb[0].mxu0 %v5578
        %v5713 = vpop.f32.mrb[0].mxu0
        %v5714 = vadd.f32 %v5613, %v5713
        %v5715 = vpop.f32.mrb[0].mxu0
        %v5716 = vpop.f32.mrb[0].mxu0
        %v5717 = vadd.f32 %v5613, %v5716
        %v5718 = vpop.f32.mrb[0].mxu0
        %5719 = vmatprep.mubr.bf16.mxu0 0
        %5720 = vmatmul.mubr.bf16.gmra.mrb[0].mxu0 %v5579
        %v5721 = vpop.f32.mrb[0].mxu0
        %v5722 = vadd.f32 %v5613, %v5721
        %v5723 = vpop.f32.mrb[0].mxu0
        %v5724 = vpop.f32.mrb[0].mxu0
        %v5725 = vadd.f32 %v5613, %v5724
        %v5726 = vpop.f32.mrb[0].mxu0
        %5727 = vmatprep.mubr.bf16.mxu0 0
        %5728 = vmatmul.mubr.bf16.gmra.mrb[0].mxu0 %v5580
        %v5729 = vpop.f32.mrb[0].mxu0
        %v5730 = vadd.f32 %v5613, %v5729
        %v5731 = vpop.f32.mrb[0].mxu0
        %v5732 = vpop.f32.mrb[0].mxu0
        %v5733 = vadd.f32 %v5613, %v5732
        %v5734 = vpop.f32.mrb[0].mxu0
        %5735 = vmatprep.mubr.bf16.mxu0 0
        %5736 = vmatmul.mubr.bf16.gmra.mrb[0].mxu0 %v5581
        %v5737 = vpop.f32.mrb[0].mxu0
        %v5738 = vadd.f32 %v5613, %v5737
        %v5739 = vpop.f32.mrb[0].mxu0
        %v5740 = vpop.f32.mrb[0].mxu0
        %v5741 = vadd.f32 %v5613, %v5740
        %v5742 = vpop.f32.mrb[0].mxu0
        %5743 = vmatprep.mubr.bf16.mxu0 0
        %5744 = vmatmul.mubr.bf16.gmra.mrb[0].mxu0 %v5582
        %v5745 = vpop.f32.mrb[0].mxu0
        %v5746 = vadd.f32 %v5613, %v5745
        %v5747 = vpop.f32.mrb[0].mxu0
        %v5748 = vpop.f32.mrb[0].mxu0
        %v5749 = vadd.f32 %v5613, %v5748
        %v5750 = vpop.f32.mrb[0].mxu0
        %5751 = vmatprep.mubr.bf16.mxu0 0
        %5752 = vmatmul.mubr.bf16.gmra.mrb[0].mxu0 %v5583
        %v5753 = vpop.f32.mrb[0].mxu0
        %v5754 = vadd.f32 %v5613, %v5753
        %v5755 = vpop.f32.mrb[0].mxu0
        %v5756 = vpop.f32.mrb[0].mxu0
        %v5757 = vadd.f32 %v5613, %v5756
        %v5758 = vpop.f32.mrb[0].mxu0
        %5759 = vmatprep.mubr.bf16.mxu0 0
        %5760 = vmatmul.mubr.bf16.gmra.mrb[0].mxu0 %v5584
        %v5761 = vpop.f32.mrb[0].mxu0
        %v5762 = vadd.f32 %v5613, %v5761
        %v5763 = vpop.f32.mrb[0].mxu0
        %v5764 = vpop.f32.mrb[0].mxu0
        %v5765 = vadd.f32 %v5613, %v5764
        %v5766 = vpop.f32.mrb[0].mxu0
        %5767 = vmatprep.mubr.bf16.mxu0 0
        %5768 = vmatmul.mubr.bf16.gmra.mrb[0].mxu0 %v5585
        %v5769 = vpop.f32.mrb[0].mxu0
        %v5770 = vadd.f32 %v5613, %v5769
        %v5771 = vpop.f32.mrb[0].mxu0
        %v5772 = vpop.f32.mrb[0].mxu0
        %v5773 = vadd.f32 %v5613, %v5772
        %v5774 = vpop.f32.mrb[0].mxu0
        %5775 = vmatprep.mubr.bf16.mxu0 0
        %5776 = vmatmul.mubr.bf16.gmra.mrb[0].mxu0 %v5586
        %v5777 = vpop.f32.mrb[0].mxu0
        %v5778 = vadd.f32 %v5613, %v5777
        %v5779 = vpop.f32.mrb[0].mxu0
        %v5780 = vpop.f32.mrb[0].mxu0
        %v5781 = vadd.f32 %v5613, %v5780
        %v5782 = vpop.f32.mrb[0].mxu0
        %5783 = vmatprep.mubr.bf16.mxu0 0
        %5784 = vmatmul.mubr.bf16.gmra.mrb[0].mxu0 %v5587
        %v5785 = vpop.f32.mrb[0].mxu0
        %v5786 = vadd.f32 %v5613, %v5785
        %v5787 = vpop.f32.mrb[0].mxu0
        %v5788 = vpop.f32.mrb[0].mxu0
        %v5789 = vadd.f32 %v5613, %v5788
        %v5790 = vpop.f32.mrb[0].mxu0
        %5791 = vmatprep.mubr.bf16.mxu0 0
        %5792 = vmatmul.mubr.bf16.gmra.mrb[0].mxu0 %v5588
        %v5793 = vpop.f32.mrb[0].mxu0
        %v5794 = vadd.f32 %v5613, %v5793
        %v5795 = vpop.f32.mrb[0].mxu0
        %v5796 = vpop.f32.mrb[0].mxu0
        %v5797 = vadd.f32 %v5613, %v5796
        %v5798 = vpop.f32.mrb[0].mxu0
        %5799 = vmatprep.mubr.bf16.mxu0 0
        %5800 = vmatmul.mubr.bf16.gmra.mrb[0].mxu0 %v5589
        %v5801 = vpop.f32.mrb[0].mxu0
        %v5802 = vadd.f32 %v5613, %v5801
        %v5803 = vpop.f32.mrb[0].mxu0
        %v5804 = vpop.f32.mrb[0].mxu0
        %v5805 = vadd.f32 %v5613, %v5804
        %v5806 = vpop.f32.mrb[0].mxu0
        %5807 = vmatprep.mubr.bf16.mxu0 0
        %5808 = vmatmul.mubr.bf16.gmra.mrb[0].mxu0 %v5590
        %v5809 = vpop.f32.mrb[0].mxu0
        %v5810 = vadd.f32 %v5613, %v5809
        %v5811 = vpop.f32.mrb[0].mxu0
        %v5812 = vpop.f32.mrb[0].mxu0
        %v5813 = vadd.f32 %v5613, %v5812
        %v5814 = vpop.f32.mrb[0].mxu0
        %5815 = vmatprep.mubr.bf16.mxu0 0
        %5816 = vmatmul.mubr.bf16.gmra.mrb[0].mxu0 %v5591
        %v5817 = vpop.f32.mrb[0].mxu0
        %v5818 = vadd.f32 %v5613, %v5817
        %v5819 = vpop.f32.mrb[0].mxu0
        %v5820 = vpop.f32.mrb[0].mxu0
        %v5821 = vadd.f32 %v5613, %v5820
        %v5822 = vpop.f32.mrb[0].mxu0
        %5823 = vdwg.mxu0
        %v5824 = vunpack.c.l.bf16 %v347
        %v5825 = vunpack.c.l.bf16 %v348
        %v5826 = vunpack.c.l.bf16 %v349
        %v5827 = vunpack.c.l.bf16 %v350
        %v5828 = vunpack.c.l.bf16 %v351
        %v5829 = vunpack.c.l.bf16 %v352
        %v5830 = vunpack.c.l.bf16 %v353
        %v5831 = vunpack.c.l.bf16 %v354
        %v5832 = vunpack.c.l.bf16 %v355
        %v5833 = vunpack.c.l.bf16 %v356
        %v5834 = vunpack.c.l.bf16 %v357
        %v5835 = vunpack.c.l.bf16 %v358
        %v5836 = vunpack.c.l.bf16 %v359
        %v5837 = vunpack.c.l.bf16 %v360
        %v5838 = vunpack.c.l.bf16 %v361
        %v5839 = vunpack.c.l.bf16 %v362
        %v5840 = vunpack.c.l.bf16 %v363
        %v5841 = vunpack.c.l.bf16 %v364
        %v5842 = vunpack.c.l.bf16 %v365
        %v5843 = vunpack.c.l.bf16 %v366
        %v5844 = vunpack.c.l.bf16 %v367
        %v5845 = vunpack.c.l.bf16 %v368
        %v5846 = vunpack.c.l.bf16 %v369
        %v5847 = vunpack.c.l.bf16 %v370
        %v5848 = vunpack.c.l.bf16 %v371
        %v5849 = vunpack.c.l.bf16 %v372
        %v5850 = vunpack.c.l.bf16 %v373
        %v5851 = vunpack.c.l.bf16 %v374
        %v5852 = vunpack.c.l.bf16 %v375
        %v5853 = vunpack.c.l.bf16 %v376
        %v5854 = vunpack.c.l.bf16 %v377
        %v5855 = vunpack.c.l.bf16 %v378
        %v5856 = vadd.f32 %v5698, %v5824
        %v5857 = vadd.f32 %v5701, %v5825
        %v5858 = vadd.f32 %v5706, %v5826
        %v5859 = vadd.f32 %v5709, %v5827
        %v5860 = vadd.f32 %v5714, %v5828
        %v5861 = vadd.f32 %v5717, %v5829
        %v5862 = vadd.f32 %v5722, %v5830
        %v5863 = vadd.f32 %v5725, %v5831
        %v5864 = vadd.f32 %v5730, %v5832
        %v5865 = vadd.f32 %v5733, %v5833
        %v5866 = vadd.f32 %v5738, %v5834
        %v5867 = vadd.f32 %v5741, %v5835
        %v5868 = vadd.f32 %v5746, %v5836
        %v5869 = vadd.f32 %v5749, %v5837
        %v5870 = vadd.f32 %v5754, %v5838
        %v5871 = vadd.f32 %v5757, %v5839
        %v5872 = vadd.f32 %v5762, %v5840
        %v5873 = vadd.f32 %v5765, %v5841
        %v5874 = vadd.f32 %v5770, %v5842
        %v5875 = vadd.f32 %v5773, %v5843
        %v5876 = vadd.f32 %v5778, %v5844
        %v5877 = vadd.f32 %v5781, %v5845
        %v5878 = vadd.f32 %v5786, %v5846
        %v5879 = vadd.f32 %v5789, %v5847
        %v5880 = vadd.f32 %v5794, %v5848
        %v5881 = vadd.f32 %v5797, %v5849
        %v5882 = vadd.f32 %v5802, %v5850
        %v5883 = vadd.f32 %v5805, %v5851
        %v5884 = vadd.f32 %v5810, %v5852
        %v5885 = vadd.f32 %v5813, %v5853
        %v5886 = vadd.f32 %v5818, %v5854
        %v5887 = vadd.f32 %v5821, %v5855
        %v5888 = vmax.f32 %v5856, 0.0
        %v5889 = vmax.f32 %v5857, 0.0
        %v5890 = vmax.f32 %v5858, 0.0
        %v5891 = vmax.f32 %v5859, 0.0
        %v5892 = vmax.f32 %v5860, 0.0
        %v5893 = vmax.f32 %v5861, 0.0
        %v5894 = vmax.f32 %v5862, 0.0
        %v5895 = vmax.f32 %v5863, 0.0
        %v5896 = vmax.f32 %v5864, 0.0
        %v5897 = vmax.f32 %v5865, 0.0
        %v5898 = vmax.f32 %v5866, 0.0
        %v5899 = vmax.f32 %v5867, 0.0
        %v5900 = vmax.f32 %v5868, 0.0
        %v5901 = vmax.f32 %v5869, 0.0
        %v5902 = vmax.f32 %v5870, 0.0
        %v5903 = vmax.f32 %v5871, 0.0
        %v5904 = vmax.f32 %v5872, 0.0
        %v5905 = vmax.f32 %v5873, 0.0
        %v5906 = vmax.f32 %v5874, 0.0
        %v5907 = vmax.f32 %v5875, 0.0
        %v5908 = vmax.f32 %v5876, 0.0
        %v5909 = vmax.f32 %v5877, 0.0
        %v5910 = vmax.f32 %v5878, 0.0
        %v5911 = vmax.f32 %v5879, 0.0
        %v5912 = vmax.f32 %v5880, 0.0
        %v5913 = vmax.f32 %v5881, 0.0
        %v5914 = vmax.f32 %v5882, 0.0
        %v5915 = vmax.f32 %v5883, 0.0
        %v5916 = vmax.f32 %v5884, 0.0
        %v5917 = vmax.f32 %v5885, 0.0
        %v5918 = vmax.f32 %v5886, 0.0
        %v5919 = vmax.f32 %v5887, 0.0
        %v5920 = vpack.c.bf16 %v5889, %v5888
        %v5921 = vpack.c.bf16 %v5891, %v5890
        %v5922 = vpack.c.bf16 %v5893, %v5892
        %v5923 = vpack.c.bf16 %v5895, %v5894
        %v5924 = vpack.c.bf16 %v5897, %v5896
        %v5925 = vpack.c.bf16 %v5899, %v5898
        %v5926 = vpack.c.bf16 %v5901, %v5900
        %v5927 = vpack.c.bf16 %v5903, %v5902
        %v5928 = vpack.c.bf16 %v5905, %v5904
        %v5929 = vpack.c.bf16 %v5907, %v5906
        %v5930 = vpack.c.bf16 %v5909, %v5908
        %v5931 = vpack.c.bf16 %v5911, %v5910
        %v5932 = vpack.c.bf16 %v5913, %v5912
        %v5933 = vpack.c.bf16 %v5915, %v5914
        %v5934 = vpack.c.bf16 %v5917, %v5916
        %v5935 = vpack.c.bf16 %v5919, %v5918
        %v5952 = vunpack.c.l.b16 %v5920
        %v5953 = vunpack.c.h.b16 %v5920
        %v5954 = vunpack.c.l.b16 %v5921
        %v5955 = vunpack.c.h.b16 %v5921
        %v5956 = vunpack.c.l.b16 %v5922
        %v5957 = vunpack.c.h.b16 %v5922
        %v5958 = vunpack.c.l.b16 %v5923
        %v5959 = vunpack.c.h.b16 %v5923
        %v5960 = vunpack.c.l.b16 %v5924
        %v5961 = vunpack.c.h.b16 %v5924
        %v5962 = vunpack.c.l.b16 %v5925
        %v5963 = vunpack.c.h.b16 %v5925
        %v5964 = vunpack.c.l.b16 %v5926
        %v5965 = vunpack.c.h.b16 %v5926
        %v5966 = vunpack.c.l.b16 %v5927
        %v5967 = vunpack.c.h.b16 %v5927
        %v5968 = vunpack.c.l.b16 %v5928
        %v5969 = vunpack.c.h.b16 %v5928
        %v5970 = vunpack.c.l.b16 %v5929
        %v5971 = vunpack.c.h.b16 %v5929
        %v5972 = vunpack.c.l.b16 %v5930
        %v5973 = vunpack.c.h.b16 %v5930
        %v5974 = vunpack.c.l.b16 %v5931
        %v5975 = vunpack.c.h.b16 %v5931
        %v5976 = vunpack.c.l.b16 %v5932
        %v5977 = vunpack.c.h.b16 %v5932
        %v5978 = vunpack.c.l.b16 %v5933
        %v5979 = vunpack.c.h.b16 %v5933
        %v5980 = vunpack.c.l.b16 %v5934
        %v5981 = vunpack.c.h.b16 %v5934
        %v5982 = vunpack.c.l.b16 %v5935
        %v5983 = vunpack.c.h.b16 %v5935
        %v5984 = vpack.c.b16 %v5952, %v5952
        %v5985 = vpack.c.b16 %v5953, %v5953
        %v5986 = vpack.c.b16 %v5954, %v5954
        %v5987 = vpack.c.b16 %v5955, %v5955
        %v5988 = vpack.c.b16 %v5956, %v5956
        %v5989 = vpack.c.b16 %v5957, %v5957
        %v5990 = vpack.c.b16 %v5958, %v5958
        %v5991 = vpack.c.b16 %v5959, %v5959
        %v5992 = vpack.c.b16 %v5960, %v5960
        %v5993 = vpack.c.b16 %v5961, %v5961
        %v5994 = vpack.c.b16 %v5962, %v5962
        %v5995 = vpack.c.b16 %v5963, %v5963
        %v5996 = vpack.c.b16 %v5964, %v5964
        %v5997 = vpack.c.b16 %v5965, %v5965
        %v5998 = vpack.c.b16 %v5966, %v5966
        %v5999 = vpack.c.b16 %v5967, %v5967
        %v6000 = vpack.c.b16 %v5968, %v5968
        %v6001 = vpack.c.b16 %v5969, %v5969
        %v6002 = vpack.c.b16 %v5970, %v5970
        %v6003 = vpack.c.b16 %v5971, %v5971
        %v6004 = vpack.c.b16 %v5972, %v5972
        %v6005 = vpack.c.b16 %v5973, %v5973
        %v6006 = vpack.c.b16 %v5974, %v5974
        %v6007 = vpack.c.b16 %v5975, %v5975
        %v6008 = vpack.c.b16 %v5976, %v5976
        %v6009 = vpack.c.b16 %v5977, %v5977
        %v6010 = vpack.c.b16 %v5978, %v5978
        %v6011 = vpack.c.b16 %v5979, %v5979
        %v6012 = vpack.c.b16 %v5980, %v5980
        %v6013 = vpack.c.b16 %v5981, %v5981
        %v6014 = vpack.c.b16 %v5982, %v5982
        %v6015 = vpack.c.b16 %v5983, %v5983
        %6048 = vst [vmem:[%s341] sm:$0xf] %v5984
        %6049 = vst [vmem:[%s341 + $0x4] sm:$0xf] %v5985
        %6050 = vst [vmem:[%s341 + $0x8] sm:$0xf] %v5986
        %6051 = vst [vmem:[%s341 + $0xc] sm:$0xf] %v5987
        %6052 = vst [vmem:[%s341 + $0x10] sm:$0xf] %v5988
        %6053 = vst [vmem:[%s341 + $0x14] sm:$0xf] %v5989
        %6054 = vst [vmem:[%s341 + $0x18] sm:$0xf] %v5990
        %6055 = vst [vmem:[%s341 + $0x1c] sm:$0xf] %v5991
        %6056 = vst [vmem:[%s341 + $0x20] sm:$0xf] %v5992
        %6057 = vst [vmem:[%s341 + $0x24] sm:$0xf] %v5993
        %6058 = vst [vmem:[%s341 + $0x28] sm:$0xf] %v5994
        %6059 = vst [vmem:[%s341 + $0x2c] sm:$0xf] %v5995
        %6060 = vst [vmem:[%s341 + $0x30] sm:$0xf] %v5996
        %6061 = vst [vmem:[%s341 + $0x34] sm:$0xf] %v5997
        %6062 = vst [vmem:[%s341 + $0x38] sm:$0xf] %v5998
        %6063 = vst [vmem:[%s341 + $0x3c] sm:$0xf] %v5999
        %6064 = vst [vmem:[%s341 + $0x40] sm:$0xf] %v6000
        %6065 = vst [vmem:[%s341 + $0x44] sm:$0xf] %v6001
        %6066 = vst [vmem:[%s341 + $0x48] sm:$0xf] %v6002
        %6067 = vst [vmem:[%s341 + $0x4c] sm:$0xf] %v6003
        %6068 = vst [vmem:[%s341 + $0x50] sm:$0xf] %v6004
        %6069 = vst [vmem:[%s341 + $0x54] sm:$0xf] %v6005
        %6070 = vst [vmem:[%s341 + $0x58] sm:$0xf] %v6006
        %6071 = vst [vmem:[%s341 + $0x5c] sm:$0xf] %v6007
        %6072 = vst [vmem:[%s341 + $0x60] sm:$0xf] %v6008
        %6073 = vst [vmem:[%s341 + $0x64] sm:$0xf] %v6009
        %6074 = vst [vmem:[%s341 + $0x68] sm:$0xf] %v6010
        %6075 = vst [vmem:[%s341 + $0x6c] sm:$0xf] %v6011
        %6076 = vst [vmem:[%s341 + $0x70] sm:$0xf] %v6012
        %6077 = vst [vmem:[%s341 + $0x74] sm:$0xf] %v6013
        %6078 = vst [vmem:[%s341 + $0x78] sm:$0xf] %v6014
        %6079 = vst [vmem:[%s341 + $0x7c] sm:$0xf] %v6015
        %6080 = vst [vmem:[#allocation2 + $0xa0] sm:$0xff] 0
        %6081 = vst [vmem:[#allocation2 + $0xa8] sm:$0xff] 0
        %6082 = vst [vmem:[#allocation2 + $0x130] sm:$0xff] 0
        %6083 = vst [vmem:[#allocation2 + $0x138] sm:$0xff] 0
        %v6084 = vpack.c.bf16 %v996, %v995
        %v6085 = vpack.c.bf16 %v998, %v997
        %v6086 = vpack.c.bf16 %v1000, %v999
        %v6087 = vpack.c.bf16 %v1002, %v1001
        %v6088 = vpack.c.bf16 %v1004, %v1003
        %v6089 = vpack.c.bf16 %v1006, %v1005
        %v6090 = vpack.c.bf16 %v1008, %v1007
        %v6091 = vpack.c.bf16 %v1010, %v1009
        %v6092 = vpack.c.bf16 %v1012, %v1011
        %v6093 = vpack.c.bf16 %v1014, %v1013
        %v6094 = vpack.c.bf16 %v1016, %v1015
        %v6095 = vpack.c.bf16 %v1018, %v1017
        %v6096 = vpack.c.bf16 %v1020, %v1019
        %v6097 = vpack.c.bf16 %v1022, %v1021
        %v6098 = vpack.c.bf16 %v1024, %v1023
        %v6099 = vpack.c.bf16 %v1026, %v1025
        %6100 = vst [vmem:[#allocation2 + $0xb0] sm:$0xff] %v6084
        %6101 = vst [vmem:[#allocation2 + $0xb8] sm:$0xff] %v6085
        %6102 = vst [vmem:[#allocation2 + $0xc0] sm:$0xff] %v6086
        %6103 = vst [vmem:[#allocation2 + $0xc8] sm:$0xff] %v6087
        %6104 = vst [vmem:[#allocation2 + $0xd0] sm:$0xff] %v6088
        %6105 = vst [vmem:[#allocation2 + $0xd8] sm:$0xff] %v6089
        %6106 = vst [vmem:[#allocation2 + $0xe0] sm:$0xff] %v6090
        %6107 = vst [vmem:[#allocation2 + $0xe8] sm:$0xff] %v6091
        %6108 = vst [vmem:[#allocation2 + $0xf0] sm:$0xff] %v6092
        %6109 = vst [vmem:[#allocation2 + $0xf8] sm:$0xff] %v6093
        %6110 = vst [vmem:[#allocation2 + $0x100] sm:$0xff] %v6094
        %6111 = vst [vmem:[#allocation2 + $0x108] sm:$0xff] %v6095
        %6112 = vst [vmem:[#allocation2 + $0x110] sm:$0xff] %v6096
        %6113 = vst [vmem:[#allocation2 + $0x118] sm:$0xff] %v6097
        %6114 = vst [vmem:[#allocation2 + $0x120] sm:$0xff] %v6098
        %6115 = vst [vmem:[#allocation2 + $0x128] sm:$0xff] %v6099
        %v6116 = vld [vmem:[#allocation2 + $0xa0] sm:$0x80]
        %v6117 = vld [vmem:[#allocation2 + $0xa8] sm:$0xff]
        %v6118 = vld [vmem:[#allocation2 + $0xb0] sm:$0xff]
        %v6119 = vld [vmem:[#allocation2 + $0xb8] sm:$0xff]
        %v6120 = vld [vmem:[#allocation2 + $0xc0] sm:$0xff]
        %v6121 = vld [vmem:[#allocation2 + $0xc8] sm:$0xff]
        %v6122 = vld [vmem:[#allocation2 + $0xd0] sm:$0xff]
        %v6123 = vld [vmem:[#allocation2 + $0xd8] sm:$0xff]
        %v6124 = vld [vmem:[#allocation2 + $0xe0] sm:$0xff]
        %v6125 = vld [vmem:[#allocation2 + $0xe8] sm:$0xff]
        %v6126 = vld [vmem:[#allocation2 + $0xf0] sm:$0xff]
        %v6127 = vld [vmem:[#allocation2 + $0xf8] sm:$0xff]
        %v6128 = vld [vmem:[#allocation2 + $0x100] sm:$0xff]
        %v6129 = vld [vmem:[#allocation2 + $0x108] sm:$0xff]
        %v6130 = vld [vmem:[#allocation2 + $0x110] sm:$0xff]
        %v6131 = vld [vmem:[#allocation2 + $0x118] sm:$0xff]
        %v6132 = vld [vmem:[#allocation2 + $0x120] sm:$0xff]
        %v6133 = vsel %vm1865, %v6116, 0
        %v6134 = vsel %vm1866, %v6117, 0
        %v6135 = vsel %vm1867, %v6118, 0
        %v6136 = vsel %vm1868, %v6119, 0
        %v6137 = vsel %vm1869, %v6120, 0
        %v6138 = vsel %vm1870, %v6121, 0
        %v6139 = vsel %vm1871, %v6122, 0
        %v6140 = vsel %vm1872, %v6123, 0
        %v6141 = vsel %vm1873, %v6124, 0
        %v6142 = vsel %vm1874, %v6125, 0
        %v6143 = vsel %vm1875, %v6126, 0
        %v6144 = vsel %vm1876, %v6127, 0
        %v6145 = vsel %vm1877, %v6128, 0
        %v6146 = vsel %vm1878, %v6129, 0
        %v6147 = vsel %vm1879, %v6130, 0
        %v6148 = vsel %vm1880, %v6131, 0
        %v6149 = vsel %vm1881, %v6132, 0
        %v6150 = vld [vmem:[#allocation8] sm:$0xf]
        %v6151 = vld [vmem:[#allocation8 + $0x4] sm:$0xf]
        %v6152 = vld [vmem:[#allocation8 + $0x8] sm:$0xf]
        %v6153 = vld [vmem:[#allocation8 + $0xc] sm:$0xf]
        %v6154 = vld [vmem:[#allocation8 + $0x10] sm:$0xf]
        %v6155 = vld [vmem:[#allocation8 + $0x14] sm:$0xf]
        %v6156 = vld [vmem:[#allocation8 + $0x18] sm:$0xf]
        %v6157 = vld [vmem:[#allocation8 + $0x1c] sm:$0xf]
        %v6158 = vld [vmem:[#allocation8 + $0x20] sm:$0xf]
        %v6159 = vld [vmem:[#allocation8 + $0x24] sm:$0xf]
        %v6160 = vld [vmem:[#allocation8 + $0x28] sm:$0xf]
        %v6161 = vld [vmem:[#allocation8 + $0x2c] sm:$0xf]
        %v6162 = vld [vmem:[#allocation8 + $0x30] sm:$0xf]
        %v6163 = vld [vmem:[#allocation8 + $0x34] sm:$0xf]
        %v6164 = vld [vmem:[#allocation8 + $0x38] sm:$0xf]
        %v6165 = vld [vmem:[#allocation8 + $0x3c] sm:$0xf]
        %v6166 = vld [vmem:[%s1915] sm:$0xf]
        %v6167 = vld [vmem:[%s1915 + $0x4] sm:$0xf]
        %v6168 = vld [vmem:[%s1915 + $0x8] sm:$0xf]
        %v6169 = vld [vmem:[%s1915 + $0xc] sm:$0xf]
        %v6170 = vld [vmem:[%s1915 + $0x10] sm:$0xf]
        %v6171 = vld [vmem:[%s1915 + $0x14] sm:$0xf]
        %v6172 = vld [vmem:[%s1915 + $0x18] sm:$0xf]
        %v6173 = vld [vmem:[%s1915 + $0x1c] sm:$0xf]
        %v6174 = vld [vmem:[%s1915 + $0x20] sm:$0xf]
        %v6175 = vld [vmem:[%s1915 + $0x24] sm:$0xf]
        %v6176 = vld [vmem:[%s1915 + $0x28] sm:$0xf]
        %v6177 = vld [vmem:[%s1915 + $0x2c] sm:$0xf]
        %v6178 = vld [vmem:[%s1915 + $0x30] sm:$0xf]
        %v6179 = vld [vmem:[%s1915 + $0x34] sm:$0xf]
        %v6180 = vld [vmem:[%s1915 + $0x38] sm:$0xf]
        %v6181 = vld [vmem:[%s1915 + $0x3c] sm:$0xf]
        %v6198 = vunpack.c.l.b16 %v6166
        %v6199 = vunpack.c.l.b16 %v6167
        %v6200 = vunpack.c.l.b16 %v6168
        %v6201 = vunpack.c.l.b16 %v6169
        %v6202 = vunpack.c.l.b16 %v6170
        %v6203 = vunpack.c.l.b16 %v6171
        %v6204 = vunpack.c.l.b16 %v6172
        %v6205 = vunpack.c.l.b16 %v6173
        %v6206 = vunpack.c.l.b16 %v6174
        %v6207 = vunpack.c.l.b16 %v6175
        %v6208 = vunpack.c.l.b16 %v6176
        %v6209 = vunpack.c.l.b16 %v6177
        %v6210 = vunpack.c.l.b16 %v6178
        %v6211 = vunpack.c.l.b16 %v6179
        %v6212 = vunpack.c.l.b16 %v6180
        %v6213 = vunpack.c.l.b16 %v6181
        %v6214 = vpack.c.b16 %v6199, %v6198
        %v6215 = vpack.c.b16 %v6201, %v6200
        %v6216 = vpack.c.b16 %v6203, %v6202
        %v6217 = vpack.c.b16 %v6205, %v6204
        %v6218 = vpack.c.b16 %v6207, %v6206
        %v6219 = vpack.c.b16 %v6209, %v6208
        %v6220 = vpack.c.b16 %v6211, %v6210
        %v6221 = vpack.c.b16 %v6213, %v6212
        %6230 = vmatprep.subr.bf16.mxu0 0
        %6231 = vmatpush1.bf16.msra.mxu0 %v6214
        %6232 = vmatprep.subr.bf16.mxu0 0
        %6233 = vmatpush1.bf16.msra.mxu0 %v6215
        %6234 = vmatprep.subr.bf16.mxu0 0
        %6235 = vmatpush1.bf16.msra.mxu0 %v6216
        %6236 = vmatprep.subr.bf16.mxu0 0
        %6237 = vmatpush1.bf16.msra.mxu0 %v6217
        %6238 = vmatprep.subr.bf16.mxu0 0
        %6239 = vmatpush1.bf16.msra.mxu0 %v6218
        %6240 = vmatprep.subr.bf16.mxu0 0
        %6241 = vmatpush1.bf16.msra.mxu0 %v6219
        %6242 = vmatprep.subr.bf16.mxu0 0
        %6243 = vmatpush1.bf16.msra.mxu0 %v6220
        %6244 = vmatprep.subr.bf16.mxu0 0
        %6245 = vmatpush1.bf16.msra.mxu0 %v6221
        %6246 = vmatprep.subr.bf16.mxu0 0
        %6247 = vmatpush1.bf16.msra.mxu0 0
        %6248 = vmatprep.subr.bf16.mxu0 0
        %6249 = vmatpush1.bf16.msra.mxu0 0
        %6250 = vmatprep.subr.bf16.mxu0 0
        %6251 = vmatpush1.bf16.msra.mxu0 0
        %6252 = vmatprep.subr.bf16.mxu0 0
        %6253 = vmatpush1.bf16.msra.mxu0 0
        %6254 = vmatprep.subr.bf16.mxu0 0
        %6255 = vmatpush1.bf16.msra.mxu0 0
        %6256 = vmatprep.subr.bf16.mxu0 0
        %6257 = vmatpush1.bf16.msra.mxu0 0
        %6258 = vmatprep.subr.bf16.mxu0 0
        %6259 = vmatpush1.bf16.msra.mxu0 0
        %6260 = vmatprep.subr.bf16.mxu0 0
        %6261 = vmatpush1.bf16.msra.mxu0 0
        %6262 = vmatprep.mubr.bf16.mxu0 0
        %6263 = vmatmul.mubr.bf16.gmra.mrb[0].mxu0 %v6117
        %v6264 = vpop.f32.mrb[0].mxu0
        %v6265 = vadd.f32 0.0, %v6264
        %v6266 = vpop.f32.mrb[0].mxu0
        %v6267 = vpop.f32.mrb[0].mxu0
        %v6268 = vadd.f32 0.0, %v6267
        %v6269 = vpop.f32.mrb[0].mxu0
        %6270 = vmatprep.mubr.bf16.mxu0 0
        %6271 = vmatmul.mubr.bf16.gmra.mrb[0].mxu0 %v6118
        %v6272 = vpop.f32.mrb[0].mxu0
        %v6273 = vadd.f32 0.0, %v6272
        %v6274 = vpop.f32.mrb[0].mxu0
        %v6275 = vpop.f32.mrb[0].mxu0
        %v6276 = vadd.f32 0.0, %v6275
        %v6277 = vpop.f32.mrb[0].mxu0
        %6278 = vmatprep.mubr.bf16.mxu0 0
        %6279 = vmatmul.mubr.bf16.gmra.mrb[0].mxu0 %v6119
        %v6280 = vpop.f32.mrb[0].mxu0
        %v6281 = vadd.f32 0.0, %v6280
        %v6282 = vpop.f32.mrb[0].mxu0
        %v6283 = vpop.f32.mrb[0].mxu0
        %v6284 = vadd.f32 0.0, %v6283
        %v6285 = vpop.f32.mrb[0].mxu0
        %6286 = vmatprep.mubr.bf16.mxu0 0
        %6287 = vmatmul.mubr.bf16.gmra.mrb[0].mxu0 %v6120
        %v6288 = vpop.f32.mrb[0].mxu0
        %v6289 = vadd.f32 0.0, %v6288
        %v6290 = vpop.f32.mrb[0].mxu0
        %v6291 = vpop.f32.mrb[0].mxu0
        %v6292 = vadd.f32 0.0, %v6291
        %v6293 = vpop.f32.mrb[0].mxu0
        %6294 = vmatprep.mubr.bf16.mxu0 0
        %6295 = vmatmul.mubr.bf16.gmra.mrb[0].mxu0 %v6121
        %v6296 = vpop.f32.mrb[0].mxu0
        %v6297 = vadd.f32 0.0, %v6296
        %v6298 = vpop.f32.mrb[0].mxu0
        %v6299 = vpop.f32.mrb[0].mxu0
        %v6300 = vadd.f32 0.0, %v6299
        %v6301 = vpop.f32.mrb[0].mxu0
        %6302 = vmatprep.mubr.bf16.mxu0 0
        %6303 = vmatmul.mubr.bf16.gmra.mrb[0].mxu0 %v6122
        %v6304 = vpop.f32.mrb[0].mxu0
        %v6305 = vadd.f32 0.0, %v6304
        %v6306 = vpop.f32.mrb[0].mxu0
        %v6307 = vpop.f32.mrb[0].mxu0
        %v6308 = vadd.f32 0.0, %v6307
        %v6309 = vpop.f32.mrb[0].mxu0
        %6310 = vmatprep.mubr.bf16.mxu0 0
        %6311 = vmatmul.mubr.bf16.gmra.mrb[0].mxu0 %v6123
        %v6312 = vpop.f32.mrb[0].mxu0
        %v6313 = vadd.f32 0.0, %v6312
        %v6314 = vpop.f32.mrb[0].mxu0
        %v6315 = vpop.f32.mrb[0].mxu0
        %v6316 = vadd.f32 0.0, %v6315
        %v6317 = vpop.f32.mrb[0].mxu0
        %6318 = vmatprep.mubr.bf16.mxu0 0
        %6319 = vmatmul.mubr.bf16.gmra.mrb[0].mxu0 %v6124
        %v6320 = vpop.f32.mrb[0].mxu0
        %v6321 = vadd.f32 0.0, %v6320
        %v6322 = vpop.f32.mrb[0].mxu0
        %v6323 = vpop.f32.mrb[0].mxu0
        %v6324 = vadd.f32 0.0, %v6323
        %v6325 = vpop.f32.mrb[0].mxu0
        %6326 = vmatprep.mubr.bf16.mxu0 0
        %6327 = vmatmul.mubr.bf16.gmra.mrb[0].mxu0 %v6125
        %v6328 = vpop.f32.mrb[0].mxu0
        %v6329 = vadd.f32 0.0, %v6328
        %v6330 = vpop.f32.mrb[0].mxu0
        %v6331 = vpop.f32.mrb[0].mxu0
        %v6332 = vadd.f32 0.0, %v6331
        %v6333 = vpop.f32.mrb[0].mxu0
        %6334 = vmatprep.mubr.bf16.mxu0 0
        %6335 = vmatmul.mubr.bf16.gmra.mrb[0].mxu0 %v6126
        %v6336 = vpop.f32.mrb[0].mxu0
        %v6337 = vadd.f32 0.0, %v6336
        %v6338 = vpop.f32.mrb[0].mxu0
        %v6339 = vpop.f32.mrb[0].mxu0
        %v6340 = vadd.f32 0.0, %v6339
        %v6341 = vpop.f32.mrb[0].mxu0
        %6342 = vmatprep.mubr.bf16.mxu0 0
        %6343 = vmatmul.mubr.bf16.gmra.mrb[0].mxu0 %v6127
        %v6344 = vpop.f32.mrb[0].mxu0
        %v6345 = vadd.f32 0.0, %v6344
        %v6346 = vpop.f32.mrb[0].mxu0
        %v6347 = vpop.f32.mrb[0].mxu0
        %v6348 = vadd.f32 0.0, %v6347
        %v6349 = vpop.f32.mrb[0].mxu0
        %6350 = vmatprep.mubr.bf16.mxu0 0
        %6351 = vmatmul.mubr.bf16.gmra.mrb[0].mxu0 %v6128
        %v6352 = vpop.f32.mrb[0].mxu0
        %v6353 = vadd.f32 0.0, %v6352
        %v6354 = vpop.f32.mrb[0].mxu0
        %v6355 = vpop.f32.mrb[0].mxu0
        %v6356 = vadd.f32 0.0, %v6355
        %v6357 = vpop.f32.mrb[0].mxu0
        %6358 = vmatprep.mubr.bf16.mxu0 0
        %6359 = vmatmul.mubr.bf16.gmra.mrb[0].mxu0 %v6129
        %v6360 = vpop.f32.mrb[0].mxu0
        %v6361 = vadd.f32 0.0, %v6360
        %v6362 = vpop.f32.mrb[0].mxu0
        %v6363 = vpop.f32.mrb[0].mxu0
        %v6364 = vadd.f32 0.0, %v6363
        %v6365 = vpop.f32.mrb[0].mxu0
        %6366 = vmatprep.mubr.bf16.mxu0 0
        %6367 = vmatmul.mubr.bf16.gmra.mrb[0].mxu0 %v6130
        %v6368 = vpop.f32.mrb[0].mxu0
        %v6369 = vadd.f32 0.0, %v6368
        %v6370 = vpop.f32.mrb[0].mxu0
        %v6371 = vpop.f32.mrb[0].mxu0
        %v6372 = vadd.f32 0.0, %v6371
        %v6373 = vpop.f32.mrb[0].mxu0
        %6374 = vmatprep.mubr.bf16.mxu0 0
        %6375 = vmatmul.mubr.bf16.gmra.mrb[0].mxu0 %v6131
        %v6376 = vpop.f32.mrb[0].mxu0
        %v6377 = vadd.f32 0.0, %v6376
        %v6378 = vpop.f32.mrb[0].mxu0
        %v6379 = vpop.f32.mrb[0].mxu0
        %v6380 = vadd.f32 0.0, %v6379
        %v6381 = vpop.f32.mrb[0].mxu0
        %6382 = vmatprep.mubr.bf16.mxu0 0
        %6383 = vmatmul.mubr.bf16.gmra.mrb[0].mxu0 %v6132
        %v6384 = vpop.f32.mrb[0].mxu0
        %v6385 = vadd.f32 0.0, %v6384
        %v6386 = vpop.f32.mrb[0].mxu0
        %v6387 = vpop.f32.mrb[0].mxu0
        %v6388 = vadd.f32 0.0, %v6387
        %v6389 = vpop.f32.mrb[0].mxu0
        %6390 = vdwg.mxu0
        %v6392 = vshrl.u32 %v6133, 16
        %v6394 = vrot.slane %v6392, 7
        %v6396 = vshrl.u32 %v6134, 16
        %v6398 = vrot.slane %v6396, 7
        %v6399 = vshll.u32 %v6134, 16
        %v6401 = vor.u32 %v6398, %v6399
        %v6402 = vsel %vm2141, %v6394, %v6401
        %v6404 = vshrl.u32 %v6135, 16
        %v6406 = vrot.slane %v6404, 7
        %v6407 = vshll.u32 %v6135, 16
        %v6409 = vor.u32 %v6406, %v6407
        %v6410 = vsel %vm2141, %v6398, %v6409
        %v6412 = vshrl.u32 %v6136, 16
        %v6414 = vrot.slane %v6412, 7
        %v6415 = vshll.u32 %v6136, 16
        %v6417 = vor.u32 %v6414, %v6415
        %v6418 = vsel %vm2141, %v6406, %v6417
        %v6420 = vshrl.u32 %v6137, 16
        %v6422 = vrot.slane %v6420, 7
        %v6423 = vshll.u32 %v6137, 16
        %v6425 = vor.u32 %v6422, %v6423
        %v6426 = vsel %vm2141, %v6414, %v6425
        %v6428 = vshrl.u32 %v6138, 16
        %v6430 = vrot.slane %v6428, 7
        %v6431 = vshll.u32 %v6138, 16
        %v6433 = vor.u32 %v6430, %v6431
        %v6434 = vsel %vm2141, %v6422, %v6433
        %v6436 = vshrl.u32 %v6139, 16
        %v6438 = vrot.slane %v6436, 7
        %v6439 = vshll.u32 %v6139, 16
        %v6441 = vor.u32 %v6438, %v6439
        %v6442 = vsel %vm2141, %v6430, %v6441
        %v6444 = vshrl.u32 %v6140, 16
        %v6446 = vrot.slane %v6444, 7
        %v6447 = vshll.u32 %v6140, 16
        %v6449 = vor.u32 %v6446, %v6447
        %v6450 = vsel %vm2141, %v6438, %v6449
        %v6452 = vshrl.u32 %v6141, 16
        %v6454 = vrot.slane %v6452, 7
        %v6455 = vshll.u32 %v6141, 16
        %v6457 = vor.u32 %v6454, %v6455
        %v6458 = vsel %vm2141, %v6446, %v6457
        %v6460 = vshrl.u32 %v6142, 16
        %v6462 = vrot.slane %v6460, 7
        %v6463 = vshll.u32 %v6142, 16
        %v6465 = vor.u32 %v6462, %v6463
        %v6466 = vsel %vm2141, %v6454, %v6465
        %v6468 = vshrl.u32 %v6143, 16
        %v6470 = vrot.slane %v6468, 7
        %v6471 = vshll.u32 %v6143, 16
        %v6473 = vor.u32 %v6470, %v6471
        %v6474 = vsel %vm2141, %v6462, %v6473
        %v6476 = vshrl.u32 %v6144, 16
        %v6478 = vrot.slane %v6476, 7
        %v6479 = vshll.u32 %v6144, 16
        %v6481 = vor.u32 %v6478, %v6479
        %v6482 = vsel %vm2141, %v6470, %v6481
        %v6484 = vshrl.u32 %v6145, 16
        %v6486 = vrot.slane %v6484, 7
        %v6487 = vshll.u32 %v6145, 16
        %v6489 = vor.u32 %v6486, %v6487
        %v6490 = vsel %vm2141, %v6478, %v6489
        %v6492 = vshrl.u32 %v6146, 16
        %v6494 = vrot.slane %v6492, 7
        %v6495 = vshll.u32 %v6146, 16
        %v6497 = vor.u32 %v6494, %v6495
        %v6498 = vsel %vm2141, %v6486, %v6497
        %v6500 = vshrl.u32 %v6147, 16
        %v6502 = vrot.slane %v6500, 7
        %v6503 = vshll.u32 %v6147, 16
        %v6505 = vor.u32 %v6502, %v6503
        %v6506 = vsel %vm2141, %v6494, %v6505
        %v6508 = vshrl.u32 %v6148, 16
        %v6510 = vrot.slane %v6508, 7
        %v6511 = vshll.u32 %v6148, 16
        %v6513 = vor.u32 %v6510, %v6511
        %v6514 = vsel %vm2141, %v6502, %v6513
        %v6516 = vshrl.u32 %v6149, 16
        %v6518 = vrot.slane %v6516, 7
        %v6519 = vshll.u32 %v6149, 16
        %v6521 = vor.u32 %v6518, %v6519
        %v6522 = vsel %vm2141, %v6510, %v6521
        %v6555 = vunpack.c.l.b16 %v6150
        %v6556 = vunpack.c.l.b16 %v6151
        %v6557 = vunpack.c.l.b16 %v6152
        %v6558 = vunpack.c.l.b16 %v6153
        %v6559 = vunpack.c.l.b16 %v6154
        %v6560 = vunpack.c.l.b16 %v6155
        %v6561 = vunpack.c.l.b16 %v6156
        %v6562 = vunpack.c.l.b16 %v6157
        %v6563 = vunpack.c.l.b16 %v6158
        %v6564 = vunpack.c.l.b16 %v6159
        %v6565 = vunpack.c.l.b16 %v6160
        %v6566 = vunpack.c.l.b16 %v6161
        %v6567 = vunpack.c.l.b16 %v6162
        %v6568 = vunpack.c.l.b16 %v6163
        %v6569 = vunpack.c.l.b16 %v6164
        %v6570 = vunpack.c.l.b16 %v6165
        %v6571 = vpack.c.b16 %v6556, %v6555
        %v6572 = vpack.c.b16 %v6558, %v6557
        %v6573 = vpack.c.b16 %v6560, %v6559
        %v6574 = vpack.c.b16 %v6562, %v6561
        %v6575 = vpack.c.b16 %v6564, %v6563
        %v6576 = vpack.c.b16 %v6566, %v6565
        %v6577 = vpack.c.b16 %v6568, %v6567
        %v6578 = vpack.c.b16 %v6570, %v6569
        %6587 = vmatprep.subr.bf16.mxu0 0
        %6588 = vmatpush1.bf16.msra.mxu0 %v6571
        %6589 = vmatprep.subr.bf16.mxu0 0
        %6590 = vmatpush1.bf16.msra.mxu0 %v6572
        %6591 = vmatprep.subr.bf16.mxu0 0
        %6592 = vmatpush1.bf16.msra.mxu0 %v6573
        %6593 = vmatprep.subr.bf16.mxu0 0
        %6594 = vmatpush1.bf16.msra.mxu0 %v6574
        %6595 = vmatprep.subr.bf16.mxu0 0
        %6596 = vmatpush1.bf16.msra.mxu0 %v6575
        %6597 = vmatprep.subr.bf16.mxu0 0
        %6598 = vmatpush1.bf16.msra.mxu0 %v6576
        %6599 = vmatprep.subr.bf16.mxu0 0
        %6600 = vmatpush1.bf16.msra.mxu0 %v6577
        %6601 = vmatprep.subr.bf16.mxu0 0
        %6602 = vmatpush1.bf16.msra.mxu0 %v6578
        %6603 = vmatprep.subr.bf16.mxu0 0
        %6604 = vmatpush1.bf16.msra.mxu0 0
        %6605 = vmatprep.subr.bf16.mxu0 0
        %6606 = vmatpush1.bf16.msra.mxu0 0
        %6607 = vmatprep.subr.bf16.mxu0 0
        %6608 = vmatpush1.bf16.msra.mxu0 0
        %6609 = vmatprep.subr.bf16.mxu0 0
        %6610 = vmatpush1.bf16.msra.mxu0 0
        %6611 = vmatprep.subr.bf16.mxu0 0
        %6612 = vmatpush1.bf16.msra.mxu0 0
        %6613 = vmatprep.subr.bf16.mxu0 0
        %6614 = vmatpush1.bf16.msra.mxu0 0
        %6615 = vmatprep.subr.bf16.mxu0 0
        %6616 = vmatpush1.bf16.msra.mxu0 0
        %6617 = vmatprep.subr.bf16.mxu0 0
        %6618 = vmatpush1.bf16.msra.mxu0 0
        %6619 = vmatprep.mubr.bf16.mxu0 0
        %6620 = vmatmul.mubr.bf16.gmra.mrb[0].mxu0 %v6402
        %v6621 = vpop.f32.mrb[0].mxu0
        %v6622 = vadd.f32 %v6265, %v6621
        %v6623 = vpop.f32.mrb[0].mxu0
        %v6624 = vpop.f32.mrb[0].mxu0
        %v6625 = vadd.f32 %v6268, %v6624
        %v6626 = vpop.f32.mrb[0].mxu0
        %6627 = vmatprep.mubr.bf16.mxu0 0
        %6628 = vmatmul.mubr.bf16.gmra.mrb[0].mxu0 %v6410
        %v6629 = vpop.f32.mrb[0].mxu0
        %v6630 = vadd.f32 %v6273, %v6629
        %v6631 = vpop.f32.mrb[0].mxu0
        %v6632 = vpop.f32.mrb[0].mxu0
        %v6633 = vadd.f32 %v6276, %v6632
        %v6634 = vpop.f32.mrb[0].mxu0
        %6635 = vmatprep.mubr.bf16.mxu0 0
        %6636 = vmatmul.mubr.bf16.gmra.mrb[0].mxu0 %v6418
        %v6637 = vpop.f32.mrb[0].mxu0
        %v6638 = vadd.f32 %v6281, %v6637
        %v6639 = vpop.f32.mrb[0].mxu0
        %v6640 = vpop.f32.mrb[0].mxu0
        %v6641 = vadd.f32 %v6284, %v6640
        %v6642 = vpop.f32.mrb[0].mxu0
        %6643 = vmatprep.mubr.bf16.mxu0 0
        %6644 = vmatmul.mubr.bf16.gmra.mrb[0].mxu0 %v6426
        %v6645 = vpop.f32.mrb[0].mxu0
        %v6646 = vadd.f32 %v6289, %v6645
        %v6647 = vpop.f32.mrb[0].mxu0
        %v6648 = vpop.f32.mrb[0].mxu0
        %v6649 = vadd.f32 %v6292, %v6648
        %v6650 = vpop.f32.mrb[0].mxu0
        %6651 = vmatprep.mubr.bf16.mxu0 0
        %6652 = vmatmul.mubr.bf16.gmra.mrb[0].mxu0 %v6434
        %v6653 = vpop.f32.mrb[0].mxu0
        %v6654 = vadd.f32 %v6297, %v6653
        %v6655 = vpop.f32.mrb[0].mxu0
        %v6656 = vpop.f32.mrb[0].mxu0
        %v6657 = vadd.f32 %v6300, %v6656
        %v6658 = vpop.f32.mrb[0].mxu0
        %6659 = vmatprep.mubr.bf16.mxu0 0
        %6660 = vmatmul.mubr.bf16.gmra.mrb[0].mxu0 %v6442
        %v6661 = vpop.f32.mrb[0].mxu0
        %v6662 = vadd.f32 %v6305, %v6661
        %v6663 = vpop.f32.mrb[0].mxu0
        %v6664 = vpop.f32.mrb[0].mxu0
        %v6665 = vadd.f32 %v6308, %v6664
        %v6666 = vpop.f32.mrb[0].mxu0
        %6667 = vmatprep.mubr.bf16.mxu0 0
        %6668 = vmatmul.mubr.bf16.gmra.mrb[0].mxu0 %v6450
        %v6669 = vpop.f32.mrb[0].mxu0
        %v6670 = vadd.f32 %v6313, %v6669
        %v6671 = vpop.f32.mrb[0].mxu0
        %v6672 = vpop.f32.mrb[0].mxu0
        %v6673 = vadd.f32 %v6316, %v6672
        %v6674 = vpop.f32.mrb[0].mxu0
        %6675 = vmatprep.mubr.bf16.mxu0 0
        %6676 = vmatmul.mubr.bf16.gmra.mrb[0].mxu0 %v6458
        %v6677 = vpop.f32.mrb[0].mxu0
        %v6678 = vadd.f32 %v6321, %v6677
        %v6679 = vpop.f32.mrb[0].mxu0
        %v6680 = vpop.f32.mrb[0].mxu0
        %v6681 = vadd.f32 %v6324, %v6680
        %v6682 = vpop.f32.mrb[0].mxu0
        %6683 = vmatprep.mubr.bf16.mxu0 0
        %6684 = vmatmul.mubr.bf16.gmra.mrb[0].mxu0 %v6466
        %v6685 = vpop.f32.mrb[0].mxu0
        %v6686 = vadd.f32 %v6329, %v6685
        %v6687 = vpop.f32.mrb[0].mxu0
        %v6688 = vpop.f32.mrb[0].mxu0
        %v6689 = vadd.f32 %v6332, %v6688
        %v6690 = vpop.f32.mrb[0].mxu0
        %6691 = vmatprep.mubr.bf16.mxu0 0
        %6692 = vmatmul.mubr.bf16.gmra.mrb[0].mxu0 %v6474
        %v6693 = vpop.f32.mrb[0].mxu0
        %v6694 = vadd.f32 %v6337, %v6693
        %v6695 = vpop.f32.mrb[0].mxu0
        %v6696 = vpop.f32.mrb[0].mxu0
        %v6697 = vadd.f32 %v6340, %v6696
        %v6698 = vpop.f32.mrb[0].mxu0
        %6699 = vmatprep.mubr.bf16.mxu0 0
        %6700 = vmatmul.mubr.bf16.gmra.mrb[0].mxu0 %v6482
        %v6701 = vpop.f32.mrb[0].mxu0
        %v6702 = vadd.f32 %v6345, %v6701
        %v6703 = vpop.f32.mrb[0].mxu0
        %v6704 = vpop.f32.mrb[0].mxu0
        %v6705 = vadd.f32 %v6348, %v6704
        %v6706 = vpop.f32.mrb[0].mxu0
        %6707 = vmatprep.mubr.bf16.mxu0 0
        %6708 = vmatmul.mubr.bf16.gmra.mrb[0].mxu0 %v6490
        %v6709 = vpop.f32.mrb[0].mxu0
        %v6710 = vadd.f32 %v6353, %v6709
        %v6711 = vpop.f32.mrb[0].mxu0
        %v6712 = vpop.f32.mrb[0].mxu0
        %v6713 = vadd.f32 %v6356, %v6712
        %v6714 = vpop.f32.mrb[0].mxu0
        %6715 = vmatprep.mubr.bf16.mxu0 0
        %6716 = vmatmul.mubr.bf16.gmra.mrb[0].mxu0 %v6498
        %v6717 = vpop.f32.mrb[0].mxu0
        %v6718 = vadd.f32 %v6361, %v6717
        %v6719 = vpop.f32.mrb[0].mxu0
        %v6720 = vpop.f32.mrb[0].mxu0
        %v6721 = vadd.f32 %v6364, %v6720
        %v6722 = vpop.f32.mrb[0].mxu0
        %6723 = vmatprep.mubr.bf16.mxu0 0
        %6724 = vmatmul.mubr.bf16.gmra.mrb[0].mxu0 %v6506
        %v6725 = vpop.f32.mrb[0].mxu0
        %v6726 = vadd.f32 %v6369, %v6725
        %v6727 = vpop.f32.mrb[0].mxu0
        %v6728 = vpop.f32.mrb[0].mxu0
        %v6729 = vadd.f32 %v6372, %v6728
        %v6730 = vpop.f32.mrb[0].mxu0
        %6731 = vmatprep.mubr.bf16.mxu0 0
        %6732 = vmatmul.mubr.bf16.gmra.mrb[0].mxu0 %v6514
        %v6733 = vpop.f32.mrb[0].mxu0
        %v6734 = vadd.f32 %v6377, %v6733
        %v6735 = vpop.f32.mrb[0].mxu0
        %v6736 = vpop.f32.mrb[0].mxu0
        %v6737 = vadd.f32 %v6380, %v6736
        %v6738 = vpop.f32.mrb[0].mxu0
        %6739 = vmatprep.mubr.bf16.mxu0 0
        %6740 = vmatmul.mubr.bf16.gmra.mrb[0].mxu0 %v6522
        %v6741 = vpop.f32.mrb[0].mxu0
        %v6742 = vadd.f32 %v6385, %v6741
        %v6743 = vpop.f32.mrb[0].mxu0
        %v6744 = vpop.f32.mrb[0].mxu0
        %v6745 = vadd.f32 %v6388, %v6744
        %v6746 = vpop.f32.mrb[0].mxu0
        %6747 = vdwg.mxu0
        %v6748 = vld [vmem:[#allocation2 + $0xa8] sm:$0xff]
        %v6749 = vld [vmem:[#allocation2 + $0xb0] sm:$0xff]
        %v6750 = vld [vmem:[#allocation2 + $0xb8] sm:$0xff]
        %v6751 = vld [vmem:[#allocation2 + $0xc0] sm:$0xff]
        %v6752 = vld [vmem:[#allocation2 + $0xc8] sm:$0xff]
        %v6753 = vld [vmem:[#allocation2 + $0xd0] sm:$0xff]
        %v6754 = vld [vmem:[#allocation2 + $0xd8] sm:$0xff]
        %v6755 = vld [vmem:[#allocation2 + $0xe0] sm:$0xff]
        %v6756 = vld [vmem:[#allocation2 + $0xe8] sm:$0xff]
        %v6757 = vld [vmem:[#allocation2 + $0xf0] sm:$0xff]
        %v6758 = vld [vmem:[#allocation2 + $0xf8] sm:$0xff]
        %v6759 = vld [vmem:[#allocation2 + $0x100] sm:$0xff]
        %v6760 = vld [vmem:[#allocation2 + $0x108] sm:$0xff]
        %v6761 = vld [vmem:[#allocation2 + $0x110] sm:$0xff]
        %v6762 = vld [vmem:[#allocation2 + $0x118] sm:$0xff]
        %v6763 = vld [vmem:[#allocation2 + $0x120] sm:$0xff]
        %v6764 = vld [vmem:[#allocation2 + $0x128] sm:$0x1]
        %v6765 = vsel %vm2819, %v6748, 0
        %v6766 = vsel %vm2820, %v6749, 0
        %v6767 = vsel %vm2821, %v6750, 0
        %v6768 = vsel %vm2822, %v6751, 0
        %v6769 = vsel %vm2823, %v6752, 0
        %v6770 = vsel %vm2824, %v6753, 0
        %v6771 = vsel %vm2825, %v6754, 0
        %v6772 = vsel %vm2826, %v6755, 0
        %v6773 = vsel %vm2827, %v6756, 0
        %v6774 = vsel %vm2828, %v6757, 0
        %v6775 = vsel %vm2829, %v6758, 0
        %v6776 = vsel %vm2830, %v6759, 0
        %v6777 = vsel %vm2831, %v6760, 0
        %v6778 = vsel %vm2832, %v6761, 0
        %v6779 = vsel %vm2833, %v6762, 0
        %v6780 = vsel %vm2834, %v6763, 0
        %v6781 = vsel %vm2835, %v6764, 0
        %v6782 = vld [vmem:[%s2853] sm:$0xf]
        %v6783 = vld [vmem:[%s2853 + $0x4] sm:$0xf]
        %v6784 = vld [vmem:[%s2853 + $0x8] sm:$0xf]
        %v6785 = vld [vmem:[%s2853 + $0xc] sm:$0xf]
        %v6786 = vld [vmem:[%s2853 + $0x10] sm:$0xf]
        %v6787 = vld [vmem:[%s2853 + $0x14] sm:$0xf]
        %v6788 = vld [vmem:[%s2853 + $0x18] sm:$0xf]
        %v6789 = vld [vmem:[%s2853 + $0x1c] sm:$0xf]
        %v6790 = vld [vmem:[%s2853 + $0x20] sm:$0xf]
        %v6791 = vld [vmem:[%s2853 + $0x24] sm:$0xf]
        %v6792 = vld [vmem:[%s2853 + $0x28] sm:$0xf]
        %v6793 = vld [vmem:[%s2853 + $0x2c] sm:$0xf]
        %v6794 = vld [vmem:[%s2853 + $0x30] sm:$0xf]
        %v6795 = vld [vmem:[%s2853 + $0x34] sm:$0xf]
        %v6796 = vld [vmem:[%s2853 + $0x38] sm:$0xf]
        %v6797 = vld [vmem:[%s2853 + $0x3c] sm:$0xf]
        %v6799 = vshrl.u32 %v6765, 16
        %v6801 = vshll.u32 %v6765, 16
        %v6803 = vrot.slane %v6801, 1
        %v6804 = vor.u32 %v6799, %v6803
        %v6806 = vshll.u32 %v6766, 16
        %v6808 = vrot.slane %v6806, 1
        %v6809 = vsel %vm1737, %v6804, %v6808
        %v6810 = vshrl.u32 %v6766, 16
        %v6812 = vor.u32 %v6810, %v6808
        %v6814 = vshll.u32 %v6767, 16
        %v6816 = vrot.slane %v6814, 1
        %v6817 = vsel %vm1737, %v6812, %v6816
        %v6818 = vshrl.u32 %v6767, 16
        %v6820 = vor.u32 %v6818, %v6816
        %v6822 = vshll.u32 %v6768, 16
        %v6824 = vrot.slane %v6822, 1
        %v6825 = vsel %vm1737, %v6820, %v6824
        %v6826 = vshrl.u32 %v6768, 16
        %v6828 = vor.u32 %v6826, %v6824
        %v6830 = vshll.u32 %v6769, 16
        %v6832 = vrot.slane %v6830, 1
        %v6833 = vsel %vm1737, %v6828, %v6832
        %v6834 = vshrl.u32 %v6769, 16
        %v6836 = vor.u32 %v6834, %v6832
        %v6838 = vshll.u32 %v6770, 16
        %v6840 = vrot.slane %v6838, 1
        %v6841 = vsel %vm1737, %v6836, %v6840
        %v6842 = vshrl.u32 %v6770, 16
        %v6844 = vor.u32 %v6842, %v6840
        %v6846 = vshll.u32 %v6771, 16
        %v6848 = vrot.slane %v6846, 1
        %v6849 = vsel %vm1737, %v6844, %v6848
        %v6850 = vshrl.u32 %v6771, 16
        %v6852 = vor.u32 %v6850, %v6848
        %v6854 = vshll.u32 %v6772, 16
        %v6856 = vrot.slane %v6854, 1
        %v6857 = vsel %vm1737, %v6852, %v6856
        %v6858 = vshrl.u32 %v6772, 16
        %v6860 = vor.u32 %v6858, %v6856
        %v6862 = vshll.u32 %v6773, 16
        %v6864 = vrot.slane %v6862, 1
        %v6865 = vsel %vm1737, %v6860, %v6864
        %v6866 = vshrl.u32 %v6773, 16
        %v6868 = vor.u32 %v6866, %v6864
        %v6870 = vshll.u32 %v6774, 16
        %v6872 = vrot.slane %v6870, 1
        %v6873 = vsel %vm1737, %v6868, %v6872
        %v6874 = vshrl.u32 %v6774, 16
        %v6876 = vor.u32 %v6874, %v6872
        %v6878 = vshll.u32 %v6775, 16
        %v6880 = vrot.slane %v6878, 1
        %v6881 = vsel %vm1737, %v6876, %v6880
        %v6882 = vshrl.u32 %v6775, 16
        %v6884 = vor.u32 %v6882, %v6880
        %v6886 = vshll.u32 %v6776, 16
        %v6888 = vrot.slane %v6886, 1
        %v6889 = vsel %vm1737, %v6884, %v6888
        %v6890 = vshrl.u32 %v6776, 16
        %v6892 = vor.u32 %v6890, %v6888
        %v6894 = vshll.u32 %v6777, 16
        %v6896 = vrot.slane %v6894, 1
        %v6897 = vsel %vm1737, %v6892, %v6896
        %v6898 = vshrl.u32 %v6777, 16
        %v6900 = vor.u32 %v6898, %v6896
        %v6902 = vshll.u32 %v6778, 16
        %v6904 = vrot.slane %v6902, 1
        %v6905 = vsel %vm1737, %v6900, %v6904
        %v6906 = vshrl.u32 %v6778, 16
        %v6908 = vor.u32 %v6906, %v6904
        %v6910 = vshll.u32 %v6779, 16
        %v6912 = vrot.slane %v6910, 1
        %v6913 = vsel %vm1737, %v6908, %v6912
        %v6914 = vshrl.u32 %v6779, 16
        %v6916 = vor.u32 %v6914, %v6912
        %v6918 = vshll.u32 %v6780, 16
        %v6920 = vrot.slane %v6918, 1
        %v6921 = vsel %vm1737, %v6916, %v6920
        %v6922 = vshrl.u32 %v6780, 16
        %v6924 = vor.u32 %v6922, %v6920
        %v6926 = vshll.u32 %v6781, 16
        %v6928 = vrot.slane %v6926, 1
        %v6929 = vsel %vm1737, %v6924, %v6928
        %v6962 = vunpack.c.l.b16 %v6782
        %v6963 = vunpack.c.l.b16 %v6783
        %v6964 = vunpack.c.l.b16 %v6784
        %v6965 = vunpack.c.l.b16 %v6785
        %v6966 = vunpack.c.l.b16 %v6786
        %v6967 = vunpack.c.l.b16 %v6787
        %v6968 = vunpack.c.l.b16 %v6788
        %v6969 = vunpack.c.l.b16 %v6789
        %v6970 = vunpack.c.l.b16 %v6790
        %v6971 = vunpack.c.l.b16 %v6791
        %v6972 = vunpack.c.l.b16 %v6792
        %v6973 = vunpack.c.l.b16 %v6793
        %v6974 = vunpack.c.l.b16 %v6794
        %v6975 = vunpack.c.l.b16 %v6795
        %v6976 = vunpack.c.l.b16 %v6796
        %v6977 = vunpack.c.l.b16 %v6797
        %v6978 = vpack.c.b16 %v6963, %v6962
        %v6979 = vpack.c.b16 %v6965, %v6964
        %v6980 = vpack.c.b16 %v6967, %v6966
        %v6981 = vpack.c.b16 %v6969, %v6968
        %v6982 = vpack.c.b16 %v6971, %v6970
        %v6983 = vpack.c.b16 %v6973, %v6972
        %v6984 = vpack.c.b16 %v6975, %v6974
        %v6985 = vpack.c.b16 %v6977, %v6976
        %6994 = vmatprep.subr.bf16.mxu0 0
        %6995 = vmatpush1.bf16.msra.mxu0 %v6978
        %6996 = vmatprep.subr.bf16.mxu0 0
        %6997 = vmatpush1.bf16.msra.mxu0 %v6979
        %6998 = vmatprep.subr.bf16.mxu0 0
        %6999 = vmatpush1.bf16.msra.mxu0 %v6980
        %7000 = vmatprep.subr.bf16.mxu0 0
        %7001 = vmatpush1.bf16.msra.mxu0 %v6981
        %7002 = vmatprep.subr.bf16.mxu0 0
        %7003 = vmatpush1.bf16.msra.mxu0 %v6982
        %7004 = vmatprep.subr.bf16.mxu0 0
        %7005 = vmatpush1.bf16.msra.mxu0 %v6983
        %7006 = vmatprep.subr.bf16.mxu0 0
        %7007 = vmatpush1.bf16.msra.mxu0 %v6984
        %7008 = vmatprep.subr.bf16.mxu0 0
        %7009 = vmatpush1.bf16.msra.mxu0 %v6985
        %7010 = vmatprep.subr.bf16.mxu0 0
        %7011 = vmatpush1.bf16.msra.mxu0 0
        %7012 = vmatprep.subr.bf16.mxu0 0
        %7013 = vmatpush1.bf16.msra.mxu0 0
        %7014 = vmatprep.subr.bf16.mxu0 0
        %7015 = vmatpush1.bf16.msra.mxu0 0
        %7016 = vmatprep.subr.bf16.mxu0 0
        %7017 = vmatpush1.bf16.msra.mxu0 0
        %7018 = vmatprep.subr.bf16.mxu0 0
        %7019 = vmatpush1.bf16.msra.mxu0 0
        %7020 = vmatprep.subr.bf16.mxu0 0
        %7021 = vmatpush1.bf16.msra.mxu0 0
        %7022 = vmatprep.subr.bf16.mxu0 0
        %7023 = vmatpush1.bf16.msra.mxu0 0
        %7024 = vmatprep.subr.bf16.mxu0 0
        %7025 = vmatpush1.bf16.msra.mxu0 0
        %7026 = vmatprep.mubr.bf16.mxu0 0
        %7027 = vmatmul.mubr.bf16.gmra.mrb[0].mxu0 %v6809
        %v7028 = vpop.f32.mrb[0].mxu0
        %v7029 = vadd.f32 0.0, %v7028
        %v7030 = vpop.f32.mrb[0].mxu0
        %v7031 = vpop.f32.mrb[0].mxu0
        %v7032 = vadd.f32 0.0, %v7031
        %v7033 = vpop.f32.mrb[0].mxu0
        %7034 = vmatprep.mubr.bf16.mxu0 0
        %7035 = vmatmul.mubr.bf16.gmra.mrb[0].mxu0 %v6817
        %v7036 = vpop.f32.mrb[0].mxu0
        %v7037 = vadd.f32 0.0, %v7036
        %v7038 = vpop.f32.mrb[0].mxu0
        %v7039 = vpop.f32.mrb[0].mxu0
        %v7040 = vadd.f32 0.0, %v7039
        %v7041 = vpop.f32.mrb[0].mxu0
        %7042 = vmatprep.mubr.bf16.mxu0 0
        %7043 = vmatmul.mubr.bf16.gmra.mrb[0].mxu0 %v6825
        %v7044 = vpop.f32.mrb[0].mxu0
        %v7045 = vadd.f32 0.0, %v7044
        %v7046 = vpop.f32.mrb[0].mxu0
        %v7047 = vpop.f32.mrb[0].mxu0
        %v7048 = vadd.f32 0.0, %v7047
        %v7049 = vpop.f32.mrb[0].mxu0
        %7050 = vmatprep.mubr.bf16.mxu0 0
        %7051 = vmatmul.mubr.bf16.gmra.mrb[0].mxu0 %v6833
        %v7052 = vpop.f32.mrb[0].mxu0
        %v7053 = vadd.f32 0.0, %v7052
        %v7054 = vpop.f32.mrb[0].mxu0
        %v7055 = vpop.f32.mrb[0].mxu0
        %v7056 = vadd.f32 0.0, %v7055
        %v7057 = vpop.f32.mrb[0].mxu0
        %7058 = vmatprep.mubr.bf16.mxu0 0
        %7059 = vmatmul.mubr.bf16.gmra.mrb[0].mxu0 %v6841
        %v7060 = vpop.f32.mrb[0].mxu0
        %v7061 = vadd.f32 0.0, %v7060
        %v7062 = vpop.f32.mrb[0].mxu0
        %v7063 = vpop.f32.mrb[0].mxu0
        %v7064 = vadd.f32 0.0, %v7063
        %v7065 = vpop.f32.mrb[0].mxu0
        %7066 = vmatprep.mubr.bf16.mxu0 0
        %7067 = vmatmul.mubr.bf16.gmra.mrb[0].mxu0 %v6849
        %v7068 = vpop.f32.mrb[0].mxu0
        %v7069 = vadd.f32 0.0, %v7068
        %v7070 = vpop.f32.mrb[0].mxu0
        %v7071 = vpop.f32.mrb[0].mxu0
        %v7072 = vadd.f32 0.0, %v7071
        %v7073 = vpop.f32.mrb[0].mxu0
        %7074 = vmatprep.mubr.bf16.mxu0 0
        %7075 = vmatmul.mubr.bf16.gmra.mrb[0].mxu0 %v6857
        %v7076 = vpop.f32.mrb[0].mxu0
        %v7077 = vadd.f32 0.0, %v7076
        %v7078 = vpop.f32.mrb[0].mxu0
        %v7079 = vpop.f32.mrb[0].mxu0
        %v7080 = vadd.f32 0.0, %v7079
        %v7081 = vpop.f32.mrb[0].mxu0
        %7082 = vmatprep.mubr.bf16.mxu0 0
        %7083 = vmatmul.mubr.bf16.gmra.mrb[0].mxu0 %v6865
        %v7084 = vpop.f32.mrb[0].mxu0
        %v7085 = vadd.f32 0.0, %v7084
        %v7086 = vpop.f32.mrb[0].mxu0
        %v7087 = vpop.f32.mrb[0].mxu0
        %v7088 = vadd.f32 0.0, %v7087
        %v7089 = vpop.f32.mrb[0].mxu0
        %7090 = vmatprep.mubr.bf16.mxu0 0
        %7091 = vmatmul.mubr.bf16.gmra.mrb[0].mxu0 %v6873
        %v7092 = vpop.f32.mrb[0].mxu0
        %v7093 = vadd.f32 0.0, %v7092
        %v7094 = vpop.f32.mrb[0].mxu0
        %v7095 = vpop.f32.mrb[0].mxu0
        %v7096 = vadd.f32 0.0, %v7095
        %v7097 = vpop.f32.mrb[0].mxu0
        %7098 = vmatprep.mubr.bf16.mxu0 0
        %7099 = vmatmul.mubr.bf16.gmra.mrb[0].mxu0 %v6881
        %v7100 = vpop.f32.mrb[0].mxu0
        %v7101 = vadd.f32 0.0, %v7100
        %v7102 = vpop.f32.mrb[0].mxu0
        %v7103 = vpop.f32.mrb[0].mxu0
        %v7104 = vadd.f32 0.0, %v7103
        %v7105 = vpop.f32.mrb[0].mxu0
        %7106 = vmatprep.mubr.bf16.mxu0 0
        %7107 = vmatmul.mubr.bf16.gmra.mrb[0].mxu0 %v6889
        %v7108 = vpop.f32.mrb[0].mxu0
        %v7109 = vadd.f32 0.0, %v7108
        %v7110 = vpop.f32.mrb[0].mxu0
        %v7111 = vpop.f32.mrb[0].mxu0
        %v7112 = vadd.f32 0.0, %v7111
        %v7113 = vpop.f32.mrb[0].mxu0
        %7114 = vmatprep.mubr.bf16.mxu0 0
        %7115 = vmatmul.mubr.bf16.gmra.mrb[0].mxu0 %v6897
        %v7116 = vpop.f32.mrb[0].mxu0
        %v7117 = vadd.f32 0.0, %v7116
        %v7118 = vpop.f32.mrb[0].mxu0
        %v7119 = vpop.f32.mrb[0].mxu0
        %v7120 = vadd.f32 0.0, %v7119
        %v7121 = vpop.f32.mrb[0].mxu0
        %7122 = vmatprep.mubr.bf16.mxu0 0
        %7123 = vmatmul.mubr.bf16.gmra.mrb[0].mxu0 %v6905
        %v7124 = vpop.f32.mrb[0].mxu0
        %v7125 = vadd.f32 0.0, %v7124
        %v7126 = vpop.f32.mrb[0].mxu0
        %v7127 = vpop.f32.mrb[0].mxu0
        %v7128 = vadd.f32 0.0, %v7127
        %v7129 = vpop.f32.mrb[0].mxu0
        %7130 = vmatprep.mubr.bf16.mxu0 0
        %7131 = vmatmul.mubr.bf16.gmra.mrb[0].mxu0 %v6913
        %v7132 = vpop.f32.mrb[0].mxu0
        %v7133 = vadd.f32 0.0, %v7132
        %v7134 = vpop.f32.mrb[0].mxu0
        %v7135 = vpop.f32.mrb[0].mxu0
        %v7136 = vadd.f32 0.0, %v7135
        %v7137 = vpop.f32.mrb[0].mxu0
        %7138 = vmatprep.mubr.bf16.mxu0 0
        %7139 = vmatmul.mubr.bf16.gmra.mrb[0].mxu0 %v6921
        %v7140 = vpop.f32.mrb[0].mxu0
        %v7141 = vadd.f32 0.0, %v7140
        %v7142 = vpop.f32.mrb[0].mxu0
        %v7143 = vpop.f32.mrb[0].mxu0
        %v7144 = vadd.f32 0.0, %v7143
        %v7145 = vpop.f32.mrb[0].mxu0
        %7146 = vmatprep.mubr.bf16.mxu0 0
        %7147 = vmatmul.mubr.bf16.gmra.mrb[0].mxu0 %v6929
        %v7148 = vpop.f32.mrb[0].mxu0
        %v7149 = vadd.f32 0.0, %v7148
        %v7150 = vpop.f32.mrb[0].mxu0
        %v7151 = vpop.f32.mrb[0].mxu0
        %v7152 = vadd.f32 0.0, %v7151
        %v7153 = vpop.f32.mrb[0].mxu0
        %7154 = vdwg.mxu0
        %v7155 = vadd.f32 %v6622, %v7029
        %v7156 = vadd.f32 %v6625, %v7032
        %v7157 = vadd.f32 %v6630, %v7037
        %v7158 = vadd.f32 %v6633, %v7040
        %v7159 = vadd.f32 %v6638, %v7045
        %v7160 = vadd.f32 %v6641, %v7048
        %v7161 = vadd.f32 %v6646, %v7053
        %v7162 = vadd.f32 %v6649, %v7056
        %v7163 = vadd.f32 %v6654, %v7061
        %v7164 = vadd.f32 %v6657, %v7064
        %v7165 = vadd.f32 %v6662, %v7069
        %v7166 = vadd.f32 %v6665, %v7072
        %v7167 = vadd.f32 %v6670, %v7077
        %v7168 = vadd.f32 %v6673, %v7080
        %v7169 = vadd.f32 %v6678, %v7085
        %v7170 = vadd.f32 %v6681, %v7088
        %v7171 = vadd.f32 %v6686, %v7093
        %v7172 = vadd.f32 %v6689, %v7096
        %v7173 = vadd.f32 %v6694, %v7101
        %v7174 = vadd.f32 %v6697, %v7104
        %v7175 = vadd.f32 %v6702, %v7109
        %v7176 = vadd.f32 %v6705, %v7112
        %v7177 = vadd.f32 %v6710, %v7117
        %v7178 = vadd.f32 %v6713, %v7120
        %v7179 = vadd.f32 %v6718, %v7125
        %v7180 = vadd.f32 %v6721, %v7128
        %v7181 = vadd.f32 %v6726, %v7133
        %v7182 = vadd.f32 %v6729, %v7136
        %v7183 = vadd.f32 %v6734, %v7141
        %v7184 = vadd.f32 %v6737, %v7144
        %v7185 = vadd.f32 %v6742, %v7149
        %v7186 = vadd.f32 %v6745, %v7152
        %v7187 = vld [vmem:[#allocation2 + $0xa8] sm:$0x80]
        %v7188 = vld [vmem:[#allocation2 + $0x128] sm:$0xff]
        %v7189 = vsel %vm1865, %v7187, 0
        %v7190 = vsel %vm1866, %v6749, 0
        %v7191 = vsel %vm1867, %v6750, 0
        %v7192 = vsel %vm1868, %v6751, 0
        %v7193 = vsel %vm1869, %v6752, 0
        %v7194 = vsel %vm1870, %v6753, 0
        %v7195 = vsel %vm1871, %v6754, 0
        %v7196 = vsel %vm1872, %v6755, 0
        %v7197 = vsel %vm1873, %v6756, 0
        %v7198 = vsel %vm1874, %v6757, 0
        %v7199 = vsel %vm1875, %v6758, 0
        %v7200 = vsel %vm1876, %v6759, 0
        %v7201 = vsel %vm1877, %v6760, 0
        %v7202 = vsel %vm1878, %v6761, 0
        %v7203 = vsel %vm1879, %v6762, 0
        %v7204 = vsel %vm1880, %v6763, 0
        %v7205 = vsel %vm1881, %v7188, 0
        %v7206 = vld [vmem:[%s3278] sm:$0xf]
        %v7207 = vld [vmem:[%s3278 + $0x4] sm:$0xf]
        %v7208 = vld [vmem:[%s3278 + $0x8] sm:$0xf]
        %v7209 = vld [vmem:[%s3278 + $0xc] sm:$0xf]
        %v7210 = vld [vmem:[%s3278 + $0x10] sm:$0xf]
        %v7211 = vld [vmem:[%s3278 + $0x14] sm:$0xf]
        %v7212 = vld [vmem:[%s3278 + $0x18] sm:$0xf]
        %v7213 = vld [vmem:[%s3278 + $0x1c] sm:$0xf]
        %v7214 = vld [vmem:[%s3278 + $0x20] sm:$0xf]
        %v7215 = vld [vmem:[%s3278 + $0x24] sm:$0xf]
        %v7216 = vld [vmem:[%s3278 + $0x28] sm:$0xf]
        %v7217 = vld [vmem:[%s3278 + $0x2c] sm:$0xf]
        %v7218 = vld [vmem:[%s3278 + $0x30] sm:$0xf]
        %v7219 = vld [vmem:[%s3278 + $0x34] sm:$0xf]
        %v7220 = vld [vmem:[%s3278 + $0x38] sm:$0xf]
        %v7221 = vld [vmem:[%s3278 + $0x3c] sm:$0xf]
        %v7223 = vshrl.u32 %v7189, 16
        %v7225 = vrot.slane %v7223, 7
        %v7227 = vshrl.u32 %v7190, 16
        %v7229 = vrot.slane %v7227, 7
        %v7230 = vshll.u32 %v7190, 16
        %v7232 = vor.u32 %v7229, %v7230
        %v7233 = vsel %vm2141, %v7225, %v7232
        %v7235 = vshrl.u32 %v7191, 16
        %v7237 = vrot.slane %v7235, 7
        %v7238 = vshll.u32 %v7191, 16
        %v7240 = vor.u32 %v7237, %v7238
        %v7241 = vsel %vm2141, %v7229, %v7240
        %v7243 = vshrl.u32 %v7192, 16
        %v7245 = vrot.slane %v7243, 7
        %v7246 = vshll.u32 %v7192, 16
        %v7248 = vor.u32 %v7245, %v7246
        %v7249 = vsel %vm2141, %v7237, %v7248
        %v7251 = vshrl.u32 %v7193, 16
        %v7253 = vrot.slane %v7251, 7
        %v7254 = vshll.u32 %v7193, 16
        %v7256 = vor.u32 %v7253, %v7254
        %v7257 = vsel %vm2141, %v7245, %v7256
        %v7259 = vshrl.u32 %v7194, 16
        %v7261 = vrot.slane %v7259, 7
        %v7262 = vshll.u32 %v7194, 16
        %v7264 = vor.u32 %v7261, %v7262
        %v7265 = vsel %vm2141, %v7253, %v7264
        %v7267 = vshrl.u32 %v7195, 16
        %v7269 = vrot.slane %v7267, 7
        %v7270 = vshll.u32 %v7195, 16
        %v7272 = vor.u32 %v7269, %v7270
        %v7273 = vsel %vm2141, %v7261, %v7272
        %v7275 = vshrl.u32 %v7196, 16
        %v7277 = vrot.slane %v7275, 7
        %v7278 = vshll.u32 %v7196, 16
        %v7280 = vor.u32 %v7277, %v7278
        %v7281 = vsel %vm2141, %v7269, %v7280
        %v7283 = vshrl.u32 %v7197, 16
        %v7285 = vrot.slane %v7283, 7
        %v7286 = vshll.u32 %v7197, 16
        %v7288 = vor.u32 %v7285, %v7286
        %v7289 = vsel %vm2141, %v7277, %v7288
        %v7291 = vshrl.u32 %v7198, 16
        %v7293 = vrot.slane %v7291, 7
        %v7294 = vshll.u32 %v7198, 16
        %v7296 = vor.u32 %v7293, %v7294
        %v7297 = vsel %vm2141, %v7285, %v7296
        %v7299 = vshrl.u32 %v7199, 16
        %v7301 = vrot.slane %v7299, 7
        %v7302 = vshll.u32 %v7199, 16
        %v7304 = vor.u32 %v7301, %v7302
        %v7305 = vsel %vm2141, %v7293, %v7304
        %v7307 = vshrl.u32 %v7200, 16
        %v7309 = vrot.slane %v7307, 7
        %v7310 = vshll.u32 %v7200, 16
        %v7312 = vor.u32 %v7309, %v7310
        %v7313 = vsel %vm2141, %v7301, %v7312
        %v7315 = vshrl.u32 %v7201, 16
        %v7317 = vrot.slane %v7315, 7
        %v7318 = vshll.u32 %v7201, 16
        %v7320 = vor.u32 %v7317, %v7318
        %v7321 = vsel %vm2141, %v7309, %v7320
        %v7323 = vshrl.u32 %v7202, 16
        %v7325 = vrot.slane %v7323, 7
        %v7326 = vshll.u32 %v7202, 16
        %v7328 = vor.u32 %v7325, %v7326
        %v7329 = vsel %vm2141, %v7317, %v7328
        %v7331 = vshrl.u32 %v7203, 16
        %v7333 = vrot.slane %v7331, 7
        %v7334 = vshll.u32 %v7203, 16
        %v7336 = vor.u32 %v7333, %v7334
        %v7337 = vsel %vm2141, %v7325, %v7336
        %v7339 = vshrl.u32 %v7204, 16
        %v7341 = vrot.slane %v7339, 7
        %v7342 = vshll.u32 %v7204, 16
        %v7344 = vor.u32 %v7341, %v7342
        %v7345 = vsel %vm2141, %v7333, %v7344
        %v7347 = vshrl.u32 %v7205, 16
        %v7349 = vrot.slane %v7347, 7
        %v7350 = vshll.u32 %v7205, 16
        %v7352 = vor.u32 %v7349, %v7350
        %v7353 = vsel %vm2141, %v7341, %v7352
        %v7386 = vunpack.c.l.b16 %v7206
        %v7387 = vunpack.c.l.b16 %v7207
        %v7388 = vunpack.c.l.b16 %v7208
        %v7389 = vunpack.c.l.b16 %v7209
        %v7390 = vunpack.c.l.b16 %v7210
        %v7391 = vunpack.c.l.b16 %v7211
        %v7392 = vunpack.c.l.b16 %v7212
        %v7393 = vunpack.c.l.b16 %v7213
        %v7394 = vunpack.c.l.b16 %v7214
        %v7395 = vunpack.c.l.b16 %v7215
        %v7396 = vunpack.c.l.b16 %v7216
        %v7397 = vunpack.c.l.b16 %v7217
        %v7398 = vunpack.c.l.b16 %v7218
        %v7399 = vunpack.c.l.b16 %v7219
        %v7400 = vunpack.c.l.b16 %v7220
        %v7401 = vunpack.c.l.b16 %v7221
        %v7402 = vpack.c.b16 %v7387, %v7386
        %v7403 = vpack.c.b16 %v7389, %v7388
        %v7404 = vpack.c.b16 %v7391, %v7390
        %v7405 = vpack.c.b16 %v7393, %v7392
        %v7406 = vpack.c.b16 %v7395, %v7394
        %v7407 = vpack.c.b16 %v7397, %v7396
        %v7408 = vpack.c.b16 %v7399, %v7398
        %v7409 = vpack.c.b16 %v7401, %v7400
        %7418 = vmatprep.subr.bf16.mxu0 0
        %7419 = vmatpush1.bf16.msra.mxu0 %v7402
        %7420 = vmatprep.subr.bf16.mxu0 0
        %7421 = vmatpush1.bf16.msra.mxu0 %v7403
        %7422 = vmatprep.subr.bf16.mxu0 0
        %7423 = vmatpush1.bf16.msra.mxu0 %v7404
        %7424 = vmatprep.subr.bf16.mxu0 0
        %7425 = vmatpush1.bf16.msra.mxu0 %v7405
        %7426 = vmatprep.subr.bf16.mxu0 0
        %7427 = vmatpush1.bf16.msra.mxu0 %v7406
        %7428 = vmatprep.subr.bf16.mxu0 0
        %7429 = vmatpush1.bf16.msra.mxu0 %v7407
        %7430 = vmatprep.subr.bf16.mxu0 0
        %7431 = vmatpush1.bf16.msra.mxu0 %v7408
        %7432 = vmatprep.subr.bf16.mxu0 0
        %7433 = vmatpush1.bf16.msra.mxu0 %v7409
        %7434 = vmatprep.subr.bf16.mxu0 0
        %7435 = vmatpush1.bf16.msra.mxu0 0
        %7436 = vmatprep.subr.bf16.mxu0 0
        %7437 = vmatpush1.bf16.msra.mxu0 0
        %7438 = vmatprep.subr.bf16.mxu0 0
        %7439 = vmatpush1.bf16.msra.mxu0 0
        %7440 = vmatprep.subr.bf16.mxu0 0
        %7441 = vmatpush1.bf16.msra.mxu0 0
        %7442 = vmatprep.subr.bf16.mxu0 0
        %7443 = vmatpush1.bf16.msra.mxu0 0
        %7444 = vmatprep.subr.bf16.mxu0 0
        %7445 = vmatpush1.bf16.msra.mxu0 0
        %7446 = vmatprep.subr.bf16.mxu0 0
        %7447 = vmatpush1.bf16.msra.mxu0 0
        %7448 = vmatprep.subr.bf16.mxu0 0
        %7449 = vmatpush1.bf16.msra.mxu0 0
        %7450 = vmatprep.mubr.bf16.mxu0 0
        %7451 = vmatmul.mubr.bf16.gmra.mrb[0].mxu0 %v7233
        %v7452 = vpop.f32.mrb[0].mxu0
        %v7453 = vadd.f32 0.0, %v7452
        %v7454 = vpop.f32.mrb[0].mxu0
        %v7455 = vpop.f32.mrb[0].mxu0
        %v7456 = vadd.f32 0.0, %v7455
        %v7457 = vpop.f32.mrb[0].mxu0
        %7458 = vmatprep.mubr.bf16.mxu0 0
        %7459 = vmatmul.mubr.bf16.gmra.mrb[0].mxu0 %v7241
        %v7460 = vpop.f32.mrb[0].mxu0
        %v7461 = vadd.f32 0.0, %v7460
        %v7462 = vpop.f32.mrb[0].mxu0
        %v7463 = vpop.f32.mrb[0].mxu0
        %v7464 = vadd.f32 0.0, %v7463
        %v7465 = vpop.f32.mrb[0].mxu0
        %7466 = vmatprep.mubr.bf16.mxu0 0
        %7467 = vmatmul.mubr.bf16.gmra.mrb[0].mxu0 %v7249
        %v7468 = vpop.f32.mrb[0].mxu0
        %v7469 = vadd.f32 0.0, %v7468
        %v7470 = vpop.f32.mrb[0].mxu0
        %v7471 = vpop.f32.mrb[0].mxu0
        %v7472 = vadd.f32 0.0, %v7471
        %v7473 = vpop.f32.mrb[0].mxu0
        %7474 = vmatprep.mubr.bf16.mxu0 0
        %7475 = vmatmul.mubr.bf16.gmra.mrb[0].mxu0 %v7257
        %v7476 = vpop.f32.mrb[0].mxu0
        %v7477 = vadd.f32 0.0, %v7476
        %v7478 = vpop.f32.mrb[0].mxu0
        %v7479 = vpop.f32.mrb[0].mxu0
        %v7480 = vadd.f32 0.0, %v7479
        %v7481 = vpop.f32.mrb[0].mxu0
        %7482 = vmatprep.mubr.bf16.mxu0 0
        %7483 = vmatmul.mubr.bf16.gmra.mrb[0].mxu0 %v7265
        %v7484 = vpop.f32.mrb[0].mxu0
        %v7485 = vadd.f32 0.0, %v7484
        %v7486 = vpop.f32.mrb[0].mxu0
        %v7487 = vpop.f32.mrb[0].mxu0
        %v7488 = vadd.f32 0.0, %v7487
        %v7489 = vpop.f32.mrb[0].mxu0
        %7490 = vmatprep.mubr.bf16.mxu0 0
        %7491 = vmatmul.mubr.bf16.gmra.mrb[0].mxu0 %v7273
        %v7492 = vpop.f32.mrb[0].mxu0
        %v7493 = vadd.f32 0.0, %v7492
        %v7494 = vpop.f32.mrb[0].mxu0
        %v7495 = vpop.f32.mrb[0].mxu0
        %v7496 = vadd.f32 0.0, %v7495
        %v7497 = vpop.f32.mrb[0].mxu0
        %7498 = vmatprep.mubr.bf16.mxu0 0
        %7499 = vmatmul.mubr.bf16.gmra.mrb[0].mxu0 %v7281
        %v7500 = vpop.f32.mrb[0].mxu0
        %v7501 = vadd.f32 0.0, %v7500
        %v7502 = vpop.f32.mrb[0].mxu0
        %v7503 = vpop.f32.mrb[0].mxu0
        %v7504 = vadd.f32 0.0, %v7503
        %v7505 = vpop.f32.mrb[0].mxu0
        %7506 = vmatprep.mubr.bf16.mxu0 0
        %7507 = vmatmul.mubr.bf16.gmra.mrb[0].mxu0 %v7289
        %v7508 = vpop.f32.mrb[0].mxu0
        %v7509 = vadd.f32 0.0, %v7508
        %v7510 = vpop.f32.mrb[0].mxu0
        %v7511 = vpop.f32.mrb[0].mxu0
        %v7512 = vadd.f32 0.0, %v7511
        %v7513 = vpop.f32.mrb[0].mxu0
        %7514 = vmatprep.mubr.bf16.mxu0 0
        %7515 = vmatmul.mubr.bf16.gmra.mrb[0].mxu0 %v7297
        %v7516 = vpop.f32.mrb[0].mxu0
        %v7517 = vadd.f32 0.0, %v7516
        %v7518 = vpop.f32.mrb[0].mxu0
        %v7519 = vpop.f32.mrb[0].mxu0
        %v7520 = vadd.f32 0.0, %v7519
        %v7521 = vpop.f32.mrb[0].mxu0
        %7522 = vmatprep.mubr.bf16.mxu0 0
        %7523 = vmatmul.mubr.bf16.gmra.mrb[0].mxu0 %v7305
        %v7524 = vpop.f32.mrb[0].mxu0
        %v7525 = vadd.f32 0.0, %v7524
        %v7526 = vpop.f32.mrb[0].mxu0
        %v7527 = vpop.f32.mrb[0].mxu0
        %v7528 = vadd.f32 0.0, %v7527
        %v7529 = vpop.f32.mrb[0].mxu0
        %7530 = vmatprep.mubr.bf16.mxu0 0
        %7531 = vmatmul.mubr.bf16.gmra.mrb[0].mxu0 %v7313
        %v7532 = vpop.f32.mrb[0].mxu0
        %v7533 = vadd.f32 0.0, %v7532
        %v7534 = vpop.f32.mrb[0].mxu0
        %v7535 = vpop.f32.mrb[0].mxu0
        %v7536 = vadd.f32 0.0, %v7535
        %v7537 = vpop.f32.mrb[0].mxu0
        %7538 = vmatprep.mubr.bf16.mxu0 0
        %7539 = vmatmul.mubr.bf16.gmra.mrb[0].mxu0 %v7321
        %v7540 = vpop.f32.mrb[0].mxu0
        %v7541 = vadd.f32 0.0, %v7540
        %v7542 = vpop.f32.mrb[0].mxu0
        %v7543 = vpop.f32.mrb[0].mxu0
        %v7544 = vadd.f32 0.0, %v7543
        %v7545 = vpop.f32.mrb[0].mxu0
        %7546 = vmatprep.mubr.bf16.mxu0 0
        %7547 = vmatmul.mubr.bf16.gmra.mrb[0].mxu0 %v7329
        %v7548 = vpop.f32.mrb[0].mxu0
        %v7549 = vadd.f32 0.0, %v7548
        %v7550 = vpop.f32.mrb[0].mxu0
        %v7551 = vpop.f32.mrb[0].mxu0
        %v7552 = vadd.f32 0.0, %v7551
        %v7553 = vpop.f32.mrb[0].mxu0
        %7554 = vmatprep.mubr.bf16.mxu0 0
        %7555 = vmatmul.mubr.bf16.gmra.mrb[0].mxu0 %v7337
        %v7556 = vpop.f32.mrb[0].mxu0
        %v7557 = vadd.f32 0.0, %v7556
        %v7558 = vpop.f32.mrb[0].mxu0
        %v7559 = vpop.f32.mrb[0].mxu0
        %v7560 = vadd.f32 0.0, %v7559
        %v7561 = vpop.f32.mrb[0].mxu0
        %7562 = vmatprep.mubr.bf16.mxu0 0
        %7563 = vmatmul.mubr.bf16.gmra.mrb[0].mxu0 %v7345
        %v7564 = vpop.f32.mrb[0].mxu0
        %v7565 = vadd.f32 0.0, %v7564
        %v7566 = vpop.f32.mrb[0].mxu0
        %v7567 = vpop.f32.mrb[0].mxu0
        %v7568 = vadd.f32 0.0, %v7567
        %v7569 = vpop.f32.mrb[0].mxu0
        %7570 = vmatprep.mubr.bf16.mxu0 0
        %7571 = vmatmul.mubr.bf16.gmra.mrb[0].mxu0 %v7353
        %v7572 = vpop.f32.mrb[0].mxu0
        %v7573 = vadd.f32 0.0, %v7572
        %v7574 = vpop.f32.mrb[0].mxu0
        %v7575 = vpop.f32.mrb[0].mxu0
        %v7576 = vadd.f32 0.0, %v7575
        %v7577 = vpop.f32.mrb[0].mxu0
        %7578 = vdwg.mxu0
        %v7579 = vadd.f32 %v7155, %v7453
        %v7580 = vadd.f32 %v7156, %v7456
        %v7581 = vadd.f32 %v7157, %v7461
        %v7582 = vadd.f32 %v7158, %v7464
        %v7583 = vadd.f32 %v7159, %v7469
        %v7584 = vadd.f32 %v7160, %v7472
        %v7585 = vadd.f32 %v7161, %v7477
        %v7586 = vadd.f32 %v7162, %v7480
        %v7587 = vadd.f32 %v7163, %v7485
        %v7588 = vadd.f32 %v7164, %v7488
        %v7589 = vadd.f32 %v7165, %v7493
        %v7590 = vadd.f32 %v7166, %v7496
        %v7591 = vadd.f32 %v7167, %v7501
        %v7592 = vadd.f32 %v7168, %v7504
        %v7593 = vadd.f32 %v7169, %v7509
        %v7594 = vadd.f32 %v7170, %v7512
        %v7595 = vadd.f32 %v7171, %v7517
        %v7596 = vadd.f32 %v7172, %v7520
        %v7597 = vadd.f32 %v7173, %v7525
        %v7598 = vadd.f32 %v7174, %v7528
        %v7599 = vadd.f32 %v7175, %v7533
        %v7600 = vadd.f32 %v7176, %v7536
        %v7601 = vadd.f32 %v7177, %v7541
        %v7602 = vadd.f32 %v7178, %v7544
        %v7603 = vadd.f32 %v7179, %v7549
        %v7604 = vadd.f32 %v7180, %v7552
        %v7605 = vadd.f32 %v7181, %v7557
        %v7606 = vadd.f32 %v7182, %v7560
        %v7607 = vadd.f32 %v7183, %v7565
        %v7608 = vadd.f32 %v7184, %v7568
        %v7609 = vadd.f32 %v7185, %v7573
        %v7610 = vadd.f32 %v7186, %v7576
        %v7611 = vld [vmem:[%s3684] sm:$0xf]
        %v7612 = vld [vmem:[%s3684 + $0x4] sm:$0xf]
        %v7613 = vld [vmem:[%s3684 + $0x8] sm:$0xf]
        %v7614 = vld [vmem:[%s3684 + $0xc] sm:$0xf]
        %v7615 = vld [vmem:[%s3684 + $0x10] sm:$0xf]
        %v7616 = vld [vmem:[%s3684 + $0x14] sm:$0xf]
        %v7617 = vld [vmem:[%s3684 + $0x18] sm:$0xf]
        %v7618 = vld [vmem:[%s3684 + $0x1c] sm:$0xf]
        %v7619 = vld [vmem:[%s3684 + $0x20] sm:$0xf]
        %v7620 = vld [vmem:[%s3684 + $0x24] sm:$0xf]
        %v7621 = vld [vmem:[%s3684 + $0x28] sm:$0xf]
        %v7622 = vld [vmem:[%s3684 + $0x2c] sm:$0xf]
        %v7623 = vld [vmem:[%s3684 + $0x30] sm:$0xf]
        %v7624 = vld [vmem:[%s3684 + $0x34] sm:$0xf]
        %v7625 = vld [vmem:[%s3684 + $0x38] sm:$0xf]
        %v7626 = vld [vmem:[%s3684 + $0x3c] sm:$0xf]
        %v7643 = vunpack.c.l.b16 %v7611
        %v7644 = vunpack.c.l.b16 %v7612
        %v7645 = vunpack.c.l.b16 %v7613
        %v7646 = vunpack.c.l.b16 %v7614
        %v7647 = vunpack.c.l.b16 %v7615
        %v7648 = vunpack.c.l.b16 %v7616
        %v7649 = vunpack.c.l.b16 %v7617
        %v7650 = vunpack.c.l.b16 %v7618
        %v7651 = vunpack.c.l.b16 %v7619
        %v7652 = vunpack.c.l.b16 %v7620
        %v7653 = vunpack.c.l.b16 %v7621
        %v7654 = vunpack.c.l.b16 %v7622
        %v7655 = vunpack.c.l.b16 %v7623
        %v7656 = vunpack.c.l.b16 %v7624
        %v7657 = vunpack.c.l.b16 %v7625
        %v7658 = vunpack.c.l.b16 %v7626
        %v7659 = vpack.c.b16 %v7644, %v7643
        %v7660 = vpack.c.b16 %v7646, %v7645
        %v7661 = vpack.c.b16 %v7648, %v7647
        %v7662 = vpack.c.b16 %v7650, %v7649
        %v7663 = vpack.c.b16 %v7652, %v7651
        %v7664 = vpack.c.b16 %v7654, %v7653
        %v7665 = vpack.c.b16 %v7656, %v7655
        %v7666 = vpack.c.b16 %v7658, %v7657
        %7675 = vmatprep.subr.bf16.mxu0 0
        %7676 = vmatpush1.bf16.msra.mxu0 %v7659
        %7677 = vmatprep.subr.bf16.mxu0 0
        %7678 = vmatpush1.bf16.msra.mxu0 %v7660
        %7679 = vmatprep.subr.bf16.mxu0 0
        %7680 = vmatpush1.bf16.msra.mxu0 %v7661
        %7681 = vmatprep.subr.bf16.mxu0 0
        %7682 = vmatpush1.bf16.msra.mxu0 %v7662
        %7683 = vmatprep.subr.bf16.mxu0 0
        %7684 = vmatpush1.bf16.msra.mxu0 %v7663
        %7685 = vmatprep.subr.bf16.mxu0 0
        %7686 = vmatpush1.bf16.msra.mxu0 %v7664
        %7687 = vmatprep.subr.bf16.mxu0 0
        %7688 = vmatpush1.bf16.msra.mxu0 %v7665
        %7689 = vmatprep.subr.bf16.mxu0 0
        %7690 = vmatpush1.bf16.msra.mxu0 %v7666
        %7691 = vmatprep.subr.bf16.mxu0 0
        %7692 = vmatpush1.bf16.msra.mxu0 0
        %7693 = vmatprep.subr.bf16.mxu0 0
        %7694 = vmatpush1.bf16.msra.mxu0 0
        %7695 = vmatprep.subr.bf16.mxu0 0
        %7696 = vmatpush1.bf16.msra.mxu0 0
        %7697 = vmatprep.subr.bf16.mxu0 0
        %7698 = vmatpush1.bf16.msra.mxu0 0
        %7699 = vmatprep.subr.bf16.mxu0 0
        %7700 = vmatpush1.bf16.msra.mxu0 0
        %7701 = vmatprep.subr.bf16.mxu0 0
        %7702 = vmatpush1.bf16.msra.mxu0 0
        %7703 = vmatprep.subr.bf16.mxu0 0
        %7704 = vmatpush1.bf16.msra.mxu0 0
        %7705 = vmatprep.subr.bf16.mxu0 0
        %7706 = vmatpush1.bf16.msra.mxu0 0
        %7707 = vmatprep.mubr.bf16.mxu0 0
        %7708 = vmatmul.mubr.bf16.gmra.mrb[0].mxu0 %v6749
        %v7709 = vpop.f32.mrb[0].mxu0
        %v7710 = vadd.f32 0.0, %v7709
        %v7711 = vpop.f32.mrb[0].mxu0
        %v7712 = vpop.f32.mrb[0].mxu0
        %v7713 = vadd.f32 0.0, %v7712
        %v7714 = vpop.f32.mrb[0].mxu0
        %7715 = vmatprep.mubr.bf16.mxu0 0
        %7716 = vmatmul.mubr.bf16.gmra.mrb[0].mxu0 %v6750
        %v7717 = vpop.f32.mrb[0].mxu0
        %v7718 = vadd.f32 0.0, %v7717
        %v7719 = vpop.f32.mrb[0].mxu0
        %v7720 = vpop.f32.mrb[0].mxu0
        %v7721 = vadd.f32 0.0, %v7720
        %v7722 = vpop.f32.mrb[0].mxu0
        %7723 = vmatprep.mubr.bf16.mxu0 0
        %7724 = vmatmul.mubr.bf16.gmra.mrb[0].mxu0 %v6751
        %v7725 = vpop.f32.mrb[0].mxu0
        %v7726 = vadd.f32 0.0, %v7725
        %v7727 = vpop.f32.mrb[0].mxu0
        %v7728 = vpop.f32.mrb[0].mxu0
        %v7729 = vadd.f32 0.0, %v7728
        %v7730 = vpop.f32.mrb[0].mxu0
        %7731 = vmatprep.mubr.bf16.mxu0 0
        %7732 = vmatmul.mubr.bf16.gmra.mrb[0].mxu0 %v6752
        %v7733 = vpop.f32.mrb[0].mxu0
        %v7734 = vadd.f32 0.0, %v7733
        %v7735 = vpop.f32.mrb[0].mxu0
        %v7736 = vpop.f32.mrb[0].mxu0
        %v7737 = vadd.f32 0.0, %v7736
        %v7738 = vpop.f32.mrb[0].mxu0
        %7739 = vmatprep.mubr.bf16.mxu0 0
        %7740 = vmatmul.mubr.bf16.gmra.mrb[0].mxu0 %v6753
        %v7741 = vpop.f32.mrb[0].mxu0
        %v7742 = vadd.f32 0.0, %v7741
        %v7743 = vpop.f32.mrb[0].mxu0
        %v7744 = vpop.f32.mrb[0].mxu0
        %v7745 = vadd.f32 0.0, %v7744
        %v7746 = vpop.f32.mrb[0].mxu0
        %7747 = vmatprep.mubr.bf16.mxu0 0
        %7748 = vmatmul.mubr.bf16.gmra.mrb[0].mxu0 %v6754
        %v7749 = vpop.f32.mrb[0].mxu0
        %v7750 = vadd.f32 0.0, %v7749
        %v7751 = vpop.f32.mrb[0].mxu0
        %v7752 = vpop.f32.mrb[0].mxu0
        %v7753 = vadd.f32 0.0, %v7752
        %v7754 = vpop.f32.mrb[0].mxu0
        %7755 = vmatprep.mubr.bf16.mxu0 0
        %7756 = vmatmul.mubr.bf16.gmra.mrb[0].mxu0 %v6755
        %v7757 = vpop.f32.mrb[0].mxu0
        %v7758 = vadd.f32 0.0, %v7757
        %v7759 = vpop.f32.mrb[0].mxu0
        %v7760 = vpop.f32.mrb[0].mxu0
        %v7761 = vadd.f32 0.0, %v7760
        %v7762 = vpop.f32.mrb[0].mxu0
        %7763 = vmatprep.mubr.bf16.mxu0 0
        %7764 = vmatmul.mubr.bf16.gmra.mrb[0].mxu0 %v6756
        %v7765 = vpop.f32.mrb[0].mxu0
        %v7766 = vadd.f32 0.0, %v7765
        %v7767 = vpop.f32.mrb[0].mxu0
        %v7768 = vpop.f32.mrb[0].mxu0
        %v7769 = vadd.f32 0.0, %v7768
        %v7770 = vpop.f32.mrb[0].mxu0
        %7771 = vmatprep.mubr.bf16.mxu0 0
        %7772 = vmatmul.mubr.bf16.gmra.mrb[0].mxu0 %v6757
        %v7773 = vpop.f32.mrb[0].mxu0
        %v7774 = vadd.f32 0.0, %v7773
        %v7775 = vpop.f32.mrb[0].mxu0
        %v7776 = vpop.f32.mrb[0].mxu0
        %v7777 = vadd.f32 0.0, %v7776
        %v7778 = vpop.f32.mrb[0].mxu0
        %7779 = vmatprep.mubr.bf16.mxu0 0
        %7780 = vmatmul.mubr.bf16.gmra.mrb[0].mxu0 %v6758
        %v7781 = vpop.f32.mrb[0].mxu0
        %v7782 = vadd.f32 0.0, %v7781
        %v7783 = vpop.f32.mrb[0].mxu0
        %v7784 = vpop.f32.mrb[0].mxu0
        %v7785 = vadd.f32 0.0, %v7784
        %v7786 = vpop.f32.mrb[0].mxu0
        %7787 = vmatprep.mubr.bf16.mxu0 0
        %7788 = vmatmul.mubr.bf16.gmra.mrb[0].mxu0 %v6759
        %v7789 = vpop.f32.mrb[0].mxu0
        %v7790 = vadd.f32 0.0, %v7789
        %v7791 = vpop.f32.mrb[0].mxu0
        %v7792 = vpop.f32.mrb[0].mxu0
        %v7793 = vadd.f32 0.0, %v7792
        %v7794 = vpop.f32.mrb[0].mxu0
        %7795 = vmatprep.mubr.bf16.mxu0 0
        %7796 = vmatmul.mubr.bf16.gmra.mrb[0].mxu0 %v6760
        %v7797 = vpop.f32.mrb[0].mxu0
        %v7798 = vadd.f32 0.0, %v7797
        %v7799 = vpop.f32.mrb[0].mxu0
        %v7800 = vpop.f32.mrb[0].mxu0
        %v7801 = vadd.f32 0.0, %v7800
        %v7802 = vpop.f32.mrb[0].mxu0
        %7803 = vmatprep.mubr.bf16.mxu0 0
        %7804 = vmatmul.mubr.bf16.gmra.mrb[0].mxu0 %v6761
        %v7805 = vpop.f32.mrb[0].mxu0
        %v7806 = vadd.f32 0.0, %v7805
        %v7807 = vpop.f32.mrb[0].mxu0
        %v7808 = vpop.f32.mrb[0].mxu0
        %v7809 = vadd.f32 0.0, %v7808
        %v7810 = vpop.f32.mrb[0].mxu0
        %7811 = vmatprep.mubr.bf16.mxu0 0
        %7812 = vmatmul.mubr.bf16.gmra.mrb[0].mxu0 %v6762
        %v7813 = vpop.f32.mrb[0].mxu0
        %v7814 = vadd.f32 0.0, %v7813
        %v7815 = vpop.f32.mrb[0].mxu0
        %v7816 = vpop.f32.mrb[0].mxu0
        %v7817 = vadd.f32 0.0, %v7816
        %v7818 = vpop.f32.mrb[0].mxu0
        %7819 = vmatprep.mubr.bf16.mxu0 0
        %7820 = vmatmul.mubr.bf16.gmra.mrb[0].mxu0 %v6763
        %v7821 = vpop.f32.mrb[0].mxu0
        %v7822 = vadd.f32 0.0, %v7821
        %v7823 = vpop.f32.mrb[0].mxu0
        %v7824 = vpop.f32.mrb[0].mxu0
        %v7825 = vadd.f32 0.0, %v7824
        %v7826 = vpop.f32.mrb[0].mxu0
        %7827 = vmatprep.mubr.bf16.mxu0 0
        %7828 = vmatmul.mubr.bf16.gmra.mrb[0].mxu0 %v7188
        %v7829 = vpop.f32.mrb[0].mxu0
        %v7830 = vadd.f32 0.0, %v7829
        %v7831 = vpop.f32.mrb[0].mxu0
        %v7832 = vpop.f32.mrb[0].mxu0
        %v7833 = vadd.f32 0.0, %v7832
        %v7834 = vpop.f32.mrb[0].mxu0
        %7835 = vdwg.mxu0
        %v7836 = vadd.f32 %v7579, %v7710
        %v7837 = vadd.f32 %v7580, %v7713
        %v7838 = vadd.f32 %v7581, %v7718
        %v7839 = vadd.f32 %v7582, %v7721
        %v7840 = vadd.f32 %v7583, %v7726
        %v7841 = vadd.f32 %v7584, %v7729
        %v7842 = vadd.f32 %v7585, %v7734
        %v7843 = vadd.f32 %v7586, %v7737
        %v7844 = vadd.f32 %v7587, %v7742
        %v7845 = vadd.f32 %v7588, %v7745
        %v7846 = vadd.f32 %v7589, %v7750
        %v7847 = vadd.f32 %v7590, %v7753
        %v7848 = vadd.f32 %v7591, %v7758
        %v7849 = vadd.f32 %v7592, %v7761
        %v7850 = vadd.f32 %v7593, %v7766
        %v7851 = vadd.f32 %v7594, %v7769
        %v7852 = vadd.f32 %v7595, %v7774
        %v7853 = vadd.f32 %v7596, %v7777
        %v7854 = vadd.f32 %v7597, %v7782
        %v7855 = vadd.f32 %v7598, %v7785
        %v7856 = vadd.f32 %v7599, %v7790
        %v7857 = vadd.f32 %v7600, %v7793
        %v7858 = vadd.f32 %v7601, %v7798
        %v7859 = vadd.f32 %v7602, %v7801
        %v7860 = vadd.f32 %v7603, %v7806
        %v7861 = vadd.f32 %v7604, %v7809
        %v7862 = vadd.f32 %v7605, %v7814
        %v7863 = vadd.f32 %v7606, %v7817
        %v7864 = vadd.f32 %v7607, %v7822
        %v7865 = vadd.f32 %v7608, %v7825
        %v7866 = vadd.f32 %v7609, %v7830
        %v7867 = vadd.f32 %v7610, %v7833
        %v7868 = vld [vmem:[#allocation2 + $0xb0] sm:$0xff]
        %v7869 = vld [vmem:[#allocation2 + $0xb8] sm:$0xff]
        %v7870 = vld [vmem:[#allocation2 + $0xc0] sm:$0xff]
        %v7871 = vld [vmem:[#allocation2 + $0xc8] sm:$0xff]
        %v7872 = vld [vmem:[#allocation2 + $0xd0] sm:$0xff]
        %v7873 = vld [vmem:[#allocation2 + $0xd8] sm:$0xff]
        %v7874 = vld [vmem:[#allocation2 + $0xe0] sm:$0xff]
        %v7875 = vld [vmem:[#allocation2 + $0xe8] sm:$0xff]
        %v7876 = vld [vmem:[#allocation2 + $0xf0] sm:$0xff]
        %v7877 = vld [vmem:[#allocation2 + $0xf8] sm:$0xff]
        %v7878 = vld [vmem:[#allocation2 + $0x100] sm:$0xff]
        %v7879 = vld [vmem:[#allocation2 + $0x108] sm:$0xff]
        %v7880 = vld [vmem:[#allocation2 + $0x110] sm:$0xff]
        %v7881 = vld [vmem:[#allocation2 + $0x118] sm:$0xff]
        %v7882 = vld [vmem:[#allocation2 + $0x120] sm:$0xff]
        %v7883 = vld [vmem:[#allocation2 + $0x128] sm:$0xff]
        %v7884 = vld [vmem:[#allocation2 + $0x130] sm:$0x1]
        %v7885 = vsel %vm2819, %v7868, 0
        %v7886 = vsel %vm2820, %v7869, 0
        %v7887 = vsel %vm2821, %v7870, 0
        %v7888 = vsel %vm2822, %v7871, 0
        %v7889 = vsel %vm2823, %v7872, 0
        %v7890 = vsel %vm2824, %v7873, 0
        %v7891 = vsel %vm2825, %v7874, 0
        %v7892 = vsel %vm2826, %v7875, 0
        %v7893 = vsel %vm2827, %v7876, 0
        %v7894 = vsel %vm2828, %v7877, 0
        %v7895 = vsel %vm2829, %v7878, 0
        %v7896 = vsel %vm2830, %v7879, 0
        %v7897 = vsel %vm2831, %v7880, 0
        %v7898 = vsel %vm2832, %v7881, 0
        %v7899 = vsel %vm2833, %v7882, 0
        %v7900 = vsel %vm2834, %v7883, 0
        %v7901 = vsel %vm2835, %v7884, 0
        %v7902 = vld [vmem:[%s3976] sm:$0xf]
        %v7903 = vld [vmem:[%s3976 + $0x4] sm:$0xf]
        %v7904 = vld [vmem:[%s3976 + $0x8] sm:$0xf]
        %v7905 = vld [vmem:[%s3976 + $0xc] sm:$0xf]
        %v7906 = vld [vmem:[%s3976 + $0x10] sm:$0xf]
        %v7907 = vld [vmem:[%s3976 + $0x14] sm:$0xf]
        %v7908 = vld [vmem:[%s3976 + $0x18] sm:$0xf]
        %v7909 = vld [vmem:[%s3976 + $0x1c] sm:$0xf]
        %v7910 = vld [vmem:[%s3976 + $0x20] sm:$0xf]
        %v7911 = vld [vmem:[%s3976 + $0x24] sm:$0xf]
        %v7912 = vld [vmem:[%s3976 + $0x28] sm:$0xf]
        %v7913 = vld [vmem:[%s3976 + $0x2c] sm:$0xf]
        %v7914 = vld [vmem:[%s3976 + $0x30] sm:$0xf]
        %v7915 = vld [vmem:[%s3976 + $0x34] sm:$0xf]
        %v7916 = vld [vmem:[%s3976 + $0x38] sm:$0xf]
        %v7917 = vld [vmem:[%s3976 + $0x3c] sm:$0xf]
        %v7919 = vshrl.u32 %v7885, 16
        %v7921 = vshll.u32 %v7885, 16
        %v7923 = vrot.slane %v7921, 1
        %v7924 = vor.u32 %v7919, %v7923
        %v7926 = vshll.u32 %v7886, 16
        %v7928 = vrot.slane %v7926, 1
        %v7929 = vsel %vm1737, %v7924, %v7928
        %v7930 = vshrl.u32 %v7886, 16
        %v7932 = vor.u32 %v7930, %v7928
        %v7934 = vshll.u32 %v7887, 16
        %v7936 = vrot.slane %v7934, 1
        %v7937 = vsel %vm1737, %v7932, %v7936
        %v7938 = vshrl.u32 %v7887, 16
        %v7940 = vor.u32 %v7938, %v7936
        %v7942 = vshll.u32 %v7888, 16
        %v7944 = vrot.slane %v7942, 1
        %v7945 = vsel %vm1737, %v7940, %v7944
        %v7946 = vshrl.u32 %v7888, 16
        %v7948 = vor.u32 %v7946, %v7944
        %v7950 = vshll.u32 %v7889, 16
        %v7952 = vrot.slane %v7950, 1
        %v7953 = vsel %vm1737, %v7948, %v7952
        %v7954 = vshrl.u32 %v7889, 16
        %v7956 = vor.u32 %v7954, %v7952
        %v7958 = vshll.u32 %v7890, 16
        %v7960 = vrot.slane %v7958, 1
        %v7961 = vsel %vm1737, %v7956, %v7960
        %v7962 = vshrl.u32 %v7890, 16
        %v7964 = vor.u32 %v7962, %v7960
        %v7966 = vshll.u32 %v7891, 16
        %v7968 = vrot.slane %v7966, 1
        %v7969 = vsel %vm1737, %v7964, %v7968
        %v7970 = vshrl.u32 %v7891, 16
        %v7972 = vor.u32 %v7970, %v7968
        %v7974 = vshll.u32 %v7892, 16
        %v7976 = vrot.slane %v7974, 1
        %v7977 = vsel %vm1737, %v7972, %v7976
        %v7978 = vshrl.u32 %v7892, 16
        %v7980 = vor.u32 %v7978, %v7976
        %v7982 = vshll.u32 %v7893, 16
        %v7984 = vrot.slane %v7982, 1
        %v7985 = vsel %vm1737, %v7980, %v7984
        %v7986 = vshrl.u32 %v7893, 16
        %v7988 = vor.u32 %v7986, %v7984
        %v7990 = vshll.u32 %v7894, 16
        %v7992 = vrot.slane %v7990, 1
        %v7993 = vsel %vm1737, %v7988, %v7992
        %v7994 = vshrl.u32 %v7894, 16
        %v7996 = vor.u32 %v7994, %v7992
        %v7998 = vshll.u32 %v7895, 16
        %v8000 = vrot.slane %v7998, 1
        %v8001 = vsel %vm1737, %v7996, %v8000
        %v8002 = vshrl.u32 %v7895, 16
        %v8004 = vor.u32 %v8002, %v8000
        %v8006 = vshll.u32 %v7896, 16
        %v8008 = vrot.slane %v8006, 1
        %v8009 = vsel %vm1737, %v8004, %v8008
        %v8010 = vshrl.u32 %v7896, 16
        %v8012 = vor.u32 %v8010, %v8008
        %v8014 = vshll.u32 %v7897, 16
        %v8016 = vrot.slane %v8014, 1
        %v8017 = vsel %vm1737, %v8012, %v8016
        %v8018 = vshrl.u32 %v7897, 16
        %v8020 = vor.u32 %v8018, %v8016
        %v8022 = vshll.u32 %v7898, 16
        %v8024 = vrot.slane %v8022, 1
        %v8025 = vsel %vm1737, %v8020, %v8024
        %v8026 = vshrl.u32 %v7898, 16
        %v8028 = vor.u32 %v8026, %v8024
        %v8030 = vshll.u32 %v7899, 16
        %v8032 = vrot.slane %v8030, 1
        %v8033 = vsel %vm1737, %v8028, %v8032
        %v8034 = vshrl.u32 %v7899, 16
        %v8036 = vor.u32 %v8034, %v8032
        %v8038 = vshll.u32 %v7900, 16
        %v8040 = vrot.slane %v8038, 1
        %v8041 = vsel %vm1737, %v8036, %v8040
        %v8042 = vshrl.u32 %v7900, 16
        %v8044 = vor.u32 %v8042, %v8040
        %v8046 = vshll.u32 %v7901, 16
        %v8048 = vrot.slane %v8046, 1
        %v8049 = vsel %vm1737, %v8044, %v8048
        %v8082 = vunpack.c.l.b16 %v7902
        %v8083 = vunpack.c.l.b16 %v7903
        %v8084 = vunpack.c.l.b16 %v7904
        %v8085 = vunpack.c.l.b16 %v7905
        %v8086 = vunpack.c.l.b16 %v7906
        %v8087 = vunpack.c.l.b16 %v7907
        %v8088 = vunpack.c.l.b16 %v7908
        %v8089 = vunpack.c.l.b16 %v7909
        %v8090 = vunpack.c.l.b16 %v7910
        %v8091 = vunpack.c.l.b16 %v7911
        %v8092 = vunpack.c.l.b16 %v7912
        %v8093 = vunpack.c.l.b16 %v7913
        %v8094 = vunpack.c.l.b16 %v7914
        %v8095 = vunpack.c.l.b16 %v7915
        %v8096 = vunpack.c.l.b16 %v7916
        %v8097 = vunpack.c.l.b16 %v7917
        %v8098 = vpack.c.b16 %v8083, %v8082
        %v8099 = vpack.c.b16 %v8085, %v8084
        %v8100 = vpack.c.b16 %v8087, %v8086
        %v8101 = vpack.c.b16 %v8089, %v8088
        %v8102 = vpack.c.b16 %v8091, %v8090
        %v8103 = vpack.c.b16 %v8093, %v8092
        %v8104 = vpack.c.b16 %v8095, %v8094
        %v8105 = vpack.c.b16 %v8097, %v8096
        %8114 = vmatprep.subr.bf16.mxu0 0
        %8115 = vmatpush1.bf16.msra.mxu0 %v8098
        %8116 = vmatprep.subr.bf16.mxu0 0
        %8117 = vmatpush1.bf16.msra.mxu0 %v8099
        %8118 = vmatprep.subr.bf16.mxu0 0
        %8119 = vmatpush1.bf16.msra.mxu0 %v8100
        %8120 = vmatprep.subr.bf16.mxu0 0
        %8121 = vmatpush1.bf16.msra.mxu0 %v8101
        %8122 = vmatprep.subr.bf16.mxu0 0
        %8123 = vmatpush1.bf16.msra.mxu0 %v8102
        %8124 = vmatprep.subr.bf16.mxu0 0
        %8125 = vmatpush1.bf16.msra.mxu0 %v8103
        %8126 = vmatprep.subr.bf16.mxu0 0
        %8127 = vmatpush1.bf16.msra.mxu0 %v8104
        %8128 = vmatprep.subr.bf16.mxu0 0
        %8129 = vmatpush1.bf16.msra.mxu0 %v8105
        %8130 = vmatprep.subr.bf16.mxu0 0
        %8131 = vmatpush1.bf16.msra.mxu0 0
        %8132 = vmatprep.subr.bf16.mxu0 0
        %8133 = vmatpush1.bf16.msra.mxu0 0
        %8134 = vmatprep.subr.bf16.mxu0 0
        %8135 = vmatpush1.bf16.msra.mxu0 0
        %8136 = vmatprep.subr.bf16.mxu0 0
        %8137 = vmatpush1.bf16.msra.mxu0 0
        %8138 = vmatprep.subr.bf16.mxu0 0
        %8139 = vmatpush1.bf16.msra.mxu0 0
        %8140 = vmatprep.subr.bf16.mxu0 0
        %8141 = vmatpush1.bf16.msra.mxu0 0
        %8142 = vmatprep.subr.bf16.mxu0 0
        %8143 = vmatpush1.bf16.msra.mxu0 0
        %8144 = vmatprep.subr.bf16.mxu0 0
        %8145 = vmatpush1.bf16.msra.mxu0 0
        %8146 = vmatprep.mubr.bf16.mxu0 0
        %8147 = vmatmul.mubr.bf16.gmra.mrb[0].mxu0 %v7929
        %v8148 = vpop.f32.mrb[0].mxu0
        %v8149 = vadd.f32 0.0, %v8148
        %v8150 = vpop.f32.mrb[0].mxu0
        %v8151 = vpop.f32.mrb[0].mxu0
        %v8152 = vadd.f32 0.0, %v8151
        %v8153 = vpop.f32.mrb[0].mxu0
        %8154 = vmatprep.mubr.bf16.mxu0 0
        %8155 = vmatmul.mubr.bf16.gmra.mrb[0].mxu0 %v7937
        %v8156 = vpop.f32.mrb[0].mxu0
        %v8157 = vadd.f32 0.0, %v8156
        %v8158 = vpop.f32.mrb[0].mxu0
        %v8159 = vpop.f32.mrb[0].mxu0
        %v8160 = vadd.f32 0.0, %v8159
        %v8161 = vpop.f32.mrb[0].mxu0
        %8162 = vmatprep.mubr.bf16.mxu0 0
        %8163 = vmatmul.mubr.bf16.gmra.mrb[0].mxu0 %v7945
        %v8164 = vpop.f32.mrb[0].mxu0
        %v8165 = vadd.f32 0.0, %v8164
        %v8166 = vpop.f32.mrb[0].mxu0
        %v8167 = vpop.f32.mrb[0].mxu0
        %v8168 = vadd.f32 0.0, %v8167
        %v8169 = vpop.f32.mrb[0].mxu0
        %8170 = vmatprep.mubr.bf16.mxu0 0
        %8171 = vmatmul.mubr.bf16.gmra.mrb[0].mxu0 %v7953
        %v8172 = vpop.f32.mrb[0].mxu0
        %v8173 = vadd.f32 0.0, %v8172
        %v8174 = vpop.f32.mrb[0].mxu0
        %v8175 = vpop.f32.mrb[0].mxu0
        %v8176 = vadd.f32 0.0, %v8175
        %v8177 = vpop.f32.mrb[0].mxu0
        %8178 = vmatprep.mubr.bf16.mxu0 0
        %8179 = vmatmul.mubr.bf16.gmra.mrb[0].mxu0 %v7961
        %v8180 = vpop.f32.mrb[0].mxu0
        %v8181 = vadd.f32 0.0, %v8180
        %v8182 = vpop.f32.mrb[0].mxu0
        %v8183 = vpop.f32.mrb[0].mxu0
        %v8184 = vadd.f32 0.0, %v8183
        %v8185 = vpop.f32.mrb[0].mxu0
        %8186 = vmatprep.mubr.bf16.mxu0 0
        %8187 = vmatmul.mubr.bf16.gmra.mrb[0].mxu0 %v7969
        %v8188 = vpop.f32.mrb[0].mxu0
        %v8189 = vadd.f32 0.0, %v8188
        %v8190 = vpop.f32.mrb[0].mxu0
        %v8191 = vpop.f32.mrb[0].mxu0
        %v8192 = vadd.f32 0.0, %v8191
        %v8193 = vpop.f32.mrb[0].mxu0
        %8194 = vmatprep.mubr.bf16.mxu0 0
        %8195 = vmatmul.mubr.bf16.gmra.mrb[0].mxu0 %v7977
        %v8196 = vpop.f32.mrb[0].mxu0
        %v8197 = vadd.f32 0.0, %v8196
        %v8198 = vpop.f32.mrb[0].mxu0
        %v8199 = vpop.f32.mrb[0].mxu0
        %v8200 = vadd.f32 0.0, %v8199
        %v8201 = vpop.f32.mrb[0].mxu0
        %8202 = vmatprep.mubr.bf16.mxu0 0
        %8203 = vmatmul.mubr.bf16.gmra.mrb[0].mxu0 %v7985
        %v8204 = vpop.f32.mrb[0].mxu0
        %v8205 = vadd.f32 0.0, %v8204
        %v8206 = vpop.f32.mrb[0].mxu0
        %v8207 = vpop.f32.mrb[0].mxu0
        %v8208 = vadd.f32 0.0, %v8207
        %v8209 = vpop.f32.mrb[0].mxu0
        %8210 = vmatprep.mubr.bf16.mxu0 0
        %8211 = vmatmul.mubr.bf16.gmra.mrb[0].mxu0 %v7993
        %v8212 = vpop.f32.mrb[0].mxu0
        %v8213 = vadd.f32 0.0, %v8212
        %v8214 = vpop.f32.mrb[0].mxu0
        %v8215 = vpop.f32.mrb[0].mxu0
        %v8216 = vadd.f32 0.0, %v8215
        %v8217 = vpop.f32.mrb[0].mxu0
        %8218 = vmatprep.mubr.bf16.mxu0 0
        %8219 = vmatmul.mubr.bf16.gmra.mrb[0].mxu0 %v8001
        %v8220 = vpop.f32.mrb[0].mxu0
        %v8221 = vadd.f32 0.0, %v8220
        %v8222 = vpop.f32.mrb[0].mxu0
        %v8223 = vpop.f32.mrb[0].mxu0
        %v8224 = vadd.f32 0.0, %v8223
        %v8225 = vpop.f32.mrb[0].mxu0
        %8226 = vmatprep.mubr.bf16.mxu0 0
        %8227 = vmatmul.mubr.bf16.gmra.mrb[0].mxu0 %v8009
        %v8228 = vpop.f32.mrb[0].mxu0
        %v8229 = vadd.f32 0.0, %v8228
        %v8230 = vpop.f32.mrb[0].mxu0
        %v8231 = vpop.f32.mrb[0].mxu0
        %v8232 = vadd.f32 0.0, %v8231
        %v8233 = vpop.f32.mrb[0].mxu0
        %8234 = vmatprep.mubr.bf16.mxu0 0
        %8235 = vmatmul.mubr.bf16.gmra.mrb[0].mxu0 %v8017
        %v8236 = vpop.f32.mrb[0].mxu0
        %v8237 = vadd.f32 0.0, %v8236
        %v8238 = vpop.f32.mrb[0].mxu0
        %v8239 = vpop.f32.mrb[0].mxu0
        %v8240 = vadd.f32 0.0, %v8239
        %v8241 = vpop.f32.mrb[0].mxu0
        %8242 = vmatprep.mubr.bf16.mxu0 0
        %8243 = vmatmul.mubr.bf16.gmra.mrb[0].mxu0 %v8025
        %v8244 = vpop.f32.mrb[0].mxu0
        %v8245 = vadd.f32 0.0, %v8244
        %v8246 = vpop.f32.mrb[0].mxu0
        %v8247 = vpop.f32.mrb[0].mxu0
        %v8248 = vadd.f32 0.0, %v8247
        %v8249 = vpop.f32.mrb[0].mxu0
        %8250 = vmatprep.mubr.bf16.mxu0 0
        %8251 = vmatmul.mubr.bf16.gmra.mrb[0].mxu0 %v8033
        %v8252 = vpop.f32.mrb[0].mxu0
        %v8253 = vadd.f32 0.0, %v8252
        %v8254 = vpop.f32.mrb[0].mxu0
        %v8255 = vpop.f32.mrb[0].mxu0
        %v8256 = vadd.f32 0.0, %v8255
        %v8257 = vpop.f32.mrb[0].mxu0
        %8258 = vmatprep.mubr.bf16.mxu0 0
        %8259 = vmatmul.mubr.bf16.gmra.mrb[0].mxu0 %v8041
        %v8260 = vpop.f32.mrb[0].mxu0
        %v8261 = vadd.f32 0.0, %v8260
        %v8262 = vpop.f32.mrb[0].mxu0
        %v8263 = vpop.f32.mrb[0].mxu0
        %v8264 = vadd.f32 0.0, %v8263
        %v8265 = vpop.f32.mrb[0].mxu0
        %8266 = vmatprep.mubr.bf16.mxu0 0
        %8267 = vmatmul.mubr.bf16.gmra.mrb[0].mxu0 %v8049
        %v8268 = vpop.f32.mrb[0].mxu0
        %v8269 = vadd.f32 0.0, %v8268
        %v8270 = vpop.f32.mrb[0].mxu0
        %v8271 = vpop.f32.mrb[0].mxu0
        %v8272 = vadd.f32 0.0, %v8271
        %v8273 = vpop.f32.mrb[0].mxu0
        %8274 = vdwg.mxu0
        %v8275 = vadd.f32 %v7836, %v8149
        %v8276 = vadd.f32 %v7837, %v8152
        %v8277 = vadd.f32 %v7838, %v8157
        %v8278 = vadd.f32 %v7839, %v8160
        %v8279 = vadd.f32 %v7840, %v8165
        %v8280 = vadd.f32 %v7841, %v8168
        %v8281 = vadd.f32 %v7842, %v8173
        %v8282 = vadd.f32 %v7843, %v8176
        %v8283 = vadd.f32 %v7844, %v8181
        %v8284 = vadd.f32 %v7845, %v8184
        %v8285 = vadd.f32 %v7846, %v8189
        %v8286 = vadd.f32 %v7847, %v8192
        %v8287 = vadd.f32 %v7848, %v8197
        %v8288 = vadd.f32 %v7849, %v8200
        %v8289 = vadd.f32 %v7850, %v8205
        %v8290 = vadd.f32 %v7851, %v8208
        %v8291 = vadd.f32 %v7852, %v8213
        %v8292 = vadd.f32 %v7853, %v8216
        %v8293 = vadd.f32 %v7854, %v8221
        %v8294 = vadd.f32 %v7855, %v8224
        %v8295 = vadd.f32 %v7856, %v8229
        %v8296 = vadd.f32 %v7857, %v8232
        %v8297 = vadd.f32 %v7858, %v8237
        %v8298 = vadd.f32 %v7859, %v8240
        %v8299 = vadd.f32 %v7860, %v8245
        %v8300 = vadd.f32 %v7861, %v8248
        %v8301 = vadd.f32 %v7862, %v8253
        %v8302 = vadd.f32 %v7863, %v8256
        %v8303 = vadd.f32 %v7864, %v8261
        %v8304 = vadd.f32 %v7865, %v8264
        %v8305 = vadd.f32 %v7866, %v8269
        %v8306 = vadd.f32 %v7867, %v8272
        %v8307 = vld [vmem:[#allocation2 + $0xb0] sm:$0x80]
        %v8308 = vld [vmem:[#allocation2 + $0x130] sm:$0xff]
        %v8309 = vsel %vm1865, %v8307, 0
        %v8310 = vsel %vm1866, %v7869, 0
        %v8311 = vsel %vm1867, %v7870, 0
        %v8312 = vsel %vm1868, %v7871, 0
        %v8313 = vsel %vm1869, %v7872, 0
        %v8314 = vsel %vm1870, %v7873, 0
        %v8315 = vsel %vm1871, %v7874, 0
        %v8316 = vsel %vm1872, %v7875, 0
        %v8317 = vsel %vm1873, %v7876, 0
        %v8318 = vsel %vm1874, %v7877, 0
        %v8319 = vsel %vm1875, %v7878, 0
        %v8320 = vsel %vm1876, %v7879, 0
        %v8321 = vsel %vm1877, %v7880, 0
        %v8322 = vsel %vm1878, %v7881, 0
        %v8323 = vsel %vm1879, %v7882, 0
        %v8324 = vsel %vm1880, %v7883, 0
        %v8325 = vsel %vm1881, %v8308, 0
        %v8326 = vld [vmem:[%s4401] sm:$0xf]
        %v8327 = vld [vmem:[%s4401 + $0x4] sm:$0xf]
        %v8328 = vld [vmem:[%s4401 + $0x8] sm:$0xf]
        %v8329 = vld [vmem:[%s4401 + $0xc] sm:$0xf]
        %v8330 = vld [vmem:[%s4401 + $0x10] sm:$0xf]
        %v8331 = vld [vmem:[%s4401 + $0x14] sm:$0xf]
        %v8332 = vld [vmem:[%s4401 + $0x18] sm:$0xf]
        %v8333 = vld [vmem:[%s4401 + $0x1c] sm:$0xf]
        %v8334 = vld [vmem:[%s4401 + $0x20] sm:$0xf]
        %v8335 = vld [vmem:[%s4401 + $0x24] sm:$0xf]
        %v8336 = vld [vmem:[%s4401 + $0x28] sm:$0xf]
        %v8337 = vld [vmem:[%s4401 + $0x2c] sm:$0xf]
        %v8338 = vld [vmem:[%s4401 + $0x30] sm:$0xf]
        %v8339 = vld [vmem:[%s4401 + $0x34] sm:$0xf]
        %v8340 = vld [vmem:[%s4401 + $0x38] sm:$0xf]
        %v8341 = vld [vmem:[%s4401 + $0x3c] sm:$0xf]
        %v8343 = vshrl.u32 %v8309, 16
        %v8345 = vrot.slane %v8343, 7
        %v8347 = vshrl.u32 %v8310, 16
        %v8349 = vrot.slane %v8347, 7
        %v8350 = vshll.u32 %v8310, 16
        %v8352 = vor.u32 %v8349, %v8350
        %v8353 = vsel %vm2141, %v8345, %v8352
        %v8355 = vshrl.u32 %v8311, 16
        %v8357 = vrot.slane %v8355, 7
        %v8358 = vshll.u32 %v8311, 16
        %v8360 = vor.u32 %v8357, %v8358
        %v8361 = vsel %vm2141, %v8349, %v8360
        %v8363 = vshrl.u32 %v8312, 16
        %v8365 = vrot.slane %v8363, 7
        %v8366 = vshll.u32 %v8312, 16
        %v8368 = vor.u32 %v8365, %v8366
        %v8369 = vsel %vm2141, %v8357, %v8368
        %v8371 = vshrl.u32 %v8313, 16
        %v8373 = vrot.slane %v8371, 7
        %v8374 = vshll.u32 %v8313, 16
        %v8376 = vor.u32 %v8373, %v8374
        %v8377 = vsel %vm2141, %v8365, %v8376
        %v8379 = vshrl.u32 %v8314, 16
        %v8381 = vrot.slane %v8379, 7
        %v8382 = vshll.u32 %v8314, 16
        %v8384 = vor.u32 %v8381, %v8382
        %v8385 = vsel %vm2141, %v8373, %v8384
        %v8387 = vshrl.u32 %v8315, 16
        %v8389 = vrot.slane %v8387, 7
        %v8390 = vshll.u32 %v8315, 16
        %v8392 = vor.u32 %v8389, %v8390
        %v8393 = vsel %vm2141, %v8381, %v8392
        %v8395 = vshrl.u32 %v8316, 16
        %v8397 = vrot.slane %v8395, 7
        %v8398 = vshll.u32 %v8316, 16
        %v8400 = vor.u32 %v8397, %v8398
        %v8401 = vsel %vm2141, %v8389, %v8400
        %v8403 = vshrl.u32 %v8317, 16
        %v8405 = vrot.slane %v8403, 7
        %v8406 = vshll.u32 %v8317, 16
        %v8408 = vor.u32 %v8405, %v8406
        %v8409 = vsel %vm2141, %v8397, %v8408
        %v8411 = vshrl.u32 %v8318, 16
        %v8413 = vrot.slane %v8411, 7
        %v8414 = vshll.u32 %v8318, 16
        %v8416 = vor.u32 %v8413, %v8414
        %v8417 = vsel %vm2141, %v8405, %v8416
        %v8419 = vshrl.u32 %v8319, 16
        %v8421 = vrot.slane %v8419, 7
        %v8422 = vshll.u32 %v8319, 16
        %v8424 = vor.u32 %v8421, %v8422
        %v8425 = vsel %vm2141, %v8413, %v8424
        %v8427 = vshrl.u32 %v8320, 16
        %v8429 = vrot.slane %v8427, 7
        %v8430 = vshll.u32 %v8320, 16
        %v8432 = vor.u32 %v8429, %v8430
        %v8433 = vsel %vm2141, %v8421, %v8432
        %v8435 = vshrl.u32 %v8321, 16
        %v8437 = vrot.slane %v8435, 7
        %v8438 = vshll.u32 %v8321, 16
        %v8440 = vor.u32 %v8437, %v8438
        %v8441 = vsel %vm2141, %v8429, %v8440
        %v8443 = vshrl.u32 %v8322, 16
        %v8445 = vrot.slane %v8443, 7
        %v8446 = vshll.u32 %v8322, 16
        %v8448 = vor.u32 %v8445, %v8446
        %v8449 = vsel %vm2141, %v8437, %v8448
        %v8451 = vshrl.u32 %v8323, 16
        %v8453 = vrot.slane %v8451, 7
        %v8454 = vshll.u32 %v8323, 16
        %v8456 = vor.u32 %v8453, %v8454
        %v8457 = vsel %vm2141, %v8445, %v8456
        %v8459 = vshrl.u32 %v8324, 16
        %v8461 = vrot.slane %v8459, 7
        %v8462 = vshll.u32 %v8324, 16
        %v8464 = vor.u32 %v8461, %v8462
        %v8465 = vsel %vm2141, %v8453, %v8464
        %v8467 = vshrl.u32 %v8325, 16
        %v8469 = vrot.slane %v8467, 7
        %v8470 = vshll.u32 %v8325, 16
        %v8472 = vor.u32 %v8469, %v8470
        %v8473 = vsel %vm2141, %v8461, %v8472
        %v8506 = vunpack.c.l.b16 %v8326
        %v8507 = vunpack.c.l.b16 %v8327
        %v8508 = vunpack.c.l.b16 %v8328
        %v8509 = vunpack.c.l.b16 %v8329
        %v8510 = vunpack.c.l.b16 %v8330
        %v8511 = vunpack.c.l.b16 %v8331
        %v8512 = vunpack.c.l.b16 %v8332
        %v8513 = vunpack.c.l.b16 %v8333
        %v8514 = vunpack.c.l.b16 %v8334
        %v8515 = vunpack.c.l.b16 %v8335
        %v8516 = vunpack.c.l.b16 %v8336
        %v8517 = vunpack.c.l.b16 %v8337
        %v8518 = vunpack.c.l.b16 %v8338
        %v8519 = vunpack.c.l.b16 %v8339
        %v8520 = vunpack.c.l.b16 %v8340
        %v8521 = vunpack.c.l.b16 %v8341
        %v8522 = vpack.c.b16 %v8507, %v8506
        %v8523 = vpack.c.b16 %v8509, %v8508
        %v8524 = vpack.c.b16 %v8511, %v8510
        %v8525 = vpack.c.b16 %v8513, %v8512
        %v8526 = vpack.c.b16 %v8515, %v8514
        %v8527 = vpack.c.b16 %v8517, %v8516
        %v8528 = vpack.c.b16 %v8519, %v8518
        %v8529 = vpack.c.b16 %v8521, %v8520
        %8538 = vmatprep.subr.bf16.mxu0 0
        %8539 = vmatpush1.bf16.msra.mxu0 %v8522
        %8540 = vmatprep.subr.bf16.mxu0 0
        %8541 = vmatpush1.bf16.msra.mxu0 %v8523
        %8542 = vmatprep.subr.bf16.mxu0 0
        %8543 = vmatpush1.bf16.msra.mxu0 %v8524
        %8544 = vmatprep.subr.bf16.mxu0 0
        %8545 = vmatpush1.bf16.msra.mxu0 %v8525
        %8546 = vmatprep.subr.bf16.mxu0 0
        %8547 = vmatpush1.bf16.msra.mxu0 %v8526
        %8548 = vmatprep.subr.bf16.mxu0 0
        %8549 = vmatpush1.bf16.msra.mxu0 %v8527
        %8550 = vmatprep.subr.bf16.mxu0 0
        %8551 = vmatpush1.bf16.msra.mxu0 %v8528
        %8552 = vmatprep.subr.bf16.mxu0 0
        %8553 = vmatpush1.bf16.msra.mxu0 %v8529
        %8554 = vmatprep.subr.bf16.mxu0 0
        %8555 = vmatpush1.bf16.msra.mxu0 0
        %8556 = vmatprep.subr.bf16.mxu0 0
        %8557 = vmatpush1.bf16.msra.mxu0 0
        %8558 = vmatprep.subr.bf16.mxu0 0
        %8559 = vmatpush1.bf16.msra.mxu0 0
        %8560 = vmatprep.subr.bf16.mxu0 0
        %8561 = vmatpush1.bf16.msra.mxu0 0
        %8562 = vmatprep.subr.bf16.mxu0 0
        %8563 = vmatpush1.bf16.msra.mxu0 0
        %8564 = vmatprep.subr.bf16.mxu0 0
        %8565 = vmatpush1.bf16.msra.mxu0 0
        %8566 = vmatprep.subr.bf16.mxu0 0
        %8567 = vmatpush1.bf16.msra.mxu0 0
        %8568 = vmatprep.subr.bf16.mxu0 0
        %8569 = vmatpush1.bf16.msra.mxu0 0
        %8570 = vmatprep.mubr.bf16.mxu0 0
        %8571 = vmatmul.mubr.bf16.gmra.mrb[0].mxu0 %v8353
        %v8572 = vpop.f32.mrb[0].mxu0
        %v8573 = vadd.f32 0.0, %v8572
        %v8574 = vpop.f32.mrb[0].mxu0
        %v8575 = vpop.f32.mrb[0].mxu0
        %v8576 = vadd.f32 0.0, %v8575
        %v8577 = vpop.f32.mrb[0].mxu0
        %8578 = vmatprep.mubr.bf16.mxu0 0
        %8579 = vmatmul.mubr.bf16.gmra.mrb[0].mxu0 %v8361
        %v8580 = vpop.f32.mrb[0].mxu0
        %v8581 = vadd.f32 0.0, %v8580
        %v8582 = vpop.f32.mrb[0].mxu0
        %v8583 = vpop.f32.mrb[0].mxu0
        %v8584 = vadd.f32 0.0, %v8583
        %v8585 = vpop.f32.mrb[0].mxu0
        %8586 = vmatprep.mubr.bf16.mxu0 0
        %8587 = vmatmul.mubr.bf16.gmra.mrb[0].mxu0 %v8369
        %v8588 = vpop.f32.mrb[0].mxu0
        %v8589 = vadd.f32 0.0, %v8588
        %v8590 = vpop.f32.mrb[0].mxu0
        %v8591 = vpop.f32.mrb[0].mxu0
        %v8592 = vadd.f32 0.0, %v8591
        %v8593 = vpop.f32.mrb[0].mxu0
        %8594 = vmatprep.mubr.bf16.mxu0 0
        %8595 = vmatmul.mubr.bf16.gmra.mrb[0].mxu0 %v8377
        %v8596 = vpop.f32.mrb[0].mxu0
        %v8597 = vadd.f32 0.0, %v8596
        %v8598 = vpop.f32.mrb[0].mxu0
        %v8599 = vpop.f32.mrb[0].mxu0
        %v8600 = vadd.f32 0.0, %v8599
        %v8601 = vpop.f32.mrb[0].mxu0
        %8602 = vmatprep.mubr.bf16.mxu0 0
        %8603 = vmatmul.mubr.bf16.gmra.mrb[0].mxu0 %v8385
        %v8604 = vpop.f32.mrb[0].mxu0
        %v8605 = vadd.f32 0.0, %v8604
        %v8606 = vpop.f32.mrb[0].mxu0
        %v8607 = vpop.f32.mrb[0].mxu0
        %v8608 = vadd.f32 0.0, %v8607
        %v8609 = vpop.f32.mrb[0].mxu0
        %8610 = vmatprep.mubr.bf16.mxu0 0
        %8611 = vmatmul.mubr.bf16.gmra.mrb[0].mxu0 %v8393
        %v8612 = vpop.f32.mrb[0].mxu0
        %v8613 = vadd.f32 0.0, %v8612
        %v8614 = vpop.f32.mrb[0].mxu0
        %v8615 = vpop.f32.mrb[0].mxu0
        %v8616 = vadd.f32 0.0, %v8615
        %v8617 = vpop.f32.mrb[0].mxu0
        %8618 = vmatprep.mubr.bf16.mxu0 0
        %8619 = vmatmul.mubr.bf16.gmra.mrb[0].mxu0 %v8401
        %v8620 = vpop.f32.mrb[0].mxu0
        %v8621 = vadd.f32 0.0, %v8620
        %v8622 = vpop.f32.mrb[0].mxu0
        %v8623 = vpop.f32.mrb[0].mxu0
        %v8624 = vadd.f32 0.0, %v8623
        %v8625 = vpop.f32.mrb[0].mxu0
        %8626 = vmatprep.mubr.bf16.mxu0 0
        %8627 = vmatmul.mubr.bf16.gmra.mrb[0].mxu0 %v8409
        %v8628 = vpop.f32.mrb[0].mxu0
        %v8629 = vadd.f32 0.0, %v8628
        %v8630 = vpop.f32.mrb[0].mxu0
        %v8631 = vpop.f32.mrb[0].mxu0
        %v8632 = vadd.f32 0.0, %v8631
        %v8633 = vpop.f32.mrb[0].mxu0
        %8634 = vmatprep.mubr.bf16.mxu0 0
        %8635 = vmatmul.mubr.bf16.gmra.mrb[0].mxu0 %v8417
        %v8636 = vpop.f32.mrb[0].mxu0
        %v8637 = vadd.f32 0.0, %v8636
        %v8638 = vpop.f32.mrb[0].mxu0
        %v8639 = vpop.f32.mrb[0].mxu0
        %v8640 = vadd.f32 0.0, %v8639
        %v8641 = vpop.f32.mrb[0].mxu0
        %8642 = vmatprep.mubr.bf16.mxu0 0
        %8643 = vmatmul.mubr.bf16.gmra.mrb[0].mxu0 %v8425
        %v8644 = vpop.f32.mrb[0].mxu0
        %v8645 = vadd.f32 0.0, %v8644
        %v8646 = vpop.f32.mrb[0].mxu0
        %v8647 = vpop.f32.mrb[0].mxu0
        %v8648 = vadd.f32 0.0, %v8647
        %v8649 = vpop.f32.mrb[0].mxu0
        %8650 = vmatprep.mubr.bf16.mxu0 0
        %8651 = vmatmul.mubr.bf16.gmra.mrb[0].mxu0 %v8433
        %v8652 = vpop.f32.mrb[0].mxu0
        %v8653 = vadd.f32 0.0, %v8652
        %v8654 = vpop.f32.mrb[0].mxu0
        %v8655 = vpop.f32.mrb[0].mxu0
        %v8656 = vadd.f32 0.0, %v8655
        %v8657 = vpop.f32.mrb[0].mxu0
        %8658 = vmatprep.mubr.bf16.mxu0 0
        %8659 = vmatmul.mubr.bf16.gmra.mrb[0].mxu0 %v8441
        %v8660 = vpop.f32.mrb[0].mxu0
        %v8661 = vadd.f32 0.0, %v8660
        %v8662 = vpop.f32.mrb[0].mxu0
        %v8663 = vpop.f32.mrb[0].mxu0
        %v8664 = vadd.f32 0.0, %v8663
        %v8665 = vpop.f32.mrb[0].mxu0
        %8666 = vmatprep.mubr.bf16.mxu0 0
        %8667 = vmatmul.mubr.bf16.gmra.mrb[0].mxu0 %v8449
        %v8668 = vpop.f32.mrb[0].mxu0
        %v8669 = vadd.f32 0.0, %v8668
        %v8670 = vpop.f32.mrb[0].mxu0
        %v8671 = vpop.f32.mrb[0].mxu0
        %v8672 = vadd.f32 0.0, %v8671
        %v8673 = vpop.f32.mrb[0].mxu0
        %8674 = vmatprep.mubr.bf16.mxu0 0
        %8675 = vmatmul.mubr.bf16.gmra.mrb[0].mxu0 %v8457
        %v8676 = vpop.f32.mrb[0].mxu0
        %v8677 = vadd.f32 0.0, %v8676
        %v8678 = vpop.f32.mrb[0].mxu0
        %v8679 = vpop.f32.mrb[0].mxu0
        %v8680 = vadd.f32 0.0, %v8679
        %v8681 = vpop.f32.mrb[0].mxu0
        %8682 = vmatprep.mubr.bf16.mxu0 0
        %8683 = vmatmul.mubr.bf16.gmra.mrb[0].mxu0 %v8465
        %v8684 = vpop.f32.mrb[0].mxu0
        %v8685 = vadd.f32 0.0, %v8684
        %v8686 = vpop.f32.mrb[0].mxu0
        %v8687 = vpop.f32.mrb[0].mxu0
        %v8688 = vadd.f32 0.0, %v8687
        %v8689 = vpop.f32.mrb[0].mxu0
        %8690 = vmatprep.mubr.bf16.mxu0 0
        %8691 = vmatmul.mubr.bf16.gmra.mrb[0].mxu0 %v8473
        %v8692 = vpop.f32.mrb[0].mxu0
        %v8693 = vadd.f32 0.0, %v8692
        %v8694 = vpop.f32.mrb[0].mxu0
        %v8695 = vpop.f32.mrb[0].mxu0
        %v8696 = vadd.f32 0.0, %v8695
        %v8697 = vpop.f32.mrb[0].mxu0
        %8698 = vdwg.mxu0
        %v8699 = vadd.f32 %v8275, %v8573
        %v8700 = vadd.f32 %v8276, %v8576
        %v8701 = vadd.f32 %v8277, %v8581
        %v8702 = vadd.f32 %v8278, %v8584
        %v8703 = vadd.f32 %v8279, %v8589
        %v8704 = vadd.f32 %v8280, %v8592
        %v8705 = vadd.f32 %v8281, %v8597
        %v8706 = vadd.f32 %v8282, %v8600
        %v8707 = vadd.f32 %v8283, %v8605
        %v8708 = vadd.f32 %v8284, %v8608
        %v8709 = vadd.f32 %v8285, %v8613
        %v8710 = vadd.f32 %v8286, %v8616
        %v8711 = vadd.f32 %v8287, %v8621
        %v8712 = vadd.f32 %v8288, %v8624
        %v8713 = vadd.f32 %v8289, %v8629
        %v8714 = vadd.f32 %v8290, %v8632
        %v8715 = vadd.f32 %v8291, %v8637
        %v8716 = vadd.f32 %v8292, %v8640
        %v8717 = vadd.f32 %v8293, %v8645
        %v8718 = vadd.f32 %v8294, %v8648
        %v8719 = vadd.f32 %v8295, %v8653
        %v8720 = vadd.f32 %v8296, %v8656
        %v8721 = vadd.f32 %v8297, %v8661
        %v8722 = vadd.f32 %v8298, %v8664
        %v8723 = vadd.f32 %v8299, %v8669
        %v8724 = vadd.f32 %v8300, %v8672
        %v8725 = vadd.f32 %v8301, %v8677
        %v8726 = vadd.f32 %v8302, %v8680
        %v8727 = vadd.f32 %v8303, %v8685
        %v8728 = vadd.f32 %v8304, %v8688
        %v8729 = vadd.f32 %v8305, %v8693
        %v8730 = vadd.f32 %v8306, %v8696
        %v8731 = vld [vmem:[%s4807] sm:$0xf]
        %v8732 = vld [vmem:[%s4807 + $0x4] sm:$0xf]
        %v8733 = vld [vmem:[%s4807 + $0x8] sm:$0xf]
        %v8734 = vld [vmem:[%s4807 + $0xc] sm:$0xf]
        %v8735 = vld [vmem:[%s4807 + $0x10] sm:$0xf]
        %v8736 = vld [vmem:[%s4807 + $0x14] sm:$0xf]
        %v8737 = vld [vmem:[%s4807 + $0x18] sm:$0xf]
        %v8738 = vld [vmem:[%s4807 + $0x1c] sm:$0xf]
        %v8739 = vld [vmem:[%s4807 + $0x20] sm:$0xf]
        %v8740 = vld [vmem:[%s4807 + $0x24] sm:$0xf]
        %v8741 = vld [vmem:[%s4807 + $0x28] sm:$0xf]
        %v8742 = vld [vmem:[%s4807 + $0x2c] sm:$0xf]
        %v8743 = vld [vmem:[%s4807 + $0x30] sm:$0xf]
        %v8744 = vld [vmem:[%s4807 + $0x34] sm:$0xf]
        %v8745 = vld [vmem:[%s4807 + $0x38] sm:$0xf]
        %v8746 = vld [vmem:[%s4807 + $0x3c] sm:$0xf]
        %v8763 = vunpack.c.l.b16 %v8731
        %v8764 = vunpack.c.l.b16 %v8732
        %v8765 = vunpack.c.l.b16 %v8733
        %v8766 = vunpack.c.l.b16 %v8734
        %v8767 = vunpack.c.l.b16 %v8735
        %v8768 = vunpack.c.l.b16 %v8736
        %v8769 = vunpack.c.l.b16 %v8737
        %v8770 = vunpack.c.l.b16 %v8738
        %v8771 = vunpack.c.l.b16 %v8739
        %v8772 = vunpack.c.l.b16 %v8740
        %v8773 = vunpack.c.l.b16 %v8741
        %v8774 = vunpack.c.l.b16 %v8742
        %v8775 = vunpack.c.l.b16 %v8743
        %v8776 = vunpack.c.l.b16 %v8744
        %v8777 = vunpack.c.l.b16 %v8745
        %v8778 = vunpack.c.l.b16 %v8746
        %v8779 = vpack.c.b16 %v8764, %v8763
        %v8780 = vpack.c.b16 %v8766, %v8765
        %v8781 = vpack.c.b16 %v8768, %v8767
        %v8782 = vpack.c.b16 %v8770, %v8769
        %v8783 = vpack.c.b16 %v8772, %v8771
        %v8784 = vpack.c.b16 %v8774, %v8773
        %v8785 = vpack.c.b16 %v8776, %v8775
        %v8786 = vpack.c.b16 %v8778, %v8777
        %8795 = vmatprep.subr.bf16.mxu0 0
        %8796 = vmatpush1.bf16.msra.mxu0 %v8779
        %8797 = vmatprep.subr.bf16.mxu0 0
        %8798 = vmatpush1.bf16.msra.mxu0 %v8780
        %8799 = vmatprep.subr.bf16.mxu0 0
        %8800 = vmatpush1.bf16.msra.mxu0 %v8781
        %8801 = vmatprep.subr.bf16.mxu0 0
        %8802 = vmatpush1.bf16.msra.mxu0 %v8782
        %8803 = vmatprep.subr.bf16.mxu0 0
        %8804 = vmatpush1.bf16.msra.mxu0 %v8783
        %8805 = vmatprep.subr.bf16.mxu0 0
        %8806 = vmatpush1.bf16.msra.mxu0 %v8784
        %8807 = vmatprep.subr.bf16.mxu0 0
        %8808 = vmatpush1.bf16.msra.mxu0 %v8785
        %8809 = vmatprep.subr.bf16.mxu0 0
        %8810 = vmatpush1.bf16.msra.mxu0 %v8786
        %8811 = vmatprep.subr.bf16.mxu0 0
        %8812 = vmatpush1.bf16.msra.mxu0 0
        %8813 = vmatprep.subr.bf16.mxu0 0
        %8814 = vmatpush1.bf16.msra.mxu0 0
        %8815 = vmatprep.subr.bf16.mxu0 0
        %8816 = vmatpush1.bf16.msra.mxu0 0
        %8817 = vmatprep.subr.bf16.mxu0 0
        %8818 = vmatpush1.bf16.msra.mxu0 0
        %8819 = vmatprep.subr.bf16.mxu0 0
        %8820 = vmatpush1.bf16.msra.mxu0 0
        %8821 = vmatprep.subr.bf16.mxu0 0
        %8822 = vmatpush1.bf16.msra.mxu0 0
        %8823 = vmatprep.subr.bf16.mxu0 0
        %8824 = vmatpush1.bf16.msra.mxu0 0
        %8825 = vmatprep.subr.bf16.mxu0 0
        %8826 = vmatpush1.bf16.msra.mxu0 0
        %8827 = vmatprep.mubr.bf16.mxu0 0
        %8828 = vmatmul.mubr.bf16.gmra.mrb[0].mxu0 %v7869
        %v8829 = vpop.f32.mrb[0].mxu0
        %v8830 = vadd.f32 0.0, %v8829
        %v8831 = vpop.f32.mrb[0].mxu0
        %v8832 = vpop.f32.mrb[0].mxu0
        %v8833 = vadd.f32 0.0, %v8832
        %v8834 = vpop.f32.mrb[0].mxu0
        %8835 = vmatprep.mubr.bf16.mxu0 0
        %8836 = vmatmul.mubr.bf16.gmra.mrb[0].mxu0 %v7870
        %v8837 = vpop.f32.mrb[0].mxu0
        %v8838 = vadd.f32 0.0, %v8837
        %v8839 = vpop.f32.mrb[0].mxu0
        %v8840 = vpop.f32.mrb[0].mxu0
        %v8841 = vadd.f32 0.0, %v8840
        %v8842 = vpop.f32.mrb[0].mxu0
        %8843 = vmatprep.mubr.bf16.mxu0 0
        %8844 = vmatmul.mubr.bf16.gmra.mrb[0].mxu0 %v7871
        %v8845 = vpop.f32.mrb[0].mxu0
        %v8846 = vadd.f32 0.0, %v8845
        %v8847 = vpop.f32.mrb[0].mxu0
        %v8848 = vpop.f32.mrb[0].mxu0
        %v8849 = vadd.f32 0.0, %v8848
        %v8850 = vpop.f32.mrb[0].mxu0
        %8851 = vmatprep.mubr.bf16.mxu0 0
        %8852 = vmatmul.mubr.bf16.gmra.mrb[0].mxu0 %v7872
        %v8853 = vpop.f32.mrb[0].mxu0
        %v8854 = vadd.f32 0.0, %v8853
        %v8855 = vpop.f32.mrb[0].mxu0
        %v8856 = vpop.f32.mrb[0].mxu0
        %v8857 = vadd.f32 0.0, %v8856
        %v8858 = vpop.f32.mrb[0].mxu0
        %8859 = vmatprep.mubr.bf16.mxu0 0
        %8860 = vmatmul.mubr.bf16.gmra.mrb[0].mxu0 %v7873
        %v8861 = vpop.f32.mrb[0].mxu0
        %v8862 = vadd.f32 0.0, %v8861
        %v8863 = vpop.f32.mrb[0].mxu0
        %v8864 = vpop.f32.mrb[0].mxu0
        %v8865 = vadd.f32 0.0, %v8864
        %v8866 = vpop.f32.mrb[0].mxu0
        %8867 = vmatprep.mubr.bf16.mxu0 0
        %8868 = vmatmul.mubr.bf16.gmra.mrb[0].mxu0 %v7874
        %v8869 = vpop.f32.mrb[0].mxu0
        %v8870 = vadd.f32 0.0, %v8869
        %v8871 = vpop.f32.mrb[0].mxu0
        %v8872 = vpop.f32.mrb[0].mxu0
        %v8873 = vadd.f32 0.0, %v8872
        %v8874 = vpop.f32.mrb[0].mxu0
        %8875 = vmatprep.mubr.bf16.mxu0 0
        %8876 = vmatmul.mubr.bf16.gmra.mrb[0].mxu0 %v7875
        %v8877 = vpop.f32.mrb[0].mxu0
        %v8878 = vadd.f32 0.0, %v8877
        %v8879 = vpop.f32.mrb[0].mxu0
        %v8880 = vpop.f32.mrb[0].mxu0
        %v8881 = vadd.f32 0.0, %v8880
        %v8882 = vpop.f32.mrb[0].mxu0
        %8883 = vmatprep.mubr.bf16.mxu0 0
        %8884 = vmatmul.mubr.bf16.gmra.mrb[0].mxu0 %v7876
        %v8885 = vpop.f32.mrb[0].mxu0
        %v8886 = vadd.f32 0.0, %v8885
        %v8887 = vpop.f32.mrb[0].mxu0
        %v8888 = vpop.f32.mrb[0].mxu0
        %v8889 = vadd.f32 0.0, %v8888
        %v8890 = vpop.f32.mrb[0].mxu0
        %8891 = vmatprep.mubr.bf16.mxu0 0
        %8892 = vmatmul.mubr.bf16.gmra.mrb[0].mxu0 %v7877
        %v8893 = vpop.f32.mrb[0].mxu0
        %v8894 = vadd.f32 0.0, %v8893
        %v8895 = vpop.f32.mrb[0].mxu0
        %v8896 = vpop.f32.mrb[0].mxu0
        %v8897 = vadd.f32 0.0, %v8896
        %v8898 = vpop.f32.mrb[0].mxu0
        %8899 = vmatprep.mubr.bf16.mxu0 0
        %8900 = vmatmul.mubr.bf16.gmra.mrb[0].mxu0 %v7878
        %v8901 = vpop.f32.mrb[0].mxu0
        %v8902 = vadd.f32 0.0, %v8901
        %v8903 = vpop.f32.mrb[0].mxu0
        %v8904 = vpop.f32.mrb[0].mxu0
        %v8905 = vadd.f32 0.0, %v8904
        %v8906 = vpop.f32.mrb[0].mxu0
        %8907 = vmatprep.mubr.bf16.mxu0 0
        %8908 = vmatmul.mubr.bf16.gmra.mrb[0].mxu0 %v7879
        %v8909 = vpop.f32.mrb[0].mxu0
        %v8910 = vadd.f32 0.0, %v8909
        %v8911 = vpop.f32.mrb[0].mxu0
        %v8912 = vpop.f32.mrb[0].mxu0
        %v8913 = vadd.f32 0.0, %v8912
        %v8914 = vpop.f32.mrb[0].mxu0
        %8915 = vmatprep.mubr.bf16.mxu0 0
        %8916 = vmatmul.mubr.bf16.gmra.mrb[0].mxu0 %v7880
        %v8917 = vpop.f32.mrb[0].mxu0
        %v8918 = vadd.f32 0.0, %v8917
        %v8919 = vpop.f32.mrb[0].mxu0
        %v8920 = vpop.f32.mrb[0].mxu0
        %v8921 = vadd.f32 0.0, %v8920
        %v8922 = vpop.f32.mrb[0].mxu0
        %8923 = vmatprep.mubr.bf16.mxu0 0
        %8924 = vmatmul.mubr.bf16.gmra.mrb[0].mxu0 %v7881
        %v8925 = vpop.f32.mrb[0].mxu0
        %v8926 = vadd.f32 0.0, %v8925
        %v8927 = vpop.f32.mrb[0].mxu0
        %v8928 = vpop.f32.mrb[0].mxu0
        %v8929 = vadd.f32 0.0, %v8928
        %v8930 = vpop.f32.mrb[0].mxu0
        %8931 = vmatprep.mubr.bf16.mxu0 0
        %8932 = vmatmul.mubr.bf16.gmra.mrb[0].mxu0 %v7882
        %v8933 = vpop.f32.mrb[0].mxu0
        %v8934 = vadd.f32 0.0, %v8933
        %v8935 = vpop.f32.mrb[0].mxu0
        %v8936 = vpop.f32.mrb[0].mxu0
        %v8937 = vadd.f32 0.0, %v8936
        %v8938 = vpop.f32.mrb[0].mxu0
        %8939 = vmatprep.mubr.bf16.mxu0 0
        %8940 = vmatmul.mubr.bf16.gmra.mrb[0].mxu0 %v7883
        %v8941 = vpop.f32.mrb[0].mxu0
        %v8942 = vadd.f32 0.0, %v8941
        %v8943 = vpop.f32.mrb[0].mxu0
        %v8944 = vpop.f32.mrb[0].mxu0
        %v8945 = vadd.f32 0.0, %v8944
        %v8946 = vpop.f32.mrb[0].mxu0
        %8947 = vmatprep.mubr.bf16.mxu0 0
        %8948 = vmatmul.mubr.bf16.gmra.mrb[0].mxu0 %v8308
        %v8949 = vpop.f32.mrb[0].mxu0
        %v8950 = vadd.f32 0.0, %v8949
        %v8951 = vpop.f32.mrb[0].mxu0
        %v8952 = vpop.f32.mrb[0].mxu0
        %v8953 = vadd.f32 0.0, %v8952
        %v8954 = vpop.f32.mrb[0].mxu0
        %8955 = vdwg.mxu0
        %v8956 = vadd.f32 %v8699, %v8830
        %v8957 = vadd.f32 %v8700, %v8833
        %v8958 = vadd.f32 %v8701, %v8838
        %v8959 = vadd.f32 %v8702, %v8841
        %v8960 = vadd.f32 %v8703, %v8846
        %v8961 = vadd.f32 %v8704, %v8849
        %v8962 = vadd.f32 %v8705, %v8854
        %v8963 = vadd.f32 %v8706, %v8857
        %v8964 = vadd.f32 %v8707, %v8862
        %v8965 = vadd.f32 %v8708, %v8865
        %v8966 = vadd.f32 %v8709, %v8870
        %v8967 = vadd.f32 %v8710, %v8873
        %v8968 = vadd.f32 %v8711, %v8878
        %v8969 = vadd.f32 %v8712, %v8881
        %v8970 = vadd.f32 %v8713, %v8886
        %v8971 = vadd.f32 %v8714, %v8889
        %v8972 = vadd.f32 %v8715, %v8894
        %v8973 = vadd.f32 %v8716, %v8897
        %v8974 = vadd.f32 %v8717, %v8902
        %v8975 = vadd.f32 %v8718, %v8905
        %v8976 = vadd.f32 %v8719, %v8910
        %v8977 = vadd.f32 %v8720, %v8913
        %v8978 = vadd.f32 %v8721, %v8918
        %v8979 = vadd.f32 %v8722, %v8921
        %v8980 = vadd.f32 %v8723, %v8926
        %v8981 = vadd.f32 %v8724, %v8929
        %v8982 = vadd.f32 %v8725, %v8934
        %v8983 = vadd.f32 %v8726, %v8937
        %v8984 = vadd.f32 %v8727, %v8942
        %v8985 = vadd.f32 %v8728, %v8945
        %v8986 = vadd.f32 %v8729, %v8950
        %v8987 = vadd.f32 %v8730, %v8953
        %v8988 = vld [vmem:[#allocation2 + $0xb8] sm:$0xff]
        %v8989 = vld [vmem:[#allocation2 + $0xc0] sm:$0xff]
        %v8990 = vld [vmem:[#allocation2 + $0xc8] sm:$0xff]
        %v8991 = vld [vmem:[#allocation2 + $0xd0] sm:$0xff]
        %v8992 = vld [vmem:[#allocation2 + $0xd8] sm:$0xff]
        %v8993 = vld [vmem:[#allocation2 + $0xe0] sm:$0xff]
        %v8994 = vld [vmem:[#allocation2 + $0xe8] sm:$0xff]
        %v8995 = vld [vmem:[#allocation2 + $0xf0] sm:$0xff]
        %v8996 = vld [vmem:[#allocation2 + $0xf8] sm:$0xff]
        %v8997 = vld [vmem:[#allocation2 + $0x100] sm:$0xff]
        %v8998 = vld [vmem:[#allocation2 + $0x108] sm:$0xff]
        %v8999 = vld [vmem:[#allocation2 + $0x110] sm:$0xff]
        %v9000 = vld [vmem:[#allocation2 + $0x118] sm:$0xff]
        %v9001 = vld [vmem:[#allocation2 + $0x120] sm:$0xff]
        %v9002 = vld [vmem:[#allocation2 + $0x128] sm:$0xff]
        %v9003 = vld [vmem:[#allocation2 + $0x130] sm:$0xff]
        %v9004 = vld [vmem:[#allocation2 + $0x138] sm:$0x1]
        %v9005 = vsel %vm2819, %v8988, 0
        %v9006 = vsel %vm2820, %v8989, 0
        %v9007 = vsel %vm2821, %v8990, 0
        %v9008 = vsel %vm2822, %v8991, 0
        %v9009 = vsel %vm2823, %v8992, 0
        %v9010 = vsel %vm2824, %v8993, 0
        %v9011 = vsel %vm2825, %v8994, 0
        %v9012 = vsel %vm2826, %v8995, 0
        %v9013 = vsel %vm2827, %v8996, 0
        %v9014 = vsel %vm2828, %v8997, 0
        %v9015 = vsel %vm2829, %v8998, 0
        %v9016 = vsel %vm2830, %v8999, 0
        %v9017 = vsel %vm2831, %v9000, 0
        %v9018 = vsel %vm2832, %v9001, 0
        %v9019 = vsel %vm2833, %v9002, 0
        %v9020 = vsel %vm2834, %v9003, 0
        %v9021 = vsel %vm2835, %v9004, 0
        %v9022 = vld [vmem:[%s5099] sm:$0xf]
        %v9023 = vld [vmem:[%s5099 + $0x4] sm:$0xf]
        %v9024 = vld [vmem:[%s5099 + $0x8] sm:$0xf]
        %v9025 = vld [vmem:[%s5099 + $0xc] sm:$0xf]
        %v9026 = vld [vmem:[%s5099 + $0x10] sm:$0xf]
        %v9027 = vld [vmem:[%s5099 + $0x14] sm:$0xf]
        %v9028 = vld [vmem:[%s5099 + $0x18] sm:$0xf]
        %v9029 = vld [vmem:[%s5099 + $0x1c] sm:$0xf]
        %v9030 = vld [vmem:[%s5099 + $0x20] sm:$0xf]
        %v9031 = vld [vmem:[%s5099 + $0x24] sm:$0xf]
        %v9032 = vld [vmem:[%s5099 + $0x28] sm:$0xf]
        %v9033 = vld [vmem:[%s5099 + $0x2c] sm:$0xf]
        %v9034 = vld [vmem:[%s5099 + $0x30] sm:$0xf]
        %v9035 = vld [vmem:[%s5099 + $0x34] sm:$0xf]
        %v9036 = vld [vmem:[%s5099 + $0x38] sm:$0xf]
        %v9037 = vld [vmem:[%s5099 + $0x3c] sm:$0xf]
        %v9039 = vshrl.u32 %v9005, 16
        %v9041 = vshll.u32 %v9005, 16
        %v9043 = vrot.slane %v9041, 1
        %v9044 = vor.u32 %v9039, %v9043
        %v9046 = vshll.u32 %v9006, 16
        %v9048 = vrot.slane %v9046, 1
        %v9049 = vsel %vm1737, %v9044, %v9048
        %v9050 = vshrl.u32 %v9006, 16
        %v9052 = vor.u32 %v9050, %v9048
        %v9054 = vshll.u32 %v9007, 16
        %v9056 = vrot.slane %v9054, 1
        %v9057 = vsel %vm1737, %v9052, %v9056
        %v9058 = vshrl.u32 %v9007, 16
        %v9060 = vor.u32 %v9058, %v9056
        %v9062 = vshll.u32 %v9008, 16
        %v9064 = vrot.slane %v9062, 1
        %v9065 = vsel %vm1737, %v9060, %v9064
        %v9066 = vshrl.u32 %v9008, 16
        %v9068 = vor.u32 %v9066, %v9064
        %v9070 = vshll.u32 %v9009, 16
        %v9072 = vrot.slane %v9070, 1
        %v9073 = vsel %vm1737, %v9068, %v9072
        %v9074 = vshrl.u32 %v9009, 16
        %v9076 = vor.u32 %v9074, %v9072
        %v9078 = vshll.u32 %v9010, 16
        %v9080 = vrot.slane %v9078, 1
        %v9081 = vsel %vm1737, %v9076, %v9080
        %v9082 = vshrl.u32 %v9010, 16
        %v9084 = vor.u32 %v9082, %v9080
        %v9086 = vshll.u32 %v9011, 16
        %v9088 = vrot.slane %v9086, 1
        %v9089 = vsel %vm1737, %v9084, %v9088
        %v9090 = vshrl.u32 %v9011, 16
        %v9092 = vor.u32 %v9090, %v9088
        %v9094 = vshll.u32 %v9012, 16
        %v9096 = vrot.slane %v9094, 1
        %v9097 = vsel %vm1737, %v9092, %v9096
        %v9098 = vshrl.u32 %v9012, 16
        %v9100 = vor.u32 %v9098, %v9096
        %v9102 = vshll.u32 %v9013, 16
        %v9104 = vrot.slane %v9102, 1
        %v9105 = vsel %vm1737, %v9100, %v9104
        %v9106 = vshrl.u32 %v9013, 16
        %v9108 = vor.u32 %v9106, %v9104
        %v9110 = vshll.u32 %v9014, 16
        %v9112 = vrot.slane %v9110, 1
        %v9113 = vsel %vm1737, %v9108, %v9112
        %v9114 = vshrl.u32 %v9014, 16
        %v9116 = vor.u32 %v9114, %v9112
        %v9118 = vshll.u32 %v9015, 16
        %v9120 = vrot.slane %v9118, 1
        %v9121 = vsel %vm1737, %v9116, %v9120
        %v9122 = vshrl.u32 %v9015, 16
        %v9124 = vor.u32 %v9122, %v9120
        %v9126 = vshll.u32 %v9016, 16
        %v9128 = vrot.slane %v9126, 1
        %v9129 = vsel %vm1737, %v9124, %v9128
        %v9130 = vshrl.u32 %v9016, 16
        %v9132 = vor.u32 %v9130, %v9128
        %v9134 = vshll.u32 %v9017, 16
        %v9136 = vrot.slane %v9134, 1
        %v9137 = vsel %vm1737, %v9132, %v9136
        %v9138 = vshrl.u32 %v9017, 16
        %v9140 = vor.u32 %v9138, %v9136
        %v9142 = vshll.u32 %v9018, 16
        %v9144 = vrot.slane %v9142, 1
        %v9145 = vsel %vm1737, %v9140, %v9144
        %v9146 = vshrl.u32 %v9018, 16
        %v9148 = vor.u32 %v9146, %v9144
        %v9150 = vshll.u32 %v9019, 16
        %v9152 = vrot.slane %v9150, 1
        %v9153 = vsel %vm1737, %v9148, %v9152
        %v9154 = vshrl.u32 %v9019, 16
        %v9156 = vor.u32 %v9154, %v9152
        %v9158 = vshll.u32 %v9020, 16
        %v9160 = vrot.slane %v9158, 1
        %v9161 = vsel %vm1737, %v9156, %v9160
        %v9162 = vshrl.u32 %v9020, 16
        %v9164 = vor.u32 %v9162, %v9160
        %v9166 = vshll.u32 %v9021, 16
        %v9168 = vrot.slane %v9166, 1
        %v9169 = vsel %vm1737, %v9164, %v9168
        %v9202 = vunpack.c.l.b16 %v9022
        %v9203 = vunpack.c.l.b16 %v9023
        %v9204 = vunpack.c.l.b16 %v9024
        %v9205 = vunpack.c.l.b16 %v9025
        %v9206 = vunpack.c.l.b16 %v9026
        %v9207 = vunpack.c.l.b16 %v9027
        %v9208 = vunpack.c.l.b16 %v9028
        %v9209 = vunpack.c.l.b16 %v9029
        %v9210 = vunpack.c.l.b16 %v9030
        %v9211 = vunpack.c.l.b16 %v9031
        %v9212 = vunpack.c.l.b16 %v9032
        %v9213 = vunpack.c.l.b16 %v9033
        %v9214 = vunpack.c.l.b16 %v9034
        %v9215 = vunpack.c.l.b16 %v9035
        %v9216 = vunpack.c.l.b16 %v9036
        %v9217 = vunpack.c.l.b16 %v9037
        %v9218 = vpack.c.b16 %v9203, %v9202
        %v9219 = vpack.c.b16 %v9205, %v9204
        %v9220 = vpack.c.b16 %v9207, %v9206
        %v9221 = vpack.c.b16 %v9209, %v9208
        %v9222 = vpack.c.b16 %v9211, %v9210
        %v9223 = vpack.c.b16 %v9213, %v9212
        %v9224 = vpack.c.b16 %v9215, %v9214
        %v9225 = vpack.c.b16 %v9217, %v9216
        %9234 = vmatprep.subr.bf16.mxu0 0
        %9235 = vmatpush1.bf16.msra.mxu0 %v9218
        %9236 = vmatprep.subr.bf16.mxu0 0
        %9237 = vmatpush1.bf16.msra.mxu0 %v9219
        %9238 = vmatprep.subr.bf16.mxu0 0
        %9239 = vmatpush1.bf16.msra.mxu0 %v9220
        %9240 = vmatprep.subr.bf16.mxu0 0
        %9241 = vmatpush1.bf16.msra.mxu0 %v9221
        %9242 = vmatprep.subr.bf16.mxu0 0
        %9243 = vmatpush1.bf16.msra.mxu0 %v9222
        %9244 = vmatprep.subr.bf16.mxu0 0
        %9245 = vmatpush1.bf16.msra.mxu0 %v9223
        %9246 = vmatprep.subr.bf16.mxu0 0
        %9247 = vmatpush1.bf16.msra.mxu0 %v9224
        %9248 = vmatprep.subr.bf16.mxu0 0
        %9249 = vmatpush1.bf16.msra.mxu0 %v9225
        %9250 = vmatprep.subr.bf16.mxu0 0
        %9251 = vmatpush1.bf16.msra.mxu0 0
        %9252 = vmatprep.subr.bf16.mxu0 0
        %9253 = vmatpush1.bf16.msra.mxu0 0
        %9254 = vmatprep.subr.bf16.mxu0 0
        %9255 = vmatpush1.bf16.msra.mxu0 0
        %9256 = vmatprep.subr.bf16.mxu0 0
        %9257 = vmatpush1.bf16.msra.mxu0 0
        %9258 = vmatprep.subr.bf16.mxu0 0
        %9259 = vmatpush1.bf16.msra.mxu0 0
        %9260 = vmatprep.subr.bf16.mxu0 0
        %9261 = vmatpush1.bf16.msra.mxu0 0
        %9262 = vmatprep.subr.bf16.mxu0 0
        %9263 = vmatpush1.bf16.msra.mxu0 0
        %9264 = vmatprep.subr.bf16.mxu0 0
        %9265 = vmatpush1.bf16.msra.mxu0 0
        %9266 = vmatprep.mubr.bf16.mxu0 0
        %9267 = vmatmul.mubr.bf16.gmra.mrb[0].mxu0 %v9049
        %v9268 = vpop.f32.mrb[0].mxu0
        %v9269 = vadd.f32 0.0, %v9268
        %v9270 = vpop.f32.mrb[0].mxu0
        %v9271 = vpop.f32.mrb[0].mxu0
        %v9272 = vadd.f32 0.0, %v9271
        %v9273 = vpop.f32.mrb[0].mxu0
        %9274 = vmatprep.mubr.bf16.mxu0 0
        %9275 = vmatmul.mubr.bf16.gmra.mrb[0].mxu0 %v9057
        %v9276 = vpop.f32.mrb[0].mxu0
        %v9277 = vadd.f32 0.0, %v9276
        %v9278 = vpop.f32.mrb[0].mxu0
        %v9279 = vpop.f32.mrb[0].mxu0
        %v9280 = vadd.f32 0.0, %v9279
        %v9281 = vpop.f32.mrb[0].mxu0
        %9282 = vmatprep.mubr.bf16.mxu0 0
        %9283 = vmatmul.mubr.bf16.gmra.mrb[0].mxu0 %v9065
        %v9284 = vpop.f32.mrb[0].mxu0
        %v9285 = vadd.f32 0.0, %v9284
        %v9286 = vpop.f32.mrb[0].mxu0
        %v9287 = vpop.f32.mrb[0].mxu0
        %v9288 = vadd.f32 0.0, %v9287
        %v9289 = vpop.f32.mrb[0].mxu0
        %9290 = vmatprep.mubr.bf16.mxu0 0
        %9291 = vmatmul.mubr.bf16.gmra.mrb[0].mxu0 %v9073
        %v9292 = vpop.f32.mrb[0].mxu0
        %v9293 = vadd.f32 0.0, %v9292
        %v9294 = vpop.f32.mrb[0].mxu0
        %v9295 = vpop.f32.mrb[0].mxu0
        %v9296 = vadd.f32 0.0, %v9295
        %v9297 = vpop.f32.mrb[0].mxu0
        %9298 = vmatprep.mubr.bf16.mxu0 0
        %9299 = vmatmul.mubr.bf16.gmra.mrb[0].mxu0 %v9081
        %v9300 = vpop.f32.mrb[0].mxu0
        %v9301 = vadd.f32 0.0, %v9300
        %v9302 = vpop.f32.mrb[0].mxu0
        %v9303 = vpop.f32.mrb[0].mxu0
        %v9304 = vadd.f32 0.0, %v9303
        %v9305 = vpop.f32.mrb[0].mxu0
        %9306 = vmatprep.mubr.bf16.mxu0 0
        %9307 = vmatmul.mubr.bf16.gmra.mrb[0].mxu0 %v9089
        %v9308 = vpop.f32.mrb[0].mxu0
        %v9309 = vadd.f32 0.0, %v9308
        %v9310 = vpop.f32.mrb[0].mxu0
        %v9311 = vpop.f32.mrb[0].mxu0
        %v9312 = vadd.f32 0.0, %v9311
        %v9313 = vpop.f32.mrb[0].mxu0
        %9314 = vmatprep.mubr.bf16.mxu0 0
        %9315 = vmatmul.mubr.bf16.gmra.mrb[0].mxu0 %v9097
        %v9316 = vpop.f32.mrb[0].mxu0
        %v9317 = vadd.f32 0.0, %v9316
        %v9318 = vpop.f32.mrb[0].mxu0
        %v9319 = vpop.f32.mrb[0].mxu0
        %v9320 = vadd.f32 0.0, %v9319
        %v9321 = vpop.f32.mrb[0].mxu0
        %9322 = vmatprep.mubr.bf16.mxu0 0
        %9323 = vmatmul.mubr.bf16.gmra.mrb[0].mxu0 %v9105
        %v9324 = vpop.f32.mrb[0].mxu0
        %v9325 = vadd.f32 0.0, %v9324
        %v9326 = vpop.f32.mrb[0].mxu0
        %v9327 = vpop.f32.mrb[0].mxu0
        %v9328 = vadd.f32 0.0, %v9327
        %v9329 = vpop.f32.mrb[0].mxu0
        %9330 = vmatprep.mubr.bf16.mxu0 0
        %9331 = vmatmul.mubr.bf16.gmra.mrb[0].mxu0 %v9113
        %v9332 = vpop.f32.mrb[0].mxu0
        %v9333 = vadd.f32 0.0, %v9332
        %v9334 = vpop.f32.mrb[0].mxu0
        %v9335 = vpop.f32.mrb[0].mxu0
        %v9336 = vadd.f32 0.0, %v9335
        %v9337 = vpop.f32.mrb[0].mxu0
        %9338 = vmatprep.mubr.bf16.mxu0 0
        %9339 = vmatmul.mubr.bf16.gmra.mrb[0].mxu0 %v9121
        %v9340 = vpop.f32.mrb[0].mxu0
        %v9341 = vadd.f32 0.0, %v9340
        %v9342 = vpop.f32.mrb[0].mxu0
        %v9343 = vpop.f32.mrb[0].mxu0
        %v9344 = vadd.f32 0.0, %v9343
        %v9345 = vpop.f32.mrb[0].mxu0
        %9346 = vmatprep.mubr.bf16.mxu0 0
        %9347 = vmatmul.mubr.bf16.gmra.mrb[0].mxu0 %v9129
        %v9348 = vpop.f32.mrb[0].mxu0
        %v9349 = vadd.f32 0.0, %v9348
        %v9350 = vpop.f32.mrb[0].mxu0
        %v9351 = vpop.f32.mrb[0].mxu0
        %v9352 = vadd.f32 0.0, %v9351
        %v9353 = vpop.f32.mrb[0].mxu0
        %9354 = vmatprep.mubr.bf16.mxu0 0
        %9355 = vmatmul.mubr.bf16.gmra.mrb[0].mxu0 %v9137
        %v9356 = vpop.f32.mrb[0].mxu0
        %v9357 = vadd.f32 0.0, %v9356
        %v9358 = vpop.f32.mrb[0].mxu0
        %v9359 = vpop.f32.mrb[0].mxu0
        %v9360 = vadd.f32 0.0, %v9359
        %v9361 = vpop.f32.mrb[0].mxu0
        %9362 = vmatprep.mubr.bf16.mxu0 0
        %9363 = vmatmul.mubr.bf16.gmra.mrb[0].mxu0 %v9145
        %v9364 = vpop.f32.mrb[0].mxu0
        %v9365 = vadd.f32 0.0, %v9364
        %v9366 = vpop.f32.mrb[0].mxu0
        %v9367 = vpop.f32.mrb[0].mxu0
        %v9368 = vadd.f32 0.0, %v9367
        %v9369 = vpop.f32.mrb[0].mxu0
        %9370 = vmatprep.mubr.bf16.mxu0 0
        %9371 = vmatmul.mubr.bf16.gmra.mrb[0].mxu0 %v9153
        %v9372 = vpop.f32.mrb[0].mxu0
        %v9373 = vadd.f32 0.0, %v9372
        %v9374 = vpop.f32.mrb[0].mxu0
        %v9375 = vpop.f32.mrb[0].mxu0
        %v9376 = vadd.f32 0.0, %v9375
        %v9377 = vpop.f32.mrb[0].mxu0
        %9378 = vmatprep.mubr.bf16.mxu0 0
        %9379 = vmatmul.mubr.bf16.gmra.mrb[0].mxu0 %v9161
        %v9380 = vpop.f32.mrb[0].mxu0
        %v9381 = vadd.f32 0.0, %v9380
        %v9382 = vpop.f32.mrb[0].mxu0
        %v9383 = vpop.f32.mrb[0].mxu0
        %v9384 = vadd.f32 0.0, %v9383
        %v9385 = vpop.f32.mrb[0].mxu0
        %9386 = vmatprep.mubr.bf16.mxu0 0
        %9387 = vmatmul.mubr.bf16.gmra.mrb[0].mxu0 %v9169
        %v9388 = vpop.f32.mrb[0].mxu0
        %v9389 = vadd.f32 0.0, %v9388
        %v9390 = vpop.f32.mrb[0].mxu0
        %v9391 = vpop.f32.mrb[0].mxu0
        %v9392 = vadd.f32 0.0, %v9391
        %v9393 = vpop.f32.mrb[0].mxu0
        %9394 = vdwg.mxu0
        %v9395 = vadd.f32 %v8956, %v9269
        %v9396 = vadd.f32 %v8957, %v9272
        %v9397 = vadd.f32 %v8958, %v9277
        %v9398 = vadd.f32 %v8959, %v9280
        %v9399 = vadd.f32 %v8960, %v9285
        %v9400 = vadd.f32 %v8961, %v9288
        %v9401 = vadd.f32 %v8962, %v9293
        %v9402 = vadd.f32 %v8963, %v9296
        %v9403 = vadd.f32 %v8964, %v9301
        %v9404 = vadd.f32 %v8965, %v9304
        %v9405 = vadd.f32 %v8966, %v9309
        %v9406 = vadd.f32 %v8967, %v9312
        %v9407 = vadd.f32 %v8968, %v9317
        %v9408 = vadd.f32 %v8969, %v9320
        %v9409 = vadd.f32 %v8970, %v9325
        %v9410 = vadd.f32 %v8971, %v9328
        %v9411 = vadd.f32 %v8972, %v9333
        %v9412 = vadd.f32 %v8973, %v9336
        %v9413 = vadd.f32 %v8974, %v9341
        %v9414 = vadd.f32 %v8975, %v9344
        %v9415 = vadd.f32 %v8976, %v9349
        %v9416 = vadd.f32 %v8977, %v9352
        %v9417 = vadd.f32 %v8978, %v9357
        %v9418 = vadd.f32 %v8979, %v9360
        %v9419 = vadd.f32 %v8980, %v9365
        %v9420 = vadd.f32 %v8981, %v9368
        %v9421 = vadd.f32 %v8982, %v9373
        %v9422 = vadd.f32 %v8983, %v9376
        %v9423 = vadd.f32 %v8984, %v9381
        %v9424 = vadd.f32 %v8985, %v9384
        %v9425 = vadd.f32 %v8986, %v9389
        %v9426 = vadd.f32 %v8987, %v9392
        %v9427 = vld [vmem:[%s4] sm:$0x1]
        %v9429 = vlaneseq
        %v9430 = vshrl.u32 %v9429, 7
        %v9431 = vsub.s32 0, %v9430
        %v9432 = vrot.slane %v9427, %v9431
        %v9434 = vadd.f32 %v9395, %v9432
        %v9435 = vadd.f32 %v9396, %v9432
        %v9436 = vadd.f32 %v9397, %v9432
        %v9437 = vadd.f32 %v9398, %v9432
        %v9438 = vadd.f32 %v9399, %v9432
        %v9439 = vadd.f32 %v9400, %v9432
        %v9440 = vadd.f32 %v9401, %v9432
        %v9441 = vadd.f32 %v9402, %v9432
        %v9442 = vadd.f32 %v9403, %v9432
        %v9443 = vadd.f32 %v9404, %v9432
        %v9444 = vadd.f32 %v9405, %v9432
        %v9445 = vadd.f32 %v9406, %v9432
        %v9446 = vadd.f32 %v9407, %v9432
        %v9447 = vadd.f32 %v9408, %v9432
        %v9448 = vadd.f32 %v9409, %v9432
        %v9449 = vadd.f32 %v9410, %v9432
        %v9450 = vadd.f32 %v9411, %v9432
        %v9451 = vadd.f32 %v9412, %v9432
        %v9452 = vadd.f32 %v9413, %v9432
        %v9453 = vadd.f32 %v9414, %v9432
        %v9454 = vadd.f32 %v9415, %v9432
        %v9455 = vadd.f32 %v9416, %v9432
        %v9456 = vadd.f32 %v9417, %v9432
        %v9457 = vadd.f32 %v9418, %v9432
        %v9458 = vadd.f32 %v9419, %v9432
        %v9459 = vadd.f32 %v9420, %v9432
        %v9460 = vadd.f32 %v9421, %v9432
        %v9461 = vadd.f32 %v9422, %v9432
        %v9462 = vadd.f32 %v9423, %v9432
        %v9463 = vadd.f32 %v9424, %v9432
        %v9464 = vadd.f32 %v9425, %v9432
        %v9465 = vadd.f32 %v9426, %v9432
        %v9466 = vmax.f32 %v9434, 0.0
        %v9467 = vmax.f32 %v9435, 0.0
        %v9468 = vmax.f32 %v9436, 0.0
        %v9469 = vmax.f32 %v9437, 0.0
        %v9470 = vmax.f32 %v9438, 0.0
        %v9471 = vmax.f32 %v9439, 0.0
        %v9472 = vmax.f32 %v9440, 0.0
        %v9473 = vmax.f32 %v9441, 0.0
        %v9474 = vmax.f32 %v9442, 0.0
        %v9475 = vmax.f32 %v9443, 0.0
        %v9476 = vmax.f32 %v9444, 0.0
        %v9477 = vmax.f32 %v9445, 0.0
        %v9478 = vmax.f32 %v9446, 0.0
        %v9479 = vmax.f32 %v9447, 0.0
        %v9480 = vmax.f32 %v9448, 0.0
        %v9481 = vmax.f32 %v9449, 0.0
        %v9482 = vmax.f32 %v9450, 0.0
        %v9483 = vmax.f32 %v9451, 0.0
        %v9484 = vmax.f32 %v9452, 0.0
        %v9485 = vmax.f32 %v9453, 0.0
        %v9486 = vmax.f32 %v9454, 0.0
        %v9487 = vmax.f32 %v9455, 0.0
        %v9488 = vmax.f32 %v9456, 0.0
        %v9489 = vmax.f32 %v9457, 0.0
        %v9490 = vmax.f32 %v9458, 0.0
        %v9491 = vmax.f32 %v9459, 0.0
        %v9492 = vmax.f32 %v9460, 0.0
        %v9493 = vmax.f32 %v9461, 0.0
        %v9494 = vmax.f32 %v9462, 0.0
        %v9495 = vmax.f32 %v9463, 0.0
        %v9496 = vmax.f32 %v9464, 0.0
        %v9497 = vmax.f32 %v9465, 0.0
        %v9498 = vpack.c.bf16 %v9467, %v9466
        %v9499 = vpack.c.bf16 %v9469, %v9468
        %v9500 = vpack.c.bf16 %v9471, %v9470
        %v9501 = vpack.c.bf16 %v9473, %v9472
        %v9502 = vpack.c.bf16 %v9475, %v9474
        %v9503 = vpack.c.bf16 %v9477, %v9476
        %v9504 = vpack.c.bf16 %v9479, %v9478
        %v9505 = vpack.c.bf16 %v9481, %v9480
        %v9506 = vpack.c.bf16 %v9483, %v9482
        %v9507 = vpack.c.bf16 %v9485, %v9484
        %v9508 = vpack.c.bf16 %v9487, %v9486
        %v9509 = vpack.c.bf16 %v9489, %v9488
        %v9510 = vpack.c.bf16 %v9491, %v9490
        %v9511 = vpack.c.bf16 %v9493, %v9492
        %v9512 = vpack.c.bf16 %v9495, %v9494
        %v9513 = vpack.c.bf16 %v9497, %v9496
        %v9514 = vld [vmem:[#allocation9] sm:$0xf]
        %v9515 = vld [vmem:[#allocation9 + $0x4] sm:$0xf]
        %v9516 = vld [vmem:[#allocation9 + $0x8] sm:$0xf]
        %v9517 = vld [vmem:[#allocation9 + $0xc] sm:$0xf]
        %v9518 = vld [vmem:[#allocation9 + $0x10] sm:$0xf]
        %v9519 = vld [vmem:[#allocation9 + $0x14] sm:$0xf]
        %v9520 = vld [vmem:[#allocation9 + $0x18] sm:$0xf]
        %v9521 = vld [vmem:[#allocation9 + $0x1c] sm:$0xf]
        %v9522 = vld [vmem:[#allocation9 + $0x20] sm:$0xf]
        %v9523 = vld [vmem:[#allocation9 + $0x24] sm:$0xf]
        %v9524 = vld [vmem:[#allocation9 + $0x28] sm:$0xf]
        %v9525 = vld [vmem:[#allocation9 + $0x2c] sm:$0xf]
        %v9526 = vld [vmem:[#allocation9 + $0x30] sm:$0xf]
        %v9527 = vld [vmem:[#allocation9 + $0x34] sm:$0xf]
        %v9528 = vld [vmem:[#allocation9 + $0x38] sm:$0xf]
        %v9529 = vld [vmem:[#allocation9 + $0x3c] sm:$0xf]
        %v9530 = vld [vmem:[%s6] sm:$0x1]
        %v9532 = vlaneseq
        %v9533 = vshrl.u32 %v9532, 7
        %v9534 = vsub.s32 0, %v9533
        %v9535 = vrot.slane %v9530, %v9534
        %v9553 = vunpack.c.l.b16 %v9514
        %v9554 = vunpack.c.l.b16 %v9515
        %v9555 = vunpack.c.l.b16 %v9516
        %v9556 = vunpack.c.l.b16 %v9517
        %v9557 = vunpack.c.l.b16 %v9518
        %v9558 = vunpack.c.l.b16 %v9519
        %v9559 = vunpack.c.l.b16 %v9520
        %v9560 = vunpack.c.l.b16 %v9521
        %v9561 = vunpack.c.l.b16 %v9522
        %v9562 = vunpack.c.l.b16 %v9523
        %v9563 = vunpack.c.l.b16 %v9524
        %v9564 = vunpack.c.l.b16 %v9525
        %v9565 = vunpack.c.l.b16 %v9526
        %v9566 = vunpack.c.l.b16 %v9527
        %v9567 = vunpack.c.l.b16 %v9528
        %v9568 = vunpack.c.l.b16 %v9529
        %v9569 = vpack.c.b16 %v9554, %v9553
        %v9570 = vpack.c.b16 %v9556, %v9555
        %v9571 = vpack.c.b16 %v9558, %v9557
        %v9572 = vpack.c.b16 %v9560, %v9559
        %v9573 = vpack.c.b16 %v9562, %v9561
        %v9574 = vpack.c.b16 %v9564, %v9563
        %v9575 = vpack.c.b16 %v9566, %v9565
        %v9576 = vpack.c.b16 %v9568, %v9567
        %9585 = vmatprep.subr.bf16.mxu0 0
        %9586 = vmatpush1.bf16.msra.mxu0 %v9569
        %9587 = vmatprep.subr.bf16.mxu0 0
        %9588 = vmatpush1.bf16.msra.mxu0 %v9570
        %9589 = vmatprep.subr.bf16.mxu0 0
        %9590 = vmatpush1.bf16.msra.mxu0 %v9571
        %9591 = vmatprep.subr.bf16.mxu0 0
        %9592 = vmatpush1.bf16.msra.mxu0 %v9572
        %9593 = vmatprep.subr.bf16.mxu0 0
        %9594 = vmatpush1.bf16.msra.mxu0 %v9573
        %9595 = vmatprep.subr.bf16.mxu0 0
        %9596 = vmatpush1.bf16.msra.mxu0 %v9574
        %9597 = vmatprep.subr.bf16.mxu0 0
        %9598 = vmatpush1.bf16.msra.mxu0 %v9575
        %9599 = vmatprep.subr.bf16.mxu0 0
        %9600 = vmatpush1.bf16.msra.mxu0 %v9576
        %9601 = vmatprep.subr.bf16.mxu0 0
        %9602 = vmatpush1.bf16.msra.mxu0 0
        %9603 = vmatprep.subr.bf16.mxu0 0
        %9604 = vmatpush1.bf16.msra.mxu0 0
        %9605 = vmatprep.subr.bf16.mxu0 0
        %9606 = vmatpush1.bf16.msra.mxu0 0
        %9607 = vmatprep.subr.bf16.mxu0 0
        %9608 = vmatpush1.bf16.msra.mxu0 0
        %9609 = vmatprep.subr.bf16.mxu0 0
        %9610 = vmatpush1.bf16.msra.mxu0 0
        %9611 = vmatprep.subr.bf16.mxu0 0
        %9612 = vmatpush1.bf16.msra.mxu0 0
        %9613 = vmatprep.subr.bf16.mxu0 0
        %9614 = vmatpush1.bf16.msra.mxu0 0
        %9615 = vmatprep.subr.bf16.mxu0 0
        %9616 = vmatpush1.bf16.msra.mxu0 0
        %9617 = vmatprep.mubr.bf16.mxu0 0
        %9618 = vmatmul.mubr.bf16.gmra.mrb[0].mxu0 %v9498
        %v9619 = vpop.f32.mrb[0].mxu0
        %v9620 = vadd.f32 %v9535, %v9619
        %v9621 = vpop.f32.mrb[0].mxu0
        %v9622 = vpop.f32.mrb[0].mxu0
        %v9623 = vadd.f32 %v9535, %v9622
        %v9624 = vpop.f32.mrb[0].mxu0
        %9625 = vmatprep.mubr.bf16.mxu0 0
        %9626 = vmatmul.mubr.bf16.gmra.mrb[0].mxu0 %v9499
        %v9627 = vpop.f32.mrb[0].mxu0
        %v9628 = vadd.f32 %v9535, %v9627
        %v9629 = vpop.f32.mrb[0].mxu0
        %v9630 = vpop.f32.mrb[0].mxu0
        %v9631 = vadd.f32 %v9535, %v9630
        %v9632 = vpop.f32.mrb[0].mxu0
        %9633 = vmatprep.mubr.bf16.mxu0 0
        %9634 = vmatmul.mubr.bf16.gmra.mrb[0].mxu0 %v9500
        %v9635 = vpop.f32.mrb[0].mxu0
        %v9636 = vadd.f32 %v9535, %v9635
        %v9637 = vpop.f32.mrb[0].mxu0
        %v9638 = vpop.f32.mrb[0].mxu0
        %v9639 = vadd.f32 %v9535, %v9638
        %v9640 = vpop.f32.mrb[0].mxu0
        %9641 = vmatprep.mubr.bf16.mxu0 0
        %9642 = vmatmul.mubr.bf16.gmra.mrb[0].mxu0 %v9501
        %v9643 = vpop.f32.mrb[0].mxu0
        %v9644 = vadd.f32 %v9535, %v9643
        %v9645 = vpop.f32.mrb[0].mxu0
        %v9646 = vpop.f32.mrb[0].mxu0
        %v9647 = vadd.f32 %v9535, %v9646
        %v9648 = vpop.f32.mrb[0].mxu0
        %9649 = vmatprep.mubr.bf16.mxu0 0
        %9650 = vmatmul.mubr.bf16.gmra.mrb[0].mxu0 %v9502
        %v9651 = vpop.f32.mrb[0].mxu0
        %v9652 = vadd.f32 %v9535, %v9651
        %v9653 = vpop.f32.mrb[0].mxu0
        %v9654 = vpop.f32.mrb[0].mxu0
        %v9655 = vadd.f32 %v9535, %v9654
        %v9656 = vpop.f32.mrb[0].mxu0
        %9657 = vmatprep.mubr.bf16.mxu0 0
        %9658 = vmatmul.mubr.bf16.gmra.mrb[0].mxu0 %v9503
        %v9659 = vpop.f32.mrb[0].mxu0
        %v9660 = vadd.f32 %v9535, %v9659
        %v9661 = vpop.f32.mrb[0].mxu0
        %v9662 = vpop.f32.mrb[0].mxu0
        %v9663 = vadd.f32 %v9535, %v9662
        %v9664 = vpop.f32.mrb[0].mxu0
        %9665 = vmatprep.mubr.bf16.mxu0 0
        %9666 = vmatmul.mubr.bf16.gmra.mrb[0].mxu0 %v9504
        %v9667 = vpop.f32.mrb[0].mxu0
        %v9668 = vadd.f32 %v9535, %v9667
        %v9669 = vpop.f32.mrb[0].mxu0
        %v9670 = vpop.f32.mrb[0].mxu0
        %v9671 = vadd.f32 %v9535, %v9670
        %v9672 = vpop.f32.mrb[0].mxu0
        %9673 = vmatprep.mubr.bf16.mxu0 0
        %9674 = vmatmul.mubr.bf16.gmra.mrb[0].mxu0 %v9505
        %v9675 = vpop.f32.mrb[0].mxu0
        %v9676 = vadd.f32 %v9535, %v9675
        %v9677 = vpop.f32.mrb[0].mxu0
        %v9678 = vpop.f32.mrb[0].mxu0
        %v9679 = vadd.f32 %v9535, %v9678
        %v9680 = vpop.f32.mrb[0].mxu0
        %9681 = vmatprep.mubr.bf16.mxu0 0
        %9682 = vmatmul.mubr.bf16.gmra.mrb[0].mxu0 %v9506
        %v9683 = vpop.f32.mrb[0].mxu0
        %v9684 = vadd.f32 %v9535, %v9683
        %v9685 = vpop.f32.mrb[0].mxu0
        %v9686 = vpop.f32.mrb[0].mxu0
        %v9687 = vadd.f32 %v9535, %v9686
        %v9688 = vpop.f32.mrb[0].mxu0
        %9689 = vmatprep.mubr.bf16.mxu0 0
        %9690 = vmatmul.mubr.bf16.gmra.mrb[0].mxu0 %v9507
        %v9691 = vpop.f32.mrb[0].mxu0
        %v9692 = vadd.f32 %v9535, %v9691
        %v9693 = vpop.f32.mrb[0].mxu0
        %v9694 = vpop.f32.mrb[0].mxu0
        %v9695 = vadd.f32 %v9535, %v9694
        %v9696 = vpop.f32.mrb[0].mxu0
        %9697 = vmatprep.mubr.bf16.mxu0 0
        %9698 = vmatmul.mubr.bf16.gmra.mrb[0].mxu0 %v9508
        %v9699 = vpop.f32.mrb[0].mxu0
        %v9700 = vadd.f32 %v9535, %v9699
        %v9701 = vpop.f32.mrb[0].mxu0
        %v9702 = vpop.f32.mrb[0].mxu0
        %v9703 = vadd.f32 %v9535, %v9702
        %v9704 = vpop.f32.mrb[0].mxu0
        %9705 = vmatprep.mubr.bf16.mxu0 0
        %9706 = vmatmul.mubr.bf16.gmra.mrb[0].mxu0 %v9509
        %v9707 = vpop.f32.mrb[0].mxu0
        %v9708 = vadd.f32 %v9535, %v9707
        %v9709 = vpop.f32.mrb[0].mxu0
        %v9710 = vpop.f32.mrb[0].mxu0
        %v9711 = vadd.f32 %v9535, %v9710
        %v9712 = vpop.f32.mrb[0].mxu0
        %9713 = vmatprep.mubr.bf16.mxu0 0
        %9714 = vmatmul.mubr.bf16.gmra.mrb[0].mxu0 %v9510
        %v9715 = vpop.f32.mrb[0].mxu0
        %v9716 = vadd.f32 %v9535, %v9715
        %v9717 = vpop.f32.mrb[0].mxu0
        %v9718 = vpop.f32.mrb[0].mxu0
        %v9719 = vadd.f32 %v9535, %v9718
        %v9720 = vpop.f32.mrb[0].mxu0
        %9721 = vmatprep.mubr.bf16.mxu0 0
        %9722 = vmatmul.mubr.bf16.gmra.mrb[0].mxu0 %v9511
        %v9723 = vpop.f32.mrb[0].mxu0
        %v9724 = vadd.f32 %v9535, %v9723
        %v9725 = vpop.f32.mrb[0].mxu0
        %v9726 = vpop.f32.mrb[0].mxu0
        %v9727 = vadd.f32 %v9535, %v9726
        %v9728 = vpop.f32.mrb[0].mxu0
        %9729 = vmatprep.mubr.bf16.mxu0 0
        %9730 = vmatmul.mubr.bf16.gmra.mrb[0].mxu0 %v9512
        %v9731 = vpop.f32.mrb[0].mxu0
        %v9732 = vadd.f32 %v9535, %v9731
        %v9733 = vpop.f32.mrb[0].mxu0
        %v9734 = vpop.f32.mrb[0].mxu0
        %v9735 = vadd.f32 %v9535, %v9734
        %v9736 = vpop.f32.mrb[0].mxu0
        %9737 = vmatprep.mubr.bf16.mxu0 0
        %9738 = vmatmul.mubr.bf16.gmra.mrb[0].mxu0 %v9513
        %v9739 = vpop.f32.mrb[0].mxu0
        %v9740 = vadd.f32 %v9535, %v9739
        %v9741 = vpop.f32.mrb[0].mxu0
        %v9742 = vpop.f32.mrb[0].mxu0
        %v9743 = vadd.f32 %v9535, %v9742
        %v9744 = vpop.f32.mrb[0].mxu0
        %9745 = vdwg.mxu0
        %v9746 = vunpack.c.l.bf16 %v379
        %v9747 = vunpack.c.l.bf16 %v380
        %v9748 = vunpack.c.l.bf16 %v381
        %v9749 = vunpack.c.l.bf16 %v382
        %v9750 = vunpack.c.l.bf16 %v383
        %v9751 = vunpack.c.l.bf16 %v384
        %v9752 = vunpack.c.l.bf16 %v385
        %v9753 = vunpack.c.l.bf16 %v386
        %v9754 = vunpack.c.l.bf16 %v387
        %v9755 = vunpack.c.l.bf16 %v388
        %v9756 = vunpack.c.l.bf16 %v389
        %v9757 = vunpack.c.l.bf16 %v390
        %v9758 = vunpack.c.l.bf16 %v391
        %v9759 = vunpack.c.l.bf16 %v392
        %v9760 = vunpack.c.l.bf16 %v393
        %v9761 = vunpack.c.l.bf16 %v394
        %v9762 = vunpack.c.l.bf16 %v395
        %v9763 = vunpack.c.l.bf16 %v396
        %v9764 = vunpack.c.l.bf16 %v397
        %v9765 = vunpack.c.l.bf16 %v398
        %v9766 = vunpack.c.l.bf16 %v399
        %v9767 = vunpack.c.l.bf16 %v400
        %v9768 = vunpack.c.l.bf16 %v401
        %v9769 = vunpack.c.l.bf16 %v402
        %v9770 = vunpack.c.l.bf16 %v403
        %v9771 = vunpack.c.l.bf16 %v404
        %v9772 = vunpack.c.l.bf16 %v405
        %v9773 = vunpack.c.l.bf16 %v406
        %v9774 = vunpack.c.l.bf16 %v407
        %v9775 = vunpack.c.l.bf16 %v408
        %v9776 = vunpack.c.l.bf16 %v409
        %v9777 = vunpack.c.l.bf16 %v410
        %v9778 = vadd.f32 %v9620, %v9746
        %v9779 = vadd.f32 %v9623, %v9747
        %v9780 = vadd.f32 %v9628, %v9748
        %v9781 = vadd.f32 %v9631, %v9749
        %v9782 = vadd.f32 %v9636, %v9750
        %v9783 = vadd.f32 %v9639, %v9751
        %v9784 = vadd.f32 %v9644, %v9752
        %v9785 = vadd.f32 %v9647, %v9753
        %v9786 = vadd.f32 %v9652, %v9754
        %v9787 = vadd.f32 %v9655, %v9755
        %v9788 = vadd.f32 %v9660, %v9756
        %v9789 = vadd.f32 %v9663, %v9757
        %v9790 = vadd.f32 %v9668, %v9758
        %v9791 = vadd.f32 %v9671, %v9759
        %v9792 = vadd.f32 %v9676, %v9760
        %v9793 = vadd.f32 %v9679, %v9761
        %v9794 = vadd.f32 %v9684, %v9762
        %v9795 = vadd.f32 %v9687, %v9763
        %v9796 = vadd.f32 %v9692, %v9764
        %v9797 = vadd.f32 %v9695, %v9765
        %v9798 = vadd.f32 %v9700, %v9766
        %v9799 = vadd.f32 %v9703, %v9767
        %v9800 = vadd.f32 %v9708, %v9768
        %v9801 = vadd.f32 %v9711, %v9769
        %v9802 = vadd.f32 %v9716, %v9770
        %v9803 = vadd.f32 %v9719, %v9771
        %v9804 = vadd.f32 %v9724, %v9772
        %v9805 = vadd.f32 %v9727, %v9773
        %v9806 = vadd.f32 %v9732, %v9774
        %v9807 = vadd.f32 %v9735, %v9775
        %v9808 = vadd.f32 %v9740, %v9776
        %v9809 = vadd.f32 %v9743, %v9777
        %v9810 = vmax.f32 %v9778, 0.0
        %v9811 = vmax.f32 %v9779, 0.0
        %v9812 = vmax.f32 %v9780, 0.0
        %v9813 = vmax.f32 %v9781, 0.0
        %v9814 = vmax.f32 %v9782, 0.0
        %v9815 = vmax.f32 %v9783, 0.0
        %v9816 = vmax.f32 %v9784, 0.0
        %v9817 = vmax.f32 %v9785, 0.0
        %v9818 = vmax.f32 %v9786, 0.0
        %v9819 = vmax.f32 %v9787, 0.0
        %v9820 = vmax.f32 %v9788, 0.0
        %v9821 = vmax.f32 %v9789, 0.0
        %v9822 = vmax.f32 %v9790, 0.0
        %v9823 = vmax.f32 %v9791, 0.0
        %v9824 = vmax.f32 %v9792, 0.0
        %v9825 = vmax.f32 %v9793, 0.0
        %v9826 = vmax.f32 %v9794, 0.0
        %v9827 = vmax.f32 %v9795, 0.0
        %v9828 = vmax.f32 %v9796, 0.0
        %v9829 = vmax.f32 %v9797, 0.0
        %v9830 = vmax.f32 %v9798, 0.0
        %v9831 = vmax.f32 %v9799, 0.0
        %v9832 = vmax.f32 %v9800, 0.0
        %v9833 = vmax.f32 %v9801, 0.0
        %v9834 = vmax.f32 %v9802, 0.0
        %v9835 = vmax.f32 %v9803, 0.0
        %v9836 = vmax.f32 %v9804, 0.0
        %v9837 = vmax.f32 %v9805, 0.0
        %v9838 = vmax.f32 %v9806, 0.0
        %v9839 = vmax.f32 %v9807, 0.0
        %v9840 = vmax.f32 %v9808, 0.0
        %v9841 = vmax.f32 %v9809, 0.0
        %v9842 = vpack.c.bf16 %v9811, %v9810
        %v9843 = vpack.c.bf16 %v9813, %v9812
        %v9844 = vpack.c.bf16 %v9815, %v9814
        %v9845 = vpack.c.bf16 %v9817, %v9816
        %v9846 = vpack.c.bf16 %v9819, %v9818
        %v9847 = vpack.c.bf16 %v9821, %v9820
        %v9848 = vpack.c.bf16 %v9823, %v9822
        %v9849 = vpack.c.bf16 %v9825, %v9824
        %v9850 = vpack.c.bf16 %v9827, %v9826
        %v9851 = vpack.c.bf16 %v9829, %v9828
        %v9852 = vpack.c.bf16 %v9831, %v9830
        %v9853 = vpack.c.bf16 %v9833, %v9832
        %v9854 = vpack.c.bf16 %v9835, %v9834
        %v9855 = vpack.c.bf16 %v9837, %v9836
        %v9856 = vpack.c.bf16 %v9839, %v9838
        %v9857 = vpack.c.bf16 %v9841, %v9840
        %v9874 = vunpack.c.l.b16 %v9842
        %v9875 = vunpack.c.h.b16 %v9842
        %v9876 = vunpack.c.l.b16 %v9843
        %v9877 = vunpack.c.h.b16 %v9843
        %v9878 = vunpack.c.l.b16 %v9844
        %v9879 = vunpack.c.h.b16 %v9844
        %v9880 = vunpack.c.l.b16 %v9845
        %v9881 = vunpack.c.h.b16 %v9845
        %v9882 = vunpack.c.l.b16 %v9846
        %v9883 = vunpack.c.h.b16 %v9846
        %v9884 = vunpack.c.l.b16 %v9847
        %v9885 = vunpack.c.h.b16 %v9847
        %v9886 = vunpack.c.l.b16 %v9848
        %v9887 = vunpack.c.h.b16 %v9848
        %v9888 = vunpack.c.l.b16 %v9849
        %v9889 = vunpack.c.h.b16 %v9849
        %v9890 = vunpack.c.l.b16 %v9850
        %v9891 = vunpack.c.h.b16 %v9850
        %v9892 = vunpack.c.l.b16 %v9851
        %v9893 = vunpack.c.h.b16 %v9851
        %v9894 = vunpack.c.l.b16 %v9852
        %v9895 = vunpack.c.h.b16 %v9852
        %v9896 = vunpack.c.l.b16 %v9853
        %v9897 = vunpack.c.h.b16 %v9853
        %v9898 = vunpack.c.l.b16 %v9854
        %v9899 = vunpack.c.h.b16 %v9854
        %v9900 = vunpack.c.l.b16 %v9855
        %v9901 = vunpack.c.h.b16 %v9855
        %v9902 = vunpack.c.l.b16 %v9856
        %v9903 = vunpack.c.h.b16 %v9856
        %v9904 = vunpack.c.l.b16 %v9857
        %v9905 = vunpack.c.h.b16 %v9857
        %v9906 = vpack.c.b16 %v9874, %v9874
        %v9907 = vpack.c.b16 %v9875, %v9875
        %v9908 = vpack.c.b16 %v9876, %v9876
        %v9909 = vpack.c.b16 %v9877, %v9877
        %v9910 = vpack.c.b16 %v9878, %v9878
        %v9911 = vpack.c.b16 %v9879, %v9879
        %v9912 = vpack.c.b16 %v9880, %v9880
        %v9913 = vpack.c.b16 %v9881, %v9881
        %v9914 = vpack.c.b16 %v9882, %v9882
        %v9915 = vpack.c.b16 %v9883, %v9883
        %v9916 = vpack.c.b16 %v9884, %v9884
        %v9917 = vpack.c.b16 %v9885, %v9885
        %v9918 = vpack.c.b16 %v9886, %v9886
        %v9919 = vpack.c.b16 %v9887, %v9887
        %v9920 = vpack.c.b16 %v9888, %v9888
        %v9921 = vpack.c.b16 %v9889, %v9889
        %v9922 = vpack.c.b16 %v9890, %v9890
        %v9923 = vpack.c.b16 %v9891, %v9891
        %v9924 = vpack.c.b16 %v9892, %v9892
        %v9925 = vpack.c.b16 %v9893, %v9893
        %v9926 = vpack.c.b16 %v9894, %v9894
        %v9927 = vpack.c.b16 %v9895, %v9895
        %v9928 = vpack.c.b16 %v9896, %v9896
        %v9929 = vpack.c.b16 %v9897, %v9897
        %v9930 = vpack.c.b16 %v9898, %v9898
        %v9931 = vpack.c.b16 %v9899, %v9899
        %v9932 = vpack.c.b16 %v9900, %v9900
        %v9933 = vpack.c.b16 %v9901, %v9901
        %v9934 = vpack.c.b16 %v9902, %v9902
        %v9935 = vpack.c.b16 %v9903, %v9903
        %v9936 = vpack.c.b16 %v9904, %v9904
        %v9937 = vpack.c.b16 %v9905, %v9905
        %s9970 = scalar_lea.vmem %s341, 128 [#allocation11]
        %9971 = vst [vmem:[%s9970] sm:$0xf] %v9906
        %9972 = vst [vmem:[%s9970 + $0x4] sm:$0xf] %v9907
        %9973 = vst [vmem:[%s9970 + $0x8] sm:$0xf] %v9908
        %9974 = vst [vmem:[%s9970 + $0xc] sm:$0xf] %v9909
        %9975 = vst [vmem:[%s9970 + $0x10] sm:$0xf] %v9910
        %9976 = vst [vmem:[%s9970 + $0x14] sm:$0xf] %v9911
        %9977 = vst [vmem:[%s9970 + $0x18] sm:$0xf] %v9912
        %9978 = vst [vmem:[%s9970 + $0x1c] sm:$0xf] %v9913
        %9979 = vst [vmem:[%s9970 + $0x20] sm:$0xf] %v9914
        %9980 = vst [vmem:[%s9970 + $0x24] sm:$0xf] %v9915
        %9981 = vst [vmem:[%s9970 + $0x28] sm:$0xf] %v9916
        %9982 = vst [vmem:[%s9970 + $0x2c] sm:$0xf] %v9917
        %9983 = vst [vmem:[%s9970 + $0x30] sm:$0xf] %v9918
        %9984 = vst [vmem:[%s9970 + $0x34] sm:$0xf] %v9919
        %9985 = vst [vmem:[%s9970 + $0x38] sm:$0xf] %v9920
        %9986 = vst [vmem:[%s9970 + $0x3c] sm:$0xf] %v9921
        %9987 = vst [vmem:[%s9970 + $0x40] sm:$0xf] %v9922
        %9988 = vst [vmem:[%s9970 + $0x44] sm:$0xf] %v9923
        %9989 = vst [vmem:[%s9970 + $0x48] sm:$0xf] %v9924
        %9990 = vst [vmem:[%s9970 + $0x4c] sm:$0xf] %v9925
        %9991 = vst [vmem:[%s9970 + $0x50] sm:$0xf] %v9926
        %9992 = vst [vmem:[%s9970 + $0x54] sm:$0xf] %v9927
        %9993 = vst [vmem:[%s9970 + $0x58] sm:$0xf] %v9928
        %9994 = vst [vmem:[%s9970 + $0x5c] sm:$0xf] %v9929
        %9995 = vst [vmem:[%s9970 + $0x60] sm:$0xf] %v9930
        %9996 = vst [vmem:[%s9970 + $0x64] sm:$0xf] %v9931
        %9997 = vst [vmem:[%s9970 + $0x68] sm:$0xf] %v9932
        %9998 = vst [vmem:[%s9970 + $0x6c] sm:$0xf] %v9933
        %9999 = vst [vmem:[%s9970 + $0x70] sm:$0xf] %v9934
        %10000 = vst [vmem:[%s9970 + $0x74] sm:$0xf] %v9935
        %10001 = vst [vmem:[%s9970 + $0x78] sm:$0xf] %v9936
        %10002 = vst [vmem:[%s9970 + $0x7c] sm:$0xf] %v9937
        %s10003 = sand.u32 %s186, 1
        %s10004 = scalar_lea.sflag [#allocation5], %s10003
        %s10005 = sand.u32 %s186, 1
        %s10006 = smul.addr %s10005, 256
        %s10007 = scalar_lea.vmem [#allocation11], %s10006
        // Predicated region
        $region65: #{tpu_custom_call.1} parent=47 // pred_check
          %p10008 = pneg %p196
        $region66: #{tpu_custom_call.1} parent=47 // pred_check_branch
          %10010 = sbr.rel (%p10008) target = $region68
        $region67: #{tpu_custom_call.1} parent=47 // pred_region
          %s10011 = smul.u32 2, %s26
          %s10013 = ssub.s32 4096, 4096
          %10014 = vsyncadd %s10004, %s10013
          %s10015 = smul.addr %s10011, 32
          %s10016 = smul.addr %s10015, 64
          %s10017 = scalar_lea.hbm %s7, %s10016
          %s10018 = sshll.u32 %s10007, 4
          %s10019 = int_to_ptr.vmem [resolvable:$true] %s10018
          %10024 = dma.vmem_to_hbm [thread:$0]  %s10019, 4096, %s10017, %s10004, 64, 64, 4
        $region68: #{tpu_custom_call.1} parent=47 // pred_fallthru
          _
      $region48: #{tpu_custom_call.1} parent=5 // pred_fallthru
        _
      %p10025 = scmp.le.s32.totalorder 2, %s21
      // Predicated region
      $region69: #{tpu_custom_call.1} parent=5 // pred_check
        %p10026 = pneg %p10025
      $region70: #{tpu_custom_call.1} parent=5 // pred_check_branch
        %10028 = sbr.rel (%p10026) target = $region72
      $region71: #{tpu_custom_call.1} parent=5 // pred_region
        %s10029 = ssub.s32 %s21, 2
        // Predicated region
        $region73: #{tpu_custom_call.1} parent=71 // pred_check
          %p10030 = pneg %p202
        $region74: #{tpu_custom_call.1} parent=71 // pred_check_branch
          %10032 = sbr.rel (%p10030) target = $region76
        $region75: #{tpu_custom_call.1} parent=71 // pred_region
          %s10033 = sand.u32 %s187, 1
          %s10034 = scalar_lea.sflag [#allocation5], %s10033
          %s10035 = sand.u32 %s187, 1
          %s10036 = smul.addr %s10035, 256
          %s10037 = scalar_lea.vmem [#allocation11], %s10036
          %10038 = dma.done %s10034, 4096
        $region76: #{tpu_custom_call.1} parent=71 // pred_fallthru
          _
      $region72: #{tpu_custom_call.1} parent=5 // pred_fallthru
        _
    $region6: #{tpu_custom_call.1} parent=1 // loop_footer
      %s25 = sadd.s32 1, %s21
    $region7: #{tpu_custom_call.1} parent=1 // loop_footer_branch
      %20 = sbr.rel target = $region3
    $region8: #{tpu_custom_call.1} parent=1 // loop_exit
      _
    %10039 = vsyncpa [#allocation4], 1
    %s10040 = scalar_lea.sflag [#allocation4], 1
    %10041 = vsyncpa %s10040, 1
    %10042 = vsyncpa [#allocation7], 1
    %10043 = vsyncpa [#allocation10], 1
    %10044 = vsyncpa [#allocation5], 1
    %s10045 = scalar_lea.sflag [#allocation5], 1
    %10046 = vsyncpa %s10045, 1

</llo_original>
